<compile_context>
chip_gen: v7x
topology: tpu7x:2x2x1
jax: 0.10.0
libtpu: 0.0.40
codegen_flags: <defaults>
</compile_context>

<pallas_src>
import functools

import jax
import jax.numpy as jnp
from jax.experimental import pallas as pl
from jax.experimental.pallas import tpu as pltpu

LANES = 128
ACC_SUBLANES = 32            # 4 independent (8,128) vreg accumulators
SMALL_INPUT_ELEMENTS = 1 << 20  # below this, XLA fusion beats kernel launch cost


def _round_up(v, m):
    return -(-v // m) * m


def _abs_diff_sum_kernel(x_ref, t_ref, o_ref, *, rows, tile_rows,
                         tiles_per_split, mask_needed):
    c = pl.program_id(0)  # core / split index ("parallel")
    i = pl.program_id(1)  # reduction step     ("arbitrary")

    @pl.when(i == 0)
    def _():
        o_ref[...] = jnp.zeros_like(o_ref)

    # Subtract/abs in the native input dtype (bf16 VALU on v6e/v7x); upcast to
    # f32 only at the accumulate.
    diff = jnp.abs(x_ref[...] - t_ref[...]).astype(jnp.float32)
    groups = tile_rows // ACC_SUBLANES

    def accumulate(d):
        # Pure VPU element-wise fold into 4 independent vreg accumulators.
        o_ref[...] += d.reshape(groups, ACC_SUBLANES, LANES).sum(axis=0).reshape(
            1, ACC_SUBLANES, LANES)

    if not mask_needed:
        accumulate(diff)
    else:
        row0 = (c * tiles_per_split + i) * tile_rows
        is_partial = row0 + tile_rows > rows

        @pl.when(jnp.logical_not(is_partial))
        def _():
            # Fast path: full tile, no mask work at all.
            accumulate(diff)

        @pl.when(is_partial)
        def _():
            # Only the tile(s) that extend past `rows` pay for iota/cmp/select.
            local_row = jax.lax.broadcasted_iota(jnp.int32, (tile_rows, 1), 0)
            accumulate(jnp.where(row0 + local_row < rows, diff, 0.0))


def ratio_loss(x, t, *, tile_rows=None,
               min_pallas_elements=SMALL_INPUT_ELEMENTS):
    assert x.shape == t.shape
    n_elems = x.size

    # Small-input / ragged fallback: pallas_call launch + pipeline fill costs
    # several us, and n % 128 != 0 would force a real HBM copy via slicing.
    if n_elems == 0 or n_elems < min_pallas_elements or n_elems % LANES != 0:
        return jnp.mean(jnp.abs(x - t))

    rows = n_elems // LANES
    # Pure reshape of contiguous buffers -- no copy, no pad.
    x2 = x.reshape(rows, LANES)
    t2 = t.reshape(rows, LANES)

    itemsize = jnp.dtype(x.dtype).itemsize
    if tile_rows is None:
        # Same VMEM footprint for 16-bit and 32-bit inputs (~8 MiB of
        # double-buffered inputs), safely under every generation's default
        # scoped-VMEM limit and the explicit 32 MiB limit below.
        tile_rows = 8192 if itemsize <= 2 else 4096
    # Keep 2 inputs x 2 pipeline buffers under ~24 MiB of the 32 MiB limit.
    max_tile_rows = (24 << 20) // (4 * LANES * itemsize)
    tile_rows = min(tile_rows, max_tile_rows)
    tile_rows = max(ACC_SUBLANES, min(tile_rows, _round_up(rows, ACC_SUBLANES)))
    tile_rows = (tile_rows // ACC_SUBLANES) * ACC_SUBLANES

    num_tiles = -(-rows // tile_rows)
    # Unconditional 2-way split across TensorCores whenever there is more than
    # one tile (megacore on v7x; harmless serial loop on v5e/v6e).
    n_split = 2 if num_tiles >= 2 else 1
    tiles_per_split = -(-num_tiles // n_split)
    # Mask needed if the last real tile is partial OR the last split overshoots.
    mask_needed = n_split * tiles_per_split * tile_rows > rows
    last_block = num_tiles - 1

    def in_index_map(c, i):
        # Clamp so the overshoot step of an odd tile count never DMAs past the
        # array; the kernel mask zeroes that tile's contribution entirely.
        return (jnp.minimum(c * tiles_per_split + i, last_block), 0)

    kernel = functools.partial(
        _abs_diff_sum_kernel,
        rows=rows,
        tile_rows=tile_rows,
        tiles_per_split=tiles_per_split,
        mask_needed=mask_needed,
    )

    cost = pl.CostEstimate(
        flops=2 * n_elems,
        transcendentals=0,
        bytes_accessed=2 * n_elems * itemsize
        + n_split * ACC_SUBLANES * LANES * 4,
    )

    partials = pl.pallas_call(
        kernel,
        out_shape=jax.ShapeDtypeStruct((n_split, ACC_SUBLANES, LANES),
                                       jnp.float32),
        grid_spec=pltpu.PrefetchScalarGridSpec(
            num_scalar_prefetch=0,
            grid=(n_split, tiles_per_split),
            in_specs=[
                pl.BlockSpec((tile_rows, LANES), in_index_map),
                pl.BlockSpec((tile_rows, LANES), in_index_map),
            ],
            out_specs=pl.BlockSpec((1, ACC_SUBLANES, LANES),
                                   lambda c, i: (c, 0, 0)),
        ),
        compiler_params=pltpu.CompilerParams(
            dimension_semantics=("parallel", "arbitrary"),
            vmem_limit_bytes=32 * 1024 * 1024,
        ),
        cost_estimate=cost,
    )(x2, t2)

    # Single tiny final cross-lane/core reduce + mean normalization.
    # (Dividing by an f32 count matches jnp.mean / torch.mean behavior.)
    total = jnp.sum(partials)
    return (total / jnp.float32(n_elems)).astype(x.dtype)


if __name__ == "__main__":
    key = jax.random.PRNGKey(0)
    k1, k2, k3, k4 = jax.random.split(key, 4)

    # Small NCHW inputs like the PyTorch module would see (XLA fallback path).
    x_s = jax.random.normal(k1, (2, 4, 16, 16), dtype=jnp.float32)
    t_s = jax.random.normal(k2, (2, 4, 16, 16), dtype=jnp.float32)
    loss_s = ratio_loss(x_s, t_s)
    jax.block_until_ready(loss_s)
    ref_s = jnp.mean(jnp.abs(x_s - t_s))
    assert jnp.allclose(loss_s, ref_s, rtol=1e-5, atol=1e-6), (loss_s, ref_s)

    # Larger input that exercises the Pallas kernel: odd tile count -> both
    # the unmasked fast path, the masked partial tile, and the clamped
    # overshoot tile of the cross-core split are covered.
    x_l = jax.random.normal(k3, (2, 3, 1372, 128), dtype=jnp.float32)
    t_l = jax.random.normal(k4, (2, 3, 1372, 128), dtype=jnp.float32)
    loss_l = ratio_loss(x_l, t_l)
    jax.block_until_ready(loss_l)
    ref_l = jnp.mean(jnp.abs(x_l - t_l))
    assert jnp.allclose(loss_l, ref_l, rtol=1e-4, atol=1e-6), (loss_l, ref_l)

    print("KERNEL_OK")
</pallas_src>

<mosaic_0001>
module attributes {stable_mosaic.version = 11 : i64} {
  func.func @_abs_diff_sum_kernel(%arg0: i32, %arg1: i32, %arg2: memref<4096x128xf32, #tpu.memory_space<vmem>>, %arg3: memref<4096x128xf32, #tpu.memory_space<vmem>>, %arg4: memref<1x32x128xf32, #tpu.memory_space<vmem>>) attributes {dimension_semantics = [#tpu.dimension_semantics<parallel>, #tpu.dimension_semantics<arbitrary>], iteration_bounds = array<i64: 2, 2>, scalar_prefetch = 0 : i64, scratch_operands = 0 : i64, tpu.core_type = #tpu.core_type<tc>, window_params = [{transform_indices = @transform_0, window_bounds = array<i64: 4096, 128>}, {transform_indices = @transform_1, window_bounds = array<i64: 4096, 128>}, {transform_indices = @transform_2, window_bounds = array<i64: 1, 32, 128>}]} {
    %c0_i32 = arith.constant 0 : i32
    %0 = arith.cmpi eq, %arg1, %c0_i32 : i32
    %1 = arith.extui %0 : i1 to i32
    %c0_i32_0 = arith.constant 0 : i32
    %2 = arith.cmpi ne, %1, %c0_i32_0 : i32
    scf.if %2 {
      %cst = arith.constant 0.000000e+00 : f32
      %17 = vector.broadcast %cst : f32 to vector<1x32x128xf32>
      %c0_7 = arith.constant 0 : index
      %c0_8 = arith.constant 0 : index
      %c0_9 = arith.constant 0 : index
      %18 = vector.load %arg4[%c0_7, %c0_8, %c0_9] : memref<1x32x128xf32, #tpu.memory_space<vmem>>, vector<1x32x128xf32>
      tpu.vector_store %arg4[%c0_7, %c0_8, %c0_9], %17 {strides = array<i32>} : memref<1x32x128xf32, #tpu.memory_space<vmem>>, vector<1x32x128xf32>,
    } else {
    }
    %c0 = arith.constant 0 : index
    %c0_1 = arith.constant 0 : index
    %3 = vector.load %arg2[%c0, %c0_1] : memref<4096x128xf32, #tpu.memory_space<vmem>>, vector<4096x128xf32>
    %c0_2 = arith.constant 0 : index
    %c0_3 = arith.constant 0 : index
    %4 = vector.load %arg3[%c0_2, %c0_3] : memref<4096x128xf32, #tpu.memory_space<vmem>>, vector<4096x128xf32>
    %5 = arith.subf %3, %4 : vector<4096x128xf32>
    %6 = math.absf %5 : vector<4096x128xf32>
    %c2_i32 = arith.constant 2 : i32
    %7 = arith.muli %arg0, %c2_i32 : i32
    %8 = arith.addi %7, %arg1 : i32
    %c4096_i32 = arith.constant 4096 : i32
    %9 = arith.muli %8, %c4096_i32 : i32
    %c4096_i32_4 = arith.constant 4096 : i32
    %10 = arith.addi %9, %c4096_i32_4 : i32
    %c8232_i32 = arith.constant 8232 : i32
    %11 = arith.cmpi sgt, %10, %c8232_i32 : i32
    %true = arith.constant true
    %12 = arith.xori %11, %true : i1
    %13 = arith.extui %12 : i1 to i32
    %c0_i32_5 = arith.constant 0 : i32
    %14 = arith.cmpi ne, %13, %c0_i32_5 : i32
    scf.if %14 {
      %c0_7 = arith.constant 0 : index
      %c0_8 = arith.constant 0 : index
      %c0_9 = arith.constant 0 : index
      %17 = vector.load %arg4[%c0_7, %c0_8, %c0_9] : memref<1x32x128xf32, #tpu.memory_space<vmem>>, vector<1x32x128xf32>
      %18 = vector.shape_cast %6 : vector<4096x128xf32> to vector<128x32x128xf32>
      %cst = arith.constant dense<0.000000e+00> : vector<32x128xf32>
      %19 = vector.multi_reduction <add>, %18, %cst [0] : vector<128x32x128xf32> to vector<32x128xf32>
      %20 = vector.shape_cast %19 : vector<32x128xf32> to vector<1x32x128xf32>
      %21 = arith.addf %17, %20 : vector<1x32x128xf32>
      %c0_10 = arith.constant 0 : index
      %c0_11 = arith.constant 0 : index
      %c0_12 = arith.constant 0 : index
      %22 = vector.load %arg4[%c0_10, %c0_11, %c0_12] : memref<1x32x128xf32, #tpu.memory_space<vmem>>, vector<1x32x128xf32>
      tpu.vector_store %arg4[%c0_10, %c0_11, %c0_12], %21 {strides = array<i32>} : memref<1x32x128xf32, #tpu.memory_space<vmem>>, vector<1x32x128xf32>,
    } else {
    }
    %15 = arith.extui %11 : i1 to i32
    %c0_i32_6 = arith.constant 0 : i32
    %16 = arith.cmpi ne, %15, %c0_i32_6 : i32
    scf.if %16 {
      %17 = tpu.iota {dimensions = array<i32: 0>} : vector<4096x1xi32>
      %18 = vector.broadcast %9 : i32 to vector<4096x1xi32>
      %19 = arith.addi %18, %17 : vector<4096x1xi32>
      %c8232_i32_7 = arith.constant 8232 : i32
      %20 = vector.broadcast %c8232_i32_7 : i32 to vector<4096x1xi32>
      %21 = arith.cmpi slt, %19, %20 : vector<4096x1xi32>
      %cst = arith.constant 0.000000e+00 : f32
      %22 = vector.shape_cast %21 : vector<4096x1xi1> to vector<4096x1xi1>
      %23 = vector.broadcast %22 : vector<4096x1xi1> to vector<4096x128xi1>
      %24 = vector.broadcast %cst : f32 to vector<4096x128xf32>
      %25 = arith.select %23, %6, %24 : vector<4096x128xi1>, vector<4096x128xf32>
      %c0_8 = arith.constant 0 : index
      %c0_9 = arith.constant 0 : index
      %c0_10 = arith.constant 0 : index
      %26 = vector.load %arg4[%c0_8, %c0_9, %c0_10] : memref<1x32x128xf32, #tpu.memory_space<vmem>>, vector<1x32x128xf32>
      %27 = vector.shape_cast %25 : vector<4096x128xf32> to vector<128x32x128xf32>
      %cst_11 = arith.constant dense<0.000000e+00> : vector<32x128xf32>
      %28 = vector.multi_reduction <add>, %27, %cst_11 [0] : vector<128x32x128xf32> to vector<32x128xf32>
      %29 = vector.shape_cast %28 : vector<32x128xf32> to vector<1x32x128xf32>
      %30 = arith.addf %26, %29 : vector<1x32x128xf32>
      %c0_12 = arith.constant 0 : index
      %c0_13 = arith.constant 0 : index
      %c0_14 = arith.constant 0 : index
      %31 = vector.load %arg4[%c0_12, %c0_13, %c0_14] : memref<1x32x128xf32, #tpu.memory_space<vmem>>, vector<1x32x128xf32>
      tpu.vector_store %arg4[%c0_12, %c0_13, %c0_14], %30 {strides = array<i32>} : memref<1x32x128xf32, #tpu.memory_space<vmem>>, vector<1x32x128xf32>,
    } else {
    }
    return
  }
  func.func @transform_0(%arg0: i32, %arg1: i32) -> (i32, i32) {
    %c2_i32 = arith.constant 2 : i32
    %0 = arith.muli %arg0, %c2_i32 : i32
    %1 = arith.addi %0, %arg1 : i32
    %c2_i32_0 = arith.constant 2 : i32
    %2 = arith.minsi %1, %c2_i32_0 : i32
    %c0_i32 = arith.constant 0 : i32
    %c0_i32_1 = arith.constant 0 : i32
    return %2, %c0_i32 : i32, i32
  }
  func.func @transform_1(%arg0: i32, %arg1: i32) -> (i32, i32) {
    %c2_i32 = arith.constant 2 : i32
    %0 = arith.muli %arg0, %c2_i32 : i32
    %1 = arith.addi %0, %arg1 : i32
    %c2_i32_0 = arith.constant 2 : i32
    %2 = arith.minsi %1, %c2_i32_0 : i32
    %c0_i32 = arith.constant 0 : i32
    %c0_i32_1 = arith.constant 0 : i32
    return %2, %c0_i32 : i32, i32
  }
  func.func @transform_2(%arg0: i32, %arg1: i32) -> (i32, i32, i32) {
    %c0_i32 = arith.constant 0 : i32
    %c0_i32_0 = arith.constant 0 : i32
    %c0_i32_1 = arith.constant 0 : i32
    return %arg0, %c0_i32, %c0_i32_0 : i32, i32, i32
  }
}

</mosaic_0001>

<llo_original>
// kernel: tpu_custom_call.1
$region0: #{tpu_custom_call.1}
  #allocation0 [shape = 'u32[]', space=smem, size = 0x4, offset = 0x4, fixed_abs, tag = 'smem constant byte address 0x4 - core index']
  #allocation1 [shape = 'u32[144,128]{1,0:T(1,128)}', space=vmem, size = 0x12000, scoped, tag = 'internal scratch']
  %s0 = inlined_call_operand.hbm [shape: f32[8232,128], index: 0, kind: input, shape index: {}]
  %s1 = inlined_call_operand.hbm [shape: f32[8232,128], index: 1, kind: input, shape index: {}]
  %s2 = inlined_call_operand.hbm [shape: f32[2,32,128], index: 2, kind: output, shape index: {}]
  %s3 = sld [smem:[#allocation0]]
  $region61: #{tpu_custom_call.1} parent=0
    _
  %s5 = ssub.s32 1, %s3
  %s6 = scalar_select 0, %s5, %s3
  $region1: #{tpu_custom_call.1} parent=0
    #allocation2 [shape = 'u8[4194304]{0}', space=vmem, size = 0x400000, scoped, tag = 'input window, operand 0']
    #allocation3 [shape = 's32[2]{0}', space=sflag, size = 0x8, scoped, tag = 'scoped memory for tpu_custom_call.1']
    #allocation4 [shape = 's32[2]{0}', space=sflag, size = 0x8, scoped, tag = 'scoped memory for tpu_custom_call.1']
    #allocation5 [shape = 'u8[4194304]{0}', space=vmem, size = 0x400000, scoped, tag = 'input window, operand 1']
    #allocation6 [shape = 's32[2]{0}', space=sflag, size = 0x8, scoped, tag = 'scoped memory for tpu_custom_call.1']
    #allocation7 [shape = 'u8[32768]{0}', space=vmem, size = 0x8000, scoped, tag = 'output window, operand 0']
    %7 = vsyncpa [#allocation3], 0
    %s8 = scalar_lea.sflag [#allocation3], 1
    %9 = vsyncpa %s8, 0
    %10 = vsyncpa [#allocation6], 0
    %s11 = scalar_lea.sflag [#allocation6], 1
    %12 = vsyncpa %s11, 0
    %13 = vsyncpa [#allocation4], 0
    %s14 = scalar_lea.sflag [#allocation4], 1
    %15 = vsyncpa %s14, 0
    loop: start=0, step=1, limit=6
    $region2: #{tpu_custom_call.1} parent=1 // loop_pre_header
      _
    $region3: #{tpu_custom_call.1} parent=1 // loop_header
      %s17 = sphi 0, %s21
      %p18 = scmp.ge.s32.totalorder %s17, 6
      %s24 = sphi 0, %s36
      %s25 = sphi 0, %s32
      %s26 = sphi 0, %s24
      %s27 = sphi 0, %s25
      %s28 = sphi 0, %s26
      %s29 = sphi 0, %s27
      %s47 = sphi 0, %s49
      %s50 = sphi 0, %s47
      %s51 = sphi 0, %s50
      %s67 = sphi 0, %s51
      %s81 = sphi 0, %s83
      %s84 = sphi 0, %s81
      %s85 = sphi 0, %s84
      %s101 = sphi 0, %s85
      %s107 = sphi 0, %s109
      %s110 = sphi 0, %s107
      %s111 = sphi 0, %s110
      %s127 = sphi 0, %s111
    $region4: #{tpu_custom_call.1} parent=1 // loop_header_branch
      %20 = sbr.rel (%p18) target = $region8
    $region5: #{tpu_custom_call.1} parent=1 // loop_body
      %s22 = ssub.s32 %s17, 1
      %s23 = ssub.s32 %s17, 2
      %s30 = sadd.s32 1, %s25
      %p31 = scmp.ge.s32.totalorder %s30, 2
      %s32 = scalar_select %p31, 0, %s30
      %s33 = sadd.s32 1, %s24
      %s34 = scalar_select %p31, %s33, %s24
      %p35 = scmp.ge.s32.totalorder %s34, 2
      %s36 = scalar_select %p35, 0, %s34
      %s37 = smul.u32 %s24, 2
      %s38 = sadd.s32 %s37, %s25
      %p39 = scmp.lt.s32.totalorder %s38, 2
      %s40 = scalar_select %p39, %s38, 2
      %s41 = smul.u32 %s36, 2
      %s42 = sadd.s32 %s41, %s32
      %p43 = scmp.lt.s32.totalorder %s42, 2
      %s44 = scalar_select %p43, %s42, 2
      %s45 = ssub.s32 %s40, %s44
      %p46 = scmp.eq.s32.totalorder %s45, 0
      %s48 = sadd.s32 %s47, 1
      %s49 = scalar_select %p46, %s47, %s48
      %p52 = pneg %p46
      %p53 = scmp.eq.s32.totalorder %s17, 3
      %p54 = por %p52, %p53
      %p55 = scmp.ne.s32.totalorder %s47, %s50
      %p56 = scmp.eq.s32.totalorder %s17, 0
      %p57 = por %p55, %p56
      %p58 = scmp.ne.s32.totalorder %s47, %s50
      %p59 = scmp.eq.s32.totalorder %s22, 3
      %p60 = por %p58, %p59
      %p61 = scmp.ne.s32.totalorder %s50, %s51
      %p62 = scmp.eq.s32.totalorder %s22, 0
      %p63 = por %p61, %p62
      %p64 = scmp.ne.s32.totalorder %s50, %s51
      %p65 = scmp.eq.s32.totalorder %s23, 3
      %p66 = por %p64, %p65
      %p68 = scmp.ne.s32.totalorder %s51, %s67
      %p69 = scmp.eq.s32.totalorder %s23, 0
      %p70 = por %p68, %p69
      %s71 = smul.u32 %s24, 2
      %s72 = sadd.s32 %s71, %s25
      %p73 = scmp.lt.s32.totalorder %s72, 2
      %s74 = scalar_select %p73, %s72, 2
      %s75 = smul.u32 %s36, 2
      %s76 = sadd.s32 %s75, %s32
      %p77 = scmp.lt.s32.totalorder %s76, 2
      %s78 = scalar_select %p77, %s76, 2
      %s79 = ssub.s32 %s74, %s78
      %p80 = scmp.eq.s32.totalorder %s79, 0
      %s82 = sadd.s32 %s81, 1
      %s83 = scalar_select %p80, %s81, %s82
      %p86 = pneg %p80
      %p87 = scmp.eq.s32.totalorder %s17, 3
      %p88 = por %p86, %p87
      %p89 = scmp.ne.s32.totalorder %s81, %s84
      %p90 = scmp.eq.s32.totalorder %s17, 0
      %p91 = por %p89, %p90
      %p92 = scmp.ne.s32.totalorder %s81, %s84
      %p93 = scmp.eq.s32.totalorder %s22, 3
      %p94 = por %p92, %p93
      %p95 = scmp.ne.s32.totalorder %s84, %s85
      %p96 = scmp.eq.s32.totalorder %s22, 0
      %p97 = por %p95, %p96
      %p98 = scmp.ne.s32.totalorder %s84, %s85
      %p99 = scmp.eq.s32.totalorder %s23, 3
      %p100 = por %p98, %p99
      %p102 = scmp.ne.s32.totalorder %s85, %s101
      %p103 = scmp.eq.s32.totalorder %s23, 0
      %p104 = por %p102, %p103
      %s105 = ssub.s32 %s24, %s36
      %p106 = scmp.eq.s32.totalorder %s105, 0
      %s108 = sadd.s32 %s107, 1
      %s109 = scalar_select %p106, %s107, %s108
      %p112 = pneg %p106
      %p113 = scmp.eq.s32.totalorder %s17, 3
      %p114 = por %p112, %p113
      %p115 = scmp.ne.s32.totalorder %s107, %s110
      %p116 = scmp.eq.s32.totalorder %s17, 0
      %p117 = por %p115, %p116
      %p118 = scmp.ne.s32.totalorder %s107, %s110
      %p119 = scmp.eq.s32.totalorder %s22, 3
      %p120 = por %p118, %p119
      %p121 = scmp.ne.s32.totalorder %s110, %s111
      %p122 = scmp.eq.s32.totalorder %s22, 0
      %p123 = por %p121, %p122
      %p124 = scmp.ne.s32.totalorder %s110, %s111
      %p125 = scmp.eq.s32.totalorder %s23, 3
      %p126 = por %p124, %p125
      %p128 = scmp.ne.s32.totalorder %s111, %s127
      %p129 = scmp.eq.s32.totalorder %s23, 0
      %p130 = por %p128, %p129
      %p131 = scmp.le.s32.totalorder 1, %s17
      %p132 = scmp.lt.s32.totalorder %s17, 5
      %p133 = pnand %p131, %p132
      %p134 = pneg %p133
      // Predicated region
      $region9: #{tpu_custom_call.1} parent=5 // pred_check
        _
      $region10: #{tpu_custom_call.1} parent=5 // pred_check_branch
        %136 = sbr.rel (%p133) target = $region12
      $region11: #{tpu_custom_call.1} parent=5 // pred_region
        %s137 = ssub.s32 %s17, 1
      $region12: #{tpu_custom_call.1} parent=5 // pred_fallthru
        _
      %p138 = scmp.lt.s32.totalorder %s17, 4
      // Predicated region
      $region13: #{tpu_custom_call.1} parent=5 // pred_check
        %p139 = pneg %p138
      $region14: #{tpu_custom_call.1} parent=5 // pred_check_branch
        %141 = sbr.rel (%p139) target = $region16
      $region15: #{tpu_custom_call.1} parent=5 // pred_region
        // Predicated region
        $region17: #{tpu_custom_call.1} parent=15 // pred_check
          %p142 = pneg %p57
        $region18: #{tpu_custom_call.1} parent=15 // pred_check_branch
          %144 = sbr.rel (%p142) target = $region20
        $region19: #{tpu_custom_call.1} parent=15 // pred_region
          %s145 = sand.u32 %s47, 1
          %s146 = scalar_lea.sflag [#allocation3], %s145
          %s147 = sand.u32 %s47, 1
          %s148 = smul.addr %s147, 4096
          %s149 = scalar_lea.vmem [#allocation2], %s148
          %s150 = smul.u32 %s24, 2
          %s151 = sadd.s32 %s150, %s25
          %p152 = scmp.lt.s32.totalorder %s151, 2
          %s153 = scalar_select %p152, %s151, 2
          %s154 = smul.u32 512, %s153
          %s155 = ssub.s32 1029, %s154
          %p156 = scmp.lt.s32.totalorder %s155, 512
          %s157 = scalar_select %p156, %s155, 512
          %s158 = smul.u32 128, %s157
          %s160 = ssub.s32 65536, %s158
          %161 = vsyncadd %s146, %s160
          %p162 = scmp.ne.s32.totalorder 0, %s158
          %s163 = smul.addr %s154, 128
          %s164 = scalar_lea.hbm %s0, %s163
          %s165 = smul.u32 8, %s157
          %s166 = sshll.u32 %s149, 4
          %s167 = int_to_ptr.vmem [resolvable:$true] %s166
          %s168 = sshll.u32 %s165, 4
          %172 = dma.hbm_to_vmem [thread:$0]  (%p162), %s164, %s168, %s167, %s146, 128, 128, 8
        $region20: #{tpu_custom_call.1} parent=15 // pred_fallthru
          _
        // Predicated region
        $region21: #{tpu_custom_call.1} parent=15 // pred_check
          %p173 = pneg %p91
        $region22: #{tpu_custom_call.1} parent=15 // pred_check_branch
          %175 = sbr.rel (%p173) target = $region24
        $region23: #{tpu_custom_call.1} parent=15 // pred_region
          %s176 = sand.u32 %s81, 1
          %s177 = scalar_lea.sflag [#allocation6], %s176
          %s178 = sand.u32 %s81, 1
          %s179 = smul.addr %s178, 4096
          %s180 = scalar_lea.vmem [#allocation5], %s179
          %s181 = smul.u32 %s24, 2
          %s182 = sadd.s32 %s181, %s25
          %p183 = scmp.lt.s32.totalorder %s182, 2
          %s184 = scalar_select %p183, %s182, 2
          %s185 = smul.u32 512, %s184
          %s186 = ssub.s32 1029, %s185
          %p187 = scmp.lt.s32.totalorder %s186, 512
          %s188 = scalar_select %p187, %s186, 512
          %s189 = smul.u32 128, %s188
          %s191 = ssub.s32 65536, %s189
          %192 = vsyncadd %s177, %s191
          %p193 = scmp.ne.s32.totalorder 0, %s189
          %s194 = smul.addr %s185, 128
          %s195 = scalar_lea.hbm %s1, %s194
          %s196 = smul.u32 8, %s188
          %s197 = sshll.u32 %s180, 4
          %s198 = int_to_ptr.vmem [resolvable:$true] %s197
          %s199 = sshll.u32 %s196, 4
          %203 = dma.hbm_to_vmem [thread:$0]  (%p193), %s195, %s199, %s198, %s177, 128, 128, 8
        $region24: #{tpu_custom_call.1} parent=15 // pred_fallthru
          _
      $region16: #{tpu_custom_call.1} parent=5 // pred_fallthru
        _
      %p204 = scmp.le.s32.totalorder 1, %s17
      %p205 = scmp.lt.s32.totalorder %s17, 5
      %p206 = pnand %p204, %p205
      %p207 = pneg %p206
      // Predicated region
      $region25: #{tpu_custom_call.1} parent=5 // pred_check
        _
      $region26: #{tpu_custom_call.1} parent=5 // pred_check_branch
        %209 = sbr.rel (%p206) target = $region28
      $region27: #{tpu_custom_call.1} parent=5 // pred_region
        %s210 = ssub.s32 %s17, 1
        %s211 = sand.u32 %s50, 1
        %s212 = scalar_lea.sflag [#allocation3], %s211
        %s213 = sand.u32 %s50, 1
        %s214 = smul.addr %s213, 4096
        %s215 = scalar_lea.vmem [#allocation2], %s214
        // Predicated region
        $region29: #{tpu_custom_call.1} parent=27 // pred_check
          %p216 = pneg %p63
        $region30: #{tpu_custom_call.1} parent=27 // pred_check_branch
          %218 = sbr.rel (%p216) target = $region32
        $region31: #{tpu_custom_call.1} parent=27 // pred_region
          %219 = dma.done %s212, 65536
        $region32: #{tpu_custom_call.1} parent=27 // pred_fallthru
          _
        %s220 = sand.u32 %s84, 1
        %s221 = scalar_lea.sflag [#allocation6], %s220
        %s222 = sand.u32 %s84, 1
        %s223 = smul.addr %s222, 4096
        %s224 = scalar_lea.vmem [#allocation5], %s223
        // Predicated region
        $region33: #{tpu_custom_call.1} parent=27 // pred_check
          %p225 = pneg %p97
        $region34: #{tpu_custom_call.1} parent=27 // pred_check_branch
          %227 = sbr.rel (%p225) target = $region36
        $region35: #{tpu_custom_call.1} parent=27 // pred_region
          %228 = dma.done %s221, 65536
        $region36: #{tpu_custom_call.1} parent=27 // pred_fallthru
          _
        %s229 = sand.u32 %s50, 1
        %s230 = scalar_lea.sflag [#allocation3], %s229
        %s231 = sand.u32 %s50, 1
        %s232 = smul.addr %s231, 4096
        %s233 = scalar_lea.vmem [#allocation2], %s232
        %p234 = pneg %p63
        %p235 = pneg %p60
        %s236 = sand.u32 %s84, 1
        %s237 = scalar_lea.sflag [#allocation6], %s236
        %s238 = sand.u32 %s84, 1
        %s239 = smul.addr %s238, 4096
        %s240 = scalar_lea.vmem [#allocation5], %s239
        %p241 = pneg %p97
        %p242 = pneg %p94
        %p243 = pneg %p123
        %p244 = pneg %p120
        %s245 = sand.u32 %s110, 1
        %s246 = scalar_lea.sflag [#allocation4], %s245
        %s247 = sand.u32 %s110, 1
        %s248 = smul.addr %s247, 32
        %s249 = scalar_lea.vmem [#allocation7], %s248
        %s250 = smul.u32 %s26, 2
        %s251 = sadd.s32 %s250, %s27
        %p252 = scmp.lt.s32.totalorder %s251, 2
        %s253 = scalar_select %p252, %s251, 2
        %s254 = smul.u32 512, %s253
        %s255 = ssub.s32 1029, %s254
        %p256 = scmp.lt.s32.totalorder %s255, 512
        %s257 = scalar_select %p256, %s255, 512
        %s258 = smul.u32 128, %s257
        %s259 = smul.u32 %s26, 2
        %s260 = sadd.s32 %s259, %s27
        %p261 = scmp.lt.s32.totalorder %s260, 2
        %s262 = scalar_select %p261, %s260, 2
        %s263 = smul.u32 512, %s262
        %s264 = ssub.s32 1029, %s263
        %p265 = scmp.lt.s32.totalorder %s264, 512
        %s266 = scalar_select %p265, %s264, 512
        %s267 = smul.u32 128, %s266
        %p268 = scmp.eq.s32.totalorder %s27, 0
        // Predicated region
        $region37: #{tpu_custom_call.1} parent=27 // pred_check
          %p269 = pneg %p268
        $region38: #{tpu_custom_call.1} parent=27 // pred_check_branch
          %271 = sbr.rel (%p269) target = $region40
        $region39: #{tpu_custom_call.1} parent=27 // pred_region
          %272 = vst [vmem:[%s249] sm:$0xff] 0.0
          %273 = vst [vmem:[%s249 + $0x8] sm:$0xff] 0.0
          %274 = vst [vmem:[%s249 + $0x10] sm:$0xff] 0.0
          %275 = vst [vmem:[%s249 + $0x18] sm:$0xff] 0.0
        $region40: #{tpu_custom_call.1} parent=27 // pred_fallthru
          _
        %v276 = vld [vmem:[%s215] sm:$0xff]
        %v277 = vld [vmem:[%s215 + $0x8] sm:$0xff]
        %v278 = vld [vmem:[%s215 + $0x10] sm:$0xff]
        %v279 = vld [vmem:[%s215 + $0x18] sm:$0xff]
        %v280 = vld [vmem:[%s215 + $0x20] sm:$0xff]
        %v281 = vld [vmem:[%s215 + $0x28] sm:$0xff]
        %v282 = vld [vmem:[%s215 + $0x30] sm:$0xff]
        %v283 = vld [vmem:[%s215 + $0x38] sm:$0xff]
        %v284 = vld [vmem:[%s215 + $0x40] sm:$0xff]
        %v285 = vld [vmem:[%s215 + $0x48] sm:$0xff]
        %v286 = vld [vmem:[%s215 + $0x50] sm:$0xff]
        %v287 = vld [vmem:[%s215 + $0x58] sm:$0xff]
        %v288 = vld [vmem:[%s215 + $0x60] sm:$0xff]
        %v289 = vld [vmem:[%s215 + $0x68] sm:$0xff]
        %v290 = vld [vmem:[%s215 + $0x70] sm:$0xff]
        %v291 = vld [vmem:[%s215 + $0x78] sm:$0xff]
        %v292 = vld [vmem:[%s215 + $0x80] sm:$0xff]
        %v293 = vld [vmem:[%s215 + $0x88] sm:$0xff]
        %v294 = vld [vmem:[%s215 + $0x90] sm:$0xff]
        %v295 = vld [vmem:[%s215 + $0x98] sm:$0xff]
        %v296 = vld [vmem:[%s215 + $0xa0] sm:$0xff]
        %v297 = vld [vmem:[%s215 + $0xa8] sm:$0xff]
        %v298 = vld [vmem:[%s215 + $0xb0] sm:$0xff]
        %v299 = vld [vmem:[%s215 + $0xb8] sm:$0xff]
        %v300 = vld [vmem:[%s215 + $0xc0] sm:$0xff]
        %v301 = vld [vmem:[%s215 + $0xc8] sm:$0xff]
        %v302 = vld [vmem:[%s215 + $0xd0] sm:$0xff]
        %v303 = vld [vmem:[%s215 + $0xd8] sm:$0xff]
        %v304 = vld [vmem:[%s215 + $0xe0] sm:$0xff]
        %v305 = vld [vmem:[%s215 + $0xe8] sm:$0xff]
        %v306 = vld [vmem:[%s215 + $0xf0] sm:$0xff]
        %v307 = vld [vmem:[%s215 + $0xf8] sm:$0xff]
        %v308 = vld [vmem:[%s215 + $0x100] sm:$0xff]
        %v309 = vld [vmem:[%s215 + $0x108] sm:$0xff]
        %v310 = vld [vmem:[%s215 + $0x110] sm:$0xff]
        %v311 = vld [vmem:[%s215 + $0x118] sm:$0xff]
        %v312 = vld [vmem:[%s215 + $0x120] sm:$0xff]
        %v313 = vld [vmem:[%s215 + $0x128] sm:$0xff]
        %v314 = vld [vmem:[%s215 + $0x130] sm:$0xff]
        %v315 = vld [vmem:[%s215 + $0x138] sm:$0xff]
        %v316 = vld [vmem:[%s215 + $0x140] sm:$0xff]
        %v317 = vld [vmem:[%s215 + $0x148] sm:$0xff]
        %v318 = vld [vmem:[%s215 + $0x150] sm:$0xff]
        %v319 = vld [vmem:[%s215 + $0x158] sm:$0xff]
        %v320 = vld [vmem:[%s215 + $0x160] sm:$0xff]
        %v321 = vld [vmem:[%s215 + $0x168] sm:$0xff]
        %v322 = vld [vmem:[%s215 + $0x170] sm:$0xff]
        %v323 = vld [vmem:[%s215 + $0x178] sm:$0xff]
        %v324 = vld [vmem:[%s215 + $0x180] sm:$0xff]
        %v325 = vld [vmem:[%s215 + $0x188] sm:$0xff]
        %v326 = vld [vmem:[%s215 + $0x190] sm:$0xff]
        %v327 = vld [vmem:[%s215 + $0x198] sm:$0xff]
        %v328 = vld [vmem:[%s215 + $0x1a0] sm:$0xff]
        %v329 = vld [vmem:[%s215 + $0x1a8] sm:$0xff]
        %v330 = vld [vmem:[%s215 + $0x1b0] sm:$0xff]
        %v331 = vld [vmem:[%s215 + $0x1b8] sm:$0xff]
        %v332 = vld [vmem:[%s215 + $0x1c0] sm:$0xff]
        %v333 = vld [vmem:[%s215 + $0x1c8] sm:$0xff]
        %v334 = vld [vmem:[%s215 + $0x1d0] sm:$0xff]
        %v335 = vld [vmem:[%s215 + $0x1d8] sm:$0xff]
        %v336 = vld [vmem:[%s215 + $0x1e0] sm:$0xff]
        %v337 = vld [vmem:[%s215 + $0x1e8] sm:$0xff]
        %v338 = vld [vmem:[%s215 + $0x1f0] sm:$0xff]
        %v339 = vld [vmem:[%s215 + $0x1f8] sm:$0xff]
        %v340 = vld [vmem:[%s215 + $0x200] sm:$0xff]
        %v341 = vld [vmem:[%s215 + $0x208] sm:$0xff]
        %v342 = vld [vmem:[%s215 + $0x210] sm:$0xff]
        %v343 = vld [vmem:[%s215 + $0x218] sm:$0xff]
        %v344 = vld [vmem:[%s215 + $0x220] sm:$0xff]
        %v345 = vld [vmem:[%s215 + $0x228] sm:$0xff]
        %v346 = vld [vmem:[%s215 + $0x230] sm:$0xff]
        %v347 = vld [vmem:[%s215 + $0x238] sm:$0xff]
        %v348 = vld [vmem:[%s215 + $0x240] sm:$0xff]
        %v349 = vld [vmem:[%s215 + $0x248] sm:$0xff]
        %v350 = vld [vmem:[%s215 + $0x250] sm:$0xff]
        %v351 = vld [vmem:[%s215 + $0x258] sm:$0xff]
        %v352 = vld [vmem:[%s215 + $0x260] sm:$0xff]
        %v353 = vld [vmem:[%s215 + $0x268] sm:$0xff]
        %v354 = vld [vmem:[%s215 + $0x270] sm:$0xff]
        %v355 = vld [vmem:[%s215 + $0x278] sm:$0xff]
        %v356 = vld [vmem:[%s215 + $0x280] sm:$0xff]
        %v357 = vld [vmem:[%s215 + $0x288] sm:$0xff]
        %v358 = vld [vmem:[%s215 + $0x290] sm:$0xff]
        %v359 = vld [vmem:[%s215 + $0x298] sm:$0xff]
        %v360 = vld [vmem:[%s215 + $0x2a0] sm:$0xff]
        %v361 = vld [vmem:[%s215 + $0x2a8] sm:$0xff]
        %v362 = vld [vmem:[%s215 + $0x2b0] sm:$0xff]
        %v363 = vld [vmem:[%s215 + $0x2b8] sm:$0xff]
        %v364 = vld [vmem:[%s215 + $0x2c0] sm:$0xff]
        %v365 = vld [vmem:[%s215 + $0x2c8] sm:$0xff]
        %v366 = vld [vmem:[%s215 + $0x2d0] sm:$0xff]
        %v367 = vld [vmem:[%s215 + $0x2d8] sm:$0xff]
        %v368 = vld [vmem:[%s215 + $0x2e0] sm:$0xff]
        %v369 = vld [vmem:[%s215 + $0x2e8] sm:$0xff]
        %v370 = vld [vmem:[%s215 + $0x2f0] sm:$0xff]
        %v371 = vld [vmem:[%s215 + $0x2f8] sm:$0xff]
        %v372 = vld [vmem:[%s215 + $0x300] sm:$0xff]
        %v373 = vld [vmem:[%s215 + $0x308] sm:$0xff]
        %v374 = vld [vmem:[%s215 + $0x310] sm:$0xff]
        %v375 = vld [vmem:[%s215 + $0x318] sm:$0xff]
        %v376 = vld [vmem:[%s215 + $0x320] sm:$0xff]
        %v377 = vld [vmem:[%s215 + $0x328] sm:$0xff]
        %v378 = vld [vmem:[%s215 + $0x330] sm:$0xff]
        %v379 = vld [vmem:[%s215 + $0x338] sm:$0xff]
        %v380 = vld [vmem:[%s215 + $0x340] sm:$0xff]
        %v381 = vld [vmem:[%s215 + $0x348] sm:$0xff]
        %v382 = vld [vmem:[%s215 + $0x350] sm:$0xff]
        %v383 = vld [vmem:[%s215 + $0x358] sm:$0xff]
        %v384 = vld [vmem:[%s215 + $0x360] sm:$0xff]
        %v385 = vld [vmem:[%s215 + $0x368] sm:$0xff]
        %v386 = vld [vmem:[%s215 + $0x370] sm:$0xff]
        %v387 = vld [vmem:[%s215 + $0x378] sm:$0xff]
        %v388 = vld [vmem:[%s215 + $0x380] sm:$0xff]
        %v389 = vld [vmem:[%s215 + $0x388] sm:$0xff]
        %v390 = vld [vmem:[%s215 + $0x390] sm:$0xff]
        %v391 = vld [vmem:[%s215 + $0x398] sm:$0xff]
        %v392 = vld [vmem:[%s215 + $0x3a0] sm:$0xff]
        %v393 = vld [vmem:[%s215 + $0x3a8] sm:$0xff]
        %v394 = vld [vmem:[%s215 + $0x3b0] sm:$0xff]
        %v395 = vld [vmem:[%s215 + $0x3b8] sm:$0xff]
        %v396 = vld [vmem:[%s215 + $0x3c0] sm:$0xff]
        %v397 = vld [vmem:[%s215 + $0x3c8] sm:$0xff]
        %v398 = vld [vmem:[%s215 + $0x3d0] sm:$0xff]
        %v399 = vld [vmem:[%s215 + $0x3d8] sm:$0xff]
        %v400 = vld [vmem:[%s215 + $0x3e0] sm:$0xff]
        %v401 = vld [vmem:[%s215 + $0x3e8] sm:$0xff]
        %v402 = vld [vmem:[%s215 + $0x3f0] sm:$0xff]
        %v403 = vld [vmem:[%s215 + $0x3f8] sm:$0xff]
        %v404 = vld [vmem:[%s215 + $0x400] sm:$0xff]
        %v405 = vld [vmem:[%s215 + $0x408] sm:$0xff]
        %v406 = vld [vmem:[%s215 + $0x410] sm:$0xff]
        %v407 = vld [vmem:[%s215 + $0x418] sm:$0xff]
        %v408 = vld [vmem:[%s215 + $0x420] sm:$0xff]
        %v409 = vld [vmem:[%s215 + $0x428] sm:$0xff]
        %v410 = vld [vmem:[%s215 + $0x430] sm:$0xff]
        %v411 = vld [vmem:[%s215 + $0x438] sm:$0xff]
        %v412 = vld [vmem:[%s215 + $0x440] sm:$0xff]
        %v413 = vld [vmem:[%s215 + $0x448] sm:$0xff]
        %v414 = vld [vmem:[%s215 + $0x450] sm:$0xff]
        %v415 = vld [vmem:[%s215 + $0x458] sm:$0xff]
        %v416 = vld [vmem:[%s215 + $0x460] sm:$0xff]
        %v417 = vld [vmem:[%s215 + $0x468] sm:$0xff]
        %v418 = vld [vmem:[%s215 + $0x470] sm:$0xff]
        %v419 = vld [vmem:[%s215 + $0x478] sm:$0xff]
        %v420 = vld [vmem:[%s215 + $0x480] sm:$0xff]
        %v421 = vld [vmem:[%s215 + $0x488] sm:$0xff]
        %v422 = vld [vmem:[%s215 + $0x490] sm:$0xff]
        %v423 = vld [vmem:[%s215 + $0x498] sm:$0xff]
        %v424 = vld [vmem:[%s215 + $0x4a0] sm:$0xff]
        %v425 = vld [vmem:[%s215 + $0x4a8] sm:$0xff]
        %v426 = vld [vmem:[%s215 + $0x4b0] sm:$0xff]
        %v427 = vld [vmem:[%s215 + $0x4b8] sm:$0xff]
        %v428 = vld [vmem:[%s215 + $0x4c0] sm:$0xff]
        %v429 = vld [vmem:[%s215 + $0x4c8] sm:$0xff]
        %v430 = vld [vmem:[%s215 + $0x4d0] sm:$0xff]
        %v431 = vld [vmem:[%s215 + $0x4d8] sm:$0xff]
        %v432 = vld [vmem:[%s215 + $0x4e0] sm:$0xff]
        %v433 = vld [vmem:[%s215 + $0x4e8] sm:$0xff]
        %v434 = vld [vmem:[%s215 + $0x4f0] sm:$0xff]
        %v435 = vld [vmem:[%s215 + $0x4f8] sm:$0xff]
        %v436 = vld [vmem:[%s215 + $0x500] sm:$0xff]
        %v437 = vld [vmem:[%s215 + $0x508] sm:$0xff]
        %v438 = vld [vmem:[%s215 + $0x510] sm:$0xff]
        %v439 = vld [vmem:[%s215 + $0x518] sm:$0xff]
        %v440 = vld [vmem:[%s215 + $0x520] sm:$0xff]
        %v441 = vld [vmem:[%s215 + $0x528] sm:$0xff]
        %v442 = vld [vmem:[%s215 + $0x530] sm:$0xff]
        %v443 = vld [vmem:[%s215 + $0x538] sm:$0xff]
        %v444 = vld [vmem:[%s215 + $0x540] sm:$0xff]
        %v445 = vld [vmem:[%s215 + $0x548] sm:$0xff]
        %v446 = vld [vmem:[%s215 + $0x550] sm:$0xff]
        %v447 = vld [vmem:[%s215 + $0x558] sm:$0xff]
        %v448 = vld [vmem:[%s215 + $0x560] sm:$0xff]
        %v449 = vld [vmem:[%s215 + $0x568] sm:$0xff]
        %v450 = vld [vmem:[%s215 + $0x570] sm:$0xff]
        %v451 = vld [vmem:[%s215 + $0x578] sm:$0xff]
        %v452 = vld [vmem:[%s215 + $0x580] sm:$0xff]
        %v453 = vld [vmem:[%s215 + $0x588] sm:$0xff]
        %v454 = vld [vmem:[%s215 + $0x590] sm:$0xff]
        %v455 = vld [vmem:[%s215 + $0x598] sm:$0xff]
        %v456 = vld [vmem:[%s215 + $0x5a0] sm:$0xff]
        %v457 = vld [vmem:[%s215 + $0x5a8] sm:$0xff]
        %v458 = vld [vmem:[%s215 + $0x5b0] sm:$0xff]
        %v459 = vld [vmem:[%s215 + $0x5b8] sm:$0xff]
        %v460 = vld [vmem:[%s215 + $0x5c0] sm:$0xff]
        %v461 = vld [vmem:[%s215 + $0x5c8] sm:$0xff]
        %v462 = vld [vmem:[%s215 + $0x5d0] sm:$0xff]
        %v463 = vld [vmem:[%s215 + $0x5d8] sm:$0xff]
        %v464 = vld [vmem:[%s215 + $0x5e0] sm:$0xff]
        %v465 = vld [vmem:[%s215 + $0x5e8] sm:$0xff]
        %v466 = vld [vmem:[%s215 + $0x5f0] sm:$0xff]
        %v467 = vld [vmem:[%s215 + $0x5f8] sm:$0xff]
        %v468 = vld [vmem:[%s215 + $0x600] sm:$0xff]
        %v469 = vld [vmem:[%s215 + $0x608] sm:$0xff]
        %v470 = vld [vmem:[%s215 + $0x610] sm:$0xff]
        %v471 = vld [vmem:[%s215 + $0x618] sm:$0xff]
        %v472 = vld [vmem:[%s215 + $0x620] sm:$0xff]
        %v473 = vld [vmem:[%s215 + $0x628] sm:$0xff]
        %v474 = vld [vmem:[%s215 + $0x630] sm:$0xff]
        %v475 = vld [vmem:[%s215 + $0x638] sm:$0xff]
        %v476 = vld [vmem:[%s215 + $0x640] sm:$0xff]
        %v477 = vld [vmem:[%s215 + $0x648] sm:$0xff]
        %v478 = vld [vmem:[%s215 + $0x650] sm:$0xff]
        %v479 = vld [vmem:[%s215 + $0x658] sm:$0xff]
        %v480 = vld [vmem:[%s215 + $0x660] sm:$0xff]
        %v481 = vld [vmem:[%s215 + $0x668] sm:$0xff]
        %v482 = vld [vmem:[%s215 + $0x670] sm:$0xff]
        %v483 = vld [vmem:[%s215 + $0x678] sm:$0xff]
        %v484 = vld [vmem:[%s215 + $0x680] sm:$0xff]
        %v485 = vld [vmem:[%s215 + $0x688] sm:$0xff]
        %v486 = vld [vmem:[%s215 + $0x690] sm:$0xff]
        %v487 = vld [vmem:[%s215 + $0x698] sm:$0xff]
        %v488 = vld [vmem:[%s215 + $0x6a0] sm:$0xff]
        %v489 = vld [vmem:[%s215 + $0x6a8] sm:$0xff]
        %v490 = vld [vmem:[%s215 + $0x6b0] sm:$0xff]
        %v491 = vld [vmem:[%s215 + $0x6b8] sm:$0xff]
        %v492 = vld [vmem:[%s215 + $0x6c0] sm:$0xff]
        %v493 = vld [vmem:[%s215 + $0x6c8] sm:$0xff]
        %v494 = vld [vmem:[%s215 + $0x6d0] sm:$0xff]
        %v495 = vld [vmem:[%s215 + $0x6d8] sm:$0xff]
        %v496 = vld [vmem:[%s215 + $0x6e0] sm:$0xff]
        %v497 = vld [vmem:[%s215 + $0x6e8] sm:$0xff]
        %v498 = vld [vmem:[%s215 + $0x6f0] sm:$0xff]
        %v499 = vld [vmem:[%s215 + $0x6f8] sm:$0xff]
        %v500 = vld [vmem:[%s215 + $0x700] sm:$0xff]
        %v501 = vld [vmem:[%s215 + $0x708] sm:$0xff]
        %v502 = vld [vmem:[%s215 + $0x710] sm:$0xff]
        %v503 = vld [vmem:[%s215 + $0x718] sm:$0xff]
        %v504 = vld [vmem:[%s215 + $0x720] sm:$0xff]
        %v505 = vld [vmem:[%s215 + $0x728] sm:$0xff]
        %v506 = vld [vmem:[%s215 + $0x730] sm:$0xff]
        %v507 = vld [vmem:[%s215 + $0x738] sm:$0xff]
        %v508 = vld [vmem:[%s215 + $0x740] sm:$0xff]
        %v509 = vld [vmem:[%s215 + $0x748] sm:$0xff]
        %v510 = vld [vmem:[%s215 + $0x750] sm:$0xff]
        %v511 = vld [vmem:[%s215 + $0x758] sm:$0xff]
        %v512 = vld [vmem:[%s215 + $0x760] sm:$0xff]
        %v513 = vld [vmem:[%s215 + $0x768] sm:$0xff]
        %v514 = vld [vmem:[%s215 + $0x770] sm:$0xff]
        %v515 = vld [vmem:[%s215 + $0x778] sm:$0xff]
        %v516 = vld [vmem:[%s215 + $0x780] sm:$0xff]
        %v517 = vld [vmem:[%s215 + $0x788] sm:$0xff]
        %v518 = vld [vmem:[%s215 + $0x790] sm:$0xff]
        %v519 = vld [vmem:[%s215 + $0x798] sm:$0xff]
        %v520 = vld [vmem:[%s215 + $0x7a0] sm:$0xff]
        %v521 = vld [vmem:[%s215 + $0x7a8] sm:$0xff]
        %v522 = vld [vmem:[%s215 + $0x7b0] sm:$0xff]
        %v523 = vld [vmem:[%s215 + $0x7b8] sm:$0xff]
        %v524 = vld [vmem:[%s215 + $0x7c0] sm:$0xff]
        %v525 = vld [vmem:[%s215 + $0x7c8] sm:$0xff]
        %v526 = vld [vmem:[%s215 + $0x7d0] sm:$0xff]
        %v527 = vld [vmem:[%s215 + $0x7d8] sm:$0xff]
        %v528 = vld [vmem:[%s215 + $0x7e0] sm:$0xff]
        %v529 = vld [vmem:[%s215 + $0x7e8] sm:$0xff]
        %v530 = vld [vmem:[%s215 + $0x7f0] sm:$0xff]
        %v531 = vld [vmem:[%s215 + $0x7f8] sm:$0xff]
        %v532 = vld [vmem:[%s215 + $0x800] sm:$0xff]
        %v533 = vld [vmem:[%s215 + $0x808] sm:$0xff]
        %v534 = vld [vmem:[%s215 + $0x810] sm:$0xff]
        %v535 = vld [vmem:[%s215 + $0x818] sm:$0xff]
        %v536 = vld [vmem:[%s215 + $0x820] sm:$0xff]
        %v537 = vld [vmem:[%s215 + $0x828] sm:$0xff]
        %v538 = vld [vmem:[%s215 + $0x830] sm:$0xff]
        %v539 = vld [vmem:[%s215 + $0x838] sm:$0xff]
        %v540 = vld [vmem:[%s215 + $0x840] sm:$0xff]
        %v541 = vld [vmem:[%s215 + $0x848] sm:$0xff]
        %v542 = vld [vmem:[%s215 + $0x850] sm:$0xff]
        %v543 = vld [vmem:[%s215 + $0x858] sm:$0xff]
        %v544 = vld [vmem:[%s215 + $0x860] sm:$0xff]
        %v545 = vld [vmem:[%s215 + $0x868] sm:$0xff]
        %v546 = vld [vmem:[%s215 + $0x870] sm:$0xff]
        %v547 = vld [vmem:[%s215 + $0x878] sm:$0xff]
        %v548 = vld [vmem:[%s215 + $0x880] sm:$0xff]
        %v549 = vld [vmem:[%s215 + $0x888] sm:$0xff]
        %v550 = vld [vmem:[%s215 + $0x890] sm:$0xff]
        %v551 = vld [vmem:[%s215 + $0x898] sm:$0xff]
        %v552 = vld [vmem:[%s215 + $0x8a0] sm:$0xff]
        %v553 = vld [vmem:[%s215 + $0x8a8] sm:$0xff]
        %v554 = vld [vmem:[%s215 + $0x8b0] sm:$0xff]
        %v555 = vld [vmem:[%s215 + $0x8b8] sm:$0xff]
        %v556 = vld [vmem:[%s215 + $0x8c0] sm:$0xff]
        %v557 = vld [vmem:[%s215 + $0x8c8] sm:$0xff]
        %v558 = vld [vmem:[%s215 + $0x8d0] sm:$0xff]
        %v559 = vld [vmem:[%s215 + $0x8d8] sm:$0xff]
        %v560 = vld [vmem:[%s215 + $0x8e0] sm:$0xff]
        %v561 = vld [vmem:[%s215 + $0x8e8] sm:$0xff]
        %v562 = vld [vmem:[%s215 + $0x8f0] sm:$0xff]
        %v563 = vld [vmem:[%s215 + $0x8f8] sm:$0xff]
        %v564 = vld [vmem:[%s215 + $0x900] sm:$0xff]
        %v565 = vld [vmem:[%s215 + $0x908] sm:$0xff]
        %v566 = vld [vmem:[%s215 + $0x910] sm:$0xff]
        %v567 = vld [vmem:[%s215 + $0x918] sm:$0xff]
        %v568 = vld [vmem:[%s215 + $0x920] sm:$0xff]
        %v569 = vld [vmem:[%s215 + $0x928] sm:$0xff]
        %v570 = vld [vmem:[%s215 + $0x930] sm:$0xff]
        %v571 = vld [vmem:[%s215 + $0x938] sm:$0xff]
        %v572 = vld [vmem:[%s215 + $0x940] sm:$0xff]
        %v573 = vld [vmem:[%s215 + $0x948] sm:$0xff]
        %v574 = vld [vmem:[%s215 + $0x950] sm:$0xff]
        %v575 = vld [vmem:[%s215 + $0x958] sm:$0xff]
        %v576 = vld [vmem:[%s215 + $0x960] sm:$0xff]
        %v577 = vld [vmem:[%s215 + $0x968] sm:$0xff]
        %v578 = vld [vmem:[%s215 + $0x970] sm:$0xff]
        %v579 = vld [vmem:[%s215 + $0x978] sm:$0xff]
        %v580 = vld [vmem:[%s215 + $0x980] sm:$0xff]
        %v581 = vld [vmem:[%s215 + $0x988] sm:$0xff]
        %v582 = vld [vmem:[%s215 + $0x990] sm:$0xff]
        %v583 = vld [vmem:[%s215 + $0x998] sm:$0xff]
        %v584 = vld [vmem:[%s215 + $0x9a0] sm:$0xff]
        %v585 = vld [vmem:[%s215 + $0x9a8] sm:$0xff]
        %v586 = vld [vmem:[%s215 + $0x9b0] sm:$0xff]
        %v587 = vld [vmem:[%s215 + $0x9b8] sm:$0xff]
        %v588 = vld [vmem:[%s215 + $0x9c0] sm:$0xff]
        %v589 = vld [vmem:[%s215 + $0x9c8] sm:$0xff]
        %v590 = vld [vmem:[%s215 + $0x9d0] sm:$0xff]
        %v591 = vld [vmem:[%s215 + $0x9d8] sm:$0xff]
        %v592 = vld [vmem:[%s215 + $0x9e0] sm:$0xff]
        %v593 = vld [vmem:[%s215 + $0x9e8] sm:$0xff]
        %v594 = vld [vmem:[%s215 + $0x9f0] sm:$0xff]
        %v595 = vld [vmem:[%s215 + $0x9f8] sm:$0xff]
        %v596 = vld [vmem:[%s215 + $0xa00] sm:$0xff]
        %v597 = vld [vmem:[%s215 + $0xa08] sm:$0xff]
        %v598 = vld [vmem:[%s215 + $0xa10] sm:$0xff]
        %v599 = vld [vmem:[%s215 + $0xa18] sm:$0xff]
        %v600 = vld [vmem:[%s215 + $0xa20] sm:$0xff]
        %v601 = vld [vmem:[%s215 + $0xa28] sm:$0xff]
        %v602 = vld [vmem:[%s215 + $0xa30] sm:$0xff]
        %v603 = vld [vmem:[%s215 + $0xa38] sm:$0xff]
        %v604 = vld [vmem:[%s215 + $0xa40] sm:$0xff]
        %v605 = vld [vmem:[%s215 + $0xa48] sm:$0xff]
        %v606 = vld [vmem:[%s215 + $0xa50] sm:$0xff]
        %v607 = vld [vmem:[%s215 + $0xa58] sm:$0xff]
        %v608 = vld [vmem:[%s215 + $0xa60] sm:$0xff]
        %v609 = vld [vmem:[%s215 + $0xa68] sm:$0xff]
        %v610 = vld [vmem:[%s215 + $0xa70] sm:$0xff]
        %v611 = vld [vmem:[%s215 + $0xa78] sm:$0xff]
        %v612 = vld [vmem:[%s215 + $0xa80] sm:$0xff]
        %v613 = vld [vmem:[%s215 + $0xa88] sm:$0xff]
        %v614 = vld [vmem:[%s215 + $0xa90] sm:$0xff]
        %v615 = vld [vmem:[%s215 + $0xa98] sm:$0xff]
        %v616 = vld [vmem:[%s215 + $0xaa0] sm:$0xff]
        %v617 = vld [vmem:[%s215 + $0xaa8] sm:$0xff]
        %v618 = vld [vmem:[%s215 + $0xab0] sm:$0xff]
        %v619 = vld [vmem:[%s215 + $0xab8] sm:$0xff]
        %v620 = vld [vmem:[%s215 + $0xac0] sm:$0xff]
        %v621 = vld [vmem:[%s215 + $0xac8] sm:$0xff]
        %v622 = vld [vmem:[%s215 + $0xad0] sm:$0xff]
        %v623 = vld [vmem:[%s215 + $0xad8] sm:$0xff]
        %v624 = vld [vmem:[%s215 + $0xae0] sm:$0xff]
        %v625 = vld [vmem:[%s215 + $0xae8] sm:$0xff]
        %v626 = vld [vmem:[%s215 + $0xaf0] sm:$0xff]
        %v627 = vld [vmem:[%s215 + $0xaf8] sm:$0xff]
        %v628 = vld [vmem:[%s215 + $0xb00] sm:$0xff]
        %v629 = vld [vmem:[%s215 + $0xb08] sm:$0xff]
        %v630 = vld [vmem:[%s215 + $0xb10] sm:$0xff]
        %v631 = vld [vmem:[%s215 + $0xb18] sm:$0xff]
        %v632 = vld [vmem:[%s215 + $0xb20] sm:$0xff]
        %v633 = vld [vmem:[%s215 + $0xb28] sm:$0xff]
        %v634 = vld [vmem:[%s215 + $0xb30] sm:$0xff]
        %v635 = vld [vmem:[%s215 + $0xb38] sm:$0xff]
        %v636 = vld [vmem:[%s215 + $0xb40] sm:$0xff]
        %v637 = vld [vmem:[%s215 + $0xb48] sm:$0xff]
        %v638 = vld [vmem:[%s215 + $0xb50] sm:$0xff]
        %v639 = vld [vmem:[%s215 + $0xb58] sm:$0xff]
        %v640 = vld [vmem:[%s215 + $0xb60] sm:$0xff]
        %v641 = vld [vmem:[%s215 + $0xb68] sm:$0xff]
        %v642 = vld [vmem:[%s215 + $0xb70] sm:$0xff]
        %v643 = vld [vmem:[%s215 + $0xb78] sm:$0xff]
        %v644 = vld [vmem:[%s215 + $0xb80] sm:$0xff]
        %v645 = vld [vmem:[%s215 + $0xb88] sm:$0xff]
        %v646 = vld [vmem:[%s215 + $0xb90] sm:$0xff]
        %v647 = vld [vmem:[%s215 + $0xb98] sm:$0xff]
        %v648 = vld [vmem:[%s215 + $0xba0] sm:$0xff]
        %v649 = vld [vmem:[%s215 + $0xba8] sm:$0xff]
        %v650 = vld [vmem:[%s215 + $0xbb0] sm:$0xff]
        %v651 = vld [vmem:[%s215 + $0xbb8] sm:$0xff]
        %v652 = vld [vmem:[%s215 + $0xbc0] sm:$0xff]
        %v653 = vld [vmem:[%s215 + $0xbc8] sm:$0xff]
        %v654 = vld [vmem:[%s215 + $0xbd0] sm:$0xff]
        %v655 = vld [vmem:[%s215 + $0xbd8] sm:$0xff]
        %v656 = vld [vmem:[%s215 + $0xbe0] sm:$0xff]
        %v657 = vld [vmem:[%s215 + $0xbe8] sm:$0xff]
        %v658 = vld [vmem:[%s215 + $0xbf0] sm:$0xff]
        %v659 = vld [vmem:[%s215 + $0xbf8] sm:$0xff]
        %v660 = vld [vmem:[%s215 + $0xc00] sm:$0xff]
        %v661 = vld [vmem:[%s215 + $0xc08] sm:$0xff]
        %v662 = vld [vmem:[%s215 + $0xc10] sm:$0xff]
        %v663 = vld [vmem:[%s215 + $0xc18] sm:$0xff]
        %v664 = vld [vmem:[%s215 + $0xc20] sm:$0xff]
        %v665 = vld [vmem:[%s215 + $0xc28] sm:$0xff]
        %v666 = vld [vmem:[%s215 + $0xc30] sm:$0xff]
        %v667 = vld [vmem:[%s215 + $0xc38] sm:$0xff]
        %v668 = vld [vmem:[%s215 + $0xc40] sm:$0xff]
        %v669 = vld [vmem:[%s215 + $0xc48] sm:$0xff]
        %v670 = vld [vmem:[%s215 + $0xc50] sm:$0xff]
        %v671 = vld [vmem:[%s215 + $0xc58] sm:$0xff]
        %v672 = vld [vmem:[%s215 + $0xc60] sm:$0xff]
        %v673 = vld [vmem:[%s215 + $0xc68] sm:$0xff]
        %v674 = vld [vmem:[%s215 + $0xc70] sm:$0xff]
        %v675 = vld [vmem:[%s215 + $0xc78] sm:$0xff]
        %v676 = vld [vmem:[%s215 + $0xc80] sm:$0xff]
        %v677 = vld [vmem:[%s215 + $0xc88] sm:$0xff]
        %v678 = vld [vmem:[%s215 + $0xc90] sm:$0xff]
        %v679 = vld [vmem:[%s215 + $0xc98] sm:$0xff]
        %v680 = vld [vmem:[%s215 + $0xca0] sm:$0xff]
        %v681 = vld [vmem:[%s215 + $0xca8] sm:$0xff]
        %v682 = vld [vmem:[%s215 + $0xcb0] sm:$0xff]
        %v683 = vld [vmem:[%s215 + $0xcb8] sm:$0xff]
        %v684 = vld [vmem:[%s215 + $0xcc0] sm:$0xff]
        %v685 = vld [vmem:[%s215 + $0xcc8] sm:$0xff]
        %v686 = vld [vmem:[%s215 + $0xcd0] sm:$0xff]
        %v687 = vld [vmem:[%s215 + $0xcd8] sm:$0xff]
        %v688 = vld [vmem:[%s215 + $0xce0] sm:$0xff]
        %v689 = vld [vmem:[%s215 + $0xce8] sm:$0xff]
        %v690 = vld [vmem:[%s215 + $0xcf0] sm:$0xff]
        %v691 = vld [vmem:[%s215 + $0xcf8] sm:$0xff]
        %v692 = vld [vmem:[%s215 + $0xd00] sm:$0xff]
        %v693 = vld [vmem:[%s215 + $0xd08] sm:$0xff]
        %v694 = vld [vmem:[%s215 + $0xd10] sm:$0xff]
        %v695 = vld [vmem:[%s215 + $0xd18] sm:$0xff]
        %v696 = vld [vmem:[%s215 + $0xd20] sm:$0xff]
        %v697 = vld [vmem:[%s215 + $0xd28] sm:$0xff]
        %v698 = vld [vmem:[%s215 + $0xd30] sm:$0xff]
        %v699 = vld [vmem:[%s215 + $0xd38] sm:$0xff]
        %v700 = vld [vmem:[%s215 + $0xd40] sm:$0xff]
        %v701 = vld [vmem:[%s215 + $0xd48] sm:$0xff]
        %v702 = vld [vmem:[%s215 + $0xd50] sm:$0xff]
        %v703 = vld [vmem:[%s215 + $0xd58] sm:$0xff]
        %v704 = vld [vmem:[%s215 + $0xd60] sm:$0xff]
        %v705 = vld [vmem:[%s215 + $0xd68] sm:$0xff]
        %v706 = vld [vmem:[%s215 + $0xd70] sm:$0xff]
        %v707 = vld [vmem:[%s215 + $0xd78] sm:$0xff]
        %v708 = vld [vmem:[%s215 + $0xd80] sm:$0xff]
        %v709 = vld [vmem:[%s215 + $0xd88] sm:$0xff]
        %v710 = vld [vmem:[%s215 + $0xd90] sm:$0xff]
        %v711 = vld [vmem:[%s215 + $0xd98] sm:$0xff]
        %v712 = vld [vmem:[%s215 + $0xda0] sm:$0xff]
        %v713 = vld [vmem:[%s215 + $0xda8] sm:$0xff]
        %v714 = vld [vmem:[%s215 + $0xdb0] sm:$0xff]
        %v715 = vld [vmem:[%s215 + $0xdb8] sm:$0xff]
        %v716 = vld [vmem:[%s215 + $0xdc0] sm:$0xff]
        %v717 = vld [vmem:[%s215 + $0xdc8] sm:$0xff]
        %v718 = vld [vmem:[%s215 + $0xdd0] sm:$0xff]
        %v719 = vld [vmem:[%s215 + $0xdd8] sm:$0xff]
        %v720 = vld [vmem:[%s215 + $0xde0] sm:$0xff]
        %v721 = vld [vmem:[%s215 + $0xde8] sm:$0xff]
        %v722 = vld [vmem:[%s215 + $0xdf0] sm:$0xff]
        %v723 = vld [vmem:[%s215 + $0xdf8] sm:$0xff]
        %v724 = vld [vmem:[%s215 + $0xe00] sm:$0xff]
        %v725 = vld [vmem:[%s215 + $0xe08] sm:$0xff]
        %v726 = vld [vmem:[%s215 + $0xe10] sm:$0xff]
        %v727 = vld [vmem:[%s215 + $0xe18] sm:$0xff]
        %v728 = vld [vmem:[%s215 + $0xe20] sm:$0xff]
        %v729 = vld [vmem:[%s215 + $0xe28] sm:$0xff]
        %v730 = vld [vmem:[%s215 + $0xe30] sm:$0xff]
        %v731 = vld [vmem:[%s215 + $0xe38] sm:$0xff]
        %v732 = vld [vmem:[%s215 + $0xe40] sm:$0xff]
        %v733 = vld [vmem:[%s215 + $0xe48] sm:$0xff]
        %v734 = vld [vmem:[%s215 + $0xe50] sm:$0xff]
        %v735 = vld [vmem:[%s215 + $0xe58] sm:$0xff]
        %v736 = vld [vmem:[%s215 + $0xe60] sm:$0xff]
        %v737 = vld [vmem:[%s215 + $0xe68] sm:$0xff]
        %v738 = vld [vmem:[%s215 + $0xe70] sm:$0xff]
        %v739 = vld [vmem:[%s215 + $0xe78] sm:$0xff]
        %v740 = vld [vmem:[%s215 + $0xe80] sm:$0xff]
        %v741 = vld [vmem:[%s215 + $0xe88] sm:$0xff]
        %v742 = vld [vmem:[%s215 + $0xe90] sm:$0xff]
        %v743 = vld [vmem:[%s215 + $0xe98] sm:$0xff]
        %v744 = vld [vmem:[%s215 + $0xea0] sm:$0xff]
        %v745 = vld [vmem:[%s215 + $0xea8] sm:$0xff]
        %v746 = vld [vmem:[%s215 + $0xeb0] sm:$0xff]
        %v747 = vld [vmem:[%s215 + $0xeb8] sm:$0xff]
        %v748 = vld [vmem:[%s215 + $0xec0] sm:$0xff]
        %v749 = vld [vmem:[%s215 + $0xec8] sm:$0xff]
        %v750 = vld [vmem:[%s215 + $0xed0] sm:$0xff]
        %v751 = vld [vmem:[%s215 + $0xed8] sm:$0xff]
        %v752 = vld [vmem:[%s215 + $0xee0] sm:$0xff]
        %v753 = vld [vmem:[%s215 + $0xee8] sm:$0xff]
        %v754 = vld [vmem:[%s215 + $0xef0] sm:$0xff]
        %v755 = vld [vmem:[%s215 + $0xef8] sm:$0xff]
        %v756 = vld [vmem:[%s215 + $0xf00] sm:$0xff]
        %v757 = vld [vmem:[%s215 + $0xf08] sm:$0xff]
        %v758 = vld [vmem:[%s215 + $0xf10] sm:$0xff]
        %v759 = vld [vmem:[%s215 + $0xf18] sm:$0xff]
        %v760 = vld [vmem:[%s215 + $0xf20] sm:$0xff]
        %v761 = vld [vmem:[%s215 + $0xf28] sm:$0xff]
        %v762 = vld [vmem:[%s215 + $0xf30] sm:$0xff]
        %v763 = vld [vmem:[%s215 + $0xf38] sm:$0xff]
        %v764 = vld [vmem:[%s215 + $0xf40] sm:$0xff]
        %v765 = vld [vmem:[%s215 + $0xf48] sm:$0xff]
        %v766 = vld [vmem:[%s215 + $0xf50] sm:$0xff]
        %v767 = vld [vmem:[%s215 + $0xf58] sm:$0xff]
        %v768 = vld [vmem:[%s215 + $0xf60] sm:$0xff]
        %v769 = vld [vmem:[%s215 + $0xf68] sm:$0xff]
        %v770 = vld [vmem:[%s215 + $0xf70] sm:$0xff]
        %v771 = vld [vmem:[%s215 + $0xf78] sm:$0xff]
        %v772 = vld [vmem:[%s215 + $0xf80] sm:$0xff]
        %v773 = vld [vmem:[%s215 + $0xf88] sm:$0xff]
        %v774 = vld [vmem:[%s215 + $0xf90] sm:$0xff]
        %v775 = vld [vmem:[%s215 + $0xf98] sm:$0xff]
        %v776 = vld [vmem:[%s215 + $0xfa0] sm:$0xff]
        %v777 = vld [vmem:[%s215 + $0xfa8] sm:$0xff]
        %v778 = vld [vmem:[%s215 + $0xfb0] sm:$0xff]
        %v779 = vld [vmem:[%s215 + $0xfb8] sm:$0xff]
        %v780 = vld [vmem:[%s215 + $0xfc0] sm:$0xff]
        %v781 = vld [vmem:[%s215 + $0xfc8] sm:$0xff]
        %v782 = vld [vmem:[%s215 + $0xfd0] sm:$0xff]
        %v783 = vld [vmem:[%s215 + $0xfd8] sm:$0xff]
        %v784 = vld [vmem:[%s215 + $0xfe0] sm:$0xff]
        %v785 = vld [vmem:[%s215 + $0xfe8] sm:$0xff]
        %v786 = vld [vmem:[%s215 + $0xff0] sm:$0xff]
        %v787 = vld [vmem:[%s215 + $0xff8] sm:$0xff]
        %v788 = vld [vmem:[%s224] sm:$0xff]
        %v789 = vld [vmem:[%s224 + $0x8] sm:$0xff]
        %v790 = vld [vmem:[%s224 + $0x10] sm:$0xff]
        %v791 = vld [vmem:[%s224 + $0x18] sm:$0xff]
        %v792 = vld [vmem:[%s224 + $0x20] sm:$0xff]
        %v793 = vld [vmem:[%s224 + $0x28] sm:$0xff]
        %v794 = vld [vmem:[%s224 + $0x30] sm:$0xff]
        %v795 = vld [vmem:[%s224 + $0x38] sm:$0xff]
        %v796 = vld [vmem:[%s224 + $0x40] sm:$0xff]
        %v797 = vld [vmem:[%s224 + $0x48] sm:$0xff]
        %v798 = vld [vmem:[%s224 + $0x50] sm:$0xff]
        %v799 = vld [vmem:[%s224 + $0x58] sm:$0xff]
        %v800 = vld [vmem:[%s224 + $0x60] sm:$0xff]
        %v801 = vld [vmem:[%s224 + $0x68] sm:$0xff]
        %v802 = vld [vmem:[%s224 + $0x70] sm:$0xff]
        %v803 = vld [vmem:[%s224 + $0x78] sm:$0xff]
        %v804 = vld [vmem:[%s224 + $0x80] sm:$0xff]
        %v805 = vld [vmem:[%s224 + $0x88] sm:$0xff]
        %v806 = vld [vmem:[%s224 + $0x90] sm:$0xff]
        %v807 = vld [vmem:[%s224 + $0x98] sm:$0xff]
        %v808 = vld [vmem:[%s224 + $0xa0] sm:$0xff]
        %v809 = vld [vmem:[%s224 + $0xa8] sm:$0xff]
        %v810 = vld [vmem:[%s224 + $0xb0] sm:$0xff]
        %v811 = vld [vmem:[%s224 + $0xb8] sm:$0xff]
        %v812 = vld [vmem:[%s224 + $0xc0] sm:$0xff]
        %v813 = vld [vmem:[%s224 + $0xc8] sm:$0xff]
        %v814 = vld [vmem:[%s224 + $0xd0] sm:$0xff]
        %v815 = vld [vmem:[%s224 + $0xd8] sm:$0xff]
        %v816 = vld [vmem:[%s224 + $0xe0] sm:$0xff]
        %v817 = vld [vmem:[%s224 + $0xe8] sm:$0xff]
        %v818 = vld [vmem:[%s224 + $0xf0] sm:$0xff]
        %v819 = vld [vmem:[%s224 + $0xf8] sm:$0xff]
        %v820 = vld [vmem:[%s224 + $0x100] sm:$0xff]
        %v821 = vld [vmem:[%s224 + $0x108] sm:$0xff]
        %v822 = vld [vmem:[%s224 + $0x110] sm:$0xff]
        %v823 = vld [vmem:[%s224 + $0x118] sm:$0xff]
        %v824 = vld [vmem:[%s224 + $0x120] sm:$0xff]
        %v825 = vld [vmem:[%s224 + $0x128] sm:$0xff]
        %v826 = vld [vmem:[%s224 + $0x130] sm:$0xff]
        %v827 = vld [vmem:[%s224 + $0x138] sm:$0xff]
        %v828 = vld [vmem:[%s224 + $0x140] sm:$0xff]
        %v829 = vld [vmem:[%s224 + $0x148] sm:$0xff]
        %v830 = vld [vmem:[%s224 + $0x150] sm:$0xff]
        %v831 = vld [vmem:[%s224 + $0x158] sm:$0xff]
        %v832 = vld [vmem:[%s224 + $0x160] sm:$0xff]
        %v833 = vld [vmem:[%s224 + $0x168] sm:$0xff]
        %v834 = vld [vmem:[%s224 + $0x170] sm:$0xff]
        %v835 = vld [vmem:[%s224 + $0x178] sm:$0xff]
        %v836 = vld [vmem:[%s224 + $0x180] sm:$0xff]
        %v837 = vld [vmem:[%s224 + $0x188] sm:$0xff]
        %v838 = vld [vmem:[%s224 + $0x190] sm:$0xff]
        %v839 = vld [vmem:[%s224 + $0x198] sm:$0xff]
        %v840 = vld [vmem:[%s224 + $0x1a0] sm:$0xff]
        %v841 = vld [vmem:[%s224 + $0x1a8] sm:$0xff]
        %v842 = vld [vmem:[%s224 + $0x1b0] sm:$0xff]
        %v843 = vld [vmem:[%s224 + $0x1b8] sm:$0xff]
        %v844 = vld [vmem:[%s224 + $0x1c0] sm:$0xff]
        %v845 = vld [vmem:[%s224 + $0x1c8] sm:$0xff]
        %v846 = vld [vmem:[%s224 + $0x1d0] sm:$0xff]
        %v847 = vld [vmem:[%s224 + $0x1d8] sm:$0xff]
        %v848 = vld [vmem:[%s224 + $0x1e0] sm:$0xff]
        %v849 = vld [vmem:[%s224 + $0x1e8] sm:$0xff]
        %v850 = vld [vmem:[%s224 + $0x1f0] sm:$0xff]
        %v851 = vld [vmem:[%s224 + $0x1f8] sm:$0xff]
        %v852 = vld [vmem:[%s224 + $0x200] sm:$0xff]
        %v853 = vld [vmem:[%s224 + $0x208] sm:$0xff]
        %v854 = vld [vmem:[%s224 + $0x210] sm:$0xff]
        %v855 = vld [vmem:[%s224 + $0x218] sm:$0xff]
        %v856 = vld [vmem:[%s224 + $0x220] sm:$0xff]
        %v857 = vld [vmem:[%s224 + $0x228] sm:$0xff]
        %v858 = vld [vmem:[%s224 + $0x230] sm:$0xff]
        %v859 = vld [vmem:[%s224 + $0x238] sm:$0xff]
        %v860 = vld [vmem:[%s224 + $0x240] sm:$0xff]
        %v861 = vld [vmem:[%s224 + $0x248] sm:$0xff]
        %v862 = vld [vmem:[%s224 + $0x250] sm:$0xff]
        %v863 = vld [vmem:[%s224 + $0x258] sm:$0xff]
        %v864 = vld [vmem:[%s224 + $0x260] sm:$0xff]
        %v865 = vld [vmem:[%s224 + $0x268] sm:$0xff]
        %v866 = vld [vmem:[%s224 + $0x270] sm:$0xff]
        %v867 = vld [vmem:[%s224 + $0x278] sm:$0xff]
        %v868 = vld [vmem:[%s224 + $0x280] sm:$0xff]
        %v869 = vld [vmem:[%s224 + $0x288] sm:$0xff]
        %v870 = vld [vmem:[%s224 + $0x290] sm:$0xff]
        %v871 = vld [vmem:[%s224 + $0x298] sm:$0xff]
        %v872 = vld [vmem:[%s224 + $0x2a0] sm:$0xff]
        %v873 = vld [vmem:[%s224 + $0x2a8] sm:$0xff]
        %v874 = vld [vmem:[%s224 + $0x2b0] sm:$0xff]
        %v875 = vld [vmem:[%s224 + $0x2b8] sm:$0xff]
        %v876 = vld [vmem:[%s224 + $0x2c0] sm:$0xff]
        %v877 = vld [vmem:[%s224 + $0x2c8] sm:$0xff]
        %v878 = vld [vmem:[%s224 + $0x2d0] sm:$0xff]
        %v879 = vld [vmem:[%s224 + $0x2d8] sm:$0xff]
        %v880 = vld [vmem:[%s224 + $0x2e0] sm:$0xff]
        %v881 = vld [vmem:[%s224 + $0x2e8] sm:$0xff]
        %v882 = vld [vmem:[%s224 + $0x2f0] sm:$0xff]
        %v883 = vld [vmem:[%s224 + $0x2f8] sm:$0xff]
        %v884 = vld [vmem:[%s224 + $0x300] sm:$0xff]
        %v885 = vld [vmem:[%s224 + $0x308] sm:$0xff]
        %v886 = vld [vmem:[%s224 + $0x310] sm:$0xff]
        %v887 = vld [vmem:[%s224 + $0x318] sm:$0xff]
        %v888 = vld [vmem:[%s224 + $0x320] sm:$0xff]
        %v889 = vld [vmem:[%s224 + $0x328] sm:$0xff]
        %v890 = vld [vmem:[%s224 + $0x330] sm:$0xff]
        %v891 = vld [vmem:[%s224 + $0x338] sm:$0xff]
        %v892 = vld [vmem:[%s224 + $0x340] sm:$0xff]
        %v893 = vld [vmem:[%s224 + $0x348] sm:$0xff]
        %v894 = vld [vmem:[%s224 + $0x350] sm:$0xff]
        %v895 = vld [vmem:[%s224 + $0x358] sm:$0xff]
        %v896 = vld [vmem:[%s224 + $0x360] sm:$0xff]
        %v897 = vld [vmem:[%s224 + $0x368] sm:$0xff]
        %v898 = vld [vmem:[%s224 + $0x370] sm:$0xff]
        %v899 = vld [vmem:[%s224 + $0x378] sm:$0xff]
        %v900 = vld [vmem:[%s224 + $0x380] sm:$0xff]
        %v901 = vld [vmem:[%s224 + $0x388] sm:$0xff]
        %v902 = vld [vmem:[%s224 + $0x390] sm:$0xff]
        %v903 = vld [vmem:[%s224 + $0x398] sm:$0xff]
        %v904 = vld [vmem:[%s224 + $0x3a0] sm:$0xff]
        %v905 = vld [vmem:[%s224 + $0x3a8] sm:$0xff]
        %v906 = vld [vmem:[%s224 + $0x3b0] sm:$0xff]
        %v907 = vld [vmem:[%s224 + $0x3b8] sm:$0xff]
        %v908 = vld [vmem:[%s224 + $0x3c0] sm:$0xff]
        %v909 = vld [vmem:[%s224 + $0x3c8] sm:$0xff]
        %v910 = vld [vmem:[%s224 + $0x3d0] sm:$0xff]
        %v911 = vld [vmem:[%s224 + $0x3d8] sm:$0xff]
        %v912 = vld [vmem:[%s224 + $0x3e0] sm:$0xff]
        %v913 = vld [vmem:[%s224 + $0x3e8] sm:$0xff]
        %v914 = vld [vmem:[%s224 + $0x3f0] sm:$0xff]
        %v915 = vld [vmem:[%s224 + $0x3f8] sm:$0xff]
        %v916 = vld [vmem:[%s224 + $0x400] sm:$0xff]
        %v917 = vld [vmem:[%s224 + $0x408] sm:$0xff]
        %v918 = vld [vmem:[%s224 + $0x410] sm:$0xff]
        %v919 = vld [vmem:[%s224 + $0x418] sm:$0xff]
        %v920 = vld [vmem:[%s224 + $0x420] sm:$0xff]
        %v921 = vld [vmem:[%s224 + $0x428] sm:$0xff]
        %v922 = vld [vmem:[%s224 + $0x430] sm:$0xff]
        %v923 = vld [vmem:[%s224 + $0x438] sm:$0xff]
        %v924 = vld [vmem:[%s224 + $0x440] sm:$0xff]
        %v925 = vld [vmem:[%s224 + $0x448] sm:$0xff]
        %v926 = vld [vmem:[%s224 + $0x450] sm:$0xff]
        %v927 = vld [vmem:[%s224 + $0x458] sm:$0xff]
        %v928 = vld [vmem:[%s224 + $0x460] sm:$0xff]
        %v929 = vld [vmem:[%s224 + $0x468] sm:$0xff]
        %v930 = vld [vmem:[%s224 + $0x470] sm:$0xff]
        %v931 = vld [vmem:[%s224 + $0x478] sm:$0xff]
        %v932 = vld [vmem:[%s224 + $0x480] sm:$0xff]
        %v933 = vld [vmem:[%s224 + $0x488] sm:$0xff]
        %v934 = vld [vmem:[%s224 + $0x490] sm:$0xff]
        %v935 = vld [vmem:[%s224 + $0x498] sm:$0xff]
        %v936 = vld [vmem:[%s224 + $0x4a0] sm:$0xff]
        %v937 = vld [vmem:[%s224 + $0x4a8] sm:$0xff]
        %v938 = vld [vmem:[%s224 + $0x4b0] sm:$0xff]
        %v939 = vld [vmem:[%s224 + $0x4b8] sm:$0xff]
        %v940 = vld [vmem:[%s224 + $0x4c0] sm:$0xff]
        %v941 = vld [vmem:[%s224 + $0x4c8] sm:$0xff]
        %v942 = vld [vmem:[%s224 + $0x4d0] sm:$0xff]
        %v943 = vld [vmem:[%s224 + $0x4d8] sm:$0xff]
        %v944 = vld [vmem:[%s224 + $0x4e0] sm:$0xff]
        %v945 = vld [vmem:[%s224 + $0x4e8] sm:$0xff]
        %v946 = vld [vmem:[%s224 + $0x4f0] sm:$0xff]
        %v947 = vld [vmem:[%s224 + $0x4f8] sm:$0xff]
        %v948 = vld [vmem:[%s224 + $0x500] sm:$0xff]
        %v949 = vld [vmem:[%s224 + $0x508] sm:$0xff]
        %v950 = vld [vmem:[%s224 + $0x510] sm:$0xff]
        %v951 = vld [vmem:[%s224 + $0x518] sm:$0xff]
        %v952 = vld [vmem:[%s224 + $0x520] sm:$0xff]
        %v953 = vld [vmem:[%s224 + $0x528] sm:$0xff]
        %v954 = vld [vmem:[%s224 + $0x530] sm:$0xff]
        %v955 = vld [vmem:[%s224 + $0x538] sm:$0xff]
        %v956 = vld [vmem:[%s224 + $0x540] sm:$0xff]
        %v957 = vld [vmem:[%s224 + $0x548] sm:$0xff]
        %v958 = vld [vmem:[%s224 + $0x550] sm:$0xff]
        %v959 = vld [vmem:[%s224 + $0x558] sm:$0xff]
        %v960 = vld [vmem:[%s224 + $0x560] sm:$0xff]
        %v961 = vld [vmem:[%s224 + $0x568] sm:$0xff]
        %v962 = vld [vmem:[%s224 + $0x570] sm:$0xff]
        %v963 = vld [vmem:[%s224 + $0x578] sm:$0xff]
        %v964 = vld [vmem:[%s224 + $0x580] sm:$0xff]
        %v965 = vld [vmem:[%s224 + $0x588] sm:$0xff]
        %v966 = vld [vmem:[%s224 + $0x590] sm:$0xff]
        %v967 = vld [vmem:[%s224 + $0x598] sm:$0xff]
        %v968 = vld [vmem:[%s224 + $0x5a0] sm:$0xff]
        %v969 = vld [vmem:[%s224 + $0x5a8] sm:$0xff]
        %v970 = vld [vmem:[%s224 + $0x5b0] sm:$0xff]
        %v971 = vld [vmem:[%s224 + $0x5b8] sm:$0xff]
        %v972 = vld [vmem:[%s224 + $0x5c0] sm:$0xff]
        %v973 = vld [vmem:[%s224 + $0x5c8] sm:$0xff]
        %v974 = vld [vmem:[%s224 + $0x5d0] sm:$0xff]
        %v975 = vld [vmem:[%s224 + $0x5d8] sm:$0xff]
        %v976 = vld [vmem:[%s224 + $0x5e0] sm:$0xff]
        %v977 = vld [vmem:[%s224 + $0x5e8] sm:$0xff]
        %v978 = vld [vmem:[%s224 + $0x5f0] sm:$0xff]
        %v979 = vld [vmem:[%s224 + $0x5f8] sm:$0xff]
        %v980 = vld [vmem:[%s224 + $0x600] sm:$0xff]
        %v981 = vld [vmem:[%s224 + $0x608] sm:$0xff]
        %v982 = vld [vmem:[%s224 + $0x610] sm:$0xff]
        %v983 = vld [vmem:[%s224 + $0x618] sm:$0xff]
        %v984 = vld [vmem:[%s224 + $0x620] sm:$0xff]
        %v985 = vld [vmem:[%s224 + $0x628] sm:$0xff]
        %v986 = vld [vmem:[%s224 + $0x630] sm:$0xff]
        %v987 = vld [vmem:[%s224 + $0x638] sm:$0xff]
        %v988 = vld [vmem:[%s224 + $0x640] sm:$0xff]
        %v989 = vld [vmem:[%s224 + $0x648] sm:$0xff]
        %v990 = vld [vmem:[%s224 + $0x650] sm:$0xff]
        %v991 = vld [vmem:[%s224 + $0x658] sm:$0xff]
        %v992 = vld [vmem:[%s224 + $0x660] sm:$0xff]
        %v993 = vld [vmem:[%s224 + $0x668] sm:$0xff]
        %v994 = vld [vmem:[%s224 + $0x670] sm:$0xff]
        %v995 = vld [vmem:[%s224 + $0x678] sm:$0xff]
        %v996 = vld [vmem:[%s224 + $0x680] sm:$0xff]
        %v997 = vld [vmem:[%s224 + $0x688] sm:$0xff]
        %v998 = vld [vmem:[%s224 + $0x690] sm:$0xff]
        %v999 = vld [vmem:[%s224 + $0x698] sm:$0xff]
        %v1000 = vld [vmem:[%s224 + $0x6a0] sm:$0xff]
        %v1001 = vld [vmem:[%s224 + $0x6a8] sm:$0xff]
        %v1002 = vld [vmem:[%s224 + $0x6b0] sm:$0xff]
        %v1003 = vld [vmem:[%s224 + $0x6b8] sm:$0xff]
        %v1004 = vld [vmem:[%s224 + $0x6c0] sm:$0xff]
        %v1005 = vld [vmem:[%s224 + $0x6c8] sm:$0xff]
        %v1006 = vld [vmem:[%s224 + $0x6d0] sm:$0xff]
        %v1007 = vld [vmem:[%s224 + $0x6d8] sm:$0xff]
        %v1008 = vld [vmem:[%s224 + $0x6e0] sm:$0xff]
        %v1009 = vld [vmem:[%s224 + $0x6e8] sm:$0xff]
        %v1010 = vld [vmem:[%s224 + $0x6f0] sm:$0xff]
        %v1011 = vld [vmem:[%s224 + $0x6f8] sm:$0xff]
        %v1012 = vld [vmem:[%s224 + $0x700] sm:$0xff]
        %v1013 = vld [vmem:[%s224 + $0x708] sm:$0xff]
        %v1014 = vld [vmem:[%s224 + $0x710] sm:$0xff]
        %v1015 = vld [vmem:[%s224 + $0x718] sm:$0xff]
        %v1016 = vld [vmem:[%s224 + $0x720] sm:$0xff]
        %v1017 = vld [vmem:[%s224 + $0x728] sm:$0xff]
        %v1018 = vld [vmem:[%s224 + $0x730] sm:$0xff]
        %v1019 = vld [vmem:[%s224 + $0x738] sm:$0xff]
        %v1020 = vld [vmem:[%s224 + $0x740] sm:$0xff]
        %v1021 = vld [vmem:[%s224 + $0x748] sm:$0xff]
        %v1022 = vld [vmem:[%s224 + $0x750] sm:$0xff]
        %v1023 = vld [vmem:[%s224 + $0x758] sm:$0xff]
        %v1024 = vld [vmem:[%s224 + $0x760] sm:$0xff]
        %v1025 = vld [vmem:[%s224 + $0x768] sm:$0xff]
        %v1026 = vld [vmem:[%s224 + $0x770] sm:$0xff]
        %v1027 = vld [vmem:[%s224 + $0x778] sm:$0xff]
        %v1028 = vld [vmem:[%s224 + $0x780] sm:$0xff]
        %v1029 = vld [vmem:[%s224 + $0x788] sm:$0xff]
        %v1030 = vld [vmem:[%s224 + $0x790] sm:$0xff]
        %v1031 = vld [vmem:[%s224 + $0x798] sm:$0xff]
        %v1032 = vld [vmem:[%s224 + $0x7a0] sm:$0xff]
        %v1033 = vld [vmem:[%s224 + $0x7a8] sm:$0xff]
        %v1034 = vld [vmem:[%s224 + $0x7b0] sm:$0xff]
        %v1035 = vld [vmem:[%s224 + $0x7b8] sm:$0xff]
        %v1036 = vld [vmem:[%s224 + $0x7c0] sm:$0xff]
        %v1037 = vld [vmem:[%s224 + $0x7c8] sm:$0xff]
        %v1038 = vld [vmem:[%s224 + $0x7d0] sm:$0xff]
        %v1039 = vld [vmem:[%s224 + $0x7d8] sm:$0xff]
        %v1040 = vld [vmem:[%s224 + $0x7e0] sm:$0xff]
        %v1041 = vld [vmem:[%s224 + $0x7e8] sm:$0xff]
        %v1042 = vld [vmem:[%s224 + $0x7f0] sm:$0xff]
        %v1043 = vld [vmem:[%s224 + $0x7f8] sm:$0xff]
        %v1044 = vld [vmem:[%s224 + $0x800] sm:$0xff]
        %v1045 = vld [vmem:[%s224 + $0x808] sm:$0xff]
        %v1046 = vld [vmem:[%s224 + $0x810] sm:$0xff]
        %v1047 = vld [vmem:[%s224 + $0x818] sm:$0xff]
        %v1048 = vld [vmem:[%s224 + $0x820] sm:$0xff]
        %v1049 = vld [vmem:[%s224 + $0x828] sm:$0xff]
        %v1050 = vld [vmem:[%s224 + $0x830] sm:$0xff]
        %v1051 = vld [vmem:[%s224 + $0x838] sm:$0xff]
        %v1052 = vld [vmem:[%s224 + $0x840] sm:$0xff]
        %v1053 = vld [vmem:[%s224 + $0x848] sm:$0xff]
        %v1054 = vld [vmem:[%s224 + $0x850] sm:$0xff]
        %v1055 = vld [vmem:[%s224 + $0x858] sm:$0xff]
        %v1056 = vld [vmem:[%s224 + $0x860] sm:$0xff]
        %v1057 = vld [vmem:[%s224 + $0x868] sm:$0xff]
        %v1058 = vld [vmem:[%s224 + $0x870] sm:$0xff]
        %v1059 = vld [vmem:[%s224 + $0x878] sm:$0xff]
        %v1060 = vld [vmem:[%s224 + $0x880] sm:$0xff]
        %v1061 = vld [vmem:[%s224 + $0x888] sm:$0xff]
        %v1062 = vld [vmem:[%s224 + $0x890] sm:$0xff]
        %v1063 = vld [vmem:[%s224 + $0x898] sm:$0xff]
        %v1064 = vld [vmem:[%s224 + $0x8a0] sm:$0xff]
        %v1065 = vld [vmem:[%s224 + $0x8a8] sm:$0xff]
        %v1066 = vld [vmem:[%s224 + $0x8b0] sm:$0xff]
        %v1067 = vld [vmem:[%s224 + $0x8b8] sm:$0xff]
        %v1068 = vld [vmem:[%s224 + $0x8c0] sm:$0xff]
        %v1069 = vld [vmem:[%s224 + $0x8c8] sm:$0xff]
        %v1070 = vld [vmem:[%s224 + $0x8d0] sm:$0xff]
        %v1071 = vld [vmem:[%s224 + $0x8d8] sm:$0xff]
        %v1072 = vld [vmem:[%s224 + $0x8e0] sm:$0xff]
        %v1073 = vld [vmem:[%s224 + $0x8e8] sm:$0xff]
        %v1074 = vld [vmem:[%s224 + $0x8f0] sm:$0xff]
        %v1075 = vld [vmem:[%s224 + $0x8f8] sm:$0xff]
        %v1076 = vld [vmem:[%s224 + $0x900] sm:$0xff]
        %v1077 = vld [vmem:[%s224 + $0x908] sm:$0xff]
        %v1078 = vld [vmem:[%s224 + $0x910] sm:$0xff]
        %v1079 = vld [vmem:[%s224 + $0x918] sm:$0xff]
        %v1080 = vld [vmem:[%s224 + $0x920] sm:$0xff]
        %v1081 = vld [vmem:[%s224 + $0x928] sm:$0xff]
        %v1082 = vld [vmem:[%s224 + $0x930] sm:$0xff]
        %v1083 = vld [vmem:[%s224 + $0x938] sm:$0xff]
        %v1084 = vld [vmem:[%s224 + $0x940] sm:$0xff]
        %v1085 = vld [vmem:[%s224 + $0x948] sm:$0xff]
        %v1086 = vld [vmem:[%s224 + $0x950] sm:$0xff]
        %v1087 = vld [vmem:[%s224 + $0x958] sm:$0xff]
        %v1088 = vld [vmem:[%s224 + $0x960] sm:$0xff]
        %v1089 = vld [vmem:[%s224 + $0x968] sm:$0xff]
        %v1090 = vld [vmem:[%s224 + $0x970] sm:$0xff]
        %v1091 = vld [vmem:[%s224 + $0x978] sm:$0xff]
        %v1092 = vld [vmem:[%s224 + $0x980] sm:$0xff]
        %v1093 = vld [vmem:[%s224 + $0x988] sm:$0xff]
        %v1094 = vld [vmem:[%s224 + $0x990] sm:$0xff]
        %v1095 = vld [vmem:[%s224 + $0x998] sm:$0xff]
        %v1096 = vld [vmem:[%s224 + $0x9a0] sm:$0xff]
        %v1097 = vld [vmem:[%s224 + $0x9a8] sm:$0xff]
        %v1098 = vld [vmem:[%s224 + $0x9b0] sm:$0xff]
        %v1099 = vld [vmem:[%s224 + $0x9b8] sm:$0xff]
        %v1100 = vld [vmem:[%s224 + $0x9c0] sm:$0xff]
        %v1101 = vld [vmem:[%s224 + $0x9c8] sm:$0xff]
        %v1102 = vld [vmem:[%s224 + $0x9d0] sm:$0xff]
        %v1103 = vld [vmem:[%s224 + $0x9d8] sm:$0xff]
        %v1104 = vld [vmem:[%s224 + $0x9e0] sm:$0xff]
        %v1105 = vld [vmem:[%s224 + $0x9e8] sm:$0xff]
        %v1106 = vld [vmem:[%s224 + $0x9f0] sm:$0xff]
        %v1107 = vld [vmem:[%s224 + $0x9f8] sm:$0xff]
        %v1108 = vld [vmem:[%s224 + $0xa00] sm:$0xff]
        %v1109 = vld [vmem:[%s224 + $0xa08] sm:$0xff]
        %v1110 = vld [vmem:[%s224 + $0xa10] sm:$0xff]
        %v1111 = vld [vmem:[%s224 + $0xa18] sm:$0xff]
        %v1112 = vld [vmem:[%s224 + $0xa20] sm:$0xff]
        %v1113 = vld [vmem:[%s224 + $0xa28] sm:$0xff]
        %v1114 = vld [vmem:[%s224 + $0xa30] sm:$0xff]
        %v1115 = vld [vmem:[%s224 + $0xa38] sm:$0xff]
        %v1116 = vld [vmem:[%s224 + $0xa40] sm:$0xff]
        %v1117 = vld [vmem:[%s224 + $0xa48] sm:$0xff]
        %v1118 = vld [vmem:[%s224 + $0xa50] sm:$0xff]
        %v1119 = vld [vmem:[%s224 + $0xa58] sm:$0xff]
        %v1120 = vld [vmem:[%s224 + $0xa60] sm:$0xff]
        %v1121 = vld [vmem:[%s224 + $0xa68] sm:$0xff]
        %v1122 = vld [vmem:[%s224 + $0xa70] sm:$0xff]
        %v1123 = vld [vmem:[%s224 + $0xa78] sm:$0xff]
        %v1124 = vld [vmem:[%s224 + $0xa80] sm:$0xff]
        %v1125 = vld [vmem:[%s224 + $0xa88] sm:$0xff]
        %v1126 = vld [vmem:[%s224 + $0xa90] sm:$0xff]
        %v1127 = vld [vmem:[%s224 + $0xa98] sm:$0xff]
        %v1128 = vld [vmem:[%s224 + $0xaa0] sm:$0xff]
        %v1129 = vld [vmem:[%s224 + $0xaa8] sm:$0xff]
        %v1130 = vld [vmem:[%s224 + $0xab0] sm:$0xff]
        %v1131 = vld [vmem:[%s224 + $0xab8] sm:$0xff]
        %v1132 = vld [vmem:[%s224 + $0xac0] sm:$0xff]
        %v1133 = vld [vmem:[%s224 + $0xac8] sm:$0xff]
        %v1134 = vld [vmem:[%s224 + $0xad0] sm:$0xff]
        %v1135 = vld [vmem:[%s224 + $0xad8] sm:$0xff]
        %v1136 = vld [vmem:[%s224 + $0xae0] sm:$0xff]
        %v1137 = vld [vmem:[%s224 + $0xae8] sm:$0xff]
        %v1138 = vld [vmem:[%s224 + $0xaf0] sm:$0xff]
        %v1139 = vld [vmem:[%s224 + $0xaf8] sm:$0xff]
        %v1140 = vld [vmem:[%s224 + $0xb00] sm:$0xff]
        %v1141 = vld [vmem:[%s224 + $0xb08] sm:$0xff]
        %v1142 = vld [vmem:[%s224 + $0xb10] sm:$0xff]
        %v1143 = vld [vmem:[%s224 + $0xb18] sm:$0xff]
        %v1144 = vld [vmem:[%s224 + $0xb20] sm:$0xff]
        %v1145 = vld [vmem:[%s224 + $0xb28] sm:$0xff]
        %v1146 = vld [vmem:[%s224 + $0xb30] sm:$0xff]
        %v1147 = vld [vmem:[%s224 + $0xb38] sm:$0xff]
        %v1148 = vld [vmem:[%s224 + $0xb40] sm:$0xff]
        %v1149 = vld [vmem:[%s224 + $0xb48] sm:$0xff]
        %v1150 = vld [vmem:[%s224 + $0xb50] sm:$0xff]
        %v1151 = vld [vmem:[%s224 + $0xb58] sm:$0xff]
        %v1152 = vld [vmem:[%s224 + $0xb60] sm:$0xff]
        %v1153 = vld [vmem:[%s224 + $0xb68] sm:$0xff]
        %v1154 = vld [vmem:[%s224 + $0xb70] sm:$0xff]
        %v1155 = vld [vmem:[%s224 + $0xb78] sm:$0xff]
        %v1156 = vld [vmem:[%s224 + $0xb80] sm:$0xff]
        %v1157 = vld [vmem:[%s224 + $0xb88] sm:$0xff]
        %v1158 = vld [vmem:[%s224 + $0xb90] sm:$0xff]
        %v1159 = vld [vmem:[%s224 + $0xb98] sm:$0xff]
        %v1160 = vld [vmem:[%s224 + $0xba0] sm:$0xff]
        %v1161 = vld [vmem:[%s224 + $0xba8] sm:$0xff]
        %v1162 = vld [vmem:[%s224 + $0xbb0] sm:$0xff]
        %v1163 = vld [vmem:[%s224 + $0xbb8] sm:$0xff]
        %v1164 = vld [vmem:[%s224 + $0xbc0] sm:$0xff]
        %v1165 = vld [vmem:[%s224 + $0xbc8] sm:$0xff]
        %v1166 = vld [vmem:[%s224 + $0xbd0] sm:$0xff]
        %v1167 = vld [vmem:[%s224 + $0xbd8] sm:$0xff]
        %v1168 = vld [vmem:[%s224 + $0xbe0] sm:$0xff]
        %v1169 = vld [vmem:[%s224 + $0xbe8] sm:$0xff]
        %v1170 = vld [vmem:[%s224 + $0xbf0] sm:$0xff]
        %v1171 = vld [vmem:[%s224 + $0xbf8] sm:$0xff]
        %v1172 = vld [vmem:[%s224 + $0xc00] sm:$0xff]
        %v1173 = vld [vmem:[%s224 + $0xc08] sm:$0xff]
        %v1174 = vld [vmem:[%s224 + $0xc10] sm:$0xff]
        %v1175 = vld [vmem:[%s224 + $0xc18] sm:$0xff]
        %v1176 = vld [vmem:[%s224 + $0xc20] sm:$0xff]
        %v1177 = vld [vmem:[%s224 + $0xc28] sm:$0xff]
        %v1178 = vld [vmem:[%s224 + $0xc30] sm:$0xff]
        %v1179 = vld [vmem:[%s224 + $0xc38] sm:$0xff]
        %v1180 = vld [vmem:[%s224 + $0xc40] sm:$0xff]
        %v1181 = vld [vmem:[%s224 + $0xc48] sm:$0xff]
        %v1182 = vld [vmem:[%s224 + $0xc50] sm:$0xff]
        %v1183 = vld [vmem:[%s224 + $0xc58] sm:$0xff]
        %v1184 = vld [vmem:[%s224 + $0xc60] sm:$0xff]
        %v1185 = vld [vmem:[%s224 + $0xc68] sm:$0xff]
        %v1186 = vld [vmem:[%s224 + $0xc70] sm:$0xff]
        %v1187 = vld [vmem:[%s224 + $0xc78] sm:$0xff]
        %v1188 = vld [vmem:[%s224 + $0xc80] sm:$0xff]
        %v1189 = vld [vmem:[%s224 + $0xc88] sm:$0xff]
        %v1190 = vld [vmem:[%s224 + $0xc90] sm:$0xff]
        %v1191 = vld [vmem:[%s224 + $0xc98] sm:$0xff]
        %v1192 = vld [vmem:[%s224 + $0xca0] sm:$0xff]
        %v1193 = vld [vmem:[%s224 + $0xca8] sm:$0xff]
        %v1194 = vld [vmem:[%s224 + $0xcb0] sm:$0xff]
        %v1195 = vld [vmem:[%s224 + $0xcb8] sm:$0xff]
        %v1196 = vld [vmem:[%s224 + $0xcc0] sm:$0xff]
        %v1197 = vld [vmem:[%s224 + $0xcc8] sm:$0xff]
        %v1198 = vld [vmem:[%s224 + $0xcd0] sm:$0xff]
        %v1199 = vld [vmem:[%s224 + $0xcd8] sm:$0xff]
        %v1200 = vld [vmem:[%s224 + $0xce0] sm:$0xff]
        %v1201 = vld [vmem:[%s224 + $0xce8] sm:$0xff]
        %v1202 = vld [vmem:[%s224 + $0xcf0] sm:$0xff]
        %v1203 = vld [vmem:[%s224 + $0xcf8] sm:$0xff]
        %v1204 = vld [vmem:[%s224 + $0xd00] sm:$0xff]
        %v1205 = vld [vmem:[%s224 + $0xd08] sm:$0xff]
        %v1206 = vld [vmem:[%s224 + $0xd10] sm:$0xff]
        %v1207 = vld [vmem:[%s224 + $0xd18] sm:$0xff]
        %v1208 = vld [vmem:[%s224 + $0xd20] sm:$0xff]
        %v1209 = vld [vmem:[%s224 + $0xd28] sm:$0xff]
        %v1210 = vld [vmem:[%s224 + $0xd30] sm:$0xff]
        %v1211 = vld [vmem:[%s224 + $0xd38] sm:$0xff]
        %v1212 = vld [vmem:[%s224 + $0xd40] sm:$0xff]
        %v1213 = vld [vmem:[%s224 + $0xd48] sm:$0xff]
        %v1214 = vld [vmem:[%s224 + $0xd50] sm:$0xff]
        %v1215 = vld [vmem:[%s224 + $0xd58] sm:$0xff]
        %v1216 = vld [vmem:[%s224 + $0xd60] sm:$0xff]
        %v1217 = vld [vmem:[%s224 + $0xd68] sm:$0xff]
        %v1218 = vld [vmem:[%s224 + $0xd70] sm:$0xff]
        %v1219 = vld [vmem:[%s224 + $0xd78] sm:$0xff]
        %v1220 = vld [vmem:[%s224 + $0xd80] sm:$0xff]
        %v1221 = vld [vmem:[%s224 + $0xd88] sm:$0xff]
        %v1222 = vld [vmem:[%s224 + $0xd90] sm:$0xff]
        %v1223 = vld [vmem:[%s224 + $0xd98] sm:$0xff]
        %v1224 = vld [vmem:[%s224 + $0xda0] sm:$0xff]
        %v1225 = vld [vmem:[%s224 + $0xda8] sm:$0xff]
        %v1226 = vld [vmem:[%s224 + $0xdb0] sm:$0xff]
        %v1227 = vld [vmem:[%s224 + $0xdb8] sm:$0xff]
        %v1228 = vld [vmem:[%s224 + $0xdc0] sm:$0xff]
        %v1229 = vld [vmem:[%s224 + $0xdc8] sm:$0xff]
        %v1230 = vld [vmem:[%s224 + $0xdd0] sm:$0xff]
        %v1231 = vld [vmem:[%s224 + $0xdd8] sm:$0xff]
        %v1232 = vld [vmem:[%s224 + $0xde0] sm:$0xff]
        %v1233 = vld [vmem:[%s224 + $0xde8] sm:$0xff]
        %v1234 = vld [vmem:[%s224 + $0xdf0] sm:$0xff]
        %v1235 = vld [vmem:[%s224 + $0xdf8] sm:$0xff]
        %v1236 = vld [vmem:[%s224 + $0xe00] sm:$0xff]
        %v1237 = vld [vmem:[%s224 + $0xe08] sm:$0xff]
        %v1238 = vld [vmem:[%s224 + $0xe10] sm:$0xff]
        %v1239 = vld [vmem:[%s224 + $0xe18] sm:$0xff]
        %v1240 = vld [vmem:[%s224 + $0xe20] sm:$0xff]
        %v1241 = vld [vmem:[%s224 + $0xe28] sm:$0xff]
        %v1242 = vld [vmem:[%s224 + $0xe30] sm:$0xff]
        %v1243 = vld [vmem:[%s224 + $0xe38] sm:$0xff]
        %v1244 = vld [vmem:[%s224 + $0xe40] sm:$0xff]
        %v1245 = vld [vmem:[%s224 + $0xe48] sm:$0xff]
        %v1246 = vld [vmem:[%s224 + $0xe50] sm:$0xff]
        %v1247 = vld [vmem:[%s224 + $0xe58] sm:$0xff]
        %v1248 = vld [vmem:[%s224 + $0xe60] sm:$0xff]
        %v1249 = vld [vmem:[%s224 + $0xe68] sm:$0xff]
        %v1250 = vld [vmem:[%s224 + $0xe70] sm:$0xff]
        %v1251 = vld [vmem:[%s224 + $0xe78] sm:$0xff]
        %v1252 = vld [vmem:[%s224 + $0xe80] sm:$0xff]
        %v1253 = vld [vmem:[%s224 + $0xe88] sm:$0xff]
        %v1254 = vld [vmem:[%s224 + $0xe90] sm:$0xff]
        %v1255 = vld [vmem:[%s224 + $0xe98] sm:$0xff]
        %v1256 = vld [vmem:[%s224 + $0xea0] sm:$0xff]
        %v1257 = vld [vmem:[%s224 + $0xea8] sm:$0xff]
        %v1258 = vld [vmem:[%s224 + $0xeb0] sm:$0xff]
        %v1259 = vld [vmem:[%s224 + $0xeb8] sm:$0xff]
        %v1260 = vld [vmem:[%s224 + $0xec0] sm:$0xff]
        %v1261 = vld [vmem:[%s224 + $0xec8] sm:$0xff]
        %v1262 = vld [vmem:[%s224 + $0xed0] sm:$0xff]
        %v1263 = vld [vmem:[%s224 + $0xed8] sm:$0xff]
        %v1264 = vld [vmem:[%s224 + $0xee0] sm:$0xff]
        %v1265 = vld [vmem:[%s224 + $0xee8] sm:$0xff]
        %v1266 = vld [vmem:[%s224 + $0xef0] sm:$0xff]
        %v1267 = vld [vmem:[%s224 + $0xef8] sm:$0xff]
        %v1268 = vld [vmem:[%s224 + $0xf00] sm:$0xff]
        %v1269 = vld [vmem:[%s224 + $0xf08] sm:$0xff]
        %v1270 = vld [vmem:[%s224 + $0xf10] sm:$0xff]
        %v1271 = vld [vmem:[%s224 + $0xf18] sm:$0xff]
        %v1272 = vld [vmem:[%s224 + $0xf20] sm:$0xff]
        %v1273 = vld [vmem:[%s224 + $0xf28] sm:$0xff]
        %v1274 = vld [vmem:[%s224 + $0xf30] sm:$0xff]
        %v1275 = vld [vmem:[%s224 + $0xf38] sm:$0xff]
        %v1276 = vld [vmem:[%s224 + $0xf40] sm:$0xff]
        %v1277 = vld [vmem:[%s224 + $0xf48] sm:$0xff]
        %v1278 = vld [vmem:[%s224 + $0xf50] sm:$0xff]
        %v1279 = vld [vmem:[%s224 + $0xf58] sm:$0xff]
        %v1280 = vld [vmem:[%s224 + $0xf60] sm:$0xff]
        %v1281 = vld [vmem:[%s224 + $0xf68] sm:$0xff]
        %v1282 = vld [vmem:[%s224 + $0xf70] sm:$0xff]
        %v1283 = vld [vmem:[%s224 + $0xf78] sm:$0xff]
        %v1284 = vld [vmem:[%s224 + $0xf80] sm:$0xff]
        %v1285 = vld [vmem:[%s224 + $0xf88] sm:$0xff]
        %v1286 = vld [vmem:[%s224 + $0xf90] sm:$0xff]
        %v1287 = vld [vmem:[%s224 + $0xf98] sm:$0xff]
        %v1288 = vld [vmem:[%s224 + $0xfa0] sm:$0xff]
        %v1289 = vld [vmem:[%s224 + $0xfa8] sm:$0xff]
        %v1290 = vld [vmem:[%s224 + $0xfb0] sm:$0xff]
        %v1291 = vld [vmem:[%s224 + $0xfb8] sm:$0xff]
        %v1292 = vld [vmem:[%s224 + $0xfc0] sm:$0xff]
        %v1293 = vld [vmem:[%s224 + $0xfc8] sm:$0xff]
        %v1294 = vld [vmem:[%s224 + $0xfd0] sm:$0xff]
        %v1295 = vld [vmem:[%s224 + $0xfd8] sm:$0xff]
        %v1296 = vld [vmem:[%s224 + $0xfe0] sm:$0xff]
        %v1297 = vld [vmem:[%s224 + $0xfe8] sm:$0xff]
        %v1298 = vld [vmem:[%s224 + $0xff0] sm:$0xff]
        %v1299 = vld [vmem:[%s224 + $0xff8] sm:$0xff]
        %v1300 = vsub.f32 %v276, %v788
        %v1301 = vsub.f32 %v277, %v789
        %v1302 = vsub.f32 %v278, %v790
        %v1303 = vsub.f32 %v279, %v791
        %v1304 = vsub.f32 %v280, %v792
        %v1305 = vsub.f32 %v281, %v793
        %v1306 = vsub.f32 %v282, %v794
        %v1307 = vsub.f32 %v283, %v795
        %v1308 = vsub.f32 %v284, %v796
        %v1309 = vsub.f32 %v285, %v797
        %v1310 = vsub.f32 %v286, %v798
        %v1311 = vsub.f32 %v287, %v799
        %v1312 = vsub.f32 %v288, %v800
        %v1313 = vsub.f32 %v289, %v801
        %v1314 = vsub.f32 %v290, %v802
        %v1315 = vsub.f32 %v291, %v803
        %v1316 = vsub.f32 %v292, %v804
        %v1317 = vsub.f32 %v293, %v805
        %v1318 = vsub.f32 %v294, %v806
        %v1319 = vsub.f32 %v295, %v807
        %v1320 = vsub.f32 %v296, %v808
        %v1321 = vsub.f32 %v297, %v809
        %v1322 = vsub.f32 %v298, %v810
        %v1323 = vsub.f32 %v299, %v811
        %v1324 = vsub.f32 %v300, %v812
        %v1325 = vsub.f32 %v301, %v813
        %v1326 = vsub.f32 %v302, %v814
        %v1327 = vsub.f32 %v303, %v815
        %v1328 = vsub.f32 %v304, %v816
        %v1329 = vsub.f32 %v305, %v817
        %v1330 = vsub.f32 %v306, %v818
        %v1331 = vsub.f32 %v307, %v819
        %v1332 = vsub.f32 %v308, %v820
        %v1333 = vsub.f32 %v309, %v821
        %v1334 = vsub.f32 %v310, %v822
        %v1335 = vsub.f32 %v311, %v823
        %v1336 = vsub.f32 %v312, %v824
        %v1337 = vsub.f32 %v313, %v825
        %v1338 = vsub.f32 %v314, %v826
        %v1339 = vsub.f32 %v315, %v827
        %v1340 = vsub.f32 %v316, %v828
        %v1341 = vsub.f32 %v317, %v829
        %v1342 = vsub.f32 %v318, %v830
        %v1343 = vsub.f32 %v319, %v831
        %v1344 = vsub.f32 %v320, %v832
        %v1345 = vsub.f32 %v321, %v833
        %v1346 = vsub.f32 %v322, %v834
        %v1347 = vsub.f32 %v323, %v835
        %v1348 = vsub.f32 %v324, %v836
        %v1349 = vsub.f32 %v325, %v837
        %v1350 = vsub.f32 %v326, %v838
        %v1351 = vsub.f32 %v327, %v839
        %v1352 = vsub.f32 %v328, %v840
        %v1353 = vsub.f32 %v329, %v841
        %v1354 = vsub.f32 %v330, %v842
        %v1355 = vsub.f32 %v331, %v843
        %v1356 = vsub.f32 %v332, %v844
        %v1357 = vsub.f32 %v333, %v845
        %v1358 = vsub.f32 %v334, %v846
        %v1359 = vsub.f32 %v335, %v847
        %v1360 = vsub.f32 %v336, %v848
        %v1361 = vsub.f32 %v337, %v849
        %v1362 = vsub.f32 %v338, %v850
        %v1363 = vsub.f32 %v339, %v851
        %v1364 = vsub.f32 %v340, %v852
        %v1365 = vsub.f32 %v341, %v853
        %v1366 = vsub.f32 %v342, %v854
        %v1367 = vsub.f32 %v343, %v855
        %v1368 = vsub.f32 %v344, %v856
        %v1369 = vsub.f32 %v345, %v857
        %v1370 = vsub.f32 %v346, %v858
        %v1371 = vsub.f32 %v347, %v859
        %v1372 = vsub.f32 %v348, %v860
        %v1373 = vsub.f32 %v349, %v861
        %v1374 = vsub.f32 %v350, %v862
        %v1375 = vsub.f32 %v351, %v863
        %v1376 = vsub.f32 %v352, %v864
        %v1377 = vsub.f32 %v353, %v865
        %v1378 = vsub.f32 %v354, %v866
        %v1379 = vsub.f32 %v355, %v867
        %v1380 = vsub.f32 %v356, %v868
        %v1381 = vsub.f32 %v357, %v869
        %v1382 = vsub.f32 %v358, %v870
        %v1383 = vsub.f32 %v359, %v871
        %v1384 = vsub.f32 %v360, %v872
        %v1385 = vsub.f32 %v361, %v873
        %v1386 = vsub.f32 %v362, %v874
        %v1387 = vsub.f32 %v363, %v875
        %v1388 = vsub.f32 %v364, %v876
        %v1389 = vsub.f32 %v365, %v877
        %v1390 = vsub.f32 %v366, %v878
        %v1391 = vsub.f32 %v367, %v879
        %v1392 = vsub.f32 %v368, %v880
        %v1393 = vsub.f32 %v369, %v881
        %v1394 = vsub.f32 %v370, %v882
        %v1395 = vsub.f32 %v371, %v883
        %v1396 = vsub.f32 %v372, %v884
        %v1397 = vsub.f32 %v373, %v885
        %v1398 = vsub.f32 %v374, %v886
        %v1399 = vsub.f32 %v375, %v887
        %v1400 = vsub.f32 %v376, %v888
        %v1401 = vsub.f32 %v377, %v889
        %v1402 = vsub.f32 %v378, %v890
        %v1403 = vsub.f32 %v379, %v891
        %v1404 = vsub.f32 %v380, %v892
        %v1405 = vsub.f32 %v381, %v893
        %v1406 = vsub.f32 %v382, %v894
        %v1407 = vsub.f32 %v383, %v895
        %v1408 = vsub.f32 %v384, %v896
        %v1409 = vsub.f32 %v385, %v897
        %v1410 = vsub.f32 %v386, %v898
        %v1411 = vsub.f32 %v387, %v899
        %v1412 = vsub.f32 %v388, %v900
        %v1413 = vsub.f32 %v389, %v901
        %v1414 = vsub.f32 %v390, %v902
        %v1415 = vsub.f32 %v391, %v903
        %v1416 = vsub.f32 %v392, %v904
        %v1417 = vsub.f32 %v393, %v905
        %v1418 = vsub.f32 %v394, %v906
        %v1419 = vsub.f32 %v395, %v907
        %v1420 = vsub.f32 %v396, %v908
        %v1421 = vsub.f32 %v397, %v909
        %v1422 = vsub.f32 %v398, %v910
        %v1423 = vsub.f32 %v399, %v911
        %v1424 = vsub.f32 %v400, %v912
        %v1425 = vsub.f32 %v401, %v913
        %v1426 = vsub.f32 %v402, %v914
        %v1427 = vsub.f32 %v403, %v915
        %v1428 = vsub.f32 %v404, %v916
        %v1429 = vsub.f32 %v405, %v917
        %v1430 = vsub.f32 %v406, %v918
        %v1431 = vsub.f32 %v407, %v919
        %v1432 = vsub.f32 %v408, %v920
        %v1433 = vsub.f32 %v409, %v921
        %v1434 = vsub.f32 %v410, %v922
        %v1435 = vsub.f32 %v411, %v923
        %v1436 = vsub.f32 %v412, %v924
        %v1437 = vsub.f32 %v413, %v925
        %v1438 = vsub.f32 %v414, %v926
        %v1439 = vsub.f32 %v415, %v927
        %v1440 = vsub.f32 %v416, %v928
        %v1441 = vsub.f32 %v417, %v929
        %v1442 = vsub.f32 %v418, %v930
        %v1443 = vsub.f32 %v419, %v931
        %v1444 = vsub.f32 %v420, %v932
        %v1445 = vsub.f32 %v421, %v933
        %v1446 = vsub.f32 %v422, %v934
        %v1447 = vsub.f32 %v423, %v935
        %v1448 = vsub.f32 %v424, %v936
        %v1449 = vsub.f32 %v425, %v937
        %v1450 = vsub.f32 %v426, %v938
        %v1451 = vsub.f32 %v427, %v939
        %v1452 = vsub.f32 %v428, %v940
        %v1453 = vsub.f32 %v429, %v941
        %v1454 = vsub.f32 %v430, %v942
        %v1455 = vsub.f32 %v431, %v943
        %v1456 = vsub.f32 %v432, %v944
        %v1457 = vsub.f32 %v433, %v945
        %v1458 = vsub.f32 %v434, %v946
        %v1459 = vsub.f32 %v435, %v947
        %v1460 = vsub.f32 %v436, %v948
        %v1461 = vsub.f32 %v437, %v949
        %v1462 = vsub.f32 %v438, %v950
        %v1463 = vsub.f32 %v439, %v951
        %v1464 = vsub.f32 %v440, %v952
        %v1465 = vsub.f32 %v441, %v953
        %v1466 = vsub.f32 %v442, %v954
        %v1467 = vsub.f32 %v443, %v955
        %v1468 = vsub.f32 %v444, %v956
        %v1469 = vsub.f32 %v445, %v957
        %v1470 = vsub.f32 %v446, %v958
        %v1471 = vsub.f32 %v447, %v959
        %v1472 = vsub.f32 %v448, %v960
        %v1473 = vsub.f32 %v449, %v961
        %v1474 = vsub.f32 %v450, %v962
        %v1475 = vsub.f32 %v451, %v963
        %v1476 = vsub.f32 %v452, %v964
        %v1477 = vsub.f32 %v453, %v965
        %v1478 = vsub.f32 %v454, %v966
        %v1479 = vsub.f32 %v455, %v967
        %v1480 = vsub.f32 %v456, %v968
        %v1481 = vsub.f32 %v457, %v969
        %v1482 = vsub.f32 %v458, %v970
        %v1483 = vsub.f32 %v459, %v971
        %v1484 = vsub.f32 %v460, %v972
        %v1485 = vsub.f32 %v461, %v973
        %v1486 = vsub.f32 %v462, %v974
        %v1487 = vsub.f32 %v463, %v975
        %v1488 = vsub.f32 %v464, %v976
        %v1489 = vsub.f32 %v465, %v977
        %v1490 = vsub.f32 %v466, %v978
        %v1491 = vsub.f32 %v467, %v979
        %v1492 = vsub.f32 %v468, %v980
        %v1493 = vsub.f32 %v469, %v981
        %v1494 = vsub.f32 %v470, %v982
        %v1495 = vsub.f32 %v471, %v983
        %v1496 = vsub.f32 %v472, %v984
        %v1497 = vsub.f32 %v473, %v985
        %v1498 = vsub.f32 %v474, %v986
        %v1499 = vsub.f32 %v475, %v987
        %v1500 = vsub.f32 %v476, %v988
        %v1501 = vsub.f32 %v477, %v989
        %v1502 = vsub.f32 %v478, %v990
        %v1503 = vsub.f32 %v479, %v991
        %v1504 = vsub.f32 %v480, %v992
        %v1505 = vsub.f32 %v481, %v993
        %v1506 = vsub.f32 %v482, %v994
        %v1507 = vsub.f32 %v483, %v995
        %v1508 = vsub.f32 %v484, %v996
        %v1509 = vsub.f32 %v485, %v997
        %v1510 = vsub.f32 %v486, %v998
        %v1511 = vsub.f32 %v487, %v999
        %v1512 = vsub.f32 %v488, %v1000
        %v1513 = vsub.f32 %v489, %v1001
        %v1514 = vsub.f32 %v490, %v1002
        %v1515 = vsub.f32 %v491, %v1003
        %v1516 = vsub.f32 %v492, %v1004
        %v1517 = vsub.f32 %v493, %v1005
        %v1518 = vsub.f32 %v494, %v1006
        %v1519 = vsub.f32 %v495, %v1007
        %v1520 = vsub.f32 %v496, %v1008
        %v1521 = vsub.f32 %v497, %v1009
        %v1522 = vsub.f32 %v498, %v1010
        %v1523 = vsub.f32 %v499, %v1011
        %v1524 = vsub.f32 %v500, %v1012
        %v1525 = vsub.f32 %v501, %v1013
        %v1526 = vsub.f32 %v502, %v1014
        %v1527 = vsub.f32 %v503, %v1015
        %v1528 = vsub.f32 %v504, %v1016
        %v1529 = vsub.f32 %v505, %v1017
        %v1530 = vsub.f32 %v506, %v1018
        %v1531 = vsub.f32 %v507, %v1019
        %v1532 = vsub.f32 %v508, %v1020
        %v1533 = vsub.f32 %v509, %v1021
        %v1534 = vsub.f32 %v510, %v1022
        %v1535 = vsub.f32 %v511, %v1023
        %v1536 = vsub.f32 %v512, %v1024
        %v1537 = vsub.f32 %v513, %v1025
        %v1538 = vsub.f32 %v514, %v1026
        %v1539 = vsub.f32 %v515, %v1027
        %v1540 = vsub.f32 %v516, %v1028
        %v1541 = vsub.f32 %v517, %v1029
        %v1542 = vsub.f32 %v518, %v1030
        %v1543 = vsub.f32 %v519, %v1031
        %v1544 = vsub.f32 %v520, %v1032
        %v1545 = vsub.f32 %v521, %v1033
        %v1546 = vsub.f32 %v522, %v1034
        %v1547 = vsub.f32 %v523, %v1035
        %v1548 = vsub.f32 %v524, %v1036
        %v1549 = vsub.f32 %v525, %v1037
        %v1550 = vsub.f32 %v526, %v1038
        %v1551 = vsub.f32 %v527, %v1039
        %v1552 = vsub.f32 %v528, %v1040
        %v1553 = vsub.f32 %v529, %v1041
        %v1554 = vsub.f32 %v530, %v1042
        %v1555 = vsub.f32 %v531, %v1043
        %v1556 = vsub.f32 %v532, %v1044
        %v1557 = vsub.f32 %v533, %v1045
        %v1558 = vsub.f32 %v534, %v1046
        %v1559 = vsub.f32 %v535, %v1047
        %v1560 = vsub.f32 %v536, %v1048
        %v1561 = vsub.f32 %v537, %v1049
        %v1562 = vsub.f32 %v538, %v1050
        %v1563 = vsub.f32 %v539, %v1051
        %v1564 = vsub.f32 %v540, %v1052
        %v1565 = vsub.f32 %v541, %v1053
        %v1566 = vsub.f32 %v542, %v1054
        %v1567 = vsub.f32 %v543, %v1055
        %v1568 = vsub.f32 %v544, %v1056
        %v1569 = vsub.f32 %v545, %v1057
        %v1570 = vsub.f32 %v546, %v1058
        %v1571 = vsub.f32 %v547, %v1059
        %v1572 = vsub.f32 %v548, %v1060
        %v1573 = vsub.f32 %v549, %v1061
        %v1574 = vsub.f32 %v550, %v1062
        %v1575 = vsub.f32 %v551, %v1063
        %v1576 = vsub.f32 %v552, %v1064
        %v1577 = vsub.f32 %v553, %v1065
        %v1578 = vsub.f32 %v554, %v1066
        %v1579 = vsub.f32 %v555, %v1067
        %v1580 = vsub.f32 %v556, %v1068
        %v1581 = vsub.f32 %v557, %v1069
        %v1582 = vsub.f32 %v558, %v1070
        %v1583 = vsub.f32 %v559, %v1071
        %v1584 = vsub.f32 %v560, %v1072
        %v1585 = vsub.f32 %v561, %v1073
        %v1586 = vsub.f32 %v562, %v1074
        %v1587 = vsub.f32 %v563, %v1075
        %v1588 = vsub.f32 %v564, %v1076
        %v1589 = vsub.f32 %v565, %v1077
        %v1590 = vsub.f32 %v566, %v1078
        %v1591 = vsub.f32 %v567, %v1079
        %v1592 = vsub.f32 %v568, %v1080
        %v1593 = vsub.f32 %v569, %v1081
        %v1594 = vsub.f32 %v570, %v1082
        %v1595 = vsub.f32 %v571, %v1083
        %v1596 = vsub.f32 %v572, %v1084
        %v1597 = vsub.f32 %v573, %v1085
        %v1598 = vsub.f32 %v574, %v1086
        %v1599 = vsub.f32 %v575, %v1087
        %v1600 = vsub.f32 %v576, %v1088
        %v1601 = vsub.f32 %v577, %v1089
        %v1602 = vsub.f32 %v578, %v1090
        %v1603 = vsub.f32 %v579, %v1091
        %v1604 = vsub.f32 %v580, %v1092
        %v1605 = vsub.f32 %v581, %v1093
        %v1606 = vsub.f32 %v582, %v1094
        %v1607 = vsub.f32 %v583, %v1095
        %v1608 = vsub.f32 %v584, %v1096
        %v1609 = vsub.f32 %v585, %v1097
        %v1610 = vsub.f32 %v586, %v1098
        %v1611 = vsub.f32 %v587, %v1099
        %v1612 = vsub.f32 %v588, %v1100
        %v1613 = vsub.f32 %v589, %v1101
        %v1614 = vsub.f32 %v590, %v1102
        %v1615 = vsub.f32 %v591, %v1103
        %v1616 = vsub.f32 %v592, %v1104
        %v1617 = vsub.f32 %v593, %v1105
        %v1618 = vsub.f32 %v594, %v1106
        %v1619 = vsub.f32 %v595, %v1107
        %v1620 = vsub.f32 %v596, %v1108
        %v1621 = vsub.f32 %v597, %v1109
        %v1622 = vsub.f32 %v598, %v1110
        %v1623 = vsub.f32 %v599, %v1111
        %v1624 = vsub.f32 %v600, %v1112
        %v1625 = vsub.f32 %v601, %v1113
        %v1626 = vsub.f32 %v602, %v1114
        %v1627 = vsub.f32 %v603, %v1115
        %v1628 = vsub.f32 %v604, %v1116
        %v1629 = vsub.f32 %v605, %v1117
        %v1630 = vsub.f32 %v606, %v1118
        %v1631 = vsub.f32 %v607, %v1119
        %v1632 = vsub.f32 %v608, %v1120
        %v1633 = vsub.f32 %v609, %v1121
        %v1634 = vsub.f32 %v610, %v1122
        %v1635 = vsub.f32 %v611, %v1123
        %v1636 = vsub.f32 %v612, %v1124
        %v1637 = vsub.f32 %v613, %v1125
        %v1638 = vsub.f32 %v614, %v1126
        %v1639 = vsub.f32 %v615, %v1127
        %v1640 = vsub.f32 %v616, %v1128
        %v1641 = vsub.f32 %v617, %v1129
        %v1642 = vsub.f32 %v618, %v1130
        %v1643 = vsub.f32 %v619, %v1131
        %v1644 = vsub.f32 %v620, %v1132
        %v1645 = vsub.f32 %v621, %v1133
        %v1646 = vsub.f32 %v622, %v1134
        %v1647 = vsub.f32 %v623, %v1135
        %v1648 = vsub.f32 %v624, %v1136
        %v1649 = vsub.f32 %v625, %v1137
        %v1650 = vsub.f32 %v626, %v1138
        %v1651 = vsub.f32 %v627, %v1139
        %v1652 = vsub.f32 %v628, %v1140
        %v1653 = vsub.f32 %v629, %v1141
        %v1654 = vsub.f32 %v630, %v1142
        %v1655 = vsub.f32 %v631, %v1143
        %v1656 = vsub.f32 %v632, %v1144
        %v1657 = vsub.f32 %v633, %v1145
        %v1658 = vsub.f32 %v634, %v1146
        %v1659 = vsub.f32 %v635, %v1147
        %v1660 = vsub.f32 %v636, %v1148
        %v1661 = vsub.f32 %v637, %v1149
        %v1662 = vsub.f32 %v638, %v1150
        %v1663 = vsub.f32 %v639, %v1151
        %v1664 = vsub.f32 %v640, %v1152
        %v1665 = vsub.f32 %v641, %v1153
        %v1666 = vsub.f32 %v642, %v1154
        %v1667 = vsub.f32 %v643, %v1155
        %v1668 = vsub.f32 %v644, %v1156
        %v1669 = vsub.f32 %v645, %v1157
        %v1670 = vsub.f32 %v646, %v1158
        %v1671 = vsub.f32 %v647, %v1159
        %v1672 = vsub.f32 %v648, %v1160
        %v1673 = vsub.f32 %v649, %v1161
        %v1674 = vsub.f32 %v650, %v1162
        %v1675 = vsub.f32 %v651, %v1163
        %v1676 = vsub.f32 %v652, %v1164
        %v1677 = vsub.f32 %v653, %v1165
        %v1678 = vsub.f32 %v654, %v1166
        %v1679 = vsub.f32 %v655, %v1167
        %v1680 = vsub.f32 %v656, %v1168
        %v1681 = vsub.f32 %v657, %v1169
        %v1682 = vsub.f32 %v658, %v1170
        %v1683 = vsub.f32 %v659, %v1171
        %v1684 = vsub.f32 %v660, %v1172
        %v1685 = vsub.f32 %v661, %v1173
        %v1686 = vsub.f32 %v662, %v1174
        %v1687 = vsub.f32 %v663, %v1175
        %v1688 = vsub.f32 %v664, %v1176
        %v1689 = vsub.f32 %v665, %v1177
        %v1690 = vsub.f32 %v666, %v1178
        %v1691 = vsub.f32 %v667, %v1179
        %v1692 = vsub.f32 %v668, %v1180
        %v1693 = vsub.f32 %v669, %v1181
        %v1694 = vsub.f32 %v670, %v1182
        %v1695 = vsub.f32 %v671, %v1183
        %v1696 = vsub.f32 %v672, %v1184
        %v1697 = vsub.f32 %v673, %v1185
        %v1698 = vsub.f32 %v674, %v1186
        %v1699 = vsub.f32 %v675, %v1187
        %v1700 = vsub.f32 %v676, %v1188
        %v1701 = vsub.f32 %v677, %v1189
        %v1702 = vsub.f32 %v678, %v1190
        %v1703 = vsub.f32 %v679, %v1191
        %v1704 = vsub.f32 %v680, %v1192
        %v1705 = vsub.f32 %v681, %v1193
        %v1706 = vsub.f32 %v682, %v1194
        %v1707 = vsub.f32 %v683, %v1195
        %v1708 = vsub.f32 %v684, %v1196
        %v1709 = vsub.f32 %v685, %v1197
        %v1710 = vsub.f32 %v686, %v1198
        %v1711 = vsub.f32 %v687, %v1199
        %v1712 = vsub.f32 %v688, %v1200
        %v1713 = vsub.f32 %v689, %v1201
        %v1714 = vsub.f32 %v690, %v1202
        %v1715 = vsub.f32 %v691, %v1203
        %v1716 = vsub.f32 %v692, %v1204
        %v1717 = vsub.f32 %v693, %v1205
        %v1718 = vsub.f32 %v694, %v1206
        %v1719 = vsub.f32 %v695, %v1207
        %v1720 = vsub.f32 %v696, %v1208
        %v1721 = vsub.f32 %v697, %v1209
        %v1722 = vsub.f32 %v698, %v1210
        %v1723 = vsub.f32 %v699, %v1211
        %v1724 = vsub.f32 %v700, %v1212
        %v1725 = vsub.f32 %v701, %v1213
        %v1726 = vsub.f32 %v702, %v1214
        %v1727 = vsub.f32 %v703, %v1215
        %v1728 = vsub.f32 %v704, %v1216
        %v1729 = vsub.f32 %v705, %v1217
        %v1730 = vsub.f32 %v706, %v1218
        %v1731 = vsub.f32 %v707, %v1219
        %v1732 = vsub.f32 %v708, %v1220
        %v1733 = vsub.f32 %v709, %v1221
        %v1734 = vsub.f32 %v710, %v1222
        %v1735 = vsub.f32 %v711, %v1223
        %v1736 = vsub.f32 %v712, %v1224
        %v1737 = vsub.f32 %v713, %v1225
        %v1738 = vsub.f32 %v714, %v1226
        %v1739 = vsub.f32 %v715, %v1227
        %v1740 = vsub.f32 %v716, %v1228
        %v1741 = vsub.f32 %v717, %v1229
        %v1742 = vsub.f32 %v718, %v1230
        %v1743 = vsub.f32 %v719, %v1231
        %v1744 = vsub.f32 %v720, %v1232
        %v1745 = vsub.f32 %v721, %v1233
        %v1746 = vsub.f32 %v722, %v1234
        %v1747 = vsub.f32 %v723, %v1235
        %v1748 = vsub.f32 %v724, %v1236
        %v1749 = vsub.f32 %v725, %v1237
        %v1750 = vsub.f32 %v726, %v1238
        %v1751 = vsub.f32 %v727, %v1239
        %v1752 = vsub.f32 %v728, %v1240
        %v1753 = vsub.f32 %v729, %v1241
        %v1754 = vsub.f32 %v730, %v1242
        %v1755 = vsub.f32 %v731, %v1243
        %v1756 = vsub.f32 %v732, %v1244
        %v1757 = vsub.f32 %v733, %v1245
        %v1758 = vsub.f32 %v734, %v1246
        %v1759 = vsub.f32 %v735, %v1247
        %v1760 = vsub.f32 %v736, %v1248
        %v1761 = vsub.f32 %v737, %v1249
        %v1762 = vsub.f32 %v738, %v1250
        %v1763 = vsub.f32 %v739, %v1251
        %v1764 = vsub.f32 %v740, %v1252
        %v1765 = vsub.f32 %v741, %v1253
        %v1766 = vsub.f32 %v742, %v1254
        %v1767 = vsub.f32 %v743, %v1255
        %v1768 = vsub.f32 %v744, %v1256
        %v1769 = vsub.f32 %v745, %v1257
        %v1770 = vsub.f32 %v746, %v1258
        %v1771 = vsub.f32 %v747, %v1259
        %v1772 = vsub.f32 %v748, %v1260
        %v1773 = vsub.f32 %v749, %v1261
        %v1774 = vsub.f32 %v750, %v1262
        %v1775 = vsub.f32 %v751, %v1263
        %v1776 = vsub.f32 %v752, %v1264
        %v1777 = vsub.f32 %v753, %v1265
        %v1778 = vsub.f32 %v754, %v1266
        %v1779 = vsub.f32 %v755, %v1267
        %v1780 = vsub.f32 %v756, %v1268
        %v1781 = vsub.f32 %v757, %v1269
        %v1782 = vsub.f32 %v758, %v1270
        %v1783 = vsub.f32 %v759, %v1271
        %v1784 = vsub.f32 %v760, %v1272
        %v1785 = vsub.f32 %v761, %v1273
        %v1786 = vsub.f32 %v762, %v1274
        %v1787 = vsub.f32 %v763, %v1275
        %v1788 = vsub.f32 %v764, %v1276
        %v1789 = vsub.f32 %v765, %v1277
        %v1790 = vsub.f32 %v766, %v1278
        %v1791 = vsub.f32 %v767, %v1279
        %v1792 = vsub.f32 %v768, %v1280
        %v1793 = vsub.f32 %v769, %v1281
        %v1794 = vsub.f32 %v770, %v1282
        %v1795 = vsub.f32 %v771, %v1283
        %v1796 = vsub.f32 %v772, %v1284
        %v1797 = vsub.f32 %v773, %v1285
        %v1798 = vsub.f32 %v774, %v1286
        %v1799 = vsub.f32 %v775, %v1287
        %v1800 = vsub.f32 %v776, %v1288
        %v1801 = vsub.f32 %v777, %v1289
        %v1802 = vsub.f32 %v778, %v1290
        %v1803 = vsub.f32 %v779, %v1291
        %v1804 = vsub.f32 %v780, %v1292
        %v1805 = vsub.f32 %v781, %v1293
        %v1806 = vsub.f32 %v782, %v1294
        %v1807 = vsub.f32 %v783, %v1295
        %v1808 = vsub.f32 %v784, %v1296
        %v1809 = vsub.f32 %v785, %v1297
        %v1810 = vsub.f32 %v786, %v1298
        %v1811 = vsub.f32 %v787, %v1299
        %v1812 = vand.u32 2147483647, %v1300
        %v1813 = vand.u32 2147483647, %v1301
        %v1814 = vand.u32 2147483647, %v1302
        %v1815 = vand.u32 2147483647, %v1303
        %v1816 = vand.u32 2147483647, %v1304
        %v1817 = vand.u32 2147483647, %v1305
        %v1818 = vand.u32 2147483647, %v1306
        %v1819 = vand.u32 2147483647, %v1307
        %v1820 = vand.u32 2147483647, %v1308
        %v1821 = vand.u32 2147483647, %v1309
        %v1822 = vand.u32 2147483647, %v1310
        %v1823 = vand.u32 2147483647, %v1311
        %v1824 = vand.u32 2147483647, %v1312
        %v1825 = vand.u32 2147483647, %v1313
        %v1826 = vand.u32 2147483647, %v1314
        %v1827 = vand.u32 2147483647, %v1315
        %v1828 = vand.u32 2147483647, %v1316
        %v1829 = vand.u32 2147483647, %v1317
        %v1830 = vand.u32 2147483647, %v1318
        %v1831 = vand.u32 2147483647, %v1319
        %v1832 = vand.u32 2147483647, %v1320
        %v1833 = vand.u32 2147483647, %v1321
        %v1834 = vand.u32 2147483647, %v1322
        %v1835 = vand.u32 2147483647, %v1323
        %v1836 = vand.u32 2147483647, %v1324
        %v1837 = vand.u32 2147483647, %v1325
        %v1838 = vand.u32 2147483647, %v1326
        %v1839 = vand.u32 2147483647, %v1327
        %v1840 = vand.u32 2147483647, %v1328
        %v1841 = vand.u32 2147483647, %v1329
        %v1842 = vand.u32 2147483647, %v1330
        %v1843 = vand.u32 2147483647, %v1331
        %v1844 = vand.u32 2147483647, %v1332
        %v1845 = vand.u32 2147483647, %v1333
        %v1846 = vand.u32 2147483647, %v1334
        %v1847 = vand.u32 2147483647, %v1335
        %v1848 = vand.u32 2147483647, %v1336
        %v1849 = vand.u32 2147483647, %v1337
        %v1850 = vand.u32 2147483647, %v1338
        %v1851 = vand.u32 2147483647, %v1339
        %v1852 = vand.u32 2147483647, %v1340
        %v1853 = vand.u32 2147483647, %v1341
        %v1854 = vand.u32 2147483647, %v1342
        %v1855 = vand.u32 2147483647, %v1343
        %v1856 = vand.u32 2147483647, %v1344
        %v1857 = vand.u32 2147483647, %v1345
        %v1858 = vand.u32 2147483647, %v1346
        %v1859 = vand.u32 2147483647, %v1347
        %v1860 = vand.u32 2147483647, %v1348
        %v1861 = vand.u32 2147483647, %v1349
        %v1862 = vand.u32 2147483647, %v1350
        %v1863 = vand.u32 2147483647, %v1351
        %v1864 = vand.u32 2147483647, %v1352
        %v1865 = vand.u32 2147483647, %v1353
        %v1866 = vand.u32 2147483647, %v1354
        %v1867 = vand.u32 2147483647, %v1355
        %v1868 = vand.u32 2147483647, %v1356
        %v1869 = vand.u32 2147483647, %v1357
        %v1870 = vand.u32 2147483647, %v1358
        %v1871 = vand.u32 2147483647, %v1359
        %v1872 = vand.u32 2147483647, %v1360
        %v1873 = vand.u32 2147483647, %v1361
        %v1874 = vand.u32 2147483647, %v1362
        %v1875 = vand.u32 2147483647, %v1363
        %v1876 = vand.u32 2147483647, %v1364
        %v1877 = vand.u32 2147483647, %v1365
        %v1878 = vand.u32 2147483647, %v1366
        %v1879 = vand.u32 2147483647, %v1367
        %v1880 = vand.u32 2147483647, %v1368
        %v1881 = vand.u32 2147483647, %v1369
        %v1882 = vand.u32 2147483647, %v1370
        %v1883 = vand.u32 2147483647, %v1371
        %v1884 = vand.u32 2147483647, %v1372
        %v1885 = vand.u32 2147483647, %v1373
        %v1886 = vand.u32 2147483647, %v1374
        %v1887 = vand.u32 2147483647, %v1375
        %v1888 = vand.u32 2147483647, %v1376
        %v1889 = vand.u32 2147483647, %v1377
        %v1890 = vand.u32 2147483647, %v1378
        %v1891 = vand.u32 2147483647, %v1379
        %v1892 = vand.u32 2147483647, %v1380
        %v1893 = vand.u32 2147483647, %v1381
        %v1894 = vand.u32 2147483647, %v1382
        %v1895 = vand.u32 2147483647, %v1383
        %v1896 = vand.u32 2147483647, %v1384
        %v1897 = vand.u32 2147483647, %v1385
        %v1898 = vand.u32 2147483647, %v1386
        %v1899 = vand.u32 2147483647, %v1387
        %v1900 = vand.u32 2147483647, %v1388
        %v1901 = vand.u32 2147483647, %v1389
        %v1902 = vand.u32 2147483647, %v1390
        %v1903 = vand.u32 2147483647, %v1391
        %v1904 = vand.u32 2147483647, %v1392
        %v1905 = vand.u32 2147483647, %v1393
        %v1906 = vand.u32 2147483647, %v1394
        %v1907 = vand.u32 2147483647, %v1395
        %v1908 = vand.u32 2147483647, %v1396
        %v1909 = vand.u32 2147483647, %v1397
        %v1910 = vand.u32 2147483647, %v1398
        %v1911 = vand.u32 2147483647, %v1399
        %v1912 = vand.u32 2147483647, %v1400
        %v1913 = vand.u32 2147483647, %v1401
        %v1914 = vand.u32 2147483647, %v1402
        %v1915 = vand.u32 2147483647, %v1403
        %v1916 = vand.u32 2147483647, %v1404
        %v1917 = vand.u32 2147483647, %v1405
        %v1918 = vand.u32 2147483647, %v1406
        %v1919 = vand.u32 2147483647, %v1407
        %v1920 = vand.u32 2147483647, %v1408
        %v1921 = vand.u32 2147483647, %v1409
        %v1922 = vand.u32 2147483647, %v1410
        %v1923 = vand.u32 2147483647, %v1411
        %v1924 = vand.u32 2147483647, %v1412
        %v1925 = vand.u32 2147483647, %v1413
        %v1926 = vand.u32 2147483647, %v1414
        %v1927 = vand.u32 2147483647, %v1415
        %v1928 = vand.u32 2147483647, %v1416
        %v1929 = vand.u32 2147483647, %v1417
        %v1930 = vand.u32 2147483647, %v1418
        %v1931 = vand.u32 2147483647, %v1419
        %v1932 = vand.u32 2147483647, %v1420
        %v1933 = vand.u32 2147483647, %v1421
        %v1934 = vand.u32 2147483647, %v1422
        %v1935 = vand.u32 2147483647, %v1423
        %v1936 = vand.u32 2147483647, %v1424
        %v1937 = vand.u32 2147483647, %v1425
        %v1938 = vand.u32 2147483647, %v1426
        %v1939 = vand.u32 2147483647, %v1427
        %v1940 = vand.u32 2147483647, %v1428
        %v1941 = vand.u32 2147483647, %v1429
        %v1942 = vand.u32 2147483647, %v1430
        %v1943 = vand.u32 2147483647, %v1431
        %v1944 = vand.u32 2147483647, %v1432
        %v1945 = vand.u32 2147483647, %v1433
        %v1946 = vand.u32 2147483647, %v1434
        %v1947 = vand.u32 2147483647, %v1435
        %v1948 = vand.u32 2147483647, %v1436
        %v1949 = vand.u32 2147483647, %v1437
        %v1950 = vand.u32 2147483647, %v1438
        %v1951 = vand.u32 2147483647, %v1439
        %v1952 = vand.u32 2147483647, %v1440
        %v1953 = vand.u32 2147483647, %v1441
        %v1954 = vand.u32 2147483647, %v1442
        %v1955 = vand.u32 2147483647, %v1443
        %v1956 = vand.u32 2147483647, %v1444
        %v1957 = vand.u32 2147483647, %v1445
        %v1958 = vand.u32 2147483647, %v1446
        %v1959 = vand.u32 2147483647, %v1447
        %v1960 = vand.u32 2147483647, %v1448
        %v1961 = vand.u32 2147483647, %v1449
        %v1962 = vand.u32 2147483647, %v1450
        %v1963 = vand.u32 2147483647, %v1451
        %v1964 = vand.u32 2147483647, %v1452
        %v1965 = vand.u32 2147483647, %v1453
        %v1966 = vand.u32 2147483647, %v1454
        %v1967 = vand.u32 2147483647, %v1455
        %v1968 = vand.u32 2147483647, %v1456
        %v1969 = vand.u32 2147483647, %v1457
        %v1970 = vand.u32 2147483647, %v1458
        %v1971 = vand.u32 2147483647, %v1459
        %v1972 = vand.u32 2147483647, %v1460
        %v1973 = vand.u32 2147483647, %v1461
        %v1974 = vand.u32 2147483647, %v1462
        %v1975 = vand.u32 2147483647, %v1463
        %v1976 = vand.u32 2147483647, %v1464
        %v1977 = vand.u32 2147483647, %v1465
        %v1978 = vand.u32 2147483647, %v1466
        %v1979 = vand.u32 2147483647, %v1467
        %v1980 = vand.u32 2147483647, %v1468
        %v1981 = vand.u32 2147483647, %v1469
        %v1982 = vand.u32 2147483647, %v1470
        %v1983 = vand.u32 2147483647, %v1471
        %v1984 = vand.u32 2147483647, %v1472
        %v1985 = vand.u32 2147483647, %v1473
        %v1986 = vand.u32 2147483647, %v1474
        %v1987 = vand.u32 2147483647, %v1475
        %v1988 = vand.u32 2147483647, %v1476
        %v1989 = vand.u32 2147483647, %v1477
        %v1990 = vand.u32 2147483647, %v1478
        %v1991 = vand.u32 2147483647, %v1479
        %v1992 = vand.u32 2147483647, %v1480
        %v1993 = vand.u32 2147483647, %v1481
        %v1994 = vand.u32 2147483647, %v1482
        %v1995 = vand.u32 2147483647, %v1483
        %v1996 = vand.u32 2147483647, %v1484
        %v1997 = vand.u32 2147483647, %v1485
        %v1998 = vand.u32 2147483647, %v1486
        %v1999 = vand.u32 2147483647, %v1487
        %v2000 = vand.u32 2147483647, %v1488
        %v2001 = vand.u32 2147483647, %v1489
        %v2002 = vand.u32 2147483647, %v1490
        %v2003 = vand.u32 2147483647, %v1491
        %v2004 = vand.u32 2147483647, %v1492
        %v2005 = vand.u32 2147483647, %v1493
        %v2006 = vand.u32 2147483647, %v1494
        %v2007 = vand.u32 2147483647, %v1495
        %v2008 = vand.u32 2147483647, %v1496
        %v2009 = vand.u32 2147483647, %v1497
        %v2010 = vand.u32 2147483647, %v1498
        %v2011 = vand.u32 2147483647, %v1499
        %v2012 = vand.u32 2147483647, %v1500
        %v2013 = vand.u32 2147483647, %v1501
        %v2014 = vand.u32 2147483647, %v1502
        %v2015 = vand.u32 2147483647, %v1503
        %v2016 = vand.u32 2147483647, %v1504
        %v2017 = vand.u32 2147483647, %v1505
        %v2018 = vand.u32 2147483647, %v1506
        %v2019 = vand.u32 2147483647, %v1507
        %v2020 = vand.u32 2147483647, %v1508
        %v2021 = vand.u32 2147483647, %v1509
        %v2022 = vand.u32 2147483647, %v1510
        %v2023 = vand.u32 2147483647, %v1511
        %v2024 = vand.u32 2147483647, %v1512
        %v2025 = vand.u32 2147483647, %v1513
        %v2026 = vand.u32 2147483647, %v1514
        %v2027 = vand.u32 2147483647, %v1515
        %v2028 = vand.u32 2147483647, %v1516
        %v2029 = vand.u32 2147483647, %v1517
        %v2030 = vand.u32 2147483647, %v1518
        %v2031 = vand.u32 2147483647, %v1519
        %v2032 = vand.u32 2147483647, %v1520
        %v2033 = vand.u32 2147483647, %v1521
        %v2034 = vand.u32 2147483647, %v1522
        %v2035 = vand.u32 2147483647, %v1523
        %v2036 = vand.u32 2147483647, %v1524
        %v2037 = vand.u32 2147483647, %v1525
        %v2038 = vand.u32 2147483647, %v1526
        %v2039 = vand.u32 2147483647, %v1527
        %v2040 = vand.u32 2147483647, %v1528
        %v2041 = vand.u32 2147483647, %v1529
        %v2042 = vand.u32 2147483647, %v1530
        %v2043 = vand.u32 2147483647, %v1531
        %v2044 = vand.u32 2147483647, %v1532
        %v2045 = vand.u32 2147483647, %v1533
        %v2046 = vand.u32 2147483647, %v1534
        %v2047 = vand.u32 2147483647, %v1535
        %v2048 = vand.u32 2147483647, %v1536
        %v2049 = vand.u32 2147483647, %v1537
        %v2050 = vand.u32 2147483647, %v1538
        %v2051 = vand.u32 2147483647, %v1539
        %v2052 = vand.u32 2147483647, %v1540
        %v2053 = vand.u32 2147483647, %v1541
        %v2054 = vand.u32 2147483647, %v1542
        %v2055 = vand.u32 2147483647, %v1543
        %v2056 = vand.u32 2147483647, %v1544
        %v2057 = vand.u32 2147483647, %v1545
        %v2058 = vand.u32 2147483647, %v1546
        %v2059 = vand.u32 2147483647, %v1547
        %v2060 = vand.u32 2147483647, %v1548
        %v2061 = vand.u32 2147483647, %v1549
        %v2062 = vand.u32 2147483647, %v1550
        %v2063 = vand.u32 2147483647, %v1551
        %v2064 = vand.u32 2147483647, %v1552
        %v2065 = vand.u32 2147483647, %v1553
        %v2066 = vand.u32 2147483647, %v1554
        %v2067 = vand.u32 2147483647, %v1555
        %v2068 = vand.u32 2147483647, %v1556
        %v2069 = vand.u32 2147483647, %v1557
        %v2070 = vand.u32 2147483647, %v1558
        %v2071 = vand.u32 2147483647, %v1559
        %v2072 = vand.u32 2147483647, %v1560
        %v2073 = vand.u32 2147483647, %v1561
        %v2074 = vand.u32 2147483647, %v1562
        %v2075 = vand.u32 2147483647, %v1563
        %v2076 = vand.u32 2147483647, %v1564
        %v2077 = vand.u32 2147483647, %v1565
        %v2078 = vand.u32 2147483647, %v1566
        %v2079 = vand.u32 2147483647, %v1567
        %v2080 = vand.u32 2147483647, %v1568
        %v2081 = vand.u32 2147483647, %v1569
        %v2082 = vand.u32 2147483647, %v1570
        %v2083 = vand.u32 2147483647, %v1571
        %v2084 = vand.u32 2147483647, %v1572
        %v2085 = vand.u32 2147483647, %v1573
        %v2086 = vand.u32 2147483647, %v1574
        %v2087 = vand.u32 2147483647, %v1575
        %v2088 = vand.u32 2147483647, %v1576
        %v2089 = vand.u32 2147483647, %v1577
        %v2090 = vand.u32 2147483647, %v1578
        %v2091 = vand.u32 2147483647, %v1579
        %v2092 = vand.u32 2147483647, %v1580
        %v2093 = vand.u32 2147483647, %v1581
        %v2094 = vand.u32 2147483647, %v1582
        %v2095 = vand.u32 2147483647, %v1583
        %v2096 = vand.u32 2147483647, %v1584
        %v2097 = vand.u32 2147483647, %v1585
        %v2098 = vand.u32 2147483647, %v1586
        %v2099 = vand.u32 2147483647, %v1587
        %v2100 = vand.u32 2147483647, %v1588
        %v2101 = vand.u32 2147483647, %v1589
        %v2102 = vand.u32 2147483647, %v1590
        %v2103 = vand.u32 2147483647, %v1591
        %v2104 = vand.u32 2147483647, %v1592
        %v2105 = vand.u32 2147483647, %v1593
        %v2106 = vand.u32 2147483647, %v1594
        %v2107 = vand.u32 2147483647, %v1595
        %v2108 = vand.u32 2147483647, %v1596
        %v2109 = vand.u32 2147483647, %v1597
        %v2110 = vand.u32 2147483647, %v1598
        %v2111 = vand.u32 2147483647, %v1599
        %v2112 = vand.u32 2147483647, %v1600
        %v2113 = vand.u32 2147483647, %v1601
        %v2114 = vand.u32 2147483647, %v1602
        %v2115 = vand.u32 2147483647, %v1603
        %v2116 = vand.u32 2147483647, %v1604
        %v2117 = vand.u32 2147483647, %v1605
        %v2118 = vand.u32 2147483647, %v1606
        %v2119 = vand.u32 2147483647, %v1607
        %v2120 = vand.u32 2147483647, %v1608
        %v2121 = vand.u32 2147483647, %v1609
        %v2122 = vand.u32 2147483647, %v1610
        %v2123 = vand.u32 2147483647, %v1611
        %v2124 = vand.u32 2147483647, %v1612
        %v2125 = vand.u32 2147483647, %v1613
        %v2126 = vand.u32 2147483647, %v1614
        %v2127 = vand.u32 2147483647, %v1615
        %v2128 = vand.u32 2147483647, %v1616
        %v2129 = vand.u32 2147483647, %v1617
        %v2130 = vand.u32 2147483647, %v1618
        %v2131 = vand.u32 2147483647, %v1619
        %v2132 = vand.u32 2147483647, %v1620
        %v2133 = vand.u32 2147483647, %v1621
        %v2134 = vand.u32 2147483647, %v1622
        %v2135 = vand.u32 2147483647, %v1623
        %v2136 = vand.u32 2147483647, %v1624
        %v2137 = vand.u32 2147483647, %v1625
        %v2138 = vand.u32 2147483647, %v1626
        %v2139 = vand.u32 2147483647, %v1627
        %v2140 = vand.u32 2147483647, %v1628
        %v2141 = vand.u32 2147483647, %v1629
        %v2142 = vand.u32 2147483647, %v1630
        %v2143 = vand.u32 2147483647, %v1631
        %v2144 = vand.u32 2147483647, %v1632
        %v2145 = vand.u32 2147483647, %v1633
        %v2146 = vand.u32 2147483647, %v1634
        %v2147 = vand.u32 2147483647, %v1635
        %v2148 = vand.u32 2147483647, %v1636
        %v2149 = vand.u32 2147483647, %v1637
        %v2150 = vand.u32 2147483647, %v1638
        %v2151 = vand.u32 2147483647, %v1639
        %v2152 = vand.u32 2147483647, %v1640
        %v2153 = vand.u32 2147483647, %v1641
        %v2154 = vand.u32 2147483647, %v1642
        %v2155 = vand.u32 2147483647, %v1643
        %v2156 = vand.u32 2147483647, %v1644
        %v2157 = vand.u32 2147483647, %v1645
        %v2158 = vand.u32 2147483647, %v1646
        %v2159 = vand.u32 2147483647, %v1647
        %v2160 = vand.u32 2147483647, %v1648
        %v2161 = vand.u32 2147483647, %v1649
        %v2162 = vand.u32 2147483647, %v1650
        %v2163 = vand.u32 2147483647, %v1651
        %v2164 = vand.u32 2147483647, %v1652
        %v2165 = vand.u32 2147483647, %v1653
        %v2166 = vand.u32 2147483647, %v1654
        %v2167 = vand.u32 2147483647, %v1655
        %v2168 = vand.u32 2147483647, %v1656
        %v2169 = vand.u32 2147483647, %v1657
        %v2170 = vand.u32 2147483647, %v1658
        %v2171 = vand.u32 2147483647, %v1659
        %v2172 = vand.u32 2147483647, %v1660
        %v2173 = vand.u32 2147483647, %v1661
        %v2174 = vand.u32 2147483647, %v1662
        %v2175 = vand.u32 2147483647, %v1663
        %v2176 = vand.u32 2147483647, %v1664
        %v2177 = vand.u32 2147483647, %v1665
        %v2178 = vand.u32 2147483647, %v1666
        %v2179 = vand.u32 2147483647, %v1667
        %v2180 = vand.u32 2147483647, %v1668
        %v2181 = vand.u32 2147483647, %v1669
        %v2182 = vand.u32 2147483647, %v1670
        %v2183 = vand.u32 2147483647, %v1671
        %v2184 = vand.u32 2147483647, %v1672
        %v2185 = vand.u32 2147483647, %v1673
        %v2186 = vand.u32 2147483647, %v1674
        %v2187 = vand.u32 2147483647, %v1675
        %v2188 = vand.u32 2147483647, %v1676
        %v2189 = vand.u32 2147483647, %v1677
        %v2190 = vand.u32 2147483647, %v1678
        %v2191 = vand.u32 2147483647, %v1679
        %v2192 = vand.u32 2147483647, %v1680
        %v2193 = vand.u32 2147483647, %v1681
        %v2194 = vand.u32 2147483647, %v1682
        %v2195 = vand.u32 2147483647, %v1683
        %v2196 = vand.u32 2147483647, %v1684
        %v2197 = vand.u32 2147483647, %v1685
        %v2198 = vand.u32 2147483647, %v1686
        %v2199 = vand.u32 2147483647, %v1687
        %v2200 = vand.u32 2147483647, %v1688
        %v2201 = vand.u32 2147483647, %v1689
        %v2202 = vand.u32 2147483647, %v1690
        %v2203 = vand.u32 2147483647, %v1691
        %v2204 = vand.u32 2147483647, %v1692
        %v2205 = vand.u32 2147483647, %v1693
        %v2206 = vand.u32 2147483647, %v1694
        %v2207 = vand.u32 2147483647, %v1695
        %v2208 = vand.u32 2147483647, %v1696
        %v2209 = vand.u32 2147483647, %v1697
        %v2210 = vand.u32 2147483647, %v1698
        %v2211 = vand.u32 2147483647, %v1699
        %v2212 = vand.u32 2147483647, %v1700
        %v2213 = vand.u32 2147483647, %v1701
        %v2214 = vand.u32 2147483647, %v1702
        %v2215 = vand.u32 2147483647, %v1703
        %v2216 = vand.u32 2147483647, %v1704
        %v2217 = vand.u32 2147483647, %v1705
        %v2218 = vand.u32 2147483647, %v1706
        %v2219 = vand.u32 2147483647, %v1707
        %v2220 = vand.u32 2147483647, %v1708
        %v2221 = vand.u32 2147483647, %v1709
        %v2222 = vand.u32 2147483647, %v1710
        %v2223 = vand.u32 2147483647, %v1711
        %v2224 = vand.u32 2147483647, %v1712
        %v2225 = vand.u32 2147483647, %v1713
        %v2226 = vand.u32 2147483647, %v1714
        %v2227 = vand.u32 2147483647, %v1715
        %v2228 = vand.u32 2147483647, %v1716
        %v2229 = vand.u32 2147483647, %v1717
        %v2230 = vand.u32 2147483647, %v1718
        %v2231 = vand.u32 2147483647, %v1719
        %v2232 = vand.u32 2147483647, %v1720
        %v2233 = vand.u32 2147483647, %v1721
        %v2234 = vand.u32 2147483647, %v1722
        %v2235 = vand.u32 2147483647, %v1723
        %v2236 = vand.u32 2147483647, %v1724
        %v2237 = vand.u32 2147483647, %v1725
        %v2238 = vand.u32 2147483647, %v1726
        %v2239 = vand.u32 2147483647, %v1727
        %v2240 = vand.u32 2147483647, %v1728
        %v2241 = vand.u32 2147483647, %v1729
        %v2242 = vand.u32 2147483647, %v1730
        %v2243 = vand.u32 2147483647, %v1731
        %v2244 = vand.u32 2147483647, %v1732
        %v2245 = vand.u32 2147483647, %v1733
        %v2246 = vand.u32 2147483647, %v1734
        %v2247 = vand.u32 2147483647, %v1735
        %v2248 = vand.u32 2147483647, %v1736
        %v2249 = vand.u32 2147483647, %v1737
        %v2250 = vand.u32 2147483647, %v1738
        %v2251 = vand.u32 2147483647, %v1739
        %v2252 = vand.u32 2147483647, %v1740
        %v2253 = vand.u32 2147483647, %v1741
        %v2254 = vand.u32 2147483647, %v1742
        %v2255 = vand.u32 2147483647, %v1743
        %v2256 = vand.u32 2147483647, %v1744
        %v2257 = vand.u32 2147483647, %v1745
        %v2258 = vand.u32 2147483647, %v1746
        %v2259 = vand.u32 2147483647, %v1747
        %v2260 = vand.u32 2147483647, %v1748
        %v2261 = vand.u32 2147483647, %v1749
        %v2262 = vand.u32 2147483647, %v1750
        %v2263 = vand.u32 2147483647, %v1751
        %v2264 = vand.u32 2147483647, %v1752
        %v2265 = vand.u32 2147483647, %v1753
        %v2266 = vand.u32 2147483647, %v1754
        %v2267 = vand.u32 2147483647, %v1755
        %v2268 = vand.u32 2147483647, %v1756
        %v2269 = vand.u32 2147483647, %v1757
        %v2270 = vand.u32 2147483647, %v1758
        %v2271 = vand.u32 2147483647, %v1759
        %v2272 = vand.u32 2147483647, %v1760
        %v2273 = vand.u32 2147483647, %v1761
        %v2274 = vand.u32 2147483647, %v1762
        %v2275 = vand.u32 2147483647, %v1763
        %v2276 = vand.u32 2147483647, %v1764
        %v2277 = vand.u32 2147483647, %v1765
        %v2278 = vand.u32 2147483647, %v1766
        %v2279 = vand.u32 2147483647, %v1767
        %v2280 = vand.u32 2147483647, %v1768
        %v2281 = vand.u32 2147483647, %v1769
        %v2282 = vand.u32 2147483647, %v1770
        %v2283 = vand.u32 2147483647, %v1771
        %v2284 = vand.u32 2147483647, %v1772
        %v2285 = vand.u32 2147483647, %v1773
        %v2286 = vand.u32 2147483647, %v1774
        %v2287 = vand.u32 2147483647, %v1775
        %v2288 = vand.u32 2147483647, %v1776
        %v2289 = vand.u32 2147483647, %v1777
        %v2290 = vand.u32 2147483647, %v1778
        %v2291 = vand.u32 2147483647, %v1779
        %v2292 = vand.u32 2147483647, %v1780
        %v2293 = vand.u32 2147483647, %v1781
        %v2294 = vand.u32 2147483647, %v1782
        %v2295 = vand.u32 2147483647, %v1783
        %v2296 = vand.u32 2147483647, %v1784
        %v2297 = vand.u32 2147483647, %v1785
        %v2298 = vand.u32 2147483647, %v1786
        %v2299 = vand.u32 2147483647, %v1787
        %v2300 = vand.u32 2147483647, %v1788
        %v2301 = vand.u32 2147483647, %v1789
        %v2302 = vand.u32 2147483647, %v1790
        %v2303 = vand.u32 2147483647, %v1791
        %v2304 = vand.u32 2147483647, %v1792
        %v2305 = vand.u32 2147483647, %v1793
        %v2306 = vand.u32 2147483647, %v1794
        %v2307 = vand.u32 2147483647, %v1795
        %v2308 = vand.u32 2147483647, %v1796
        %v2309 = vand.u32 2147483647, %v1797
        %v2310 = vand.u32 2147483647, %v1798
        %v2311 = vand.u32 2147483647, %v1799
        %v2312 = vand.u32 2147483647, %v1800
        %v2313 = vand.u32 2147483647, %v1801
        %v2314 = vand.u32 2147483647, %v1802
        %v2315 = vand.u32 2147483647, %v1803
        %v2316 = vand.u32 2147483647, %v1804
        %v2317 = vand.u32 2147483647, %v1805
        %v2318 = vand.u32 2147483647, %v1806
        %v2319 = vand.u32 2147483647, %v1807
        %v2320 = vand.u32 2147483647, %v1808
        %v2321 = vand.u32 2147483647, %v1809
        %v2322 = vand.u32 2147483647, %v1810
        %v2323 = vand.u32 2147483647, %v1811
        %s2324 = smul.u32 %s26, 2
        %s2325 = sadd.s32 %s2324, %s27
        %s2326 = smul.u32 %s2325, 4096
        %s2327 = sadd.s32 %s2326, 4096
        %p2328 = scmp.gt.s32.totalorder %s2327, 8232
        %p2329 = scmp.le.s32.totalorder %s2327, 8232
        // Predicated region
        $region41: #{tpu_custom_call.1} parent=27 // pred_check
          %p2330 = pneg %p2329
        $region42: #{tpu_custom_call.1} parent=27 // pred_check_branch
          %2332 = sbr.rel (%p2330) target = $region44
        $region43: #{tpu_custom_call.1} parent=27 // pred_region
          %v2333 = vld [vmem:[%s249] sm:$0xff]
          %v2334 = vld [vmem:[%s249 + $0x8] sm:$0xff]
          %v2335 = vld [vmem:[%s249 + $0x10] sm:$0xff]
          %v2336 = vld [vmem:[%s249 + $0x18] sm:$0xff]
          %v2337 = vadd.f32 %v1812, %v1816
          %v2338 = vadd.f32 %v2337, %v1820
          %v2339 = vadd.f32 %v2338, %v1824
          %v2340 = vadd.f32 %v2339, %v1828
          %v2341 = vadd.f32 %v2340, %v1832
          %v2342 = vadd.f32 %v2341, %v1836
          %v2343 = vadd.f32 %v2342, %v1840
          %v2344 = vadd.f32 %v2343, %v1844
          %v2345 = vadd.f32 %v2344, %v1848
          %v2346 = vadd.f32 %v2345, %v1852
          %v2347 = vadd.f32 %v2346, %v1856
          %v2348 = vadd.f32 %v2347, %v1860
          %v2349 = vadd.f32 %v2348, %v1864
          %v2350 = vadd.f32 %v2349, %v1868
          %v2351 = vadd.f32 %v2350, %v1872
          %v2352 = vadd.f32 %v2351, %v1876
          %v2353 = vadd.f32 %v2352, %v1880
          %v2354 = vadd.f32 %v2353, %v1884
          %v2355 = vadd.f32 %v2354, %v1888
          %v2356 = vadd.f32 %v2355, %v1892
          %v2357 = vadd.f32 %v2356, %v1896
          %v2358 = vadd.f32 %v2357, %v1900
          %v2359 = vadd.f32 %v2358, %v1904
          %v2360 = vadd.f32 %v2359, %v1908
          %v2361 = vadd.f32 %v2360, %v1912
          %v2362 = vadd.f32 %v2361, %v1916
          %v2363 = vadd.f32 %v2362, %v1920
          %v2364 = vadd.f32 %v2363, %v1924
          %v2365 = vadd.f32 %v2364, %v1928
          %v2366 = vadd.f32 %v2365, %v1932
          %v2367 = vadd.f32 %v2366, %v1936
          %v2368 = vadd.f32 %v2367, %v1940
          %v2369 = vadd.f32 %v2368, %v1944
          %v2370 = vadd.f32 %v2369, %v1948
          %v2371 = vadd.f32 %v2370, %v1952
          %v2372 = vadd.f32 %v2371, %v1956
          %v2373 = vadd.f32 %v2372, %v1960
          %v2374 = vadd.f32 %v2373, %v1964
          %v2375 = vadd.f32 %v2374, %v1968
          %v2376 = vadd.f32 %v2375, %v1972
          %v2377 = vadd.f32 %v2376, %v1976
          %v2378 = vadd.f32 %v2377, %v1980
          %v2379 = vadd.f32 %v2378, %v1984
          %v2380 = vadd.f32 %v2379, %v1988
          %v2381 = vadd.f32 %v2380, %v1992
          %v2382 = vadd.f32 %v2381, %v1996
          %v2383 = vadd.f32 %v2382, %v2000
          %v2384 = vadd.f32 %v2383, %v2004
          %v2385 = vadd.f32 %v2384, %v2008
          %v2386 = vadd.f32 %v2385, %v2012
          %v2387 = vadd.f32 %v2386, %v2016
          %v2388 = vadd.f32 %v2387, %v2020
          %v2389 = vadd.f32 %v2388, %v2024
          %v2390 = vadd.f32 %v2389, %v2028
          %v2391 = vadd.f32 %v2390, %v2032
          %v2392 = vadd.f32 %v2391, %v2036
          %v2393 = vadd.f32 %v2392, %v2040
          %v2394 = vadd.f32 %v2393, %v2044
          %v2395 = vadd.f32 %v2394, %v2048
          %v2396 = vadd.f32 %v2395, %v2052
          %v2397 = vadd.f32 %v2396, %v2056
          %v2398 = vadd.f32 %v2397, %v2060
          %v2399 = vadd.f32 %v2398, %v2064
          %v2400 = vadd.f32 %v2399, %v2068
          %v2401 = vadd.f32 %v2400, %v2072
          %v2402 = vadd.f32 %v2401, %v2076
          %v2403 = vadd.f32 %v2402, %v2080
          %v2404 = vadd.f32 %v2403, %v2084
          %v2405 = vadd.f32 %v2404, %v2088
          %v2406 = vadd.f32 %v2405, %v2092
          %v2407 = vadd.f32 %v2406, %v2096
          %v2408 = vadd.f32 %v2407, %v2100
          %v2409 = vadd.f32 %v2408, %v2104
          %v2410 = vadd.f32 %v2409, %v2108
          %v2411 = vadd.f32 %v2410, %v2112
          %v2412 = vadd.f32 %v2411, %v2116
          %v2413 = vadd.f32 %v2412, %v2120
          %v2414 = vadd.f32 %v2413, %v2124
          %v2415 = vadd.f32 %v2414, %v2128
          %v2416 = vadd.f32 %v2415, %v2132
          %v2417 = vadd.f32 %v2416, %v2136
          %v2418 = vadd.f32 %v2417, %v2140
          %v2419 = vadd.f32 %v2418, %v2144
          %v2420 = vadd.f32 %v2419, %v2148
          %v2421 = vadd.f32 %v2420, %v2152
          %v2422 = vadd.f32 %v2421, %v2156
          %v2423 = vadd.f32 %v2422, %v2160
          %v2424 = vadd.f32 %v2423, %v2164
          %v2425 = vadd.f32 %v2424, %v2168
          %v2426 = vadd.f32 %v2425, %v2172
          %v2427 = vadd.f32 %v2426, %v2176
          %v2428 = vadd.f32 %v2427, %v2180
          %v2429 = vadd.f32 %v2428, %v2184
          %v2430 = vadd.f32 %v2429, %v2188
          %v2431 = vadd.f32 %v2430, %v2192
          %v2432 = vadd.f32 %v2431, %v2196
          %v2433 = vadd.f32 %v2432, %v2200
          %v2434 = vadd.f32 %v2433, %v2204
          %v2435 = vadd.f32 %v2434, %v2208
          %v2436 = vadd.f32 %v2435, %v2212
          %v2437 = vadd.f32 %v2436, %v2216
          %v2438 = vadd.f32 %v2437, %v2220
          %v2439 = vadd.f32 %v2438, %v2224
          %v2440 = vadd.f32 %v2439, %v2228
          %v2441 = vadd.f32 %v2440, %v2232
          %v2442 = vadd.f32 %v2441, %v2236
          %v2443 = vadd.f32 %v2442, %v2240
          %v2444 = vadd.f32 %v2443, %v2244
          %v2445 = vadd.f32 %v2444, %v2248
          %v2446 = vadd.f32 %v2445, %v2252
          %v2447 = vadd.f32 %v2446, %v2256
          %v2448 = vadd.f32 %v2447, %v2260
          %v2449 = vadd.f32 %v2448, %v2264
          %v2450 = vadd.f32 %v2449, %v2268
          %v2451 = vadd.f32 %v2450, %v2272
          %v2452 = vadd.f32 %v2451, %v2276
          %v2453 = vadd.f32 %v2452, %v2280
          %v2454 = vadd.f32 %v2453, %v2284
          %v2455 = vadd.f32 %v2454, %v2288
          %v2456 = vadd.f32 %v2455, %v2292
          %v2457 = vadd.f32 %v2456, %v2296
          %v2458 = vadd.f32 %v2457, %v2300
          %v2459 = vadd.f32 %v2458, %v2304
          %v2460 = vadd.f32 %v2459, %v2308
          %v2461 = vadd.f32 %v2460, %v2312
          %v2462 = vadd.f32 %v2461, %v2316
          %v2463 = vadd.f32 %v2462, %v2320
          %v2464 = vadd.f32 %v1813, %v1817
          %v2465 = vadd.f32 %v2464, %v1821
          %v2466 = vadd.f32 %v2465, %v1825
          %v2467 = vadd.f32 %v2466, %v1829
          %v2468 = vadd.f32 %v2467, %v1833
          %v2469 = vadd.f32 %v2468, %v1837
          %v2470 = vadd.f32 %v2469, %v1841
          %v2471 = vadd.f32 %v2470, %v1845
          %v2472 = vadd.f32 %v2471, %v1849
          %v2473 = vadd.f32 %v2472, %v1853
          %v2474 = vadd.f32 %v2473, %v1857
          %v2475 = vadd.f32 %v2474, %v1861
          %v2476 = vadd.f32 %v2475, %v1865
          %v2477 = vadd.f32 %v2476, %v1869
          %v2478 = vadd.f32 %v2477, %v1873
          %v2479 = vadd.f32 %v2478, %v1877
          %v2480 = vadd.f32 %v2479, %v1881
          %v2481 = vadd.f32 %v2480, %v1885
          %v2482 = vadd.f32 %v2481, %v1889
          %v2483 = vadd.f32 %v2482, %v1893
          %v2484 = vadd.f32 %v2483, %v1897
          %v2485 = vadd.f32 %v2484, %v1901
          %v2486 = vadd.f32 %v2485, %v1905
          %v2487 = vadd.f32 %v2486, %v1909
          %v2488 = vadd.f32 %v2487, %v1913
          %v2489 = vadd.f32 %v2488, %v1917
          %v2490 = vadd.f32 %v2489, %v1921
          %v2491 = vadd.f32 %v2490, %v1925
          %v2492 = vadd.f32 %v2491, %v1929
          %v2493 = vadd.f32 %v2492, %v1933
          %v2494 = vadd.f32 %v2493, %v1937
          %v2495 = vadd.f32 %v2494, %v1941
          %v2496 = vadd.f32 %v2495, %v1945
          %v2497 = vadd.f32 %v2496, %v1949
          %v2498 = vadd.f32 %v2497, %v1953
          %v2499 = vadd.f32 %v2498, %v1957
          %v2500 = vadd.f32 %v2499, %v1961
          %v2501 = vadd.f32 %v2500, %v1965
          %v2502 = vadd.f32 %v2501, %v1969
          %v2503 = vadd.f32 %v2502, %v1973
          %v2504 = vadd.f32 %v2503, %v1977
          %v2505 = vadd.f32 %v2504, %v1981
          %v2506 = vadd.f32 %v2505, %v1985
          %v2507 = vadd.f32 %v2506, %v1989
          %v2508 = vadd.f32 %v2507, %v1993
          %v2509 = vadd.f32 %v2508, %v1997
          %v2510 = vadd.f32 %v2509, %v2001
          %v2511 = vadd.f32 %v2510, %v2005
          %v2512 = vadd.f32 %v2511, %v2009
          %v2513 = vadd.f32 %v2512, %v2013
          %v2514 = vadd.f32 %v2513, %v2017
          %v2515 = vadd.f32 %v2514, %v2021
          %v2516 = vadd.f32 %v2515, %v2025
          %v2517 = vadd.f32 %v2516, %v2029
          %v2518 = vadd.f32 %v2517, %v2033
          %v2519 = vadd.f32 %v2518, %v2037
          %v2520 = vadd.f32 %v2519, %v2041
          %v2521 = vadd.f32 %v2520, %v2045
          %v2522 = vadd.f32 %v2521, %v2049
          %v2523 = vadd.f32 %v2522, %v2053
          %v2524 = vadd.f32 %v2523, %v2057
          %v2525 = vadd.f32 %v2524, %v2061
          %v2526 = vadd.f32 %v2525, %v2065
          %v2527 = vadd.f32 %v2526, %v2069
          %v2528 = vadd.f32 %v2527, %v2073
          %v2529 = vadd.f32 %v2528, %v2077
          %v2530 = vadd.f32 %v2529, %v2081
          %v2531 = vadd.f32 %v2530, %v2085
          %v2532 = vadd.f32 %v2531, %v2089
          %v2533 = vadd.f32 %v2532, %v2093
          %v2534 = vadd.f32 %v2533, %v2097
          %v2535 = vadd.f32 %v2534, %v2101
          %v2536 = vadd.f32 %v2535, %v2105
          %v2537 = vadd.f32 %v2536, %v2109
          %v2538 = vadd.f32 %v2537, %v2113
          %v2539 = vadd.f32 %v2538, %v2117
          %v2540 = vadd.f32 %v2539, %v2121
          %v2541 = vadd.f32 %v2540, %v2125
          %v2542 = vadd.f32 %v2541, %v2129
          %v2543 = vadd.f32 %v2542, %v2133
          %v2544 = vadd.f32 %v2543, %v2137
          %v2545 = vadd.f32 %v2544, %v2141
          %v2546 = vadd.f32 %v2545, %v2145
          %v2547 = vadd.f32 %v2546, %v2149
          %v2548 = vadd.f32 %v2547, %v2153
          %v2549 = vadd.f32 %v2548, %v2157
          %v2550 = vadd.f32 %v2549, %v2161
          %v2551 = vadd.f32 %v2550, %v2165
          %v2552 = vadd.f32 %v2551, %v2169
          %v2553 = vadd.f32 %v2552, %v2173
          %v2554 = vadd.f32 %v2553, %v2177
          %v2555 = vadd.f32 %v2554, %v2181
          %v2556 = vadd.f32 %v2555, %v2185
          %v2557 = vadd.f32 %v2556, %v2189
          %v2558 = vadd.f32 %v2557, %v2193
          %v2559 = vadd.f32 %v2558, %v2197
          %v2560 = vadd.f32 %v2559, %v2201
          %v2561 = vadd.f32 %v2560, %v2205
          %v2562 = vadd.f32 %v2561, %v2209
          %v2563 = vadd.f32 %v2562, %v2213
          %v2564 = vadd.f32 %v2563, %v2217
          %v2565 = vadd.f32 %v2564, %v2221
          %v2566 = vadd.f32 %v2565, %v2225
          %v2567 = vadd.f32 %v2566, %v2229
          %v2568 = vadd.f32 %v2567, %v2233
          %v2569 = vadd.f32 %v2568, %v2237
          %v2570 = vadd.f32 %v2569, %v2241
          %v2571 = vadd.f32 %v2570, %v2245
          %v2572 = vadd.f32 %v2571, %v2249
          %v2573 = vadd.f32 %v2572, %v2253
          %v2574 = vadd.f32 %v2573, %v2257
          %v2575 = vadd.f32 %v2574, %v2261
          %v2576 = vadd.f32 %v2575, %v2265
          %v2577 = vadd.f32 %v2576, %v2269
          %v2578 = vadd.f32 %v2577, %v2273
          %v2579 = vadd.f32 %v2578, %v2277
          %v2580 = vadd.f32 %v2579, %v2281
          %v2581 = vadd.f32 %v2580, %v2285
          %v2582 = vadd.f32 %v2581, %v2289
          %v2583 = vadd.f32 %v2582, %v2293
          %v2584 = vadd.f32 %v2583, %v2297
          %v2585 = vadd.f32 %v2584, %v2301
          %v2586 = vadd.f32 %v2585, %v2305
          %v2587 = vadd.f32 %v2586, %v2309
          %v2588 = vadd.f32 %v2587, %v2313
          %v2589 = vadd.f32 %v2588, %v2317
          %v2590 = vadd.f32 %v2589, %v2321
          %v2591 = vadd.f32 %v1814, %v1818
          %v2592 = vadd.f32 %v2591, %v1822
          %v2593 = vadd.f32 %v2592, %v1826
          %v2594 = vadd.f32 %v2593, %v1830
          %v2595 = vadd.f32 %v2594, %v1834
          %v2596 = vadd.f32 %v2595, %v1838
          %v2597 = vadd.f32 %v2596, %v1842
          %v2598 = vadd.f32 %v2597, %v1846
          %v2599 = vadd.f32 %v2598, %v1850
          %v2600 = vadd.f32 %v2599, %v1854
          %v2601 = vadd.f32 %v2600, %v1858
          %v2602 = vadd.f32 %v2601, %v1862
          %v2603 = vadd.f32 %v2602, %v1866
          %v2604 = vadd.f32 %v2603, %v1870
          %v2605 = vadd.f32 %v2604, %v1874
          %v2606 = vadd.f32 %v2605, %v1878
          %v2607 = vadd.f32 %v2606, %v1882
          %v2608 = vadd.f32 %v2607, %v1886
          %v2609 = vadd.f32 %v2608, %v1890
          %v2610 = vadd.f32 %v2609, %v1894
          %v2611 = vadd.f32 %v2610, %v1898
          %v2612 = vadd.f32 %v2611, %v1902
          %v2613 = vadd.f32 %v2612, %v1906
          %v2614 = vadd.f32 %v2613, %v1910
          %v2615 = vadd.f32 %v2614, %v1914
          %v2616 = vadd.f32 %v2615, %v1918
          %v2617 = vadd.f32 %v2616, %v1922
          %v2618 = vadd.f32 %v2617, %v1926
          %v2619 = vadd.f32 %v2618, %v1930
          %v2620 = vadd.f32 %v2619, %v1934
          %v2621 = vadd.f32 %v2620, %v1938
          %v2622 = vadd.f32 %v2621, %v1942
          %v2623 = vadd.f32 %v2622, %v1946
          %v2624 = vadd.f32 %v2623, %v1950
          %v2625 = vadd.f32 %v2624, %v1954
          %v2626 = vadd.f32 %v2625, %v1958
          %v2627 = vadd.f32 %v2626, %v1962
          %v2628 = vadd.f32 %v2627, %v1966
          %v2629 = vadd.f32 %v2628, %v1970
          %v2630 = vadd.f32 %v2629, %v1974
          %v2631 = vadd.f32 %v2630, %v1978
          %v2632 = vadd.f32 %v2631, %v1982
          %v2633 = vadd.f32 %v2632, %v1986
          %v2634 = vadd.f32 %v2633, %v1990
          %v2635 = vadd.f32 %v2634, %v1994
          %v2636 = vadd.f32 %v2635, %v1998
          %v2637 = vadd.f32 %v2636, %v2002
          %v2638 = vadd.f32 %v2637, %v2006
          %v2639 = vadd.f32 %v2638, %v2010
          %v2640 = vadd.f32 %v2639, %v2014
          %v2641 = vadd.f32 %v2640, %v2018
          %v2642 = vadd.f32 %v2641, %v2022
          %v2643 = vadd.f32 %v2642, %v2026
          %v2644 = vadd.f32 %v2643, %v2030
          %v2645 = vadd.f32 %v2644, %v2034
          %v2646 = vadd.f32 %v2645, %v2038
          %v2647 = vadd.f32 %v2646, %v2042
          %v2648 = vadd.f32 %v2647, %v2046
          %v2649 = vadd.f32 %v2648, %v2050
          %v2650 = vadd.f32 %v2649, %v2054
          %v2651 = vadd.f32 %v2650, %v2058
          %v2652 = vadd.f32 %v2651, %v2062
          %v2653 = vadd.f32 %v2652, %v2066
          %v2654 = vadd.f32 %v2653, %v2070
          %v2655 = vadd.f32 %v2654, %v2074
          %v2656 = vadd.f32 %v2655, %v2078
          %v2657 = vadd.f32 %v2656, %v2082
          %v2658 = vadd.f32 %v2657, %v2086
          %v2659 = vadd.f32 %v2658, %v2090
          %v2660 = vadd.f32 %v2659, %v2094
          %v2661 = vadd.f32 %v2660, %v2098
          %v2662 = vadd.f32 %v2661, %v2102
          %v2663 = vadd.f32 %v2662, %v2106
          %v2664 = vadd.f32 %v2663, %v2110
          %v2665 = vadd.f32 %v2664, %v2114
          %v2666 = vadd.f32 %v2665, %v2118
          %v2667 = vadd.f32 %v2666, %v2122
          %v2668 = vadd.f32 %v2667, %v2126
          %v2669 = vadd.f32 %v2668, %v2130
          %v2670 = vadd.f32 %v2669, %v2134
          %v2671 = vadd.f32 %v2670, %v2138
          %v2672 = vadd.f32 %v2671, %v2142
          %v2673 = vadd.f32 %v2672, %v2146
          %v2674 = vadd.f32 %v2673, %v2150
          %v2675 = vadd.f32 %v2674, %v2154
          %v2676 = vadd.f32 %v2675, %v2158
          %v2677 = vadd.f32 %v2676, %v2162
          %v2678 = vadd.f32 %v2677, %v2166
          %v2679 = vadd.f32 %v2678, %v2170
          %v2680 = vadd.f32 %v2679, %v2174
          %v2681 = vadd.f32 %v2680, %v2178
          %v2682 = vadd.f32 %v2681, %v2182
          %v2683 = vadd.f32 %v2682, %v2186
          %v2684 = vadd.f32 %v2683, %v2190
          %v2685 = vadd.f32 %v2684, %v2194
          %v2686 = vadd.f32 %v2685, %v2198
          %v2687 = vadd.f32 %v2686, %v2202
          %v2688 = vadd.f32 %v2687, %v2206
          %v2689 = vadd.f32 %v2688, %v2210
          %v2690 = vadd.f32 %v2689, %v2214
          %v2691 = vadd.f32 %v2690, %v2218
          %v2692 = vadd.f32 %v2691, %v2222
          %v2693 = vadd.f32 %v2692, %v2226
          %v2694 = vadd.f32 %v2693, %v2230
          %v2695 = vadd.f32 %v2694, %v2234
          %v2696 = vadd.f32 %v2695, %v2238
          %v2697 = vadd.f32 %v2696, %v2242
          %v2698 = vadd.f32 %v2697, %v2246
          %v2699 = vadd.f32 %v2698, %v2250
          %v2700 = vadd.f32 %v2699, %v2254
          %v2701 = vadd.f32 %v2700, %v2258
          %v2702 = vadd.f32 %v2701, %v2262
          %v2703 = vadd.f32 %v2702, %v2266
          %v2704 = vadd.f32 %v2703, %v2270
          %v2705 = vadd.f32 %v2704, %v2274
          %v2706 = vadd.f32 %v2705, %v2278
          %v2707 = vadd.f32 %v2706, %v2282
          %v2708 = vadd.f32 %v2707, %v2286
          %v2709 = vadd.f32 %v2708, %v2290
          %v2710 = vadd.f32 %v2709, %v2294
          %v2711 = vadd.f32 %v2710, %v2298
          %v2712 = vadd.f32 %v2711, %v2302
          %v2713 = vadd.f32 %v2712, %v2306
          %v2714 = vadd.f32 %v2713, %v2310
          %v2715 = vadd.f32 %v2714, %v2314
          %v2716 = vadd.f32 %v2715, %v2318
          %v2717 = vadd.f32 %v2716, %v2322
          %v2718 = vadd.f32 %v1815, %v1819
          %v2719 = vadd.f32 %v2718, %v1823
          %v2720 = vadd.f32 %v2719, %v1827
          %v2721 = vadd.f32 %v2720, %v1831
          %v2722 = vadd.f32 %v2721, %v1835
          %v2723 = vadd.f32 %v2722, %v1839
          %v2724 = vadd.f32 %v2723, %v1843
          %v2725 = vadd.f32 %v2724, %v1847
          %v2726 = vadd.f32 %v2725, %v1851
          %v2727 = vadd.f32 %v2726, %v1855
          %v2728 = vadd.f32 %v2727, %v1859
          %v2729 = vadd.f32 %v2728, %v1863
          %v2730 = vadd.f32 %v2729, %v1867
          %v2731 = vadd.f32 %v2730, %v1871
          %v2732 = vadd.f32 %v2731, %v1875
          %v2733 = vadd.f32 %v2732, %v1879
          %v2734 = vadd.f32 %v2733, %v1883
          %v2735 = vadd.f32 %v2734, %v1887
          %v2736 = vadd.f32 %v2735, %v1891
          %v2737 = vadd.f32 %v2736, %v1895
          %v2738 = vadd.f32 %v2737, %v1899
          %v2739 = vadd.f32 %v2738, %v1903
          %v2740 = vadd.f32 %v2739, %v1907
          %v2741 = vadd.f32 %v2740, %v1911
          %v2742 = vadd.f32 %v2741, %v1915
          %v2743 = vadd.f32 %v2742, %v1919
          %v2744 = vadd.f32 %v2743, %v1923
          %v2745 = vadd.f32 %v2744, %v1927
          %v2746 = vadd.f32 %v2745, %v1931
          %v2747 = vadd.f32 %v2746, %v1935
          %v2748 = vadd.f32 %v2747, %v1939
          %v2749 = vadd.f32 %v2748, %v1943
          %v2750 = vadd.f32 %v2749, %v1947
          %v2751 = vadd.f32 %v2750, %v1951
          %v2752 = vadd.f32 %v2751, %v1955
          %v2753 = vadd.f32 %v2752, %v1959
          %v2754 = vadd.f32 %v2753, %v1963
          %v2755 = vadd.f32 %v2754, %v1967
          %v2756 = vadd.f32 %v2755, %v1971
          %v2757 = vadd.f32 %v2756, %v1975
          %v2758 = vadd.f32 %v2757, %v1979
          %v2759 = vadd.f32 %v2758, %v1983
          %v2760 = vadd.f32 %v2759, %v1987
          %v2761 = vadd.f32 %v2760, %v1991
          %v2762 = vadd.f32 %v2761, %v1995
          %v2763 = vadd.f32 %v2762, %v1999
          %v2764 = vadd.f32 %v2763, %v2003
          %v2765 = vadd.f32 %v2764, %v2007
          %v2766 = vadd.f32 %v2765, %v2011
          %v2767 = vadd.f32 %v2766, %v2015
          %v2768 = vadd.f32 %v2767, %v2019
          %v2769 = vadd.f32 %v2768, %v2023
          %v2770 = vadd.f32 %v2769, %v2027
          %v2771 = vadd.f32 %v2770, %v2031
          %v2772 = vadd.f32 %v2771, %v2035
          %v2773 = vadd.f32 %v2772, %v2039
          %v2774 = vadd.f32 %v2773, %v2043
          %v2775 = vadd.f32 %v2774, %v2047
          %v2776 = vadd.f32 %v2775, %v2051
          %v2777 = vadd.f32 %v2776, %v2055
          %v2778 = vadd.f32 %v2777, %v2059
          %v2779 = vadd.f32 %v2778, %v2063
          %v2780 = vadd.f32 %v2779, %v2067
          %v2781 = vadd.f32 %v2780, %v2071
          %v2782 = vadd.f32 %v2781, %v2075
          %v2783 = vadd.f32 %v2782, %v2079
          %v2784 = vadd.f32 %v2783, %v2083
          %v2785 = vadd.f32 %v2784, %v2087
          %v2786 = vadd.f32 %v2785, %v2091
          %v2787 = vadd.f32 %v2786, %v2095
          %v2788 = vadd.f32 %v2787, %v2099
          %v2789 = vadd.f32 %v2788, %v2103
          %v2790 = vadd.f32 %v2789, %v2107
          %v2791 = vadd.f32 %v2790, %v2111
          %v2792 = vadd.f32 %v2791, %v2115
          %v2793 = vadd.f32 %v2792, %v2119
          %v2794 = vadd.f32 %v2793, %v2123
          %v2795 = vadd.f32 %v2794, %v2127
          %v2796 = vadd.f32 %v2795, %v2131
          %v2797 = vadd.f32 %v2796, %v2135
          %v2798 = vadd.f32 %v2797, %v2139
          %v2799 = vadd.f32 %v2798, %v2143
          %v2800 = vadd.f32 %v2799, %v2147
          %v2801 = vadd.f32 %v2800, %v2151
          %v2802 = vadd.f32 %v2801, %v2155
          %v2803 = vadd.f32 %v2802, %v2159
          %v2804 = vadd.f32 %v2803, %v2163
          %v2805 = vadd.f32 %v2804, %v2167
          %v2806 = vadd.f32 %v2805, %v2171
          %v2807 = vadd.f32 %v2806, %v2175
          %v2808 = vadd.f32 %v2807, %v2179
          %v2809 = vadd.f32 %v2808, %v2183
          %v2810 = vadd.f32 %v2809, %v2187
          %v2811 = vadd.f32 %v2810, %v2191
          %v2812 = vadd.f32 %v2811, %v2195
          %v2813 = vadd.f32 %v2812, %v2199
          %v2814 = vadd.f32 %v2813, %v2203
          %v2815 = vadd.f32 %v2814, %v2207
          %v2816 = vadd.f32 %v2815, %v2211
          %v2817 = vadd.f32 %v2816, %v2215
          %v2818 = vadd.f32 %v2817, %v2219
          %v2819 = vadd.f32 %v2818, %v2223
          %v2820 = vadd.f32 %v2819, %v2227
          %v2821 = vadd.f32 %v2820, %v2231
          %v2822 = vadd.f32 %v2821, %v2235
          %v2823 = vadd.f32 %v2822, %v2239
          %v2824 = vadd.f32 %v2823, %v2243
          %v2825 = vadd.f32 %v2824, %v2247
          %v2826 = vadd.f32 %v2825, %v2251
          %v2827 = vadd.f32 %v2826, %v2255
          %v2828 = vadd.f32 %v2827, %v2259
          %v2829 = vadd.f32 %v2828, %v2263
          %v2830 = vadd.f32 %v2829, %v2267
          %v2831 = vadd.f32 %v2830, %v2271
          %v2832 = vadd.f32 %v2831, %v2275
          %v2833 = vadd.f32 %v2832, %v2279
          %v2834 = vadd.f32 %v2833, %v2283
          %v2835 = vadd.f32 %v2834, %v2287
          %v2836 = vadd.f32 %v2835, %v2291
          %v2837 = vadd.f32 %v2836, %v2295
          %v2838 = vadd.f32 %v2837, %v2299
          %v2839 = vadd.f32 %v2838, %v2303
          %v2840 = vadd.f32 %v2839, %v2307
          %v2841 = vadd.f32 %v2840, %v2311
          %v2842 = vadd.f32 %v2841, %v2315
          %v2843 = vadd.f32 %v2842, %v2319
          %v2844 = vadd.f32 %v2843, %v2323
          %v2845 = vadd.f32 %v2333, %v2463
          %v2846 = vadd.f32 %v2334, %v2590
          %v2847 = vadd.f32 %v2335, %v2717
          %v2848 = vadd.f32 %v2336, %v2844
          %2849 = vst [vmem:[%s249] sm:$0xff] %v2845
          %2850 = vst [vmem:[%s249 + $0x8] sm:$0xff] %v2846
          %2851 = vst [vmem:[%s249 + $0x10] sm:$0xff] %v2847
          %2852 = vst [vmem:[%s249 + $0x18] sm:$0xff] %v2848
        $region44: #{tpu_custom_call.1} parent=27 // pred_fallthru
          _
        // Predicated region
        $region45: #{tpu_custom_call.1} parent=27 // pred_check
          %p2853 = pneg %p2328
        $region46: #{tpu_custom_call.1} parent=27 // pred_check_branch
          %2855 = sbr.rel (%p2853) target = $region48
        $region47: #{tpu_custom_call.1} parent=27 // pred_region
          %v2856 = vlaneseq
          %v2857 = vshrl.u32 %v2856, 7
          %v2858 = vadd.s32 %v2857, 8
          %v2859 = vadd.s32 %v2857, 16
          %v2860 = vadd.s32 %v2857, 24
          %v2861 = vadd.s32 %v2857, 32
          %v2862 = vadd.s32 %v2857, 40
          %v2863 = vadd.s32 %v2857, 48
          %v2864 = vadd.s32 %v2857, 56
          %v2865 = vadd.s32 %v2857, 64
          %v2866 = vadd.s32 %v2857, 72
          %v2867 = vadd.s32 %v2857, 80
          %v2868 = vadd.s32 %v2857, 88
          %v2869 = vadd.s32 %v2857, 96
          %v2870 = vadd.s32 %v2857, 104
          %v2871 = vadd.s32 %v2857, 112
          %v2872 = vadd.s32 %v2857, 120
          %v2873 = vadd.s32 %v2857, 128
          %v2874 = vadd.s32 %v2857, 136
          %v2875 = vadd.s32 %v2857, 144
          %v2876 = vadd.s32 %v2857, 152
          %v2877 = vadd.s32 %v2857, 160
          %v2878 = vadd.s32 %v2857, 168
          %v2879 = vadd.s32 %v2857, 176
          %v2880 = vadd.s32 %v2857, 184
          %v2881 = vadd.s32 %v2857, 192
          %v2882 = vadd.s32 %v2857, 200
          %v2883 = vadd.s32 %v2857, 208
          %v2884 = vadd.s32 %v2857, 216
          %v2885 = vadd.s32 %v2857, 224
          %v2886 = vadd.s32 %v2857, 232
          %v2887 = vadd.s32 %v2857, 240
          %v2888 = vadd.s32 %v2857, 248
          %v2889 = vadd.s32 %v2857, 256
          %v2890 = vadd.s32 %v2857, 264
          %v2891 = vadd.s32 %v2857, 272
          %v2892 = vadd.s32 %v2857, 280
          %v2893 = vadd.s32 %v2857, 288
          %v2894 = vadd.s32 %v2857, 296
          %v2895 = vadd.s32 %v2857, 304
          %v2896 = vadd.s32 %v2857, 312
          %v2897 = vadd.s32 %v2857, 320
          %v2898 = vadd.s32 %v2857, 328
          %v2899 = vadd.s32 %v2857, 336
          %v2900 = vadd.s32 %v2857, 344
          %v2901 = vadd.s32 %v2857, 352
          %v2902 = vadd.s32 %v2857, 360
          %v2903 = vadd.s32 %v2857, 368
          %v2904 = vadd.s32 %v2857, 376
          %v2905 = vadd.s32 %v2857, 384
          %v2906 = vadd.s32 %v2857, 392
          %v2907 = vadd.s32 %v2857, 400
          %v2908 = vadd.s32 %v2857, 408
          %v2909 = vadd.s32 %v2857, 416
          %v2910 = vadd.s32 %v2857, 424
          %v2911 = vadd.s32 %v2857, 432
          %v2912 = vadd.s32 %v2857, 440
          %v2913 = vadd.s32 %v2857, 448
          %v2914 = vadd.s32 %v2857, 456
          %v2915 = vadd.s32 %v2857, 464
          %v2916 = vadd.s32 %v2857, 472
          %v2917 = vadd.s32 %v2857, 480
          %v2918 = vadd.s32 %v2857, 488
          %v2919 = vadd.s32 %v2857, 496
          %v2920 = vadd.s32 %v2857, 504
          %v2921 = vadd.s32 %v2857, 512
          %v2922 = vadd.s32 %v2857, 520
          %v2923 = vadd.s32 %v2857, 528
          %v2924 = vadd.s32 %v2857, 536
          %v2925 = vadd.s32 %v2857, 544
          %v2926 = vadd.s32 %v2857, 552
          %v2927 = vadd.s32 %v2857, 560
          %v2928 = vadd.s32 %v2857, 568
          %v2929 = vadd.s32 %v2857, 576
          %v2930 = vadd.s32 %v2857, 584
          %v2931 = vadd.s32 %v2857, 592
          %v2932 = vadd.s32 %v2857, 600
          %v2933 = vadd.s32 %v2857, 608
          %v2934 = vadd.s32 %v2857, 616
          %v2935 = vadd.s32 %v2857, 624
          %v2936 = vadd.s32 %v2857, 632
          %v2937 = vadd.s32 %v2857, 640
          %v2938 = vadd.s32 %v2857, 648
          %v2939 = vadd.s32 %v2857, 656
          %v2940 = vadd.s32 %v2857, 664
          %v2941 = vadd.s32 %v2857, 672
          %v2942 = vadd.s32 %v2857, 680
          %v2943 = vadd.s32 %v2857, 688
          %v2944 = vadd.s32 %v2857, 696
          %v2945 = vadd.s32 %v2857, 704
          %v2946 = vadd.s32 %v2857, 712
          %v2947 = vadd.s32 %v2857, 720
          %v2948 = vadd.s32 %v2857, 728
          %v2949 = vadd.s32 %v2857, 736
          %v2950 = vadd.s32 %v2857, 744
          %v2951 = vadd.s32 %v2857, 752
          %v2952 = vadd.s32 %v2857, 760
          %v2953 = vadd.s32 %v2857, 768
          %v2954 = vadd.s32 %v2857, 776
          %v2955 = vadd.s32 %v2857, 784
          %v2956 = vadd.s32 %v2857, 792
          %v2957 = vadd.s32 %v2857, 800
          %v2958 = vadd.s32 %v2857, 808
          %v2959 = vadd.s32 %v2857, 816
          %v2960 = vadd.s32 %v2857, 824
          %v2961 = vadd.s32 %v2857, 832
          %v2962 = vadd.s32 %v2857, 840
          %v2963 = vadd.s32 %v2857, 848
          %v2964 = vadd.s32 %v2857, 856
          %v2965 = vadd.s32 %v2857, 864
          %v2966 = vadd.s32 %v2857, 872
          %v2967 = vadd.s32 %v2857, 880
          %v2968 = vadd.s32 %v2857, 888
          %v2969 = vadd.s32 %v2857, 896
          %v2970 = vadd.s32 %v2857, 904
          %v2971 = vadd.s32 %v2857, 912
          %v2972 = vadd.s32 %v2857, 920
          %v2973 = vadd.s32 %v2857, 928
          %v2974 = vadd.s32 %v2857, 936
          %v2975 = vadd.s32 %v2857, 944
          %v2976 = vadd.s32 %v2857, 952
          %v2977 = vadd.s32 %v2857, 960
          %v2978 = vadd.s32 %v2857, 968
          %v2979 = vadd.s32 %v2857, 976
          %v2980 = vadd.s32 %v2857, 984
          %v2981 = vadd.s32 %v2857, 992
          %v2982 = vadd.s32 %v2857, 1000
          %v2983 = vadd.s32 %v2857, 1008
          %v2984 = vadd.s32 %v2857, 1016
          %v2985 = vadd.s32 %v2857, 1024
          %v2986 = vadd.s32 %v2857, 1032
          %v2987 = vadd.s32 %v2857, 1040
          %v2988 = vadd.s32 %v2857, 1048
          %v2989 = vadd.s32 %v2857, 1056
          %v2990 = vadd.s32 %v2857, 1064
          %v2991 = vadd.s32 %v2857, 1072
          %v2992 = vadd.s32 %v2857, 1080
          %v2993 = vadd.s32 %v2857, 1088
          %v2994 = vadd.s32 %v2857, 1096
          %v2995 = vadd.s32 %v2857, 1104
          %v2996 = vadd.s32 %v2857, 1112
          %v2997 = vadd.s32 %v2857, 1120
          %v2998 = vadd.s32 %v2857, 1128
          %v2999 = vadd.s32 %v2857, 1136
          %v3000 = vadd.s32 %v2857, 1144
          %v3001 = vadd.s32 %v2857, 1152
          %v3002 = vadd.s32 %v2857, 1160
          %v3003 = vadd.s32 %v2857, 1168
          %v3004 = vadd.s32 %v2857, 1176
          %v3005 = vadd.s32 %v2857, 1184
          %v3006 = vadd.s32 %v2857, 1192
          %v3007 = vadd.s32 %v2857, 1200
          %v3008 = vadd.s32 %v2857, 1208
          %v3009 = vadd.s32 %v2857, 1216
          %v3010 = vadd.s32 %v2857, 1224
          %v3011 = vadd.s32 %v2857, 1232
          %v3012 = vadd.s32 %v2857, 1240
          %v3013 = vadd.s32 %v2857, 1248
          %v3014 = vadd.s32 %v2857, 1256
          %v3015 = vadd.s32 %v2857, 1264
          %v3016 = vadd.s32 %v2857, 1272
          %v3017 = vadd.s32 %v2857, 1280
          %v3018 = vadd.s32 %v2857, 1288
          %v3019 = vadd.s32 %v2857, 1296
          %v3020 = vadd.s32 %v2857, 1304
          %v3021 = vadd.s32 %v2857, 1312
          %v3022 = vadd.s32 %v2857, 1320
          %v3023 = vadd.s32 %v2857, 1328
          %v3024 = vadd.s32 %v2857, 1336
          %v3025 = vadd.s32 %v2857, 1344
          %v3026 = vadd.s32 %v2857, 1352
          %v3027 = vadd.s32 %v2857, 1360
          %v3028 = vadd.s32 %v2857, 1368
          %v3029 = vadd.s32 %v2857, 1376
          %v3030 = vadd.s32 %v2857, 1384
          %v3031 = vadd.s32 %v2857, 1392
          %v3032 = vadd.s32 %v2857, 1400
          %v3033 = vadd.s32 %v2857, 1408
          %v3034 = vadd.s32 %v2857, 1416
          %v3035 = vadd.s32 %v2857, 1424
          %v3036 = vadd.s32 %v2857, 1432
          %v3037 = vadd.s32 %v2857, 1440
          %v3038 = vadd.s32 %v2857, 1448
          %v3039 = vadd.s32 %v2857, 1456
          %v3040 = vadd.s32 %v2857, 1464
          %v3041 = vadd.s32 %v2857, 1472
          %v3042 = vadd.s32 %v2857, 1480
          %v3043 = vadd.s32 %v2857, 1488
          %v3044 = vadd.s32 %v2857, 1496
          %v3045 = vadd.s32 %v2857, 1504
          %v3046 = vadd.s32 %v2857, 1512
          %v3047 = vadd.s32 %v2857, 1520
          %v3048 = vadd.s32 %v2857, 1528
          %v3049 = vadd.s32 %v2857, 1536
          %v3050 = vadd.s32 %v2857, 1544
          %v3051 = vadd.s32 %v2857, 1552
          %v3052 = vadd.s32 %v2857, 1560
          %v3053 = vadd.s32 %v2857, 1568
          %v3054 = vadd.s32 %v2857, 1576
          %v3055 = vadd.s32 %v2857, 1584
          %v3056 = vadd.s32 %v2857, 1592
          %v3057 = vadd.s32 %v2857, 1600
          %v3058 = vadd.s32 %v2857, 1608
          %v3059 = vadd.s32 %v2857, 1616
          %v3060 = vadd.s32 %v2857, 1624
          %v3061 = vadd.s32 %v2857, 1632
          %v3062 = vadd.s32 %v2857, 1640
          %v3063 = vadd.s32 %v2857, 1648
          %v3064 = vadd.s32 %v2857, 1656
          %v3065 = vadd.s32 %v2857, 1664
          %v3066 = vadd.s32 %v2857, 1672
          %v3067 = vadd.s32 %v2857, 1680
          %v3068 = vadd.s32 %v2857, 1688
          %v3069 = vadd.s32 %v2857, 1696
          %v3070 = vadd.s32 %v2857, 1704
          %v3071 = vadd.s32 %v2857, 1712
          %v3072 = vadd.s32 %v2857, 1720
          %v3073 = vadd.s32 %v2857, 1728
          %v3074 = vadd.s32 %v2857, 1736
          %v3075 = vadd.s32 %v2857, 1744
          %v3076 = vadd.s32 %v2857, 1752
          %v3077 = vadd.s32 %v2857, 1760
          %v3078 = vadd.s32 %v2857, 1768
          %v3079 = vadd.s32 %v2857, 1776
          %v3080 = vadd.s32 %v2857, 1784
          %v3081 = vadd.s32 %v2857, 1792
          %v3082 = vadd.s32 %v2857, 1800
          %v3083 = vadd.s32 %v2857, 1808
          %v3084 = vadd.s32 %v2857, 1816
          %v3085 = vadd.s32 %v2857, 1824
          %v3086 = vadd.s32 %v2857, 1832
          %v3087 = vadd.s32 %v2857, 1840
          %v3088 = vadd.s32 %v2857, 1848
          %v3089 = vadd.s32 %v2857, 1856
          %v3090 = vadd.s32 %v2857, 1864
          %v3091 = vadd.s32 %v2857, 1872
          %v3092 = vadd.s32 %v2857, 1880
          %v3093 = vadd.s32 %v2857, 1888
          %v3094 = vadd.s32 %v2857, 1896
          %v3095 = vadd.s32 %v2857, 1904
          %v3096 = vadd.s32 %v2857, 1912
          %v3097 = vadd.s32 %v2857, 1920
          %v3098 = vadd.s32 %v2857, 1928
          %v3099 = vadd.s32 %v2857, 1936
          %v3100 = vadd.s32 %v2857, 1944
          %v3101 = vadd.s32 %v2857, 1952
          %v3102 = vadd.s32 %v2857, 1960
          %v3103 = vadd.s32 %v2857, 1968
          %v3104 = vadd.s32 %v2857, 1976
          %v3105 = vadd.s32 %v2857, 1984
          %v3106 = vadd.s32 %v2857, 1992
          %v3107 = vadd.s32 %v2857, 2000
          %v3108 = vadd.s32 %v2857, 2008
          %v3109 = vadd.s32 %v2857, 2016
          %v3110 = vadd.s32 %v2857, 2024
          %v3111 = vadd.s32 %v2857, 2032
          %v3112 = vadd.s32 %v2857, 2040
          %v3113 = vadd.s32 %v2857, 2048
          %v3114 = vadd.s32 %v2857, 2056
          %v3115 = vadd.s32 %v2857, 2064
          %v3116 = vadd.s32 %v2857, 2072
          %v3117 = vadd.s32 %v2857, 2080
          %v3118 = vadd.s32 %v2857, 2088
          %v3119 = vadd.s32 %v2857, 2096
          %v3120 = vadd.s32 %v2857, 2104
          %v3121 = vadd.s32 %v2857, 2112
          %v3122 = vadd.s32 %v2857, 2120
          %v3123 = vadd.s32 %v2857, 2128
          %v3124 = vadd.s32 %v2857, 2136
          %v3125 = vadd.s32 %v2857, 2144
          %v3126 = vadd.s32 %v2857, 2152
          %v3127 = vadd.s32 %v2857, 2160
          %v3128 = vadd.s32 %v2857, 2168
          %v3129 = vadd.s32 %v2857, 2176
          %v3130 = vadd.s32 %v2857, 2184
          %v3131 = vadd.s32 %v2857, 2192
          %v3132 = vadd.s32 %v2857, 2200
          %v3133 = vadd.s32 %v2857, 2208
          %v3134 = vadd.s32 %v2857, 2216
          %v3135 = vadd.s32 %v2857, 2224
          %v3136 = vadd.s32 %v2857, 2232
          %v3137 = vadd.s32 %v2857, 2240
          %v3138 = vadd.s32 %v2857, 2248
          %v3139 = vadd.s32 %v2857, 2256
          %v3140 = vadd.s32 %v2857, 2264
          %v3141 = vadd.s32 %v2857, 2272
          %v3142 = vadd.s32 %v2857, 2280
          %v3143 = vadd.s32 %v2857, 2288
          %v3144 = vadd.s32 %v2857, 2296
          %v3145 = vadd.s32 %v2857, 2304
          %v3146 = vadd.s32 %v2857, 2312
          %v3147 = vadd.s32 %v2857, 2320
          %v3148 = vadd.s32 %v2857, 2328
          %v3149 = vadd.s32 %v2857, 2336
          %v3150 = vadd.s32 %v2857, 2344
          %v3151 = vadd.s32 %v2857, 2352
          %v3152 = vadd.s32 %v2857, 2360
          %v3153 = vadd.s32 %v2857, 2368
          %v3154 = vadd.s32 %v2857, 2376
          %v3155 = vadd.s32 %v2857, 2384
          %v3156 = vadd.s32 %v2857, 2392
          %v3157 = vadd.s32 %v2857, 2400
          %v3158 = vadd.s32 %v2857, 2408
          %v3159 = vadd.s32 %v2857, 2416
          %v3160 = vadd.s32 %v2857, 2424
          %v3161 = vadd.s32 %v2857, 2432
          %v3162 = vadd.s32 %v2857, 2440
          %v3163 = vadd.s32 %v2857, 2448
          %v3164 = vadd.s32 %v2857, 2456
          %v3165 = vadd.s32 %v2857, 2464
          %v3166 = vadd.s32 %v2857, 2472
          %v3167 = vadd.s32 %v2857, 2480
          %v3168 = vadd.s32 %v2857, 2488
          %v3169 = vadd.s32 %v2857, 2496
          %v3170 = vadd.s32 %v2857, 2504
          %v3171 = vadd.s32 %v2857, 2512
          %v3172 = vadd.s32 %v2857, 2520
          %v3173 = vadd.s32 %v2857, 2528
          %v3174 = vadd.s32 %v2857, 2536
          %v3175 = vadd.s32 %v2857, 2544
          %v3176 = vadd.s32 %v2857, 2552
          %v3177 = vadd.s32 %v2857, 2560
          %v3178 = vadd.s32 %v2857, 2568
          %v3179 = vadd.s32 %v2857, 2576
          %v3180 = vadd.s32 %v2857, 2584
          %v3181 = vadd.s32 %v2857, 2592
          %v3182 = vadd.s32 %v2857, 2600
          %v3183 = vadd.s32 %v2857, 2608
          %v3184 = vadd.s32 %v2857, 2616
          %v3185 = vadd.s32 %v2857, 2624
          %v3186 = vadd.s32 %v2857, 2632
          %v3187 = vadd.s32 %v2857, 2640
          %v3188 = vadd.s32 %v2857, 2648
          %v3189 = vadd.s32 %v2857, 2656
          %v3190 = vadd.s32 %v2857, 2664
          %v3191 = vadd.s32 %v2857, 2672
          %v3192 = vadd.s32 %v2857, 2680
          %v3193 = vadd.s32 %v2857, 2688
          %v3194 = vadd.s32 %v2857, 2696
          %v3195 = vadd.s32 %v2857, 2704
          %v3196 = vadd.s32 %v2857, 2712
          %v3197 = vadd.s32 %v2857, 2720
          %v3198 = vadd.s32 %v2857, 2728
          %v3199 = vadd.s32 %v2857, 2736
          %v3200 = vadd.s32 %v2857, 2744
          %v3201 = vadd.s32 %v2857, 2752
          %v3202 = vadd.s32 %v2857, 2760
          %v3203 = vadd.s32 %v2857, 2768
          %v3204 = vadd.s32 %v2857, 2776
          %v3205 = vadd.s32 %v2857, 2784
          %v3206 = vadd.s32 %v2857, 2792
          %v3207 = vadd.s32 %v2857, 2800
          %v3208 = vadd.s32 %v2857, 2808
          %v3209 = vadd.s32 %v2857, 2816
          %v3210 = vadd.s32 %v2857, 2824
          %v3211 = vadd.s32 %v2857, 2832
          %v3212 = vadd.s32 %v2857, 2840
          %v3213 = vadd.s32 %v2857, 2848
          %v3214 = vadd.s32 %v2857, 2856
          %v3215 = vadd.s32 %v2857, 2864
          %v3216 = vadd.s32 %v2857, 2872
          %v3217 = vadd.s32 %v2857, 2880
          %v3218 = vadd.s32 %v2857, 2888
          %v3219 = vadd.s32 %v2857, 2896
          %v3220 = vadd.s32 %v2857, 2904
          %v3221 = vadd.s32 %v2857, 2912
          %v3222 = vadd.s32 %v2857, 2920
          %v3223 = vadd.s32 %v2857, 2928
          %v3224 = vadd.s32 %v2857, 2936
          %v3225 = vadd.s32 %v2857, 2944
          %v3226 = vadd.s32 %v2857, 2952
          %v3227 = vadd.s32 %v2857, 2960
          %v3228 = vadd.s32 %v2857, 2968
          %v3229 = vadd.s32 %v2857, 2976
          %v3230 = vadd.s32 %v2857, 2984
          %v3231 = vadd.s32 %v2857, 2992
          %v3232 = vadd.s32 %v2857, 3000
          %v3233 = vadd.s32 %v2857, 3008
          %v3234 = vadd.s32 %v2857, 3016
          %v3235 = vadd.s32 %v2857, 3024
          %v3236 = vadd.s32 %v2857, 3032
          %v3237 = vadd.s32 %v2857, 3040
          %v3238 = vadd.s32 %v2857, 3048
          %v3239 = vadd.s32 %v2857, 3056
          %v3240 = vadd.s32 %v2857, 3064
          %v3241 = vadd.s32 %v2857, 3072
          %v3242 = vadd.s32 %v2857, 3080
          %v3243 = vadd.s32 %v2857, 3088
          %v3244 = vadd.s32 %v2857, 3096
          %v3245 = vadd.s32 %v2857, 3104
          %v3246 = vadd.s32 %v2857, 3112
          %v3247 = vadd.s32 %v2857, 3120
          %v3248 = vadd.s32 %v2857, 3128
          %v3249 = vadd.s32 %v2857, 3136
          %v3250 = vadd.s32 %v2857, 3144
          %v3251 = vadd.s32 %v2857, 3152
          %v3252 = vadd.s32 %v2857, 3160
          %v3253 = vadd.s32 %v2857, 3168
          %v3254 = vadd.s32 %v2857, 3176
          %v3255 = vadd.s32 %v2857, 3184
          %v3256 = vadd.s32 %v2857, 3192
          %v3257 = vadd.s32 %v2857, 3200
          %v3258 = vadd.s32 %v2857, 3208
          %v3259 = vadd.s32 %v2857, 3216
          %v3260 = vadd.s32 %v2857, 3224
          %v3261 = vadd.s32 %v2857, 3232
          %v3262 = vadd.s32 %v2857, 3240
          %v3263 = vadd.s32 %v2857, 3248
          %v3264 = vadd.s32 %v2857, 3256
          %v3265 = vadd.s32 %v2857, 3264
          %v3266 = vadd.s32 %v2857, 3272
          %v3267 = vadd.s32 %v2857, 3280
          %v3268 = vadd.s32 %v2857, 3288
          %v3269 = vadd.s32 %v2857, 3296
          %v3270 = vadd.s32 %v2857, 3304
          %v3271 = vadd.s32 %v2857, 3312
          %v3272 = vadd.s32 %v2857, 3320
          %v3273 = vadd.s32 %v2857, 3328
          %v3274 = vadd.s32 %v2857, 3336
          %v3275 = vadd.s32 %v2857, 3344
          %v3276 = vadd.s32 %v2857, 3352
          %v3277 = vadd.s32 %v2857, 3360
          %v3278 = vadd.s32 %v2857, 3368
          %v3279 = vadd.s32 %v2857, 3376
          %v3280 = vadd.s32 %v2857, 3384
          %v3281 = vadd.s32 %v2857, 3392
          %v3282 = vadd.s32 %v2857, 3400
          %v3283 = vadd.s32 %v2857, 3408
          %v3284 = vadd.s32 %v2857, 3416
          %v3285 = vadd.s32 %v2857, 3424
          %v3286 = vadd.s32 %v2857, 3432
          %v3287 = vadd.s32 %v2857, 3440
          %v3288 = vadd.s32 %v2857, 3448
          %v3289 = vadd.s32 %v2857, 3456
          %v3290 = vadd.s32 %v2857, 3464
          %v3291 = vadd.s32 %v2857, 3472
          %v3292 = vadd.s32 %v2857, 3480
          %v3293 = vadd.s32 %v2857, 3488
          %v3294 = vadd.s32 %v2857, 3496
          %v3295 = vadd.s32 %v2857, 3504
          %v3296 = vadd.s32 %v2857, 3512
          %v3297 = vadd.s32 %v2857, 3520
          %v3298 = vadd.s32 %v2857, 3528
          %v3299 = vadd.s32 %v2857, 3536
          %v3300 = vadd.s32 %v2857, 3544
          %v3301 = vadd.s32 %v2857, 3552
          %v3302 = vadd.s32 %v2857, 3560
          %v3303 = vadd.s32 %v2857, 3568
          %v3304 = vadd.s32 %v2857, 3576
          %v3305 = vadd.s32 %v2857, 3584
          %v3306 = vadd.s32 %v2857, 3592
          %v3307 = vadd.s32 %v2857, 3600
          %v3308 = vadd.s32 %v2857, 3608
          %v3309 = vadd.s32 %v2857, 3616
          %v3310 = vadd.s32 %v2857, 3624
          %v3311 = vadd.s32 %v2857, 3632
          %v3312 = vadd.s32 %v2857, 3640
          %v3313 = vadd.s32 %v2857, 3648
          %v3314 = vadd.s32 %v2857, 3656
          %v3315 = vadd.s32 %v2857, 3664
          %v3316 = vadd.s32 %v2857, 3672
          %v3317 = vadd.s32 %v2857, 3680
          %v3318 = vadd.s32 %v2857, 3688
          %v3319 = vadd.s32 %v2857, 3696
          %v3320 = vadd.s32 %v2857, 3704
          %v3321 = vadd.s32 %v2857, 3712
          %v3322 = vadd.s32 %v2857, 3720
          %v3323 = vadd.s32 %v2857, 3728
          %v3324 = vadd.s32 %v2857, 3736
          %v3325 = vadd.s32 %v2857, 3744
          %v3326 = vadd.s32 %v2857, 3752
          %v3327 = vadd.s32 %v2857, 3760
          %v3328 = vadd.s32 %v2857, 3768
          %v3329 = vadd.s32 %v2857, 3776
          %v3330 = vadd.s32 %v2857, 3784
          %v3331 = vadd.s32 %v2857, 3792
          %v3332 = vadd.s32 %v2857, 3800
          %v3333 = vadd.s32 %v2857, 3808
          %v3334 = vadd.s32 %v2857, 3816
          %v3335 = vadd.s32 %v2857, 3824
          %v3336 = vadd.s32 %v2857, 3832
          %v3337 = vadd.s32 %v2857, 3840
          %v3338 = vadd.s32 %v2857, 3848
          %v3339 = vadd.s32 %v2857, 3856
          %v3340 = vadd.s32 %v2857, 3864
          %v3341 = vadd.s32 %v2857, 3872
          %v3342 = vadd.s32 %v2857, 3880
          %v3343 = vadd.s32 %v2857, 3888
          %v3344 = vadd.s32 %v2857, 3896
          %v3345 = vadd.s32 %v2857, 3904
          %v3346 = vadd.s32 %v2857, 3912
          %v3347 = vadd.s32 %v2857, 3920
          %v3348 = vadd.s32 %v2857, 3928
          %v3349 = vadd.s32 %v2857, 3936
          %v3350 = vadd.s32 %v2857, 3944
          %v3351 = vadd.s32 %v2857, 3952
          %v3352 = vadd.s32 %v2857, 3960
          %v3353 = vadd.s32 %v2857, 3968
          %v3354 = vadd.s32 %v2857, 3976
          %v3355 = vadd.s32 %v2857, 3984
          %v3356 = vadd.s32 %v2857, 3992
          %v3357 = vadd.s32 %v2857, 4000
          %v3358 = vadd.s32 %v2857, 4008
          %v3359 = vadd.s32 %v2857, 4016
          %v3360 = vadd.s32 %v2857, 4024
          %v3361 = vadd.s32 %v2857, 4032
          %v3362 = vadd.s32 %v2857, 4040
          %v3363 = vadd.s32 %v2857, 4048
          %v3364 = vadd.s32 %v2857, 4056
          %v3365 = vadd.s32 %v2857, 4064
          %v3366 = vadd.s32 %v2857, 4072
          %v3367 = vadd.s32 %v2857, 4080
          %v3368 = vadd.s32 %v2857, 4088
          %v3369 = vstv %s2326
          %v3370 = vadd.s32 %v3369, %v2857
          %v3371 = vadd.s32 %v3369, %v2858
          %v3372 = vadd.s32 %v3369, %v2859
          %v3373 = vadd.s32 %v3369, %v2860
          %v3374 = vadd.s32 %v3369, %v2861
          %v3375 = vadd.s32 %v3369, %v2862
          %v3376 = vadd.s32 %v3369, %v2863
          %v3377 = vadd.s32 %v3369, %v2864
          %v3378 = vadd.s32 %v3369, %v2865
          %v3379 = vadd.s32 %v3369, %v2866
          %v3380 = vadd.s32 %v3369, %v2867
          %v3381 = vadd.s32 %v3369, %v2868
          %v3382 = vadd.s32 %v3369, %v2869
          %v3383 = vadd.s32 %v3369, %v2870
          %v3384 = vadd.s32 %v3369, %v2871
          %v3385 = vadd.s32 %v3369, %v2872
          %v3386 = vadd.s32 %v3369, %v2873
          %v3387 = vadd.s32 %v3369, %v2874
          %v3388 = vadd.s32 %v3369, %v2875
          %v3389 = vadd.s32 %v3369, %v2876
          %v3390 = vadd.s32 %v3369, %v2877
          %v3391 = vadd.s32 %v3369, %v2878
          %v3392 = vadd.s32 %v3369, %v2879
          %v3393 = vadd.s32 %v3369, %v2880
          %v3394 = vadd.s32 %v3369, %v2881
          %v3395 = vadd.s32 %v3369, %v2882
          %v3396 = vadd.s32 %v3369, %v2883
          %v3397 = vadd.s32 %v3369, %v2884
          %v3398 = vadd.s32 %v3369, %v2885
          %v3399 = vadd.s32 %v3369, %v2886
          %v3400 = vadd.s32 %v3369, %v2887
          %v3401 = vadd.s32 %v3369, %v2888
          %v3402 = vadd.s32 %v3369, %v2889
          %v3403 = vadd.s32 %v3369, %v2890
          %v3404 = vadd.s32 %v3369, %v2891
          %v3405 = vadd.s32 %v3369, %v2892
          %v3406 = vadd.s32 %v3369, %v2893
          %v3407 = vadd.s32 %v3369, %v2894
          %v3408 = vadd.s32 %v3369, %v2895
          %v3409 = vadd.s32 %v3369, %v2896
          %v3410 = vadd.s32 %v3369, %v2897
          %v3411 = vadd.s32 %v3369, %v2898
          %v3412 = vadd.s32 %v3369, %v2899
          %v3413 = vadd.s32 %v3369, %v2900
          %v3414 = vadd.s32 %v3369, %v2901
          %v3415 = vadd.s32 %v3369, %v2902
          %v3416 = vadd.s32 %v3369, %v2903
          %v3417 = vadd.s32 %v3369, %v2904
          %v3418 = vadd.s32 %v3369, %v2905
          %v3419 = vadd.s32 %v3369, %v2906
          %v3420 = vadd.s32 %v3369, %v2907
          %v3421 = vadd.s32 %v3369, %v2908
          %v3422 = vadd.s32 %v3369, %v2909
          %v3423 = vadd.s32 %v3369, %v2910
          %v3424 = vadd.s32 %v3369, %v2911
          %v3425 = vadd.s32 %v3369, %v2912
          %v3426 = vadd.s32 %v3369, %v2913
          %v3427 = vadd.s32 %v3369, %v2914
          %v3428 = vadd.s32 %v3369, %v2915
          %v3429 = vadd.s32 %v3369, %v2916
          %v3430 = vadd.s32 %v3369, %v2917
          %v3431 = vadd.s32 %v3369, %v2918
          %v3432 = vadd.s32 %v3369, %v2919
          %v3433 = vadd.s32 %v3369, %v2920
          %v3434 = vadd.s32 %v3369, %v2921
          %v3435 = vadd.s32 %v3369, %v2922
          %v3436 = vadd.s32 %v3369, %v2923
          %v3437 = vadd.s32 %v3369, %v2924
          %v3438 = vadd.s32 %v3369, %v2925
          %v3439 = vadd.s32 %v3369, %v2926
          %v3440 = vadd.s32 %v3369, %v2927
          %v3441 = vadd.s32 %v3369, %v2928
          %v3442 = vadd.s32 %v3369, %v2929
          %v3443 = vadd.s32 %v3369, %v2930
          %v3444 = vadd.s32 %v3369, %v2931
          %v3445 = vadd.s32 %v3369, %v2932
          %v3446 = vadd.s32 %v3369, %v2933
          %v3447 = vadd.s32 %v3369, %v2934
          %v3448 = vadd.s32 %v3369, %v2935
          %v3449 = vadd.s32 %v3369, %v2936
          %v3450 = vadd.s32 %v3369, %v2937
          %v3451 = vadd.s32 %v3369, %v2938
          %v3452 = vadd.s32 %v3369, %v2939
          %v3453 = vadd.s32 %v3369, %v2940
          %v3454 = vadd.s32 %v3369, %v2941
          %v3455 = vadd.s32 %v3369, %v2942
          %v3456 = vadd.s32 %v3369, %v2943
          %v3457 = vadd.s32 %v3369, %v2944
          %v3458 = vadd.s32 %v3369, %v2945
          %v3459 = vadd.s32 %v3369, %v2946
          %v3460 = vadd.s32 %v3369, %v2947
          %v3461 = vadd.s32 %v3369, %v2948
          %v3462 = vadd.s32 %v3369, %v2949
          %v3463 = vadd.s32 %v3369, %v2950
          %v3464 = vadd.s32 %v3369, %v2951
          %v3465 = vadd.s32 %v3369, %v2952
          %v3466 = vadd.s32 %v3369, %v2953
          %v3467 = vadd.s32 %v3369, %v2954
          %v3468 = vadd.s32 %v3369, %v2955
          %v3469 = vadd.s32 %v3369, %v2956
          %v3470 = vadd.s32 %v3369, %v2957
          %v3471 = vadd.s32 %v3369, %v2958
          %v3472 = vadd.s32 %v3369, %v2959
          %v3473 = vadd.s32 %v3369, %v2960
          %v3474 = vadd.s32 %v3369, %v2961
          %v3475 = vadd.s32 %v3369, %v2962
          %v3476 = vadd.s32 %v3369, %v2963
          %v3477 = vadd.s32 %v3369, %v2964
          %v3478 = vadd.s32 %v3369, %v2965
          %v3479 = vadd.s32 %v3369, %v2966
          %v3480 = vadd.s32 %v3369, %v2967
          %v3481 = vadd.s32 %v3369, %v2968
          %v3482 = vadd.s32 %v3369, %v2969
          %v3483 = vadd.s32 %v3369, %v2970
          %v3484 = vadd.s32 %v3369, %v2971
          %v3485 = vadd.s32 %v3369, %v2972
          %v3486 = vadd.s32 %v3369, %v2973
          %v3487 = vadd.s32 %v3369, %v2974
          %v3488 = vadd.s32 %v3369, %v2975
          %v3489 = vadd.s32 %v3369, %v2976
          %v3490 = vadd.s32 %v3369, %v2977
          %v3491 = vadd.s32 %v3369, %v2978
          %v3492 = vadd.s32 %v3369, %v2979
          %v3493 = vadd.s32 %v3369, %v2980
          %v3494 = vadd.s32 %v3369, %v2981
          %v3495 = vadd.s32 %v3369, %v2982
          %v3496 = vadd.s32 %v3369, %v2983
          %v3497 = vadd.s32 %v3369, %v2984
          %v3498 = vadd.s32 %v3369, %v2985
          %v3499 = vadd.s32 %v3369, %v2986
          %v3500 = vadd.s32 %v3369, %v2987
          %v3501 = vadd.s32 %v3369, %v2988
          %v3502 = vadd.s32 %v3369, %v2989
          %v3503 = vadd.s32 %v3369, %v2990
          %v3504 = vadd.s32 %v3369, %v2991
          %v3505 = vadd.s32 %v3369, %v2992
          %v3506 = vadd.s32 %v3369, %v2993
          %v3507 = vadd.s32 %v3369, %v2994
          %v3508 = vadd.s32 %v3369, %v2995
          %v3509 = vadd.s32 %v3369, %v2996
          %v3510 = vadd.s32 %v3369, %v2997
          %v3511 = vadd.s32 %v3369, %v2998
          %v3512 = vadd.s32 %v3369, %v2999
          %v3513 = vadd.s32 %v3369, %v3000
          %v3514 = vadd.s32 %v3369, %v3001
          %v3515 = vadd.s32 %v3369, %v3002
          %v3516 = vadd.s32 %v3369, %v3003
          %v3517 = vadd.s32 %v3369, %v3004
          %v3518 = vadd.s32 %v3369, %v3005
          %v3519 = vadd.s32 %v3369, %v3006
          %v3520 = vadd.s32 %v3369, %v3007
          %v3521 = vadd.s32 %v3369, %v3008
          %v3522 = vadd.s32 %v3369, %v3009
          %v3523 = vadd.s32 %v3369, %v3010
          %v3524 = vadd.s32 %v3369, %v3011
          %v3525 = vadd.s32 %v3369, %v3012
          %v3526 = vadd.s32 %v3369, %v3013
          %v3527 = vadd.s32 %v3369, %v3014
          %v3528 = vadd.s32 %v3369, %v3015
          %v3529 = vadd.s32 %v3369, %v3016
          %v3530 = vadd.s32 %v3369, %v3017
          %v3531 = vadd.s32 %v3369, %v3018
          %v3532 = vadd.s32 %v3369, %v3019
          %v3533 = vadd.s32 %v3369, %v3020
          %v3534 = vadd.s32 %v3369, %v3021
          %v3535 = vadd.s32 %v3369, %v3022
          %v3536 = vadd.s32 %v3369, %v3023
          %v3537 = vadd.s32 %v3369, %v3024
          %v3538 = vadd.s32 %v3369, %v3025
          %v3539 = vadd.s32 %v3369, %v3026
          %v3540 = vadd.s32 %v3369, %v3027
          %v3541 = vadd.s32 %v3369, %v3028
          %v3542 = vadd.s32 %v3369, %v3029
          %v3543 = vadd.s32 %v3369, %v3030
          %v3544 = vadd.s32 %v3369, %v3031
          %v3545 = vadd.s32 %v3369, %v3032
          %v3546 = vadd.s32 %v3369, %v3033
          %v3547 = vadd.s32 %v3369, %v3034
          %v3548 = vadd.s32 %v3369, %v3035
          %v3549 = vadd.s32 %v3369, %v3036
          %v3550 = vadd.s32 %v3369, %v3037
          %v3551 = vadd.s32 %v3369, %v3038
          %v3552 = vadd.s32 %v3369, %v3039
          %v3553 = vadd.s32 %v3369, %v3040
          %v3554 = vadd.s32 %v3369, %v3041
          %v3555 = vadd.s32 %v3369, %v3042
          %v3556 = vadd.s32 %v3369, %v3043
          %v3557 = vadd.s32 %v3369, %v3044
          %v3558 = vadd.s32 %v3369, %v3045
          %v3559 = vadd.s32 %v3369, %v3046
          %v3560 = vadd.s32 %v3369, %v3047
          %v3561 = vadd.s32 %v3369, %v3048
          %v3562 = vadd.s32 %v3369, %v3049
          %v3563 = vadd.s32 %v3369, %v3050
          %v3564 = vadd.s32 %v3369, %v3051
          %v3565 = vadd.s32 %v3369, %v3052
          %v3566 = vadd.s32 %v3369, %v3053
          %v3567 = vadd.s32 %v3369, %v3054
          %v3568 = vadd.s32 %v3369, %v3055
          %v3569 = vadd.s32 %v3369, %v3056
          %v3570 = vadd.s32 %v3369, %v3057
          %v3571 = vadd.s32 %v3369, %v3058
          %v3572 = vadd.s32 %v3369, %v3059
          %v3573 = vadd.s32 %v3369, %v3060
          %v3574 = vadd.s32 %v3369, %v3061
          %v3575 = vadd.s32 %v3369, %v3062
          %v3576 = vadd.s32 %v3369, %v3063
          %v3577 = vadd.s32 %v3369, %v3064
          %v3578 = vadd.s32 %v3369, %v3065
          %v3579 = vadd.s32 %v3369, %v3066
          %v3580 = vadd.s32 %v3369, %v3067
          %v3581 = vadd.s32 %v3369, %v3068
          %v3582 = vadd.s32 %v3369, %v3069
          %v3583 = vadd.s32 %v3369, %v3070
          %v3584 = vadd.s32 %v3369, %v3071
          %v3585 = vadd.s32 %v3369, %v3072
          %v3586 = vadd.s32 %v3369, %v3073
          %v3587 = vadd.s32 %v3369, %v3074
          %v3588 = vadd.s32 %v3369, %v3075
          %v3589 = vadd.s32 %v3369, %v3076
          %v3590 = vadd.s32 %v3369, %v3077
          %v3591 = vadd.s32 %v3369, %v3078
          %v3592 = vadd.s32 %v3369, %v3079
          %v3593 = vadd.s32 %v3369, %v3080
          %v3594 = vadd.s32 %v3369, %v3081
          %v3595 = vadd.s32 %v3369, %v3082
          %v3596 = vadd.s32 %v3369, %v3083
          %v3597 = vadd.s32 %v3369, %v3084
          %v3598 = vadd.s32 %v3369, %v3085
          %v3599 = vadd.s32 %v3369, %v3086
          %v3600 = vadd.s32 %v3369, %v3087
          %v3601 = vadd.s32 %v3369, %v3088
          %v3602 = vadd.s32 %v3369, %v3089
          %v3603 = vadd.s32 %v3369, %v3090
          %v3604 = vadd.s32 %v3369, %v3091
          %v3605 = vadd.s32 %v3369, %v3092
          %v3606 = vadd.s32 %v3369, %v3093
          %v3607 = vadd.s32 %v3369, %v3094
          %v3608 = vadd.s32 %v3369, %v3095
          %v3609 = vadd.s32 %v3369, %v3096
          %v3610 = vadd.s32 %v3369, %v3097
          %v3611 = vadd.s32 %v3369, %v3098
          %v3612 = vadd.s32 %v3369, %v3099
          %v3613 = vadd.s32 %v3369, %v3100
          %v3614 = vadd.s32 %v3369, %v3101
          %v3615 = vadd.s32 %v3369, %v3102
          %v3616 = vadd.s32 %v3369, %v3103
          %v3617 = vadd.s32 %v3369, %v3104
          %v3618 = vadd.s32 %v3369, %v3105
          %v3619 = vadd.s32 %v3369, %v3106
          %v3620 = vadd.s32 %v3369, %v3107
          %v3621 = vadd.s32 %v3369, %v3108
          %v3622 = vadd.s32 %v3369, %v3109
          %v3623 = vadd.s32 %v3369, %v3110
          %v3624 = vadd.s32 %v3369, %v3111
          %v3625 = vadd.s32 %v3369, %v3112
          %v3626 = vadd.s32 %v3369, %v3113
          %v3627 = vadd.s32 %v3369, %v3114
          %v3628 = vadd.s32 %v3369, %v3115
          %v3629 = vadd.s32 %v3369, %v3116
          %v3630 = vadd.s32 %v3369, %v3117
          %v3631 = vadd.s32 %v3369, %v3118
          %v3632 = vadd.s32 %v3369, %v3119
          %v3633 = vadd.s32 %v3369, %v3120
          %v3634 = vadd.s32 %v3369, %v3121
          %v3635 = vadd.s32 %v3369, %v3122
          %v3636 = vadd.s32 %v3369, %v3123
          %v3637 = vadd.s32 %v3369, %v3124
          %v3638 = vadd.s32 %v3369, %v3125
          %v3639 = vadd.s32 %v3369, %v3126
          %v3640 = vadd.s32 %v3369, %v3127
          %v3641 = vadd.s32 %v3369, %v3128
          %v3642 = vadd.s32 %v3369, %v3129
          %v3643 = vadd.s32 %v3369, %v3130
          %v3644 = vadd.s32 %v3369, %v3131
          %v3645 = vadd.s32 %v3369, %v3132
          %v3646 = vadd.s32 %v3369, %v3133
          %v3647 = vadd.s32 %v3369, %v3134
          %v3648 = vadd.s32 %v3369, %v3135
          %v3649 = vadd.s32 %v3369, %v3136
          %v3650 = vadd.s32 %v3369, %v3137
          %v3651 = vadd.s32 %v3369, %v3138
          %v3652 = vadd.s32 %v3369, %v3139
          %v3653 = vadd.s32 %v3369, %v3140
          %v3654 = vadd.s32 %v3369, %v3141
          %v3655 = vadd.s32 %v3369, %v3142
          %v3656 = vadd.s32 %v3369, %v3143
          %v3657 = vadd.s32 %v3369, %v3144
          %v3658 = vadd.s32 %v3369, %v3145
          %v3659 = vadd.s32 %v3369, %v3146
          %v3660 = vadd.s32 %v3369, %v3147
          %v3661 = vadd.s32 %v3369, %v3148
          %v3662 = vadd.s32 %v3369, %v3149
          %v3663 = vadd.s32 %v3369, %v3150
          %v3664 = vadd.s32 %v3369, %v3151
          %v3665 = vadd.s32 %v3369, %v3152
          %v3666 = vadd.s32 %v3369, %v3153
          %v3667 = vadd.s32 %v3369, %v3154
          %v3668 = vadd.s32 %v3369, %v3155
          %v3669 = vadd.s32 %v3369, %v3156
          %v3670 = vadd.s32 %v3369, %v3157
          %v3671 = vadd.s32 %v3369, %v3158
          %v3672 = vadd.s32 %v3369, %v3159
          %v3673 = vadd.s32 %v3369, %v3160
          %v3674 = vadd.s32 %v3369, %v3161
          %v3675 = vadd.s32 %v3369, %v3162
          %v3676 = vadd.s32 %v3369, %v3163
          %v3677 = vadd.s32 %v3369, %v3164
          %v3678 = vadd.s32 %v3369, %v3165
          %v3679 = vadd.s32 %v3369, %v3166
          %v3680 = vadd.s32 %v3369, %v3167
          %v3681 = vadd.s32 %v3369, %v3168
          %v3682 = vadd.s32 %v3369, %v3169
          %v3683 = vadd.s32 %v3369, %v3170
          %v3684 = vadd.s32 %v3369, %v3171
          %v3685 = vadd.s32 %v3369, %v3172
          %v3686 = vadd.s32 %v3369, %v3173
          %v3687 = vadd.s32 %v3369, %v3174
          %v3688 = vadd.s32 %v3369, %v3175
          %v3689 = vadd.s32 %v3369, %v3176
          %v3690 = vadd.s32 %v3369, %v3177
          %v3691 = vadd.s32 %v3369, %v3178
          %v3692 = vadd.s32 %v3369, %v3179
          %v3693 = vadd.s32 %v3369, %v3180
          %v3694 = vadd.s32 %v3369, %v3181
          %v3695 = vadd.s32 %v3369, %v3182
          %v3696 = vadd.s32 %v3369, %v3183
          %v3697 = vadd.s32 %v3369, %v3184
          %v3698 = vadd.s32 %v3369, %v3185
          %v3699 = vadd.s32 %v3369, %v3186
          %v3700 = vadd.s32 %v3369, %v3187
          %v3701 = vadd.s32 %v3369, %v3188
          %v3702 = vadd.s32 %v3369, %v3189
          %v3703 = vadd.s32 %v3369, %v3190
          %v3704 = vadd.s32 %v3369, %v3191
          %v3705 = vadd.s32 %v3369, %v3192
          %v3706 = vadd.s32 %v3369, %v3193
          %v3707 = vadd.s32 %v3369, %v3194
          %v3708 = vadd.s32 %v3369, %v3195
          %v3709 = vadd.s32 %v3369, %v3196
          %v3710 = vadd.s32 %v3369, %v3197
          %v3711 = vadd.s32 %v3369, %v3198
          %v3712 = vadd.s32 %v3369, %v3199
          %v3713 = vadd.s32 %v3369, %v3200
          %v3714 = vadd.s32 %v3369, %v3201
          %v3715 = vadd.s32 %v3369, %v3202
          %v3716 = vadd.s32 %v3369, %v3203
          %v3717 = vadd.s32 %v3369, %v3204
          %v3718 = vadd.s32 %v3369, %v3205
          %v3719 = vadd.s32 %v3369, %v3206
          %v3720 = vadd.s32 %v3369, %v3207
          %v3721 = vadd.s32 %v3369, %v3208
          %v3722 = vadd.s32 %v3369, %v3209
          %v3723 = vadd.s32 %v3369, %v3210
          %v3724 = vadd.s32 %v3369, %v3211
          %v3725 = vadd.s32 %v3369, %v3212
          %v3726 = vadd.s32 %v3369, %v3213
          %v3727 = vadd.s32 %v3369, %v3214
          %v3728 = vadd.s32 %v3369, %v3215
          %v3729 = vadd.s32 %v3369, %v3216
          %v3730 = vadd.s32 %v3369, %v3217
          %v3731 = vadd.s32 %v3369, %v3218
          %v3732 = vadd.s32 %v3369, %v3219
          %v3733 = vadd.s32 %v3369, %v3220
          %v3734 = vadd.s32 %v3369, %v3221
          %v3735 = vadd.s32 %v3369, %v3222
          %v3736 = vadd.s32 %v3369, %v3223
          %v3737 = vadd.s32 %v3369, %v3224
          %v3738 = vadd.s32 %v3369, %v3225
          %v3739 = vadd.s32 %v3369, %v3226
          %v3740 = vadd.s32 %v3369, %v3227
          %v3741 = vadd.s32 %v3369, %v3228
          %v3742 = vadd.s32 %v3369, %v3229
          %v3743 = vadd.s32 %v3369, %v3230
          %v3744 = vadd.s32 %v3369, %v3231
          %v3745 = vadd.s32 %v3369, %v3232
          %v3746 = vadd.s32 %v3369, %v3233
          %v3747 = vadd.s32 %v3369, %v3234
          %v3748 = vadd.s32 %v3369, %v3235
          %v3749 = vadd.s32 %v3369, %v3236
          %v3750 = vadd.s32 %v3369, %v3237
          %v3751 = vadd.s32 %v3369, %v3238
          %v3752 = vadd.s32 %v3369, %v3239
          %v3753 = vadd.s32 %v3369, %v3240
          %v3754 = vadd.s32 %v3369, %v3241
          %v3755 = vadd.s32 %v3369, %v3242
          %v3756 = vadd.s32 %v3369, %v3243
          %v3757 = vadd.s32 %v3369, %v3244
          %v3758 = vadd.s32 %v3369, %v3245
          %v3759 = vadd.s32 %v3369, %v3246
          %v3760 = vadd.s32 %v3369, %v3247
          %v3761 = vadd.s32 %v3369, %v3248
          %v3762 = vadd.s32 %v3369, %v3249
          %v3763 = vadd.s32 %v3369, %v3250
          %v3764 = vadd.s32 %v3369, %v3251
          %v3765 = vadd.s32 %v3369, %v3252
          %v3766 = vadd.s32 %v3369, %v3253
          %v3767 = vadd.s32 %v3369, %v3254
          %v3768 = vadd.s32 %v3369, %v3255
          %v3769 = vadd.s32 %v3369, %v3256
          %v3770 = vadd.s32 %v3369, %v3257
          %v3771 = vadd.s32 %v3369, %v3258
          %v3772 = vadd.s32 %v3369, %v3259
          %v3773 = vadd.s32 %v3369, %v3260
          %v3774 = vadd.s32 %v3369, %v3261
          %v3775 = vadd.s32 %v3369, %v3262
          %v3776 = vadd.s32 %v3369, %v3263
          %v3777 = vadd.s32 %v3369, %v3264
          %v3778 = vadd.s32 %v3369, %v3265
          %v3779 = vadd.s32 %v3369, %v3266
          %v3780 = vadd.s32 %v3369, %v3267
          %v3781 = vadd.s32 %v3369, %v3268
          %v3782 = vadd.s32 %v3369, %v3269
          %v3783 = vadd.s32 %v3369, %v3270
          %v3784 = vadd.s32 %v3369, %v3271
          %v3785 = vadd.s32 %v3369, %v3272
          %v3786 = vadd.s32 %v3369, %v3273
          %v3787 = vadd.s32 %v3369, %v3274
          %v3788 = vadd.s32 %v3369, %v3275
          %v3789 = vadd.s32 %v3369, %v3276
          %v3790 = vadd.s32 %v3369, %v3277
          %v3791 = vadd.s32 %v3369, %v3278
          %v3792 = vadd.s32 %v3369, %v3279
          %v3793 = vadd.s32 %v3369, %v3280
          %v3794 = vadd.s32 %v3369, %v3281
          %v3795 = vadd.s32 %v3369, %v3282
          %v3796 = vadd.s32 %v3369, %v3283
          %v3797 = vadd.s32 %v3369, %v3284
          %v3798 = vadd.s32 %v3369, %v3285
          %v3799 = vadd.s32 %v3369, %v3286
          %v3800 = vadd.s32 %v3369, %v3287
          %v3801 = vadd.s32 %v3369, %v3288
          %v3802 = vadd.s32 %v3369, %v3289
          %v3803 = vadd.s32 %v3369, %v3290
          %v3804 = vadd.s32 %v3369, %v3291
          %v3805 = vadd.s32 %v3369, %v3292
          %v3806 = vadd.s32 %v3369, %v3293
          %v3807 = vadd.s32 %v3369, %v3294
          %v3808 = vadd.s32 %v3369, %v3295
          %v3809 = vadd.s32 %v3369, %v3296
          %v3810 = vadd.s32 %v3369, %v3297
          %v3811 = vadd.s32 %v3369, %v3298
          %v3812 = vadd.s32 %v3369, %v3299
          %v3813 = vadd.s32 %v3369, %v3300
          %v3814 = vadd.s32 %v3369, %v3301
          %v3815 = vadd.s32 %v3369, %v3302
          %v3816 = vadd.s32 %v3369, %v3303
          %v3817 = vadd.s32 %v3369, %v3304
          %v3818 = vadd.s32 %v3369, %v3305
          %v3819 = vadd.s32 %v3369, %v3306
          %v3820 = vadd.s32 %v3369, %v3307
          %v3821 = vadd.s32 %v3369, %v3308
          %v3822 = vadd.s32 %v3369, %v3309
          %v3823 = vadd.s32 %v3369, %v3310
          %v3824 = vadd.s32 %v3369, %v3311
          %v3825 = vadd.s32 %v3369, %v3312
          %v3826 = vadd.s32 %v3369, %v3313
          %v3827 = vadd.s32 %v3369, %v3314
          %v3828 = vadd.s32 %v3369, %v3315
          %v3829 = vadd.s32 %v3369, %v3316
          %v3830 = vadd.s32 %v3369, %v3317
          %v3831 = vadd.s32 %v3369, %v3318
          %v3832 = vadd.s32 %v3369, %v3319
          %v3833 = vadd.s32 %v3369, %v3320
          %v3834 = vadd.s32 %v3369, %v3321
          %v3835 = vadd.s32 %v3369, %v3322
          %v3836 = vadd.s32 %v3369, %v3323
          %v3837 = vadd.s32 %v3369, %v3324
          %v3838 = vadd.s32 %v3369, %v3325
          %v3839 = vadd.s32 %v3369, %v3326
          %v3840 = vadd.s32 %v3369, %v3327
          %v3841 = vadd.s32 %v3369, %v3328
          %v3842 = vadd.s32 %v3369, %v3329
          %v3843 = vadd.s32 %v3369, %v3330
          %v3844 = vadd.s32 %v3369, %v3331
          %v3845 = vadd.s32 %v3369, %v3332
          %v3846 = vadd.s32 %v3369, %v3333
          %v3847 = vadd.s32 %v3369, %v3334
          %v3848 = vadd.s32 %v3369, %v3335
          %v3849 = vadd.s32 %v3369, %v3336
          %v3850 = vadd.s32 %v3369, %v3337
          %v3851 = vadd.s32 %v3369, %v3338
          %v3852 = vadd.s32 %v3369, %v3339
          %v3853 = vadd.s32 %v3369, %v3340
          %v3854 = vadd.s32 %v3369, %v3341
          %v3855 = vadd.s32 %v3369, %v3342
          %v3856 = vadd.s32 %v3369, %v3343
          %v3857 = vadd.s32 %v3369, %v3344
          %v3858 = vadd.s32 %v3369, %v3345
          %v3859 = vadd.s32 %v3369, %v3346
          %v3860 = vadd.s32 %v3369, %v3347
          %v3861 = vadd.s32 %v3369, %v3348
          %v3862 = vadd.s32 %v3369, %v3349
          %v3863 = vadd.s32 %v3369, %v3350
          %v3864 = vadd.s32 %v3369, %v3351
          %v3865 = vadd.s32 %v3369, %v3352
          %v3866 = vadd.s32 %v3369, %v3353
          %v3867 = vadd.s32 %v3369, %v3354
          %v3868 = vadd.s32 %v3369, %v3355
          %v3869 = vadd.s32 %v3369, %v3356
          %v3870 = vadd.s32 %v3369, %v3357
          %v3871 = vadd.s32 %v3369, %v3358
          %v3872 = vadd.s32 %v3369, %v3359
          %v3873 = vadd.s32 %v3369, %v3360
          %v3874 = vadd.s32 %v3369, %v3361
          %v3875 = vadd.s32 %v3369, %v3362
          %v3876 = vadd.s32 %v3369, %v3363
          %v3877 = vadd.s32 %v3369, %v3364
          %v3878 = vadd.s32 %v3369, %v3365
          %v3879 = vadd.s32 %v3369, %v3366
          %v3880 = vadd.s32 %v3369, %v3367
          %v3881 = vadd.s32 %v3369, %v3368
          %vm3882 = vcmp.lt.s32.totalorder %v3370, 8232
          %vm3883 = vcmp.lt.s32.totalorder %v3371, 8232
          %vm3884 = vcmp.lt.s32.totalorder %v3372, 8232
          %vm3885 = vcmp.lt.s32.totalorder %v3373, 8232
          %vm3886 = vcmp.lt.s32.totalorder %v3374, 8232
          %vm3887 = vcmp.lt.s32.totalorder %v3375, 8232
          %vm3888 = vcmp.lt.s32.totalorder %v3376, 8232
          %vm3889 = vcmp.lt.s32.totalorder %v3377, 8232
          %vm3890 = vcmp.lt.s32.totalorder %v3378, 8232
          %vm3891 = vcmp.lt.s32.totalorder %v3379, 8232
          %vm3892 = vcmp.lt.s32.totalorder %v3380, 8232
          %vm3893 = vcmp.lt.s32.totalorder %v3381, 8232
          %vm3894 = vcmp.lt.s32.totalorder %v3382, 8232
          %vm3895 = vcmp.lt.s32.totalorder %v3383, 8232
          %vm3896 = vcmp.lt.s32.totalorder %v3384, 8232
          %vm3897 = vcmp.lt.s32.totalorder %v3385, 8232
          %vm3898 = vcmp.lt.s32.totalorder %v3386, 8232
          %vm3899 = vcmp.lt.s32.totalorder %v3387, 8232
          %vm3900 = vcmp.lt.s32.totalorder %v3388, 8232
          %vm3901 = vcmp.lt.s32.totalorder %v3389, 8232
          %vm3902 = vcmp.lt.s32.totalorder %v3390, 8232
          %vm3903 = vcmp.lt.s32.totalorder %v3391, 8232
          %vm3904 = vcmp.lt.s32.totalorder %v3392, 8232
          %vm3905 = vcmp.lt.s32.totalorder %v3393, 8232
          %vm3906 = vcmp.lt.s32.totalorder %v3394, 8232
          %vm3907 = vcmp.lt.s32.totalorder %v3395, 8232
          %vm3908 = vcmp.lt.s32.totalorder %v3396, 8232
          %vm3909 = vcmp.lt.s32.totalorder %v3397, 8232
          %vm3910 = vcmp.lt.s32.totalorder %v3398, 8232
          %vm3911 = vcmp.lt.s32.totalorder %v3399, 8232
          %vm3912 = vcmp.lt.s32.totalorder %v3400, 8232
          %vm3913 = vcmp.lt.s32.totalorder %v3401, 8232
          %vm3914 = vcmp.lt.s32.totalorder %v3402, 8232
          %vm3915 = vcmp.lt.s32.totalorder %v3403, 8232
          %vm3916 = vcmp.lt.s32.totalorder %v3404, 8232
          %vm3917 = vcmp.lt.s32.totalorder %v3405, 8232
          %vm3918 = vcmp.lt.s32.totalorder %v3406, 8232
          %vm3919 = vcmp.lt.s32.totalorder %v3407, 8232
          %vm3920 = vcmp.lt.s32.totalorder %v3408, 8232
          %vm3921 = vcmp.lt.s32.totalorder %v3409, 8232
          %vm3922 = vcmp.lt.s32.totalorder %v3410, 8232
          %vm3923 = vcmp.lt.s32.totalorder %v3411, 8232
          %vm3924 = vcmp.lt.s32.totalorder %v3412, 8232
          %vm3925 = vcmp.lt.s32.totalorder %v3413, 8232
          %vm3926 = vcmp.lt.s32.totalorder %v3414, 8232
          %vm3927 = vcmp.lt.s32.totalorder %v3415, 8232
          %vm3928 = vcmp.lt.s32.totalorder %v3416, 8232
          %vm3929 = vcmp.lt.s32.totalorder %v3417, 8232
          %vm3930 = vcmp.lt.s32.totalorder %v3418, 8232
          %vm3931 = vcmp.lt.s32.totalorder %v3419, 8232
          %vm3932 = vcmp.lt.s32.totalorder %v3420, 8232
          %vm3933 = vcmp.lt.s32.totalorder %v3421, 8232
          %vm3934 = vcmp.lt.s32.totalorder %v3422, 8232
          %vm3935 = vcmp.lt.s32.totalorder %v3423, 8232
          %vm3936 = vcmp.lt.s32.totalorder %v3424, 8232
          %vm3937 = vcmp.lt.s32.totalorder %v3425, 8232
          %vm3938 = vcmp.lt.s32.totalorder %v3426, 8232
          %vm3939 = vcmp.lt.s32.totalorder %v3427, 8232
          %vm3940 = vcmp.lt.s32.totalorder %v3428, 8232
          %vm3941 = vcmp.lt.s32.totalorder %v3429, 8232
          %vm3942 = vcmp.lt.s32.totalorder %v3430, 8232
          %vm3943 = vcmp.lt.s32.totalorder %v3431, 8232
          %vm3944 = vcmp.lt.s32.totalorder %v3432, 8232
          %vm3945 = vcmp.lt.s32.totalorder %v3433, 8232
          %vm3946 = vcmp.lt.s32.totalorder %v3434, 8232
          %vm3947 = vcmp.lt.s32.totalorder %v3435, 8232
          %vm3948 = vcmp.lt.s32.totalorder %v3436, 8232
          %vm3949 = vcmp.lt.s32.totalorder %v3437, 8232
          %vm3950 = vcmp.lt.s32.totalorder %v3438, 8232
          %vm3951 = vcmp.lt.s32.totalorder %v3439, 8232
          %vm3952 = vcmp.lt.s32.totalorder %v3440, 8232
          %vm3953 = vcmp.lt.s32.totalorder %v3441, 8232
          %vm3954 = vcmp.lt.s32.totalorder %v3442, 8232
          %vm3955 = vcmp.lt.s32.totalorder %v3443, 8232
          %vm3956 = vcmp.lt.s32.totalorder %v3444, 8232
          %vm3957 = vcmp.lt.s32.totalorder %v3445, 8232
          %vm3958 = vcmp.lt.s32.totalorder %v3446, 8232
          %vm3959 = vcmp.lt.s32.totalorder %v3447, 8232
          %vm3960 = vcmp.lt.s32.totalorder %v3448, 8232
          %vm3961 = vcmp.lt.s32.totalorder %v3449, 8232
          %vm3962 = vcmp.lt.s32.totalorder %v3450, 8232
          %vm3963 = vcmp.lt.s32.totalorder %v3451, 8232
          %vm3964 = vcmp.lt.s32.totalorder %v3452, 8232
          %vm3965 = vcmp.lt.s32.totalorder %v3453, 8232
          %vm3966 = vcmp.lt.s32.totalorder %v3454, 8232
          %vm3967 = vcmp.lt.s32.totalorder %v3455, 8232
          %vm3968 = vcmp.lt.s32.totalorder %v3456, 8232
          %vm3969 = vcmp.lt.s32.totalorder %v3457, 8232
          %vm3970 = vcmp.lt.s32.totalorder %v3458, 8232
          %vm3971 = vcmp.lt.s32.totalorder %v3459, 8232
          %vm3972 = vcmp.lt.s32.totalorder %v3460, 8232
          %vm3973 = vcmp.lt.s32.totalorder %v3461, 8232
          %vm3974 = vcmp.lt.s32.totalorder %v3462, 8232
          %vm3975 = vcmp.lt.s32.totalorder %v3463, 8232
          %vm3976 = vcmp.lt.s32.totalorder %v3464, 8232
          %vm3977 = vcmp.lt.s32.totalorder %v3465, 8232
          %vm3978 = vcmp.lt.s32.totalorder %v3466, 8232
          %vm3979 = vcmp.lt.s32.totalorder %v3467, 8232
          %vm3980 = vcmp.lt.s32.totalorder %v3468, 8232
          %vm3981 = vcmp.lt.s32.totalorder %v3469, 8232
          %vm3982 = vcmp.lt.s32.totalorder %v3470, 8232
          %vm3983 = vcmp.lt.s32.totalorder %v3471, 8232
          %vm3984 = vcmp.lt.s32.totalorder %v3472, 8232
          %vm3985 = vcmp.lt.s32.totalorder %v3473, 8232
          %vm3986 = vcmp.lt.s32.totalorder %v3474, 8232
          %vm3987 = vcmp.lt.s32.totalorder %v3475, 8232
          %vm3988 = vcmp.lt.s32.totalorder %v3476, 8232
          %vm3989 = vcmp.lt.s32.totalorder %v3477, 8232
          %vm3990 = vcmp.lt.s32.totalorder %v3478, 8232
          %vm3991 = vcmp.lt.s32.totalorder %v3479, 8232
          %vm3992 = vcmp.lt.s32.totalorder %v3480, 8232
          %vm3993 = vcmp.lt.s32.totalorder %v3481, 8232
          %vm3994 = vcmp.lt.s32.totalorder %v3482, 8232
          %vm3995 = vcmp.lt.s32.totalorder %v3483, 8232
          %vm3996 = vcmp.lt.s32.totalorder %v3484, 8232
          %vm3997 = vcmp.lt.s32.totalorder %v3485, 8232
          %vm3998 = vcmp.lt.s32.totalorder %v3486, 8232
          %vm3999 = vcmp.lt.s32.totalorder %v3487, 8232
          %vm4000 = vcmp.lt.s32.totalorder %v3488, 8232
          %vm4001 = vcmp.lt.s32.totalorder %v3489, 8232
          %vm4002 = vcmp.lt.s32.totalorder %v3490, 8232
          %vm4003 = vcmp.lt.s32.totalorder %v3491, 8232
          %vm4004 = vcmp.lt.s32.totalorder %v3492, 8232
          %vm4005 = vcmp.lt.s32.totalorder %v3493, 8232
          %vm4006 = vcmp.lt.s32.totalorder %v3494, 8232
          %vm4007 = vcmp.lt.s32.totalorder %v3495, 8232
          %vm4008 = vcmp.lt.s32.totalorder %v3496, 8232
          %vm4009 = vcmp.lt.s32.totalorder %v3497, 8232
          %vm4010 = vcmp.lt.s32.totalorder %v3498, 8232
          %vm4011 = vcmp.lt.s32.totalorder %v3499, 8232
          %vm4012 = vcmp.lt.s32.totalorder %v3500, 8232
          %vm4013 = vcmp.lt.s32.totalorder %v3501, 8232
          %vm4014 = vcmp.lt.s32.totalorder %v3502, 8232
          %vm4015 = vcmp.lt.s32.totalorder %v3503, 8232
          %vm4016 = vcmp.lt.s32.totalorder %v3504, 8232
          %vm4017 = vcmp.lt.s32.totalorder %v3505, 8232
          %vm4018 = vcmp.lt.s32.totalorder %v3506, 8232
          %vm4019 = vcmp.lt.s32.totalorder %v3507, 8232
          %vm4020 = vcmp.lt.s32.totalorder %v3508, 8232
          %vm4021 = vcmp.lt.s32.totalorder %v3509, 8232
          %vm4022 = vcmp.lt.s32.totalorder %v3510, 8232
          %vm4023 = vcmp.lt.s32.totalorder %v3511, 8232
          %vm4024 = vcmp.lt.s32.totalorder %v3512, 8232
          %vm4025 = vcmp.lt.s32.totalorder %v3513, 8232
          %vm4026 = vcmp.lt.s32.totalorder %v3514, 8232
          %vm4027 = vcmp.lt.s32.totalorder %v3515, 8232
          %vm4028 = vcmp.lt.s32.totalorder %v3516, 8232
          %vm4029 = vcmp.lt.s32.totalorder %v3517, 8232
          %vm4030 = vcmp.lt.s32.totalorder %v3518, 8232
          %vm4031 = vcmp.lt.s32.totalorder %v3519, 8232
          %vm4032 = vcmp.lt.s32.totalorder %v3520, 8232
          %vm4033 = vcmp.lt.s32.totalorder %v3521, 8232
          %vm4034 = vcmp.lt.s32.totalorder %v3522, 8232
          %vm4035 = vcmp.lt.s32.totalorder %v3523, 8232
          %vm4036 = vcmp.lt.s32.totalorder %v3524, 8232
          %vm4037 = vcmp.lt.s32.totalorder %v3525, 8232
          %vm4038 = vcmp.lt.s32.totalorder %v3526, 8232
          %vm4039 = vcmp.lt.s32.totalorder %v3527, 8232
          %vm4040 = vcmp.lt.s32.totalorder %v3528, 8232
          %vm4041 = vcmp.lt.s32.totalorder %v3529, 8232
          %vm4042 = vcmp.lt.s32.totalorder %v3530, 8232
          %vm4043 = vcmp.lt.s32.totalorder %v3531, 8232
          %vm4044 = vcmp.lt.s32.totalorder %v3532, 8232
          %vm4045 = vcmp.lt.s32.totalorder %v3533, 8232
          %vm4046 = vcmp.lt.s32.totalorder %v3534, 8232
          %vm4047 = vcmp.lt.s32.totalorder %v3535, 8232
          %vm4048 = vcmp.lt.s32.totalorder %v3536, 8232
          %vm4049 = vcmp.lt.s32.totalorder %v3537, 8232
          %vm4050 = vcmp.lt.s32.totalorder %v3538, 8232
          %vm4051 = vcmp.lt.s32.totalorder %v3539, 8232
          %vm4052 = vcmp.lt.s32.totalorder %v3540, 8232
          %vm4053 = vcmp.lt.s32.totalorder %v3541, 8232
          %vm4054 = vcmp.lt.s32.totalorder %v3542, 8232
          %vm4055 = vcmp.lt.s32.totalorder %v3543, 8232
          %vm4056 = vcmp.lt.s32.totalorder %v3544, 8232
          %vm4057 = vcmp.lt.s32.totalorder %v3545, 8232
          %vm4058 = vcmp.lt.s32.totalorder %v3546, 8232
          %vm4059 = vcmp.lt.s32.totalorder %v3547, 8232
          %vm4060 = vcmp.lt.s32.totalorder %v3548, 8232
          %vm4061 = vcmp.lt.s32.totalorder %v3549, 8232
          %vm4062 = vcmp.lt.s32.totalorder %v3550, 8232
          %vm4063 = vcmp.lt.s32.totalorder %v3551, 8232
          %vm4064 = vcmp.lt.s32.totalorder %v3552, 8232
          %vm4065 = vcmp.lt.s32.totalorder %v3553, 8232
          %vm4066 = vcmp.lt.s32.totalorder %v3554, 8232
          %vm4067 = vcmp.lt.s32.totalorder %v3555, 8232
          %vm4068 = vcmp.lt.s32.totalorder %v3556, 8232
          %vm4069 = vcmp.lt.s32.totalorder %v3557, 8232
          %vm4070 = vcmp.lt.s32.totalorder %v3558, 8232
          %vm4071 = vcmp.lt.s32.totalorder %v3559, 8232
          %vm4072 = vcmp.lt.s32.totalorder %v3560, 8232
          %vm4073 = vcmp.lt.s32.totalorder %v3561, 8232
          %vm4074 = vcmp.lt.s32.totalorder %v3562, 8232
          %vm4075 = vcmp.lt.s32.totalorder %v3563, 8232
          %vm4076 = vcmp.lt.s32.totalorder %v3564, 8232
          %vm4077 = vcmp.lt.s32.totalorder %v3565, 8232
          %vm4078 = vcmp.lt.s32.totalorder %v3566, 8232
          %vm4079 = vcmp.lt.s32.totalorder %v3567, 8232
          %vm4080 = vcmp.lt.s32.totalorder %v3568, 8232
          %vm4081 = vcmp.lt.s32.totalorder %v3569, 8232
          %vm4082 = vcmp.lt.s32.totalorder %v3570, 8232
          %vm4083 = vcmp.lt.s32.totalorder %v3571, 8232
          %vm4084 = vcmp.lt.s32.totalorder %v3572, 8232
          %vm4085 = vcmp.lt.s32.totalorder %v3573, 8232
          %vm4086 = vcmp.lt.s32.totalorder %v3574, 8232
          %vm4087 = vcmp.lt.s32.totalorder %v3575, 8232
          %vm4088 = vcmp.lt.s32.totalorder %v3576, 8232
          %vm4089 = vcmp.lt.s32.totalorder %v3577, 8232
          %vm4090 = vcmp.lt.s32.totalorder %v3578, 8232
          %vm4091 = vcmp.lt.s32.totalorder %v3579, 8232
          %vm4092 = vcmp.lt.s32.totalorder %v3580, 8232
          %vm4093 = vcmp.lt.s32.totalorder %v3581, 8232
          %vm4094 = vcmp.lt.s32.totalorder %v3582, 8232
          %vm4095 = vcmp.lt.s32.totalorder %v3583, 8232
          %vm4096 = vcmp.lt.s32.totalorder %v3584, 8232
          %vm4097 = vcmp.lt.s32.totalorder %v3585, 8232
          %vm4098 = vcmp.lt.s32.totalorder %v3586, 8232
          %vm4099 = vcmp.lt.s32.totalorder %v3587, 8232
          %vm4100 = vcmp.lt.s32.totalorder %v3588, 8232
          %vm4101 = vcmp.lt.s32.totalorder %v3589, 8232
          %vm4102 = vcmp.lt.s32.totalorder %v3590, 8232
          %vm4103 = vcmp.lt.s32.totalorder %v3591, 8232
          %vm4104 = vcmp.lt.s32.totalorder %v3592, 8232
          %vm4105 = vcmp.lt.s32.totalorder %v3593, 8232
          %vm4106 = vcmp.lt.s32.totalorder %v3594, 8232
          %vm4107 = vcmp.lt.s32.totalorder %v3595, 8232
          %vm4108 = vcmp.lt.s32.totalorder %v3596, 8232
          %vm4109 = vcmp.lt.s32.totalorder %v3597, 8232
          %vm4110 = vcmp.lt.s32.totalorder %v3598, 8232
          %vm4111 = vcmp.lt.s32.totalorder %v3599, 8232
          %vm4112 = vcmp.lt.s32.totalorder %v3600, 8232
          %vm4113 = vcmp.lt.s32.totalorder %v3601, 8232
          %vm4114 = vcmp.lt.s32.totalorder %v3602, 8232
          %vm4115 = vcmp.lt.s32.totalorder %v3603, 8232
          %vm4116 = vcmp.lt.s32.totalorder %v3604, 8232
          %vm4117 = vcmp.lt.s32.totalorder %v3605, 8232
          %vm4118 = vcmp.lt.s32.totalorder %v3606, 8232
          %vm4119 = vcmp.lt.s32.totalorder %v3607, 8232
          %vm4120 = vcmp.lt.s32.totalorder %v3608, 8232
          %vm4121 = vcmp.lt.s32.totalorder %v3609, 8232
          %vm4122 = vcmp.lt.s32.totalorder %v3610, 8232
          %vm4123 = vcmp.lt.s32.totalorder %v3611, 8232
          %vm4124 = vcmp.lt.s32.totalorder %v3612, 8232
          %vm4125 = vcmp.lt.s32.totalorder %v3613, 8232
          %vm4126 = vcmp.lt.s32.totalorder %v3614, 8232
          %vm4127 = vcmp.lt.s32.totalorder %v3615, 8232
          %vm4128 = vcmp.lt.s32.totalorder %v3616, 8232
          %vm4129 = vcmp.lt.s32.totalorder %v3617, 8232
          %vm4130 = vcmp.lt.s32.totalorder %v3618, 8232
          %vm4131 = vcmp.lt.s32.totalorder %v3619, 8232
          %vm4132 = vcmp.lt.s32.totalorder %v3620, 8232
          %vm4133 = vcmp.lt.s32.totalorder %v3621, 8232
          %vm4134 = vcmp.lt.s32.totalorder %v3622, 8232
          %vm4135 = vcmp.lt.s32.totalorder %v3623, 8232
          %vm4136 = vcmp.lt.s32.totalorder %v3624, 8232
          %vm4137 = vcmp.lt.s32.totalorder %v3625, 8232
          %vm4138 = vcmp.lt.s32.totalorder %v3626, 8232
          %vm4139 = vcmp.lt.s32.totalorder %v3627, 8232
          %vm4140 = vcmp.lt.s32.totalorder %v3628, 8232
          %vm4141 = vcmp.lt.s32.totalorder %v3629, 8232
          %vm4142 = vcmp.lt.s32.totalorder %v3630, 8232
          %vm4143 = vcmp.lt.s32.totalorder %v3631, 8232
          %vm4144 = vcmp.lt.s32.totalorder %v3632, 8232
          %vm4145 = vcmp.lt.s32.totalorder %v3633, 8232
          %vm4146 = vcmp.lt.s32.totalorder %v3634, 8232
          %vm4147 = vcmp.lt.s32.totalorder %v3635, 8232
          %vm4148 = vcmp.lt.s32.totalorder %v3636, 8232
          %vm4149 = vcmp.lt.s32.totalorder %v3637, 8232
          %vm4150 = vcmp.lt.s32.totalorder %v3638, 8232
          %vm4151 = vcmp.lt.s32.totalorder %v3639, 8232
          %vm4152 = vcmp.lt.s32.totalorder %v3640, 8232
          %vm4153 = vcmp.lt.s32.totalorder %v3641, 8232
          %vm4154 = vcmp.lt.s32.totalorder %v3642, 8232
          %vm4155 = vcmp.lt.s32.totalorder %v3643, 8232
          %vm4156 = vcmp.lt.s32.totalorder %v3644, 8232
          %vm4157 = vcmp.lt.s32.totalorder %v3645, 8232
          %vm4158 = vcmp.lt.s32.totalorder %v3646, 8232
          %vm4159 = vcmp.lt.s32.totalorder %v3647, 8232
          %vm4160 = vcmp.lt.s32.totalorder %v3648, 8232
          %vm4161 = vcmp.lt.s32.totalorder %v3649, 8232
          %vm4162 = vcmp.lt.s32.totalorder %v3650, 8232
          %vm4163 = vcmp.lt.s32.totalorder %v3651, 8232
          %vm4164 = vcmp.lt.s32.totalorder %v3652, 8232
          %vm4165 = vcmp.lt.s32.totalorder %v3653, 8232
          %vm4166 = vcmp.lt.s32.totalorder %v3654, 8232
          %vm4167 = vcmp.lt.s32.totalorder %v3655, 8232
          %vm4168 = vcmp.lt.s32.totalorder %v3656, 8232
          %vm4169 = vcmp.lt.s32.totalorder %v3657, 8232
          %vm4170 = vcmp.lt.s32.totalorder %v3658, 8232
          %vm4171 = vcmp.lt.s32.totalorder %v3659, 8232
          %vm4172 = vcmp.lt.s32.totalorder %v3660, 8232
          %vm4173 = vcmp.lt.s32.totalorder %v3661, 8232
          %vm4174 = vcmp.lt.s32.totalorder %v3662, 8232
          %vm4175 = vcmp.lt.s32.totalorder %v3663, 8232
          %vm4176 = vcmp.lt.s32.totalorder %v3664, 8232
          %vm4177 = vcmp.lt.s32.totalorder %v3665, 8232
          %vm4178 = vcmp.lt.s32.totalorder %v3666, 8232
          %vm4179 = vcmp.lt.s32.totalorder %v3667, 8232
          %vm4180 = vcmp.lt.s32.totalorder %v3668, 8232
          %vm4181 = vcmp.lt.s32.totalorder %v3669, 8232
          %vm4182 = vcmp.lt.s32.totalorder %v3670, 8232
          %vm4183 = vcmp.lt.s32.totalorder %v3671, 8232
          %vm4184 = vcmp.lt.s32.totalorder %v3672, 8232
          %vm4185 = vcmp.lt.s32.totalorder %v3673, 8232
          %vm4186 = vcmp.lt.s32.totalorder %v3674, 8232
          %vm4187 = vcmp.lt.s32.totalorder %v3675, 8232
          %vm4188 = vcmp.lt.s32.totalorder %v3676, 8232
          %vm4189 = vcmp.lt.s32.totalorder %v3677, 8232
          %vm4190 = vcmp.lt.s32.totalorder %v3678, 8232
          %vm4191 = vcmp.lt.s32.totalorder %v3679, 8232
          %vm4192 = vcmp.lt.s32.totalorder %v3680, 8232
          %vm4193 = vcmp.lt.s32.totalorder %v3681, 8232
          %vm4194 = vcmp.lt.s32.totalorder %v3682, 8232
          %vm4195 = vcmp.lt.s32.totalorder %v3683, 8232
          %vm4196 = vcmp.lt.s32.totalorder %v3684, 8232
          %vm4197 = vcmp.lt.s32.totalorder %v3685, 8232
          %vm4198 = vcmp.lt.s32.totalorder %v3686, 8232
          %vm4199 = vcmp.lt.s32.totalorder %v3687, 8232
          %vm4200 = vcmp.lt.s32.totalorder %v3688, 8232
          %vm4201 = vcmp.lt.s32.totalorder %v3689, 8232
          %vm4202 = vcmp.lt.s32.totalorder %v3690, 8232
          %vm4203 = vcmp.lt.s32.totalorder %v3691, 8232
          %vm4204 = vcmp.lt.s32.totalorder %v3692, 8232
          %vm4205 = vcmp.lt.s32.totalorder %v3693, 8232
          %vm4206 = vcmp.lt.s32.totalorder %v3694, 8232
          %vm4207 = vcmp.lt.s32.totalorder %v3695, 8232
          %vm4208 = vcmp.lt.s32.totalorder %v3696, 8232
          %vm4209 = vcmp.lt.s32.totalorder %v3697, 8232
          %vm4210 = vcmp.lt.s32.totalorder %v3698, 8232
          %vm4211 = vcmp.lt.s32.totalorder %v3699, 8232
          %vm4212 = vcmp.lt.s32.totalorder %v3700, 8232
          %vm4213 = vcmp.lt.s32.totalorder %v3701, 8232
          %vm4214 = vcmp.lt.s32.totalorder %v3702, 8232
          %vm4215 = vcmp.lt.s32.totalorder %v3703, 8232
          %vm4216 = vcmp.lt.s32.totalorder %v3704, 8232
          %vm4217 = vcmp.lt.s32.totalorder %v3705, 8232
          %vm4218 = vcmp.lt.s32.totalorder %v3706, 8232
          %vm4219 = vcmp.lt.s32.totalorder %v3707, 8232
          %vm4220 = vcmp.lt.s32.totalorder %v3708, 8232
          %vm4221 = vcmp.lt.s32.totalorder %v3709, 8232
          %vm4222 = vcmp.lt.s32.totalorder %v3710, 8232
          %vm4223 = vcmp.lt.s32.totalorder %v3711, 8232
          %vm4224 = vcmp.lt.s32.totalorder %v3712, 8232
          %vm4225 = vcmp.lt.s32.totalorder %v3713, 8232
          %vm4226 = vcmp.lt.s32.totalorder %v3714, 8232
          %vm4227 = vcmp.lt.s32.totalorder %v3715, 8232
          %vm4228 = vcmp.lt.s32.totalorder %v3716, 8232
          %vm4229 = vcmp.lt.s32.totalorder %v3717, 8232
          %vm4230 = vcmp.lt.s32.totalorder %v3718, 8232
          %vm4231 = vcmp.lt.s32.totalorder %v3719, 8232
          %vm4232 = vcmp.lt.s32.totalorder %v3720, 8232
          %vm4233 = vcmp.lt.s32.totalorder %v3721, 8232
          %vm4234 = vcmp.lt.s32.totalorder %v3722, 8232
          %vm4235 = vcmp.lt.s32.totalorder %v3723, 8232
          %vm4236 = vcmp.lt.s32.totalorder %v3724, 8232
          %vm4237 = vcmp.lt.s32.totalorder %v3725, 8232
          %vm4238 = vcmp.lt.s32.totalorder %v3726, 8232
          %vm4239 = vcmp.lt.s32.totalorder %v3727, 8232
          %vm4240 = vcmp.lt.s32.totalorder %v3728, 8232
          %vm4241 = vcmp.lt.s32.totalorder %v3729, 8232
          %vm4242 = vcmp.lt.s32.totalorder %v3730, 8232
          %vm4243 = vcmp.lt.s32.totalorder %v3731, 8232
          %vm4244 = vcmp.lt.s32.totalorder %v3732, 8232
          %vm4245 = vcmp.lt.s32.totalorder %v3733, 8232
          %vm4246 = vcmp.lt.s32.totalorder %v3734, 8232
          %vm4247 = vcmp.lt.s32.totalorder %v3735, 8232
          %vm4248 = vcmp.lt.s32.totalorder %v3736, 8232
          %vm4249 = vcmp.lt.s32.totalorder %v3737, 8232
          %vm4250 = vcmp.lt.s32.totalorder %v3738, 8232
          %vm4251 = vcmp.lt.s32.totalorder %v3739, 8232
          %vm4252 = vcmp.lt.s32.totalorder %v3740, 8232
          %vm4253 = vcmp.lt.s32.totalorder %v3741, 8232
          %vm4254 = vcmp.lt.s32.totalorder %v3742, 8232
          %vm4255 = vcmp.lt.s32.totalorder %v3743, 8232
          %vm4256 = vcmp.lt.s32.totalorder %v3744, 8232
          %vm4257 = vcmp.lt.s32.totalorder %v3745, 8232
          %vm4258 = vcmp.lt.s32.totalorder %v3746, 8232
          %vm4259 = vcmp.lt.s32.totalorder %v3747, 8232
          %vm4260 = vcmp.lt.s32.totalorder %v3748, 8232
          %vm4261 = vcmp.lt.s32.totalorder %v3749, 8232
          %vm4262 = vcmp.lt.s32.totalorder %v3750, 8232
          %vm4263 = vcmp.lt.s32.totalorder %v3751, 8232
          %vm4264 = vcmp.lt.s32.totalorder %v3752, 8232
          %vm4265 = vcmp.lt.s32.totalorder %v3753, 8232
          %vm4266 = vcmp.lt.s32.totalorder %v3754, 8232
          %vm4267 = vcmp.lt.s32.totalorder %v3755, 8232
          %vm4268 = vcmp.lt.s32.totalorder %v3756, 8232
          %vm4269 = vcmp.lt.s32.totalorder %v3757, 8232
          %vm4270 = vcmp.lt.s32.totalorder %v3758, 8232
          %vm4271 = vcmp.lt.s32.totalorder %v3759, 8232
          %vm4272 = vcmp.lt.s32.totalorder %v3760, 8232
          %vm4273 = vcmp.lt.s32.totalorder %v3761, 8232
          %vm4274 = vcmp.lt.s32.totalorder %v3762, 8232
          %vm4275 = vcmp.lt.s32.totalorder %v3763, 8232
          %vm4276 = vcmp.lt.s32.totalorder %v3764, 8232
          %vm4277 = vcmp.lt.s32.totalorder %v3765, 8232
          %vm4278 = vcmp.lt.s32.totalorder %v3766, 8232
          %vm4279 = vcmp.lt.s32.totalorder %v3767, 8232
          %vm4280 = vcmp.lt.s32.totalorder %v3768, 8232
          %vm4281 = vcmp.lt.s32.totalorder %v3769, 8232
          %vm4282 = vcmp.lt.s32.totalorder %v3770, 8232
          %vm4283 = vcmp.lt.s32.totalorder %v3771, 8232
          %vm4284 = vcmp.lt.s32.totalorder %v3772, 8232
          %vm4285 = vcmp.lt.s32.totalorder %v3773, 8232
          %vm4286 = vcmp.lt.s32.totalorder %v3774, 8232
          %vm4287 = vcmp.lt.s32.totalorder %v3775, 8232
          %vm4288 = vcmp.lt.s32.totalorder %v3776, 8232
          %vm4289 = vcmp.lt.s32.totalorder %v3777, 8232
          %vm4290 = vcmp.lt.s32.totalorder %v3778, 8232
          %vm4291 = vcmp.lt.s32.totalorder %v3779, 8232
          %vm4292 = vcmp.lt.s32.totalorder %v3780, 8232
          %vm4293 = vcmp.lt.s32.totalorder %v3781, 8232
          %vm4294 = vcmp.lt.s32.totalorder %v3782, 8232
          %vm4295 = vcmp.lt.s32.totalorder %v3783, 8232
          %vm4296 = vcmp.lt.s32.totalorder %v3784, 8232
          %vm4297 = vcmp.lt.s32.totalorder %v3785, 8232
          %vm4298 = vcmp.lt.s32.totalorder %v3786, 8232
          %vm4299 = vcmp.lt.s32.totalorder %v3787, 8232
          %vm4300 = vcmp.lt.s32.totalorder %v3788, 8232
          %vm4301 = vcmp.lt.s32.totalorder %v3789, 8232
          %vm4302 = vcmp.lt.s32.totalorder %v3790, 8232
          %vm4303 = vcmp.lt.s32.totalorder %v3791, 8232
          %vm4304 = vcmp.lt.s32.totalorder %v3792, 8232
          %vm4305 = vcmp.lt.s32.totalorder %v3793, 8232
          %vm4306 = vcmp.lt.s32.totalorder %v3794, 8232
          %vm4307 = vcmp.lt.s32.totalorder %v3795, 8232
          %vm4308 = vcmp.lt.s32.totalorder %v3796, 8232
          %vm4309 = vcmp.lt.s32.totalorder %v3797, 8232
          %vm4310 = vcmp.lt.s32.totalorder %v3798, 8232
          %vm4311 = vcmp.lt.s32.totalorder %v3799, 8232
          %vm4312 = vcmp.lt.s32.totalorder %v3800, 8232
          %vm4313 = vcmp.lt.s32.totalorder %v3801, 8232
          %vm4314 = vcmp.lt.s32.totalorder %v3802, 8232
          %vm4315 = vcmp.lt.s32.totalorder %v3803, 8232
          %vm4316 = vcmp.lt.s32.totalorder %v3804, 8232
          %vm4317 = vcmp.lt.s32.totalorder %v3805, 8232
          %vm4318 = vcmp.lt.s32.totalorder %v3806, 8232
          %vm4319 = vcmp.lt.s32.totalorder %v3807, 8232
          %vm4320 = vcmp.lt.s32.totalorder %v3808, 8232
          %vm4321 = vcmp.lt.s32.totalorder %v3809, 8232
          %vm4322 = vcmp.lt.s32.totalorder %v3810, 8232
          %vm4323 = vcmp.lt.s32.totalorder %v3811, 8232
          %vm4324 = vcmp.lt.s32.totalorder %v3812, 8232
          %vm4325 = vcmp.lt.s32.totalorder %v3813, 8232
          %vm4326 = vcmp.lt.s32.totalorder %v3814, 8232
          %vm4327 = vcmp.lt.s32.totalorder %v3815, 8232
          %vm4328 = vcmp.lt.s32.totalorder %v3816, 8232
          %vm4329 = vcmp.lt.s32.totalorder %v3817, 8232
          %vm4330 = vcmp.lt.s32.totalorder %v3818, 8232
          %vm4331 = vcmp.lt.s32.totalorder %v3819, 8232
          %vm4332 = vcmp.lt.s32.totalorder %v3820, 8232
          %vm4333 = vcmp.lt.s32.totalorder %v3821, 8232
          %vm4334 = vcmp.lt.s32.totalorder %v3822, 8232
          %vm4335 = vcmp.lt.s32.totalorder %v3823, 8232
          %vm4336 = vcmp.lt.s32.totalorder %v3824, 8232
          %vm4337 = vcmp.lt.s32.totalorder %v3825, 8232
          %vm4338 = vcmp.lt.s32.totalorder %v3826, 8232
          %vm4339 = vcmp.lt.s32.totalorder %v3827, 8232
          %vm4340 = vcmp.lt.s32.totalorder %v3828, 8232
          %vm4341 = vcmp.lt.s32.totalorder %v3829, 8232
          %vm4342 = vcmp.lt.s32.totalorder %v3830, 8232
          %vm4343 = vcmp.lt.s32.totalorder %v3831, 8232
          %vm4344 = vcmp.lt.s32.totalorder %v3832, 8232
          %vm4345 = vcmp.lt.s32.totalorder %v3833, 8232
          %vm4346 = vcmp.lt.s32.totalorder %v3834, 8232
          %vm4347 = vcmp.lt.s32.totalorder %v3835, 8232
          %vm4348 = vcmp.lt.s32.totalorder %v3836, 8232
          %vm4349 = vcmp.lt.s32.totalorder %v3837, 8232
          %vm4350 = vcmp.lt.s32.totalorder %v3838, 8232
          %vm4351 = vcmp.lt.s32.totalorder %v3839, 8232
          %vm4352 = vcmp.lt.s32.totalorder %v3840, 8232
          %vm4353 = vcmp.lt.s32.totalorder %v3841, 8232
          %vm4354 = vcmp.lt.s32.totalorder %v3842, 8232
          %vm4355 = vcmp.lt.s32.totalorder %v3843, 8232
          %vm4356 = vcmp.lt.s32.totalorder %v3844, 8232
          %vm4357 = vcmp.lt.s32.totalorder %v3845, 8232
          %vm4358 = vcmp.lt.s32.totalorder %v3846, 8232
          %vm4359 = vcmp.lt.s32.totalorder %v3847, 8232
          %vm4360 = vcmp.lt.s32.totalorder %v3848, 8232
          %vm4361 = vcmp.lt.s32.totalorder %v3849, 8232
          %vm4362 = vcmp.lt.s32.totalorder %v3850, 8232
          %vm4363 = vcmp.lt.s32.totalorder %v3851, 8232
          %vm4364 = vcmp.lt.s32.totalorder %v3852, 8232
          %vm4365 = vcmp.lt.s32.totalorder %v3853, 8232
          %vm4366 = vcmp.lt.s32.totalorder %v3854, 8232
          %vm4367 = vcmp.lt.s32.totalorder %v3855, 8232
          %vm4368 = vcmp.lt.s32.totalorder %v3856, 8232
          %vm4369 = vcmp.lt.s32.totalorder %v3857, 8232
          %vm4370 = vcmp.lt.s32.totalorder %v3858, 8232
          %vm4371 = vcmp.lt.s32.totalorder %v3859, 8232
          %vm4372 = vcmp.lt.s32.totalorder %v3860, 8232
          %vm4373 = vcmp.lt.s32.totalorder %v3861, 8232
          %vm4374 = vcmp.lt.s32.totalorder %v3862, 8232
          %vm4375 = vcmp.lt.s32.totalorder %v3863, 8232
          %vm4376 = vcmp.lt.s32.totalorder %v3864, 8232
          %vm4377 = vcmp.lt.s32.totalorder %v3865, 8232
          %vm4378 = vcmp.lt.s32.totalorder %v3866, 8232
          %vm4379 = vcmp.lt.s32.totalorder %v3867, 8232
          %vm4380 = vcmp.lt.s32.totalorder %v3868, 8232
          %vm4381 = vcmp.lt.s32.totalorder %v3869, 8232
          %vm4382 = vcmp.lt.s32.totalorder %v3870, 8232
          %vm4383 = vcmp.lt.s32.totalorder %v3871, 8232
          %vm4384 = vcmp.lt.s32.totalorder %v3872, 8232
          %vm4385 = vcmp.lt.s32.totalorder %v3873, 8232
          %vm4386 = vcmp.lt.s32.totalorder %v3874, 8232
          %vm4387 = vcmp.lt.s32.totalorder %v3875, 8232
          %vm4388 = vcmp.lt.s32.totalorder %v3876, 8232
          %vm4389 = vcmp.lt.s32.totalorder %v3877, 8232
          %vm4390 = vcmp.lt.s32.totalorder %v3878, 8232
          %vm4391 = vcmp.lt.s32.totalorder %v3879, 8232
          %vm4392 = vcmp.lt.s32.totalorder %v3880, 8232
          %vm4393 = vcmp.lt.s32.totalorder %v3881, 8232
          %v4394 = vsel %vm3882, 1, 0
          %v4395 = vsel %vm3883, 1, 0
          %v4396 = vsel %vm3884, 1, 0
          %v4397 = vsel %vm3885, 1, 0
          %v4398 = vsel %vm3886, 1, 0
          %v4399 = vsel %vm3887, 1, 0
          %v4400 = vsel %vm3888, 1, 0
          %v4401 = vsel %vm3889, 1, 0
          %v4402 = vsel %vm3890, 1, 0
          %v4403 = vsel %vm3891, 1, 0
          %v4404 = vsel %vm3892, 1, 0
          %v4405 = vsel %vm3893, 1, 0
          %v4406 = vsel %vm3894, 1, 0
          %v4407 = vsel %vm3895, 1, 0
          %v4408 = vsel %vm3896, 1, 0
          %v4409 = vsel %vm3897, 1, 0
          %v4410 = vsel %vm3898, 1, 0
          %v4411 = vsel %vm3899, 1, 0
          %v4412 = vsel %vm3900, 1, 0
          %v4413 = vsel %vm3901, 1, 0
          %v4414 = vsel %vm3902, 1, 0
          %v4415 = vsel %vm3903, 1, 0
          %v4416 = vsel %vm3904, 1, 0
          %v4417 = vsel %vm3905, 1, 0
          %v4418 = vsel %vm3906, 1, 0
          %v4419 = vsel %vm3907, 1, 0
          %v4420 = vsel %vm3908, 1, 0
          %v4421 = vsel %vm3909, 1, 0
          %v4422 = vsel %vm3910, 1, 0
          %v4423 = vsel %vm3911, 1, 0
          %v4424 = vsel %vm3912, 1, 0
          %v4425 = vsel %vm3913, 1, 0
          %v4426 = vsel %vm3914, 1, 0
          %v4427 = vsel %vm3915, 1, 0
          %v4428 = vsel %vm3916, 1, 0
          %v4429 = vsel %vm3917, 1, 0
          %v4430 = vsel %vm3918, 1, 0
          %v4431 = vsel %vm3919, 1, 0
          %v4432 = vsel %vm3920, 1, 0
          %v4433 = vsel %vm3921, 1, 0
          %v4434 = vsel %vm3922, 1, 0
          %v4435 = vsel %vm3923, 1, 0
          %v4436 = vsel %vm3924, 1, 0
          %v4437 = vsel %vm3925, 1, 0
          %v4438 = vsel %vm3926, 1, 0
          %v4439 = vsel %vm3927, 1, 0
          %v4440 = vsel %vm3928, 1, 0
          %v4441 = vsel %vm3929, 1, 0
          %v4442 = vsel %vm3930, 1, 0
          %v4443 = vsel %vm3931, 1, 0
          %v4444 = vsel %vm3932, 1, 0
          %v4445 = vsel %vm3933, 1, 0
          %v4446 = vsel %vm3934, 1, 0
          %v4447 = vsel %vm3935, 1, 0
          %v4448 = vsel %vm3936, 1, 0
          %v4449 = vsel %vm3937, 1, 0
          %v4450 = vsel %vm3938, 1, 0
          %v4451 = vsel %vm3939, 1, 0
          %v4452 = vsel %vm3940, 1, 0
          %v4453 = vsel %vm3941, 1, 0
          %v4454 = vsel %vm3942, 1, 0
          %v4455 = vsel %vm3943, 1, 0
          %v4456 = vsel %vm3944, 1, 0
          %v4457 = vsel %vm3945, 1, 0
          %v4458 = vsel %vm3946, 1, 0
          %v4459 = vsel %vm3947, 1, 0
          %v4460 = vsel %vm3948, 1, 0
          %v4461 = vsel %vm3949, 1, 0
          %v4462 = vsel %vm3950, 1, 0
          %v4463 = vsel %vm3951, 1, 0
          %v4464 = vsel %vm3952, 1, 0
          %v4465 = vsel %vm3953, 1, 0
          %v4466 = vsel %vm3954, 1, 0
          %v4467 = vsel %vm3955, 1, 0
          %v4468 = vsel %vm3956, 1, 0
          %v4469 = vsel %vm3957, 1, 0
          %v4470 = vsel %vm3958, 1, 0
          %v4471 = vsel %vm3959, 1, 0
          %v4472 = vsel %vm3960, 1, 0
          %v4473 = vsel %vm3961, 1, 0
          %v4474 = vsel %vm3962, 1, 0
          %v4475 = vsel %vm3963, 1, 0
          %v4476 = vsel %vm3964, 1, 0
          %v4477 = vsel %vm3965, 1, 0
          %v4478 = vsel %vm3966, 1, 0
          %v4479 = vsel %vm3967, 1, 0
          %v4480 = vsel %vm3968, 1, 0
          %v4481 = vsel %vm3969, 1, 0
          %v4482 = vsel %vm3970, 1, 0
          %v4483 = vsel %vm3971, 1, 0
          %v4484 = vsel %vm3972, 1, 0
          %v4485 = vsel %vm3973, 1, 0
          %v4486 = vsel %vm3974, 1, 0
          %v4487 = vsel %vm3975, 1, 0
          %v4488 = vsel %vm3976, 1, 0
          %v4489 = vsel %vm3977, 1, 0
          %v4490 = vsel %vm3978, 1, 0
          %v4491 = vsel %vm3979, 1, 0
          %v4492 = vsel %vm3980, 1, 0
          %v4493 = vsel %vm3981, 1, 0
          %v4494 = vsel %vm3982, 1, 0
          %v4495 = vsel %vm3983, 1, 0
          %v4496 = vsel %vm3984, 1, 0
          %v4497 = vsel %vm3985, 1, 0
          %v4498 = vsel %vm3986, 1, 0
          %v4499 = vsel %vm3987, 1, 0
          %v4500 = vsel %vm3988, 1, 0
          %v4501 = vsel %vm3989, 1, 0
          %v4502 = vsel %vm3990, 1, 0
          %v4503 = vsel %vm3991, 1, 0
          %v4504 = vsel %vm3992, 1, 0
          %v4505 = vsel %vm3993, 1, 0
          %v4506 = vsel %vm3994, 1, 0
          %v4507 = vsel %vm3995, 1, 0
          %v4508 = vsel %vm3996, 1, 0
          %v4509 = vsel %vm3997, 1, 0
          %v4510 = vsel %vm3998, 1, 0
          %v4511 = vsel %vm3999, 1, 0
          %v4512 = vsel %vm4000, 1, 0
          %v4513 = vsel %vm4001, 1, 0
          %v4514 = vsel %vm4002, 1, 0
          %v4515 = vsel %vm4003, 1, 0
          %v4516 = vsel %vm4004, 1, 0
          %v4517 = vsel %vm4005, 1, 0
          %v4518 = vsel %vm4006, 1, 0
          %v4519 = vsel %vm4007, 1, 0
          %v4520 = vsel %vm4008, 1, 0
          %v4521 = vsel %vm4009, 1, 0
          %v4522 = vsel %vm4010, 1, 0
          %v4523 = vsel %vm4011, 1, 0
          %v4524 = vsel %vm4012, 1, 0
          %v4525 = vsel %vm4013, 1, 0
          %v4526 = vsel %vm4014, 1, 0
          %v4527 = vsel %vm4015, 1, 0
          %v4528 = vsel %vm4016, 1, 0
          %v4529 = vsel %vm4017, 1, 0
          %v4530 = vsel %vm4018, 1, 0
          %v4531 = vsel %vm4019, 1, 0
          %v4532 = vsel %vm4020, 1, 0
          %v4533 = vsel %vm4021, 1, 0
          %v4534 = vsel %vm4022, 1, 0
          %v4535 = vsel %vm4023, 1, 0
          %v4536 = vsel %vm4024, 1, 0
          %v4537 = vsel %vm4025, 1, 0
          %v4538 = vsel %vm4026, 1, 0
          %v4539 = vsel %vm4027, 1, 0
          %v4540 = vsel %vm4028, 1, 0
          %v4541 = vsel %vm4029, 1, 0
          %v4542 = vsel %vm4030, 1, 0
          %v4543 = vsel %vm4031, 1, 0
          %v4544 = vsel %vm4032, 1, 0
          %v4545 = vsel %vm4033, 1, 0
          %v4546 = vsel %vm4034, 1, 0
          %v4547 = vsel %vm4035, 1, 0
          %v4548 = vsel %vm4036, 1, 0
          %v4549 = vsel %vm4037, 1, 0
          %v4550 = vsel %vm4038, 1, 0
          %v4551 = vsel %vm4039, 1, 0
          %v4552 = vsel %vm4040, 1, 0
          %v4553 = vsel %vm4041, 1, 0
          %v4554 = vsel %vm4042, 1, 0
          %v4555 = vsel %vm4043, 1, 0
          %v4556 = vsel %vm4044, 1, 0
          %v4557 = vsel %vm4045, 1, 0
          %v4558 = vsel %vm4046, 1, 0
          %v4559 = vsel %vm4047, 1, 0
          %v4560 = vsel %vm4048, 1, 0
          %v4561 = vsel %vm4049, 1, 0
          %v4562 = vsel %vm4050, 1, 0
          %v4563 = vsel %vm4051, 1, 0
          %v4564 = vsel %vm4052, 1, 0
          %v4565 = vsel %vm4053, 1, 0
          %v4566 = vsel %vm4054, 1, 0
          %v4567 = vsel %vm4055, 1, 0
          %v4568 = vsel %vm4056, 1, 0
          %v4569 = vsel %vm4057, 1, 0
          %v4570 = vsel %vm4058, 1, 0
          %v4571 = vsel %vm4059, 1, 0
          %v4572 = vsel %vm4060, 1, 0
          %v4573 = vsel %vm4061, 1, 0
          %v4574 = vsel %vm4062, 1, 0
          %v4575 = vsel %vm4063, 1, 0
          %v4576 = vsel %vm4064, 1, 0
          %v4577 = vsel %vm4065, 1, 0
          %v4578 = vsel %vm4066, 1, 0
          %v4579 = vsel %vm4067, 1, 0
          %v4580 = vsel %vm4068, 1, 0
          %v4581 = vsel %vm4069, 1, 0
          %v4582 = vsel %vm4070, 1, 0
          %v4583 = vsel %vm4071, 1, 0
          %v4584 = vsel %vm4072, 1, 0
          %v4585 = vsel %vm4073, 1, 0
          %v4586 = vsel %vm4074, 1, 0
          %v4587 = vsel %vm4075, 1, 0
          %v4588 = vsel %vm4076, 1, 0
          %v4589 = vsel %vm4077, 1, 0
          %v4590 = vsel %vm4078, 1, 0
          %v4591 = vsel %vm4079, 1, 0
          %v4592 = vsel %vm4080, 1, 0
          %v4593 = vsel %vm4081, 1, 0
          %v4594 = vsel %vm4082, 1, 0
          %v4595 = vsel %vm4083, 1, 0
          %v4596 = vsel %vm4084, 1, 0
          %v4597 = vsel %vm4085, 1, 0
          %v4598 = vsel %vm4086, 1, 0
          %v4599 = vsel %vm4087, 1, 0
          %v4600 = vsel %vm4088, 1, 0
          %v4601 = vsel %vm4089, 1, 0
          %v4602 = vsel %vm4090, 1, 0
          %v4603 = vsel %vm4091, 1, 0
          %v4604 = vsel %vm4092, 1, 0
          %v4605 = vsel %vm4093, 1, 0
          %v4606 = vsel %vm4094, 1, 0
          %v4607 = vsel %vm4095, 1, 0
          %v4608 = vsel %vm4096, 1, 0
          %v4609 = vsel %vm4097, 1, 0
          %v4610 = vsel %vm4098, 1, 0
          %v4611 = vsel %vm4099, 1, 0
          %v4612 = vsel %vm4100, 1, 0
          %v4613 = vsel %vm4101, 1, 0
          %v4614 = vsel %vm4102, 1, 0
          %v4615 = vsel %vm4103, 1, 0
          %v4616 = vsel %vm4104, 1, 0
          %v4617 = vsel %vm4105, 1, 0
          %v4618 = vsel %vm4106, 1, 0
          %v4619 = vsel %vm4107, 1, 0
          %v4620 = vsel %vm4108, 1, 0
          %v4621 = vsel %vm4109, 1, 0
          %v4622 = vsel %vm4110, 1, 0
          %v4623 = vsel %vm4111, 1, 0
          %v4624 = vsel %vm4112, 1, 0
          %v4625 = vsel %vm4113, 1, 0
          %v4626 = vsel %vm4114, 1, 0
          %v4627 = vsel %vm4115, 1, 0
          %v4628 = vsel %vm4116, 1, 0
          %v4629 = vsel %vm4117, 1, 0
          %v4630 = vsel %vm4118, 1, 0
          %v4631 = vsel %vm4119, 1, 0
          %v4632 = vsel %vm4120, 1, 0
          %v4633 = vsel %vm4121, 1, 0
          %v4634 = vsel %vm4122, 1, 0
          %v4635 = vsel %vm4123, 1, 0
          %v4636 = vsel %vm4124, 1, 0
          %v4637 = vsel %vm4125, 1, 0
          %v4638 = vsel %vm4126, 1, 0
          %v4639 = vsel %vm4127, 1, 0
          %v4640 = vsel %vm4128, 1, 0
          %v4641 = vsel %vm4129, 1, 0
          %v4642 = vsel %vm4130, 1, 0
          %v4643 = vsel %vm4131, 1, 0
          %v4644 = vsel %vm4132, 1, 0
          %v4645 = vsel %vm4133, 1, 0
          %v4646 = vsel %vm4134, 1, 0
          %v4647 = vsel %vm4135, 1, 0
          %v4648 = vsel %vm4136, 1, 0
          %v4649 = vsel %vm4137, 1, 0
          %v4650 = vsel %vm4138, 1, 0
          %v4651 = vsel %vm4139, 1, 0
          %v4652 = vsel %vm4140, 1, 0
          %v4653 = vsel %vm4141, 1, 0
          %v4654 = vsel %vm4142, 1, 0
          %v4655 = vsel %vm4143, 1, 0
          %v4656 = vsel %vm4144, 1, 0
          %v4657 = vsel %vm4145, 1, 0
          %v4658 = vsel %vm4146, 1, 0
          %v4659 = vsel %vm4147, 1, 0
          %v4660 = vsel %vm4148, 1, 0
          %v4661 = vsel %vm4149, 1, 0
          %v4662 = vsel %vm4150, 1, 0
          %v4663 = vsel %vm4151, 1, 0
          %v4664 = vsel %vm4152, 1, 0
          %v4665 = vsel %vm4153, 1, 0
          %v4666 = vsel %vm4154, 1, 0
          %v4667 = vsel %vm4155, 1, 0
          %v4668 = vsel %vm4156, 1, 0
          %v4669 = vsel %vm4157, 1, 0
          %v4670 = vsel %vm4158, 1, 0
          %v4671 = vsel %vm4159, 1, 0
          %v4672 = vsel %vm4160, 1, 0
          %v4673 = vsel %vm4161, 1, 0
          %v4674 = vsel %vm4162, 1, 0
          %v4675 = vsel %vm4163, 1, 0
          %v4676 = vsel %vm4164, 1, 0
          %v4677 = vsel %vm4165, 1, 0
          %v4678 = vsel %vm4166, 1, 0
          %v4679 = vsel %vm4167, 1, 0
          %v4680 = vsel %vm4168, 1, 0
          %v4681 = vsel %vm4169, 1, 0
          %v4682 = vsel %vm4170, 1, 0
          %v4683 = vsel %vm4171, 1, 0
          %v4684 = vsel %vm4172, 1, 0
          %v4685 = vsel %vm4173, 1, 0
          %v4686 = vsel %vm4174, 1, 0
          %v4687 = vsel %vm4175, 1, 0
          %v4688 = vsel %vm4176, 1, 0
          %v4689 = vsel %vm4177, 1, 0
          %v4690 = vsel %vm4178, 1, 0
          %v4691 = vsel %vm4179, 1, 0
          %v4692 = vsel %vm4180, 1, 0
          %v4693 = vsel %vm4181, 1, 0
          %v4694 = vsel %vm4182, 1, 0
          %v4695 = vsel %vm4183, 1, 0
          %v4696 = vsel %vm4184, 1, 0
          %v4697 = vsel %vm4185, 1, 0
          %v4698 = vsel %vm4186, 1, 0
          %v4699 = vsel %vm4187, 1, 0
          %v4700 = vsel %vm4188, 1, 0
          %v4701 = vsel %vm4189, 1, 0
          %v4702 = vsel %vm4190, 1, 0
          %v4703 = vsel %vm4191, 1, 0
          %v4704 = vsel %vm4192, 1, 0
          %v4705 = vsel %vm4193, 1, 0
          %v4706 = vsel %vm4194, 1, 0
          %v4707 = vsel %vm4195, 1, 0
          %v4708 = vsel %vm4196, 1, 0
          %v4709 = vsel %vm4197, 1, 0
          %v4710 = vsel %vm4198, 1, 0
          %v4711 = vsel %vm4199, 1, 0
          %v4712 = vsel %vm4200, 1, 0
          %v4713 = vsel %vm4201, 1, 0
          %v4714 = vsel %vm4202, 1, 0
          %v4715 = vsel %vm4203, 1, 0
          %v4716 = vsel %vm4204, 1, 0
          %v4717 = vsel %vm4205, 1, 0
          %v4718 = vsel %vm4206, 1, 0
          %v4719 = vsel %vm4207, 1, 0
          %v4720 = vsel %vm4208, 1, 0
          %v4721 = vsel %vm4209, 1, 0
          %v4722 = vsel %vm4210, 1, 0
          %v4723 = vsel %vm4211, 1, 0
          %v4724 = vsel %vm4212, 1, 0
          %v4725 = vsel %vm4213, 1, 0
          %v4726 = vsel %vm4214, 1, 0
          %v4727 = vsel %vm4215, 1, 0
          %v4728 = vsel %vm4216, 1, 0
          %v4729 = vsel %vm4217, 1, 0
          %v4730 = vsel %vm4218, 1, 0
          %v4731 = vsel %vm4219, 1, 0
          %v4732 = vsel %vm4220, 1, 0
          %v4733 = vsel %vm4221, 1, 0
          %v4734 = vsel %vm4222, 1, 0
          %v4735 = vsel %vm4223, 1, 0
          %v4736 = vsel %vm4224, 1, 0
          %v4737 = vsel %vm4225, 1, 0
          %v4738 = vsel %vm4226, 1, 0
          %v4739 = vsel %vm4227, 1, 0
          %v4740 = vsel %vm4228, 1, 0
          %v4741 = vsel %vm4229, 1, 0
          %v4742 = vsel %vm4230, 1, 0
          %v4743 = vsel %vm4231, 1, 0
          %v4744 = vsel %vm4232, 1, 0
          %v4745 = vsel %vm4233, 1, 0
          %v4746 = vsel %vm4234, 1, 0
          %v4747 = vsel %vm4235, 1, 0
          %v4748 = vsel %vm4236, 1, 0
          %v4749 = vsel %vm4237, 1, 0
          %v4750 = vsel %vm4238, 1, 0
          %v4751 = vsel %vm4239, 1, 0
          %v4752 = vsel %vm4240, 1, 0
          %v4753 = vsel %vm4241, 1, 0
          %v4754 = vsel %vm4242, 1, 0
          %v4755 = vsel %vm4243, 1, 0
          %v4756 = vsel %vm4244, 1, 0
          %v4757 = vsel %vm4245, 1, 0
          %v4758 = vsel %vm4246, 1, 0
          %v4759 = vsel %vm4247, 1, 0
          %v4760 = vsel %vm4248, 1, 0
          %v4761 = vsel %vm4249, 1, 0
          %v4762 = vsel %vm4250, 1, 0
          %v4763 = vsel %vm4251, 1, 0
          %v4764 = vsel %vm4252, 1, 0
          %v4765 = vsel %vm4253, 1, 0
          %v4766 = vsel %vm4254, 1, 0
          %v4767 = vsel %vm4255, 1, 0
          %v4768 = vsel %vm4256, 1, 0
          %v4769 = vsel %vm4257, 1, 0
          %v4770 = vsel %vm4258, 1, 0
          %v4771 = vsel %vm4259, 1, 0
          %v4772 = vsel %vm4260, 1, 0
          %v4773 = vsel %vm4261, 1, 0
          %v4774 = vsel %vm4262, 1, 0
          %v4775 = vsel %vm4263, 1, 0
          %v4776 = vsel %vm4264, 1, 0
          %v4777 = vsel %vm4265, 1, 0
          %v4778 = vsel %vm4266, 1, 0
          %v4779 = vsel %vm4267, 1, 0
          %v4780 = vsel %vm4268, 1, 0
          %v4781 = vsel %vm4269, 1, 0
          %v4782 = vsel %vm4270, 1, 0
          %v4783 = vsel %vm4271, 1, 0
          %v4784 = vsel %vm4272, 1, 0
          %v4785 = vsel %vm4273, 1, 0
          %v4786 = vsel %vm4274, 1, 0
          %v4787 = vsel %vm4275, 1, 0
          %v4788 = vsel %vm4276, 1, 0
          %v4789 = vsel %vm4277, 1, 0
          %v4790 = vsel %vm4278, 1, 0
          %v4791 = vsel %vm4279, 1, 0
          %v4792 = vsel %vm4280, 1, 0
          %v4793 = vsel %vm4281, 1, 0
          %v4794 = vsel %vm4282, 1, 0
          %v4795 = vsel %vm4283, 1, 0
          %v4796 = vsel %vm4284, 1, 0
          %v4797 = vsel %vm4285, 1, 0
          %v4798 = vsel %vm4286, 1, 0
          %v4799 = vsel %vm4287, 1, 0
          %v4800 = vsel %vm4288, 1, 0
          %v4801 = vsel %vm4289, 1, 0
          %v4802 = vsel %vm4290, 1, 0
          %v4803 = vsel %vm4291, 1, 0
          %v4804 = vsel %vm4292, 1, 0
          %v4805 = vsel %vm4293, 1, 0
          %v4806 = vsel %vm4294, 1, 0
          %v4807 = vsel %vm4295, 1, 0
          %v4808 = vsel %vm4296, 1, 0
          %v4809 = vsel %vm4297, 1, 0
          %v4810 = vsel %vm4298, 1, 0
          %v4811 = vsel %vm4299, 1, 0
          %v4812 = vsel %vm4300, 1, 0
          %v4813 = vsel %vm4301, 1, 0
          %v4814 = vsel %vm4302, 1, 0
          %v4815 = vsel %vm4303, 1, 0
          %v4816 = vsel %vm4304, 1, 0
          %v4817 = vsel %vm4305, 1, 0
          %v4818 = vsel %vm4306, 1, 0
          %v4819 = vsel %vm4307, 1, 0
          %v4820 = vsel %vm4308, 1, 0
          %v4821 = vsel %vm4309, 1, 0
          %v4822 = vsel %vm4310, 1, 0
          %v4823 = vsel %vm4311, 1, 0
          %v4824 = vsel %vm4312, 1, 0
          %v4825 = vsel %vm4313, 1, 0
          %v4826 = vsel %vm4314, 1, 0
          %v4827 = vsel %vm4315, 1, 0
          %v4828 = vsel %vm4316, 1, 0
          %v4829 = vsel %vm4317, 1, 0
          %v4830 = vsel %vm4318, 1, 0
          %v4831 = vsel %vm4319, 1, 0
          %v4832 = vsel %vm4320, 1, 0
          %v4833 = vsel %vm4321, 1, 0
          %v4834 = vsel %vm4322, 1, 0
          %v4835 = vsel %vm4323, 1, 0
          %v4836 = vsel %vm4324, 1, 0
          %v4837 = vsel %vm4325, 1, 0
          %v4838 = vsel %vm4326, 1, 0
          %v4839 = vsel %vm4327, 1, 0
          %v4840 = vsel %vm4328, 1, 0
          %v4841 = vsel %vm4329, 1, 0
          %v4842 = vsel %vm4330, 1, 0
          %v4843 = vsel %vm4331, 1, 0
          %v4844 = vsel %vm4332, 1, 0
          %v4845 = vsel %vm4333, 1, 0
          %v4846 = vsel %vm4334, 1, 0
          %v4847 = vsel %vm4335, 1, 0
          %v4848 = vsel %vm4336, 1, 0
          %v4849 = vsel %vm4337, 1, 0
          %v4850 = vsel %vm4338, 1, 0
          %v4851 = vsel %vm4339, 1, 0
          %v4852 = vsel %vm4340, 1, 0
          %v4853 = vsel %vm4341, 1, 0
          %v4854 = vsel %vm4342, 1, 0
          %v4855 = vsel %vm4343, 1, 0
          %v4856 = vsel %vm4344, 1, 0
          %v4857 = vsel %vm4345, 1, 0
          %v4858 = vsel %vm4346, 1, 0
          %v4859 = vsel %vm4347, 1, 0
          %v4860 = vsel %vm4348, 1, 0
          %v4861 = vsel %vm4349, 1, 0
          %v4862 = vsel %vm4350, 1, 0
          %v4863 = vsel %vm4351, 1, 0
          %v4864 = vsel %vm4352, 1, 0
          %v4865 = vsel %vm4353, 1, 0
          %v4866 = vsel %vm4354, 1, 0
          %v4867 = vsel %vm4355, 1, 0
          %v4868 = vsel %vm4356, 1, 0
          %v4869 = vsel %vm4357, 1, 0
          %v4870 = vsel %vm4358, 1, 0
          %v4871 = vsel %vm4359, 1, 0
          %v4872 = vsel %vm4360, 1, 0
          %v4873 = vsel %vm4361, 1, 0
          %v4874 = vsel %vm4362, 1, 0
          %v4875 = vsel %vm4363, 1, 0
          %v4876 = vsel %vm4364, 1, 0
          %v4877 = vsel %vm4365, 1, 0
          %v4878 = vsel %vm4366, 1, 0
          %v4879 = vsel %vm4367, 1, 0
          %v4880 = vsel %vm4368, 1, 0
          %v4881 = vsel %vm4369, 1, 0
          %v4882 = vsel %vm4370, 1, 0
          %v4883 = vsel %vm4371, 1, 0
          %v4884 = vsel %vm4372, 1, 0
          %v4885 = vsel %vm4373, 1, 0
          %v4886 = vsel %vm4374, 1, 0
          %v4887 = vsel %vm4375, 1, 0
          %v4888 = vsel %vm4376, 1, 0
          %v4889 = vsel %vm4377, 1, 0
          %v4890 = vsel %vm4378, 1, 0
          %v4891 = vsel %vm4379, 1, 0
          %v4892 = vsel %vm4380, 1, 0
          %v4893 = vsel %vm4381, 1, 0
          %v4894 = vsel %vm4382, 1, 0
          %v4895 = vsel %vm4383, 1, 0
          %v4896 = vsel %vm4384, 1, 0
          %v4897 = vsel %vm4385, 1, 0
          %v4898 = vsel %vm4386, 1, 0
          %v4899 = vsel %vm4387, 1, 0
          %v4900 = vsel %vm4388, 1, 0
          %v4901 = vsel %vm4389, 1, 0
          %v4902 = vsel %vm4390, 1, 0
          %v4903 = vsel %vm4391, 1, 0
          %v4904 = vsel %vm4392, 1, 0
          %v4905 = vsel %vm4393, 1, 0
          %vm4906 = vcmp.eq.s32.totalorder %v4394, 1
          %vm4907 = vcmp.eq.s32.totalorder %v4395, 1
          %vm4908 = vcmp.eq.s32.totalorder %v4396, 1
          %vm4909 = vcmp.eq.s32.totalorder %v4397, 1
          %vm4910 = vcmp.eq.s32.totalorder %v4398, 1
          %vm4911 = vcmp.eq.s32.totalorder %v4399, 1
          %vm4912 = vcmp.eq.s32.totalorder %v4400, 1
          %vm4913 = vcmp.eq.s32.totalorder %v4401, 1
          %vm4914 = vcmp.eq.s32.totalorder %v4402, 1
          %vm4915 = vcmp.eq.s32.totalorder %v4403, 1
          %vm4916 = vcmp.eq.s32.totalorder %v4404, 1
          %vm4917 = vcmp.eq.s32.totalorder %v4405, 1
          %vm4918 = vcmp.eq.s32.totalorder %v4406, 1
          %vm4919 = vcmp.eq.s32.totalorder %v4407, 1
          %vm4920 = vcmp.eq.s32.totalorder %v4408, 1
          %vm4921 = vcmp.eq.s32.totalorder %v4409, 1
          %vm4922 = vcmp.eq.s32.totalorder %v4410, 1
          %vm4923 = vcmp.eq.s32.totalorder %v4411, 1
          %vm4924 = vcmp.eq.s32.totalorder %v4412, 1
          %vm4925 = vcmp.eq.s32.totalorder %v4413, 1
          %vm4926 = vcmp.eq.s32.totalorder %v4414, 1
          %vm4927 = vcmp.eq.s32.totalorder %v4415, 1
          %vm4928 = vcmp.eq.s32.totalorder %v4416, 1
          %vm4929 = vcmp.eq.s32.totalorder %v4417, 1
          %vm4930 = vcmp.eq.s32.totalorder %v4418, 1
          %vm4931 = vcmp.eq.s32.totalorder %v4419, 1
          %vm4932 = vcmp.eq.s32.totalorder %v4420, 1
          %vm4933 = vcmp.eq.s32.totalorder %v4421, 1
          %vm4934 = vcmp.eq.s32.totalorder %v4422, 1
          %vm4935 = vcmp.eq.s32.totalorder %v4423, 1
          %vm4936 = vcmp.eq.s32.totalorder %v4424, 1
          %vm4937 = vcmp.eq.s32.totalorder %v4425, 1
          %vm4938 = vcmp.eq.s32.totalorder %v4426, 1
          %vm4939 = vcmp.eq.s32.totalorder %v4427, 1
          %vm4940 = vcmp.eq.s32.totalorder %v4428, 1
          %vm4941 = vcmp.eq.s32.totalorder %v4429, 1
          %vm4942 = vcmp.eq.s32.totalorder %v4430, 1
          %vm4943 = vcmp.eq.s32.totalorder %v4431, 1
          %vm4944 = vcmp.eq.s32.totalorder %v4432, 1
          %vm4945 = vcmp.eq.s32.totalorder %v4433, 1
          %vm4946 = vcmp.eq.s32.totalorder %v4434, 1
          %vm4947 = vcmp.eq.s32.totalorder %v4435, 1
          %vm4948 = vcmp.eq.s32.totalorder %v4436, 1
          %vm4949 = vcmp.eq.s32.totalorder %v4437, 1
          %vm4950 = vcmp.eq.s32.totalorder %v4438, 1
          %vm4951 = vcmp.eq.s32.totalorder %v4439, 1
          %vm4952 = vcmp.eq.s32.totalorder %v4440, 1
          %vm4953 = vcmp.eq.s32.totalorder %v4441, 1
          %vm4954 = vcmp.eq.s32.totalorder %v4442, 1
          %vm4955 = vcmp.eq.s32.totalorder %v4443, 1
          %vm4956 = vcmp.eq.s32.totalorder %v4444, 1
          %vm4957 = vcmp.eq.s32.totalorder %v4445, 1
          %vm4958 = vcmp.eq.s32.totalorder %v4446, 1
          %vm4959 = vcmp.eq.s32.totalorder %v4447, 1
          %vm4960 = vcmp.eq.s32.totalorder %v4448, 1
          %vm4961 = vcmp.eq.s32.totalorder %v4449, 1
          %vm4962 = vcmp.eq.s32.totalorder %v4450, 1
          %vm4963 = vcmp.eq.s32.totalorder %v4451, 1
          %vm4964 = vcmp.eq.s32.totalorder %v4452, 1
          %vm4965 = vcmp.eq.s32.totalorder %v4453, 1
          %vm4966 = vcmp.eq.s32.totalorder %v4454, 1
          %vm4967 = vcmp.eq.s32.totalorder %v4455, 1
          %vm4968 = vcmp.eq.s32.totalorder %v4456, 1
          %vm4969 = vcmp.eq.s32.totalorder %v4457, 1
          %vm4970 = vcmp.eq.s32.totalorder %v4458, 1
          %vm4971 = vcmp.eq.s32.totalorder %v4459, 1
          %vm4972 = vcmp.eq.s32.totalorder %v4460, 1
          %vm4973 = vcmp.eq.s32.totalorder %v4461, 1
          %vm4974 = vcmp.eq.s32.totalorder %v4462, 1
          %vm4975 = vcmp.eq.s32.totalorder %v4463, 1
          %vm4976 = vcmp.eq.s32.totalorder %v4464, 1
          %vm4977 = vcmp.eq.s32.totalorder %v4465, 1
          %vm4978 = vcmp.eq.s32.totalorder %v4466, 1
          %vm4979 = vcmp.eq.s32.totalorder %v4467, 1
          %vm4980 = vcmp.eq.s32.totalorder %v4468, 1
          %vm4981 = vcmp.eq.s32.totalorder %v4469, 1
          %vm4982 = vcmp.eq.s32.totalorder %v4470, 1
          %vm4983 = vcmp.eq.s32.totalorder %v4471, 1
          %vm4984 = vcmp.eq.s32.totalorder %v4472, 1
          %vm4985 = vcmp.eq.s32.totalorder %v4473, 1
          %vm4986 = vcmp.eq.s32.totalorder %v4474, 1
          %vm4987 = vcmp.eq.s32.totalorder %v4475, 1
          %vm4988 = vcmp.eq.s32.totalorder %v4476, 1
          %vm4989 = vcmp.eq.s32.totalorder %v4477, 1
          %vm4990 = vcmp.eq.s32.totalorder %v4478, 1
          %vm4991 = vcmp.eq.s32.totalorder %v4479, 1
          %vm4992 = vcmp.eq.s32.totalorder %v4480, 1
          %vm4993 = vcmp.eq.s32.totalorder %v4481, 1
          %vm4994 = vcmp.eq.s32.totalorder %v4482, 1
          %vm4995 = vcmp.eq.s32.totalorder %v4483, 1
          %vm4996 = vcmp.eq.s32.totalorder %v4484, 1
          %vm4997 = vcmp.eq.s32.totalorder %v4485, 1
          %vm4998 = vcmp.eq.s32.totalorder %v4486, 1
          %vm4999 = vcmp.eq.s32.totalorder %v4487, 1
          %vm5000 = vcmp.eq.s32.totalorder %v4488, 1
          %vm5001 = vcmp.eq.s32.totalorder %v4489, 1
          %vm5002 = vcmp.eq.s32.totalorder %v4490, 1
          %vm5003 = vcmp.eq.s32.totalorder %v4491, 1
          %vm5004 = vcmp.eq.s32.totalorder %v4492, 1
          %vm5005 = vcmp.eq.s32.totalorder %v4493, 1
          %vm5006 = vcmp.eq.s32.totalorder %v4494, 1
          %vm5007 = vcmp.eq.s32.totalorder %v4495, 1
          %vm5008 = vcmp.eq.s32.totalorder %v4496, 1
          %vm5009 = vcmp.eq.s32.totalorder %v4497, 1
          %vm5010 = vcmp.eq.s32.totalorder %v4498, 1
          %vm5011 = vcmp.eq.s32.totalorder %v4499, 1
          %vm5012 = vcmp.eq.s32.totalorder %v4500, 1
          %vm5013 = vcmp.eq.s32.totalorder %v4501, 1
          %vm5014 = vcmp.eq.s32.totalorder %v4502, 1
          %vm5015 = vcmp.eq.s32.totalorder %v4503, 1
          %vm5016 = vcmp.eq.s32.totalorder %v4504, 1
          %vm5017 = vcmp.eq.s32.totalorder %v4505, 1
          %vm5018 = vcmp.eq.s32.totalorder %v4506, 1
          %vm5019 = vcmp.eq.s32.totalorder %v4507, 1
          %vm5020 = vcmp.eq.s32.totalorder %v4508, 1
          %vm5021 = vcmp.eq.s32.totalorder %v4509, 1
          %vm5022 = vcmp.eq.s32.totalorder %v4510, 1
          %vm5023 = vcmp.eq.s32.totalorder %v4511, 1
          %vm5024 = vcmp.eq.s32.totalorder %v4512, 1
          %vm5025 = vcmp.eq.s32.totalorder %v4513, 1
          %vm5026 = vcmp.eq.s32.totalorder %v4514, 1
          %vm5027 = vcmp.eq.s32.totalorder %v4515, 1
          %vm5028 = vcmp.eq.s32.totalorder %v4516, 1
          %vm5029 = vcmp.eq.s32.totalorder %v4517, 1
          %vm5030 = vcmp.eq.s32.totalorder %v4518, 1
          %vm5031 = vcmp.eq.s32.totalorder %v4519, 1
          %vm5032 = vcmp.eq.s32.totalorder %v4520, 1
          %vm5033 = vcmp.eq.s32.totalorder %v4521, 1
          %vm5034 = vcmp.eq.s32.totalorder %v4522, 1
          %vm5035 = vcmp.eq.s32.totalorder %v4523, 1
          %vm5036 = vcmp.eq.s32.totalorder %v4524, 1
          %vm5037 = vcmp.eq.s32.totalorder %v4525, 1
          %vm5038 = vcmp.eq.s32.totalorder %v4526, 1
          %vm5039 = vcmp.eq.s32.totalorder %v4527, 1
          %vm5040 = vcmp.eq.s32.totalorder %v4528, 1
          %vm5041 = vcmp.eq.s32.totalorder %v4529, 1
          %vm5042 = vcmp.eq.s32.totalorder %v4530, 1
          %vm5043 = vcmp.eq.s32.totalorder %v4531, 1
          %vm5044 = vcmp.eq.s32.totalorder %v4532, 1
          %vm5045 = vcmp.eq.s32.totalorder %v4533, 1
          %vm5046 = vcmp.eq.s32.totalorder %v4534, 1
          %vm5047 = vcmp.eq.s32.totalorder %v4535, 1
          %vm5048 = vcmp.eq.s32.totalorder %v4536, 1
          %vm5049 = vcmp.eq.s32.totalorder %v4537, 1
          %vm5050 = vcmp.eq.s32.totalorder %v4538, 1
          %vm5051 = vcmp.eq.s32.totalorder %v4539, 1
          %vm5052 = vcmp.eq.s32.totalorder %v4540, 1
          %vm5053 = vcmp.eq.s32.totalorder %v4541, 1
          %vm5054 = vcmp.eq.s32.totalorder %v4542, 1
          %vm5055 = vcmp.eq.s32.totalorder %v4543, 1
          %vm5056 = vcmp.eq.s32.totalorder %v4544, 1
          %vm5057 = vcmp.eq.s32.totalorder %v4545, 1
          %vm5058 = vcmp.eq.s32.totalorder %v4546, 1
          %vm5059 = vcmp.eq.s32.totalorder %v4547, 1
          %vm5060 = vcmp.eq.s32.totalorder %v4548, 1
          %vm5061 = vcmp.eq.s32.totalorder %v4549, 1
          %vm5062 = vcmp.eq.s32.totalorder %v4550, 1
          %vm5063 = vcmp.eq.s32.totalorder %v4551, 1
          %vm5064 = vcmp.eq.s32.totalorder %v4552, 1
          %vm5065 = vcmp.eq.s32.totalorder %v4553, 1
          %vm5066 = vcmp.eq.s32.totalorder %v4554, 1
          %vm5067 = vcmp.eq.s32.totalorder %v4555, 1
          %vm5068 = vcmp.eq.s32.totalorder %v4556, 1
          %vm5069 = vcmp.eq.s32.totalorder %v4557, 1
          %vm5070 = vcmp.eq.s32.totalorder %v4558, 1
          %vm5071 = vcmp.eq.s32.totalorder %v4559, 1
          %vm5072 = vcmp.eq.s32.totalorder %v4560, 1
          %vm5073 = vcmp.eq.s32.totalorder %v4561, 1
          %vm5074 = vcmp.eq.s32.totalorder %v4562, 1
          %vm5075 = vcmp.eq.s32.totalorder %v4563, 1
          %vm5076 = vcmp.eq.s32.totalorder %v4564, 1
          %vm5077 = vcmp.eq.s32.totalorder %v4565, 1
          %vm5078 = vcmp.eq.s32.totalorder %v4566, 1
          %vm5079 = vcmp.eq.s32.totalorder %v4567, 1
          %vm5080 = vcmp.eq.s32.totalorder %v4568, 1
          %vm5081 = vcmp.eq.s32.totalorder %v4569, 1
          %vm5082 = vcmp.eq.s32.totalorder %v4570, 1
          %vm5083 = vcmp.eq.s32.totalorder %v4571, 1
          %vm5084 = vcmp.eq.s32.totalorder %v4572, 1
          %vm5085 = vcmp.eq.s32.totalorder %v4573, 1
          %vm5086 = vcmp.eq.s32.totalorder %v4574, 1
          %vm5087 = vcmp.eq.s32.totalorder %v4575, 1
          %vm5088 = vcmp.eq.s32.totalorder %v4576, 1
          %vm5089 = vcmp.eq.s32.totalorder %v4577, 1
          %vm5090 = vcmp.eq.s32.totalorder %v4578, 1
          %vm5091 = vcmp.eq.s32.totalorder %v4579, 1
          %vm5092 = vcmp.eq.s32.totalorder %v4580, 1
          %vm5093 = vcmp.eq.s32.totalorder %v4581, 1
          %vm5094 = vcmp.eq.s32.totalorder %v4582, 1
          %vm5095 = vcmp.eq.s32.totalorder %v4583, 1
          %vm5096 = vcmp.eq.s32.totalorder %v4584, 1
          %vm5097 = vcmp.eq.s32.totalorder %v4585, 1
          %vm5098 = vcmp.eq.s32.totalorder %v4586, 1
          %vm5099 = vcmp.eq.s32.totalorder %v4587, 1
          %vm5100 = vcmp.eq.s32.totalorder %v4588, 1
          %vm5101 = vcmp.eq.s32.totalorder %v4589, 1
          %vm5102 = vcmp.eq.s32.totalorder %v4590, 1
          %vm5103 = vcmp.eq.s32.totalorder %v4591, 1
          %vm5104 = vcmp.eq.s32.totalorder %v4592, 1
          %vm5105 = vcmp.eq.s32.totalorder %v4593, 1
          %vm5106 = vcmp.eq.s32.totalorder %v4594, 1
          %vm5107 = vcmp.eq.s32.totalorder %v4595, 1
          %vm5108 = vcmp.eq.s32.totalorder %v4596, 1
          %vm5109 = vcmp.eq.s32.totalorder %v4597, 1
          %vm5110 = vcmp.eq.s32.totalorder %v4598, 1
          %vm5111 = vcmp.eq.s32.totalorder %v4599, 1
          %vm5112 = vcmp.eq.s32.totalorder %v4600, 1
          %vm5113 = vcmp.eq.s32.totalorder %v4601, 1
          %vm5114 = vcmp.eq.s32.totalorder %v4602, 1
          %vm5115 = vcmp.eq.s32.totalorder %v4603, 1
          %vm5116 = vcmp.eq.s32.totalorder %v4604, 1
          %vm5117 = vcmp.eq.s32.totalorder %v4605, 1
          %vm5118 = vcmp.eq.s32.totalorder %v4606, 1
          %vm5119 = vcmp.eq.s32.totalorder %v4607, 1
          %vm5120 = vcmp.eq.s32.totalorder %v4608, 1
          %vm5121 = vcmp.eq.s32.totalorder %v4609, 1
          %vm5122 = vcmp.eq.s32.totalorder %v4610, 1
          %vm5123 = vcmp.eq.s32.totalorder %v4611, 1
          %vm5124 = vcmp.eq.s32.totalorder %v4612, 1
          %vm5125 = vcmp.eq.s32.totalorder %v4613, 1
          %vm5126 = vcmp.eq.s32.totalorder %v4614, 1
          %vm5127 = vcmp.eq.s32.totalorder %v4615, 1
          %vm5128 = vcmp.eq.s32.totalorder %v4616, 1
          %vm5129 = vcmp.eq.s32.totalorder %v4617, 1
          %vm5130 = vcmp.eq.s32.totalorder %v4618, 1
          %vm5131 = vcmp.eq.s32.totalorder %v4619, 1
          %vm5132 = vcmp.eq.s32.totalorder %v4620, 1
          %vm5133 = vcmp.eq.s32.totalorder %v4621, 1
          %vm5134 = vcmp.eq.s32.totalorder %v4622, 1
          %vm5135 = vcmp.eq.s32.totalorder %v4623, 1
          %vm5136 = vcmp.eq.s32.totalorder %v4624, 1
          %vm5137 = vcmp.eq.s32.totalorder %v4625, 1
          %vm5138 = vcmp.eq.s32.totalorder %v4626, 1
          %vm5139 = vcmp.eq.s32.totalorder %v4627, 1
          %vm5140 = vcmp.eq.s32.totalorder %v4628, 1
          %vm5141 = vcmp.eq.s32.totalorder %v4629, 1
          %vm5142 = vcmp.eq.s32.totalorder %v4630, 1
          %vm5143 = vcmp.eq.s32.totalorder %v4631, 1
          %vm5144 = vcmp.eq.s32.totalorder %v4632, 1
          %vm5145 = vcmp.eq.s32.totalorder %v4633, 1
          %vm5146 = vcmp.eq.s32.totalorder %v4634, 1
          %vm5147 = vcmp.eq.s32.totalorder %v4635, 1
          %vm5148 = vcmp.eq.s32.totalorder %v4636, 1
          %vm5149 = vcmp.eq.s32.totalorder %v4637, 1
          %vm5150 = vcmp.eq.s32.totalorder %v4638, 1
          %vm5151 = vcmp.eq.s32.totalorder %v4639, 1
          %vm5152 = vcmp.eq.s32.totalorder %v4640, 1
          %vm5153 = vcmp.eq.s32.totalorder %v4641, 1
          %vm5154 = vcmp.eq.s32.totalorder %v4642, 1
          %vm5155 = vcmp.eq.s32.totalorder %v4643, 1
          %vm5156 = vcmp.eq.s32.totalorder %v4644, 1
          %vm5157 = vcmp.eq.s32.totalorder %v4645, 1
          %vm5158 = vcmp.eq.s32.totalorder %v4646, 1
          %vm5159 = vcmp.eq.s32.totalorder %v4647, 1
          %vm5160 = vcmp.eq.s32.totalorder %v4648, 1
          %vm5161 = vcmp.eq.s32.totalorder %v4649, 1
          %vm5162 = vcmp.eq.s32.totalorder %v4650, 1
          %vm5163 = vcmp.eq.s32.totalorder %v4651, 1
          %vm5164 = vcmp.eq.s32.totalorder %v4652, 1
          %vm5165 = vcmp.eq.s32.totalorder %v4653, 1
          %vm5166 = vcmp.eq.s32.totalorder %v4654, 1
          %vm5167 = vcmp.eq.s32.totalorder %v4655, 1
          %vm5168 = vcmp.eq.s32.totalorder %v4656, 1
          %vm5169 = vcmp.eq.s32.totalorder %v4657, 1
          %vm5170 = vcmp.eq.s32.totalorder %v4658, 1
          %vm5171 = vcmp.eq.s32.totalorder %v4659, 1
          %vm5172 = vcmp.eq.s32.totalorder %v4660, 1
          %vm5173 = vcmp.eq.s32.totalorder %v4661, 1
          %vm5174 = vcmp.eq.s32.totalorder %v4662, 1
          %vm5175 = vcmp.eq.s32.totalorder %v4663, 1
          %vm5176 = vcmp.eq.s32.totalorder %v4664, 1
          %vm5177 = vcmp.eq.s32.totalorder %v4665, 1
          %vm5178 = vcmp.eq.s32.totalorder %v4666, 1
          %vm5179 = vcmp.eq.s32.totalorder %v4667, 1
          %vm5180 = vcmp.eq.s32.totalorder %v4668, 1
          %vm5181 = vcmp.eq.s32.totalorder %v4669, 1
          %vm5182 = vcmp.eq.s32.totalorder %v4670, 1
          %vm5183 = vcmp.eq.s32.totalorder %v4671, 1
          %vm5184 = vcmp.eq.s32.totalorder %v4672, 1
          %vm5185 = vcmp.eq.s32.totalorder %v4673, 1
          %vm5186 = vcmp.eq.s32.totalorder %v4674, 1
          %vm5187 = vcmp.eq.s32.totalorder %v4675, 1
          %vm5188 = vcmp.eq.s32.totalorder %v4676, 1
          %vm5189 = vcmp.eq.s32.totalorder %v4677, 1
          %vm5190 = vcmp.eq.s32.totalorder %v4678, 1
          %vm5191 = vcmp.eq.s32.totalorder %v4679, 1
          %vm5192 = vcmp.eq.s32.totalorder %v4680, 1
          %vm5193 = vcmp.eq.s32.totalorder %v4681, 1
          %vm5194 = vcmp.eq.s32.totalorder %v4682, 1
          %vm5195 = vcmp.eq.s32.totalorder %v4683, 1
          %vm5196 = vcmp.eq.s32.totalorder %v4684, 1
          %vm5197 = vcmp.eq.s32.totalorder %v4685, 1
          %vm5198 = vcmp.eq.s32.totalorder %v4686, 1
          %vm5199 = vcmp.eq.s32.totalorder %v4687, 1
          %vm5200 = vcmp.eq.s32.totalorder %v4688, 1
          %vm5201 = vcmp.eq.s32.totalorder %v4689, 1
          %vm5202 = vcmp.eq.s32.totalorder %v4690, 1
          %vm5203 = vcmp.eq.s32.totalorder %v4691, 1
          %vm5204 = vcmp.eq.s32.totalorder %v4692, 1
          %vm5205 = vcmp.eq.s32.totalorder %v4693, 1
          %vm5206 = vcmp.eq.s32.totalorder %v4694, 1
          %vm5207 = vcmp.eq.s32.totalorder %v4695, 1
          %vm5208 = vcmp.eq.s32.totalorder %v4696, 1
          %vm5209 = vcmp.eq.s32.totalorder %v4697, 1
          %vm5210 = vcmp.eq.s32.totalorder %v4698, 1
          %vm5211 = vcmp.eq.s32.totalorder %v4699, 1
          %vm5212 = vcmp.eq.s32.totalorder %v4700, 1
          %vm5213 = vcmp.eq.s32.totalorder %v4701, 1
          %vm5214 = vcmp.eq.s32.totalorder %v4702, 1
          %vm5215 = vcmp.eq.s32.totalorder %v4703, 1
          %vm5216 = vcmp.eq.s32.totalorder %v4704, 1
          %vm5217 = vcmp.eq.s32.totalorder %v4705, 1
          %vm5218 = vcmp.eq.s32.totalorder %v4706, 1
          %vm5219 = vcmp.eq.s32.totalorder %v4707, 1
          %vm5220 = vcmp.eq.s32.totalorder %v4708, 1
          %vm5221 = vcmp.eq.s32.totalorder %v4709, 1
          %vm5222 = vcmp.eq.s32.totalorder %v4710, 1
          %vm5223 = vcmp.eq.s32.totalorder %v4711, 1
          %vm5224 = vcmp.eq.s32.totalorder %v4712, 1
          %vm5225 = vcmp.eq.s32.totalorder %v4713, 1
          %vm5226 = vcmp.eq.s32.totalorder %v4714, 1
          %vm5227 = vcmp.eq.s32.totalorder %v4715, 1
          %vm5228 = vcmp.eq.s32.totalorder %v4716, 1
          %vm5229 = vcmp.eq.s32.totalorder %v4717, 1
          %vm5230 = vcmp.eq.s32.totalorder %v4718, 1
          %vm5231 = vcmp.eq.s32.totalorder %v4719, 1
          %vm5232 = vcmp.eq.s32.totalorder %v4720, 1
          %vm5233 = vcmp.eq.s32.totalorder %v4721, 1
          %vm5234 = vcmp.eq.s32.totalorder %v4722, 1
          %vm5235 = vcmp.eq.s32.totalorder %v4723, 1
          %vm5236 = vcmp.eq.s32.totalorder %v4724, 1
          %vm5237 = vcmp.eq.s32.totalorder %v4725, 1
          %vm5238 = vcmp.eq.s32.totalorder %v4726, 1
          %vm5239 = vcmp.eq.s32.totalorder %v4727, 1
          %vm5240 = vcmp.eq.s32.totalorder %v4728, 1
          %vm5241 = vcmp.eq.s32.totalorder %v4729, 1
          %vm5242 = vcmp.eq.s32.totalorder %v4730, 1
          %vm5243 = vcmp.eq.s32.totalorder %v4731, 1
          %vm5244 = vcmp.eq.s32.totalorder %v4732, 1
          %vm5245 = vcmp.eq.s32.totalorder %v4733, 1
          %vm5246 = vcmp.eq.s32.totalorder %v4734, 1
          %vm5247 = vcmp.eq.s32.totalorder %v4735, 1
          %vm5248 = vcmp.eq.s32.totalorder %v4736, 1
          %vm5249 = vcmp.eq.s32.totalorder %v4737, 1
          %vm5250 = vcmp.eq.s32.totalorder %v4738, 1
          %vm5251 = vcmp.eq.s32.totalorder %v4739, 1
          %vm5252 = vcmp.eq.s32.totalorder %v4740, 1
          %vm5253 = vcmp.eq.s32.totalorder %v4741, 1
          %vm5254 = vcmp.eq.s32.totalorder %v4742, 1
          %vm5255 = vcmp.eq.s32.totalorder %v4743, 1
          %vm5256 = vcmp.eq.s32.totalorder %v4744, 1
          %vm5257 = vcmp.eq.s32.totalorder %v4745, 1
          %vm5258 = vcmp.eq.s32.totalorder %v4746, 1
          %vm5259 = vcmp.eq.s32.totalorder %v4747, 1
          %vm5260 = vcmp.eq.s32.totalorder %v4748, 1
          %vm5261 = vcmp.eq.s32.totalorder %v4749, 1
          %vm5262 = vcmp.eq.s32.totalorder %v4750, 1
          %vm5263 = vcmp.eq.s32.totalorder %v4751, 1
          %vm5264 = vcmp.eq.s32.totalorder %v4752, 1
          %vm5265 = vcmp.eq.s32.totalorder %v4753, 1
          %vm5266 = vcmp.eq.s32.totalorder %v4754, 1
          %vm5267 = vcmp.eq.s32.totalorder %v4755, 1
          %vm5268 = vcmp.eq.s32.totalorder %v4756, 1
          %vm5269 = vcmp.eq.s32.totalorder %v4757, 1
          %vm5270 = vcmp.eq.s32.totalorder %v4758, 1
          %vm5271 = vcmp.eq.s32.totalorder %v4759, 1
          %vm5272 = vcmp.eq.s32.totalorder %v4760, 1
          %vm5273 = vcmp.eq.s32.totalorder %v4761, 1
          %vm5274 = vcmp.eq.s32.totalorder %v4762, 1
          %vm5275 = vcmp.eq.s32.totalorder %v4763, 1
          %vm5276 = vcmp.eq.s32.totalorder %v4764, 1
          %vm5277 = vcmp.eq.s32.totalorder %v4765, 1
          %vm5278 = vcmp.eq.s32.totalorder %v4766, 1
          %vm5279 = vcmp.eq.s32.totalorder %v4767, 1
          %vm5280 = vcmp.eq.s32.totalorder %v4768, 1
          %vm5281 = vcmp.eq.s32.totalorder %v4769, 1
          %vm5282 = vcmp.eq.s32.totalorder %v4770, 1
          %vm5283 = vcmp.eq.s32.totalorder %v4771, 1
          %vm5284 = vcmp.eq.s32.totalorder %v4772, 1
          %vm5285 = vcmp.eq.s32.totalorder %v4773, 1
          %vm5286 = vcmp.eq.s32.totalorder %v4774, 1
          %vm5287 = vcmp.eq.s32.totalorder %v4775, 1
          %vm5288 = vcmp.eq.s32.totalorder %v4776, 1
          %vm5289 = vcmp.eq.s32.totalorder %v4777, 1
          %vm5290 = vcmp.eq.s32.totalorder %v4778, 1
          %vm5291 = vcmp.eq.s32.totalorder %v4779, 1
          %vm5292 = vcmp.eq.s32.totalorder %v4780, 1
          %vm5293 = vcmp.eq.s32.totalorder %v4781, 1
          %vm5294 = vcmp.eq.s32.totalorder %v4782, 1
          %vm5295 = vcmp.eq.s32.totalorder %v4783, 1
          %vm5296 = vcmp.eq.s32.totalorder %v4784, 1
          %vm5297 = vcmp.eq.s32.totalorder %v4785, 1
          %vm5298 = vcmp.eq.s32.totalorder %v4786, 1
          %vm5299 = vcmp.eq.s32.totalorder %v4787, 1
          %vm5300 = vcmp.eq.s32.totalorder %v4788, 1
          %vm5301 = vcmp.eq.s32.totalorder %v4789, 1
          %vm5302 = vcmp.eq.s32.totalorder %v4790, 1
          %vm5303 = vcmp.eq.s32.totalorder %v4791, 1
          %vm5304 = vcmp.eq.s32.totalorder %v4792, 1
          %vm5305 = vcmp.eq.s32.totalorder %v4793, 1
          %vm5306 = vcmp.eq.s32.totalorder %v4794, 1
          %vm5307 = vcmp.eq.s32.totalorder %v4795, 1
          %vm5308 = vcmp.eq.s32.totalorder %v4796, 1
          %vm5309 = vcmp.eq.s32.totalorder %v4797, 1
          %vm5310 = vcmp.eq.s32.totalorder %v4798, 1
          %vm5311 = vcmp.eq.s32.totalorder %v4799, 1
          %vm5312 = vcmp.eq.s32.totalorder %v4800, 1
          %vm5313 = vcmp.eq.s32.totalorder %v4801, 1
          %vm5314 = vcmp.eq.s32.totalorder %v4802, 1
          %vm5315 = vcmp.eq.s32.totalorder %v4803, 1
          %vm5316 = vcmp.eq.s32.totalorder %v4804, 1
          %vm5317 = vcmp.eq.s32.totalorder %v4805, 1
          %vm5318 = vcmp.eq.s32.totalorder %v4806, 1
          %vm5319 = vcmp.eq.s32.totalorder %v4807, 1
          %vm5320 = vcmp.eq.s32.totalorder %v4808, 1
          %vm5321 = vcmp.eq.s32.totalorder %v4809, 1
          %vm5322 = vcmp.eq.s32.totalorder %v4810, 1
          %vm5323 = vcmp.eq.s32.totalorder %v4811, 1
          %vm5324 = vcmp.eq.s32.totalorder %v4812, 1
          %vm5325 = vcmp.eq.s32.totalorder %v4813, 1
          %vm5326 = vcmp.eq.s32.totalorder %v4814, 1
          %vm5327 = vcmp.eq.s32.totalorder %v4815, 1
          %vm5328 = vcmp.eq.s32.totalorder %v4816, 1
          %vm5329 = vcmp.eq.s32.totalorder %v4817, 1
          %vm5330 = vcmp.eq.s32.totalorder %v4818, 1
          %vm5331 = vcmp.eq.s32.totalorder %v4819, 1
          %vm5332 = vcmp.eq.s32.totalorder %v4820, 1
          %vm5333 = vcmp.eq.s32.totalorder %v4821, 1
          %vm5334 = vcmp.eq.s32.totalorder %v4822, 1
          %vm5335 = vcmp.eq.s32.totalorder %v4823, 1
          %vm5336 = vcmp.eq.s32.totalorder %v4824, 1
          %vm5337 = vcmp.eq.s32.totalorder %v4825, 1
          %vm5338 = vcmp.eq.s32.totalorder %v4826, 1
          %vm5339 = vcmp.eq.s32.totalorder %v4827, 1
          %vm5340 = vcmp.eq.s32.totalorder %v4828, 1
          %vm5341 = vcmp.eq.s32.totalorder %v4829, 1
          %vm5342 = vcmp.eq.s32.totalorder %v4830, 1
          %vm5343 = vcmp.eq.s32.totalorder %v4831, 1
          %vm5344 = vcmp.eq.s32.totalorder %v4832, 1
          %vm5345 = vcmp.eq.s32.totalorder %v4833, 1
          %vm5346 = vcmp.eq.s32.totalorder %v4834, 1
          %vm5347 = vcmp.eq.s32.totalorder %v4835, 1
          %vm5348 = vcmp.eq.s32.totalorder %v4836, 1
          %vm5349 = vcmp.eq.s32.totalorder %v4837, 1
          %vm5350 = vcmp.eq.s32.totalorder %v4838, 1
          %vm5351 = vcmp.eq.s32.totalorder %v4839, 1
          %vm5352 = vcmp.eq.s32.totalorder %v4840, 1
          %vm5353 = vcmp.eq.s32.totalorder %v4841, 1
          %vm5354 = vcmp.eq.s32.totalorder %v4842, 1
          %vm5355 = vcmp.eq.s32.totalorder %v4843, 1
          %vm5356 = vcmp.eq.s32.totalorder %v4844, 1
          %vm5357 = vcmp.eq.s32.totalorder %v4845, 1
          %vm5358 = vcmp.eq.s32.totalorder %v4846, 1
          %vm5359 = vcmp.eq.s32.totalorder %v4847, 1
          %vm5360 = vcmp.eq.s32.totalorder %v4848, 1
          %vm5361 = vcmp.eq.s32.totalorder %v4849, 1
          %vm5362 = vcmp.eq.s32.totalorder %v4850, 1
          %vm5363 = vcmp.eq.s32.totalorder %v4851, 1
          %vm5364 = vcmp.eq.s32.totalorder %v4852, 1
          %vm5365 = vcmp.eq.s32.totalorder %v4853, 1
          %vm5366 = vcmp.eq.s32.totalorder %v4854, 1
          %vm5367 = vcmp.eq.s32.totalorder %v4855, 1
          %vm5368 = vcmp.eq.s32.totalorder %v4856, 1
          %vm5369 = vcmp.eq.s32.totalorder %v4857, 1
          %vm5370 = vcmp.eq.s32.totalorder %v4858, 1
          %vm5371 = vcmp.eq.s32.totalorder %v4859, 1
          %vm5372 = vcmp.eq.s32.totalorder %v4860, 1
          %vm5373 = vcmp.eq.s32.totalorder %v4861, 1
          %vm5374 = vcmp.eq.s32.totalorder %v4862, 1
          %vm5375 = vcmp.eq.s32.totalorder %v4863, 1
          %vm5376 = vcmp.eq.s32.totalorder %v4864, 1
          %vm5377 = vcmp.eq.s32.totalorder %v4865, 1
          %vm5378 = vcmp.eq.s32.totalorder %v4866, 1
          %vm5379 = vcmp.eq.s32.totalorder %v4867, 1
          %vm5380 = vcmp.eq.s32.totalorder %v4868, 1
          %vm5381 = vcmp.eq.s32.totalorder %v4869, 1
          %vm5382 = vcmp.eq.s32.totalorder %v4870, 1
          %vm5383 = vcmp.eq.s32.totalorder %v4871, 1
          %vm5384 = vcmp.eq.s32.totalorder %v4872, 1
          %vm5385 = vcmp.eq.s32.totalorder %v4873, 1
          %vm5386 = vcmp.eq.s32.totalorder %v4874, 1
          %vm5387 = vcmp.eq.s32.totalorder %v4875, 1
          %vm5388 = vcmp.eq.s32.totalorder %v4876, 1
          %vm5389 = vcmp.eq.s32.totalorder %v4877, 1
          %vm5390 = vcmp.eq.s32.totalorder %v4878, 1
          %vm5391 = vcmp.eq.s32.totalorder %v4879, 1
          %vm5392 = vcmp.eq.s32.totalorder %v4880, 1
          %vm5393 = vcmp.eq.s32.totalorder %v4881, 1
          %vm5394 = vcmp.eq.s32.totalorder %v4882, 1
          %vm5395 = vcmp.eq.s32.totalorder %v4883, 1
          %vm5396 = vcmp.eq.s32.totalorder %v4884, 1
          %vm5397 = vcmp.eq.s32.totalorder %v4885, 1
          %vm5398 = vcmp.eq.s32.totalorder %v4886, 1
          %vm5399 = vcmp.eq.s32.totalorder %v4887, 1
          %vm5400 = vcmp.eq.s32.totalorder %v4888, 1
          %vm5401 = vcmp.eq.s32.totalorder %v4889, 1
          %vm5402 = vcmp.eq.s32.totalorder %v4890, 1
          %vm5403 = vcmp.eq.s32.totalorder %v4891, 1
          %vm5404 = vcmp.eq.s32.totalorder %v4892, 1
          %vm5405 = vcmp.eq.s32.totalorder %v4893, 1
          %vm5406 = vcmp.eq.s32.totalorder %v4894, 1
          %vm5407 = vcmp.eq.s32.totalorder %v4895, 1
          %vm5408 = vcmp.eq.s32.totalorder %v4896, 1
          %vm5409 = vcmp.eq.s32.totalorder %v4897, 1
          %vm5410 = vcmp.eq.s32.totalorder %v4898, 1
          %vm5411 = vcmp.eq.s32.totalorder %v4899, 1
          %vm5412 = vcmp.eq.s32.totalorder %v4900, 1
          %vm5413 = vcmp.eq.s32.totalorder %v4901, 1
          %vm5414 = vcmp.eq.s32.totalorder %v4902, 1
          %vm5415 = vcmp.eq.s32.totalorder %v4903, 1
          %vm5416 = vcmp.eq.s32.totalorder %v4904, 1
          %vm5417 = vcmp.eq.s32.totalorder %v4905, 1
          %v5418 = vsel %vm4906, %v1812, 0.0
          %v5419 = vsel %vm4907, %v1813, 0.0
          %v5420 = vsel %vm4908, %v1814, 0.0
          %v5421 = vsel %vm4909, %v1815, 0.0
          %v5422 = vsel %vm4910, %v1816, 0.0
          %v5423 = vsel %vm4911, %v1817, 0.0
          %v5424 = vsel %vm4912, %v1818, 0.0
          %v5425 = vsel %vm4913, %v1819, 0.0
          %v5426 = vsel %vm4914, %v1820, 0.0
          %v5427 = vsel %vm4915, %v1821, 0.0
          %v5428 = vsel %vm4916, %v1822, 0.0
          %v5429 = vsel %vm4917, %v1823, 0.0
          %v5430 = vsel %vm4918, %v1824, 0.0
          %v5431 = vsel %vm4919, %v1825, 0.0
          %v5432 = vsel %vm4920, %v1826, 0.0
          %v5433 = vsel %vm4921, %v1827, 0.0
          %v5434 = vsel %vm4922, %v1828, 0.0
          %v5435 = vsel %vm4923, %v1829, 0.0
          %v5436 = vsel %vm4924, %v1830, 0.0
          %v5437 = vsel %vm4925, %v1831, 0.0
          %v5438 = vsel %vm4926, %v1832, 0.0
          %v5439 = vsel %vm4927, %v1833, 0.0
          %v5440 = vsel %vm4928, %v1834, 0.0
          %v5441 = vsel %vm4929, %v1835, 0.0
          %v5442 = vsel %vm4930, %v1836, 0.0
          %v5443 = vsel %vm4931, %v1837, 0.0
          %v5444 = vsel %vm4932, %v1838, 0.0
          %v5445 = vsel %vm4933, %v1839, 0.0
          %v5446 = vsel %vm4934, %v1840, 0.0
          %v5447 = vsel %vm4935, %v1841, 0.0
          %v5448 = vsel %vm4936, %v1842, 0.0
          %v5449 = vsel %vm4937, %v1843, 0.0
          %v5450 = vsel %vm4938, %v1844, 0.0
          %v5451 = vsel %vm4939, %v1845, 0.0
          %v5452 = vsel %vm4940, %v1846, 0.0
          %v5453 = vsel %vm4941, %v1847, 0.0
          %v5454 = vsel %vm4942, %v1848, 0.0
          %v5455 = vsel %vm4943, %v1849, 0.0
          %v5456 = vsel %vm4944, %v1850, 0.0
          %v5457 = vsel %vm4945, %v1851, 0.0
          %v5458 = vsel %vm4946, %v1852, 0.0
          %v5459 = vsel %vm4947, %v1853, 0.0
          %v5460 = vsel %vm4948, %v1854, 0.0
          %v5461 = vsel %vm4949, %v1855, 0.0
          %v5462 = vsel %vm4950, %v1856, 0.0
          %v5463 = vsel %vm4951, %v1857, 0.0
          %v5464 = vsel %vm4952, %v1858, 0.0
          %v5465 = vsel %vm4953, %v1859, 0.0
          %v5466 = vsel %vm4954, %v1860, 0.0
          %v5467 = vsel %vm4955, %v1861, 0.0
          %v5468 = vsel %vm4956, %v1862, 0.0
          %v5469 = vsel %vm4957, %v1863, 0.0
          %v5470 = vsel %vm4958, %v1864, 0.0
          %v5471 = vsel %vm4959, %v1865, 0.0
          %v5472 = vsel %vm4960, %v1866, 0.0
          %v5473 = vsel %vm4961, %v1867, 0.0
          %v5474 = vsel %vm4962, %v1868, 0.0
          %v5475 = vsel %vm4963, %v1869, 0.0
          %v5476 = vsel %vm4964, %v1870, 0.0
          %v5477 = vsel %vm4965, %v1871, 0.0
          %v5478 = vsel %vm4966, %v1872, 0.0
          %v5479 = vsel %vm4967, %v1873, 0.0
          %v5480 = vsel %vm4968, %v1874, 0.0
          %v5481 = vsel %vm4969, %v1875, 0.0
          %v5482 = vsel %vm4970, %v1876, 0.0
          %v5483 = vsel %vm4971, %v1877, 0.0
          %v5484 = vsel %vm4972, %v1878, 0.0
          %v5485 = vsel %vm4973, %v1879, 0.0
          %v5486 = vsel %vm4974, %v1880, 0.0
          %v5487 = vsel %vm4975, %v1881, 0.0
          %v5488 = vsel %vm4976, %v1882, 0.0
          %v5489 = vsel %vm4977, %v1883, 0.0
          %v5490 = vsel %vm4978, %v1884, 0.0
          %v5491 = vsel %vm4979, %v1885, 0.0
          %v5492 = vsel %vm4980, %v1886, 0.0
          %v5493 = vsel %vm4981, %v1887, 0.0
          %v5494 = vsel %vm4982, %v1888, 0.0
          %v5495 = vsel %vm4983, %v1889, 0.0
          %v5496 = vsel %vm4984, %v1890, 0.0
          %v5497 = vsel %vm4985, %v1891, 0.0
          %v5498 = vsel %vm4986, %v1892, 0.0
          %v5499 = vsel %vm4987, %v1893, 0.0
          %v5500 = vsel %vm4988, %v1894, 0.0
          %v5501 = vsel %vm4989, %v1895, 0.0
          %v5502 = vsel %vm4990, %v1896, 0.0
          %v5503 = vsel %vm4991, %v1897, 0.0
          %v5504 = vsel %vm4992, %v1898, 0.0
          %v5505 = vsel %vm4993, %v1899, 0.0
          %v5506 = vsel %vm4994, %v1900, 0.0
          %v5507 = vsel %vm4995, %v1901, 0.0
          %v5508 = vsel %vm4996, %v1902, 0.0
          %v5509 = vsel %vm4997, %v1903, 0.0
          %v5510 = vsel %vm4998, %v1904, 0.0
          %v5511 = vsel %vm4999, %v1905, 0.0
          %v5512 = vsel %vm5000, %v1906, 0.0
          %v5513 = vsel %vm5001, %v1907, 0.0
          %v5514 = vsel %vm5002, %v1908, 0.0
          %v5515 = vsel %vm5003, %v1909, 0.0
          %v5516 = vsel %vm5004, %v1910, 0.0
          %v5517 = vsel %vm5005, %v1911, 0.0
          %v5518 = vsel %vm5006, %v1912, 0.0
          %v5519 = vsel %vm5007, %v1913, 0.0
          %v5520 = vsel %vm5008, %v1914, 0.0
          %v5521 = vsel %vm5009, %v1915, 0.0
          %v5522 = vsel %vm5010, %v1916, 0.0
          %v5523 = vsel %vm5011, %v1917, 0.0
          %v5524 = vsel %vm5012, %v1918, 0.0
          %v5525 = vsel %vm5013, %v1919, 0.0
          %v5526 = vsel %vm5014, %v1920, 0.0
          %v5527 = vsel %vm5015, %v1921, 0.0
          %v5528 = vsel %vm5016, %v1922, 0.0
          %v5529 = vsel %vm5017, %v1923, 0.0
          %v5530 = vsel %vm5018, %v1924, 0.0
          %v5531 = vsel %vm5019, %v1925, 0.0
          %v5532 = vsel %vm5020, %v1926, 0.0
          %v5533 = vsel %vm5021, %v1927, 0.0
          %v5534 = vsel %vm5022, %v1928, 0.0
          %v5535 = vsel %vm5023, %v1929, 0.0
          %v5536 = vsel %vm5024, %v1930, 0.0
          %v5537 = vsel %vm5025, %v1931, 0.0
          %v5538 = vsel %vm5026, %v1932, 0.0
          %v5539 = vsel %vm5027, %v1933, 0.0
          %v5540 = vsel %vm5028, %v1934, 0.0
          %v5541 = vsel %vm5029, %v1935, 0.0
          %v5542 = vsel %vm5030, %v1936, 0.0
          %v5543 = vsel %vm5031, %v1937, 0.0
          %v5544 = vsel %vm5032, %v1938, 0.0
          %v5545 = vsel %vm5033, %v1939, 0.0
          %v5546 = vsel %vm5034, %v1940, 0.0
          %v5547 = vsel %vm5035, %v1941, 0.0
          %v5548 = vsel %vm5036, %v1942, 0.0
          %v5549 = vsel %vm5037, %v1943, 0.0
          %v5550 = vsel %vm5038, %v1944, 0.0
          %v5551 = vsel %vm5039, %v1945, 0.0
          %v5552 = vsel %vm5040, %v1946, 0.0
          %v5553 = vsel %vm5041, %v1947, 0.0
          %v5554 = vsel %vm5042, %v1948, 0.0
          %v5555 = vsel %vm5043, %v1949, 0.0
          %v5556 = vsel %vm5044, %v1950, 0.0
          %v5557 = vsel %vm5045, %v1951, 0.0
          %v5558 = vsel %vm5046, %v1952, 0.0
          %v5559 = vsel %vm5047, %v1953, 0.0
          %v5560 = vsel %vm5048, %v1954, 0.0
          %v5561 = vsel %vm5049, %v1955, 0.0
          %v5562 = vsel %vm5050, %v1956, 0.0
          %v5563 = vsel %vm5051, %v1957, 0.0
          %v5564 = vsel %vm5052, %v1958, 0.0
          %v5565 = vsel %vm5053, %v1959, 0.0
          %v5566 = vsel %vm5054, %v1960, 0.0
          %v5567 = vsel %vm5055, %v1961, 0.0
          %v5568 = vsel %vm5056, %v1962, 0.0
          %v5569 = vsel %vm5057, %v1963, 0.0
          %v5570 = vsel %vm5058, %v1964, 0.0
          %v5571 = vsel %vm5059, %v1965, 0.0
          %v5572 = vsel %vm5060, %v1966, 0.0
          %v5573 = vsel %vm5061, %v1967, 0.0
          %v5574 = vsel %vm5062, %v1968, 0.0
          %v5575 = vsel %vm5063, %v1969, 0.0
          %v5576 = vsel %vm5064, %v1970, 0.0
          %v5577 = vsel %vm5065, %v1971, 0.0
          %v5578 = vsel %vm5066, %v1972, 0.0
          %v5579 = vsel %vm5067, %v1973, 0.0
          %v5580 = vsel %vm5068, %v1974, 0.0
          %v5581 = vsel %vm5069, %v1975, 0.0
          %v5582 = vsel %vm5070, %v1976, 0.0
          %v5583 = vsel %vm5071, %v1977, 0.0
          %v5584 = vsel %vm5072, %v1978, 0.0
          %v5585 = vsel %vm5073, %v1979, 0.0
          %v5586 = vsel %vm5074, %v1980, 0.0
          %v5587 = vsel %vm5075, %v1981, 0.0
          %v5588 = vsel %vm5076, %v1982, 0.0
          %v5589 = vsel %vm5077, %v1983, 0.0
          %v5590 = vsel %vm5078, %v1984, 0.0
          %v5591 = vsel %vm5079, %v1985, 0.0
          %v5592 = vsel %vm5080, %v1986, 0.0
          %v5593 = vsel %vm5081, %v1987, 0.0
          %v5594 = vsel %vm5082, %v1988, 0.0
          %v5595 = vsel %vm5083, %v1989, 0.0
          %v5596 = vsel %vm5084, %v1990, 0.0
          %v5597 = vsel %vm5085, %v1991, 0.0
          %v5598 = vsel %vm5086, %v1992, 0.0
          %v5599 = vsel %vm5087, %v1993, 0.0
          %v5600 = vsel %vm5088, %v1994, 0.0
          %v5601 = vsel %vm5089, %v1995, 0.0
          %v5602 = vsel %vm5090, %v1996, 0.0
          %v5603 = vsel %vm5091, %v1997, 0.0
          %v5604 = vsel %vm5092, %v1998, 0.0
          %v5605 = vsel %vm5093, %v1999, 0.0
          %v5606 = vsel %vm5094, %v2000, 0.0
          %v5607 = vsel %vm5095, %v2001, 0.0
          %v5608 = vsel %vm5096, %v2002, 0.0
          %v5609 = vsel %vm5097, %v2003, 0.0
          %v5610 = vsel %vm5098, %v2004, 0.0
          %v5611 = vsel %vm5099, %v2005, 0.0
          %v5612 = vsel %vm5100, %v2006, 0.0
          %v5613 = vsel %vm5101, %v2007, 0.0
          %v5614 = vsel %vm5102, %v2008, 0.0
          %v5615 = vsel %vm5103, %v2009, 0.0
          %v5616 = vsel %vm5104, %v2010, 0.0
          %v5617 = vsel %vm5105, %v2011, 0.0
          %v5618 = vsel %vm5106, %v2012, 0.0
          %v5619 = vsel %vm5107, %v2013, 0.0
          %v5620 = vsel %vm5108, %v2014, 0.0
          %v5621 = vsel %vm5109, %v2015, 0.0
          %v5622 = vsel %vm5110, %v2016, 0.0
          %v5623 = vsel %vm5111, %v2017, 0.0
          %v5624 = vsel %vm5112, %v2018, 0.0
          %v5625 = vsel %vm5113, %v2019, 0.0
          %v5626 = vsel %vm5114, %v2020, 0.0
          %v5627 = vsel %vm5115, %v2021, 0.0
          %v5628 = vsel %vm5116, %v2022, 0.0
          %v5629 = vsel %vm5117, %v2023, 0.0
          %v5630 = vsel %vm5118, %v2024, 0.0
          %v5631 = vsel %vm5119, %v2025, 0.0
          %v5632 = vsel %vm5120, %v2026, 0.0
          %v5633 = vsel %vm5121, %v2027, 0.0
          %v5634 = vsel %vm5122, %v2028, 0.0
          %v5635 = vsel %vm5123, %v2029, 0.0
          %v5636 = vsel %vm5124, %v2030, 0.0
          %v5637 = vsel %vm5125, %v2031, 0.0
          %v5638 = vsel %vm5126, %v2032, 0.0
          %v5639 = vsel %vm5127, %v2033, 0.0
          %v5640 = vsel %vm5128, %v2034, 0.0
          %v5641 = vsel %vm5129, %v2035, 0.0
          %v5642 = vsel %vm5130, %v2036, 0.0
          %v5643 = vsel %vm5131, %v2037, 0.0
          %v5644 = vsel %vm5132, %v2038, 0.0
          %v5645 = vsel %vm5133, %v2039, 0.0
          %v5646 = vsel %vm5134, %v2040, 0.0
          %v5647 = vsel %vm5135, %v2041, 0.0
          %v5648 = vsel %vm5136, %v2042, 0.0
          %v5649 = vsel %vm5137, %v2043, 0.0
          %v5650 = vsel %vm5138, %v2044, 0.0
          %v5651 = vsel %vm5139, %v2045, 0.0
          %v5652 = vsel %vm5140, %v2046, 0.0
          %v5653 = vsel %vm5141, %v2047, 0.0
          %v5654 = vsel %vm5142, %v2048, 0.0
          %v5655 = vsel %vm5143, %v2049, 0.0
          %v5656 = vsel %vm5144, %v2050, 0.0
          %v5657 = vsel %vm5145, %v2051, 0.0
          %v5658 = vsel %vm5146, %v2052, 0.0
          %v5659 = vsel %vm5147, %v2053, 0.0
          %v5660 = vsel %vm5148, %v2054, 0.0
          %v5661 = vsel %vm5149, %v2055, 0.0
          %v5662 = vsel %vm5150, %v2056, 0.0
          %v5663 = vsel %vm5151, %v2057, 0.0
          %v5664 = vsel %vm5152, %v2058, 0.0
          %v5665 = vsel %vm5153, %v2059, 0.0
          %v5666 = vsel %vm5154, %v2060, 0.0
          %v5667 = vsel %vm5155, %v2061, 0.0
          %v5668 = vsel %vm5156, %v2062, 0.0
          %v5669 = vsel %vm5157, %v2063, 0.0
          %v5670 = vsel %vm5158, %v2064, 0.0
          %v5671 = vsel %vm5159, %v2065, 0.0
          %v5672 = vsel %vm5160, %v2066, 0.0
          %v5673 = vsel %vm5161, %v2067, 0.0
          %v5674 = vsel %vm5162, %v2068, 0.0
          %v5675 = vsel %vm5163, %v2069, 0.0
          %v5676 = vsel %vm5164, %v2070, 0.0
          %v5677 = vsel %vm5165, %v2071, 0.0
          %v5678 = vsel %vm5166, %v2072, 0.0
          %v5679 = vsel %vm5167, %v2073, 0.0
          %v5680 = vsel %vm5168, %v2074, 0.0
          %v5681 = vsel %vm5169, %v2075, 0.0
          %v5682 = vsel %vm5170, %v2076, 0.0
          %v5683 = vsel %vm5171, %v2077, 0.0
          %v5684 = vsel %vm5172, %v2078, 0.0
          %v5685 = vsel %vm5173, %v2079, 0.0
          %v5686 = vsel %vm5174, %v2080, 0.0
          %v5687 = vsel %vm5175, %v2081, 0.0
          %v5688 = vsel %vm5176, %v2082, 0.0
          %v5689 = vsel %vm5177, %v2083, 0.0
          %v5690 = vsel %vm5178, %v2084, 0.0
          %v5691 = vsel %vm5179, %v2085, 0.0
          %v5692 = vsel %vm5180, %v2086, 0.0
          %v5693 = vsel %vm5181, %v2087, 0.0
          %v5694 = vsel %vm5182, %v2088, 0.0
          %v5695 = vsel %vm5183, %v2089, 0.0
          %v5696 = vsel %vm5184, %v2090, 0.0
          %v5697 = vsel %vm5185, %v2091, 0.0
          %v5698 = vsel %vm5186, %v2092, 0.0
          %v5699 = vsel %vm5187, %v2093, 0.0
          %v5700 = vsel %vm5188, %v2094, 0.0
          %v5701 = vsel %vm5189, %v2095, 0.0
          %v5702 = vsel %vm5190, %v2096, 0.0
          %v5703 = vsel %vm5191, %v2097, 0.0
          %v5704 = vsel %vm5192, %v2098, 0.0
          %v5705 = vsel %vm5193, %v2099, 0.0
          %v5706 = vsel %vm5194, %v2100, 0.0
          %v5707 = vsel %vm5195, %v2101, 0.0
          %v5708 = vsel %vm5196, %v2102, 0.0
          %v5709 = vsel %vm5197, %v2103, 0.0
          %v5710 = vsel %vm5198, %v2104, 0.0
          %v5711 = vsel %vm5199, %v2105, 0.0
          %v5712 = vsel %vm5200, %v2106, 0.0
          %v5713 = vsel %vm5201, %v2107, 0.0
          %v5714 = vsel %vm5202, %v2108, 0.0
          %v5715 = vsel %vm5203, %v2109, 0.0
          %v5716 = vsel %vm5204, %v2110, 0.0
          %v5717 = vsel %vm5205, %v2111, 0.0
          %v5718 = vsel %vm5206, %v2112, 0.0
          %v5719 = vsel %vm5207, %v2113, 0.0
          %v5720 = vsel %vm5208, %v2114, 0.0
          %v5721 = vsel %vm5209, %v2115, 0.0
          %v5722 = vsel %vm5210, %v2116, 0.0
          %v5723 = vsel %vm5211, %v2117, 0.0
          %v5724 = vsel %vm5212, %v2118, 0.0
          %v5725 = vsel %vm5213, %v2119, 0.0
          %v5726 = vsel %vm5214, %v2120, 0.0
          %v5727 = vsel %vm5215, %v2121, 0.0
          %v5728 = vsel %vm5216, %v2122, 0.0
          %v5729 = vsel %vm5217, %v2123, 0.0
          %v5730 = vsel %vm5218, %v2124, 0.0
          %v5731 = vsel %vm5219, %v2125, 0.0
          %v5732 = vsel %vm5220, %v2126, 0.0
          %v5733 = vsel %vm5221, %v2127, 0.0
          %v5734 = vsel %vm5222, %v2128, 0.0
          %v5735 = vsel %vm5223, %v2129, 0.0
          %v5736 = vsel %vm5224, %v2130, 0.0
          %v5737 = vsel %vm5225, %v2131, 0.0
          %v5738 = vsel %vm5226, %v2132, 0.0
          %v5739 = vsel %vm5227, %v2133, 0.0
          %v5740 = vsel %vm5228, %v2134, 0.0
          %v5741 = vsel %vm5229, %v2135, 0.0
          %v5742 = vsel %vm5230, %v2136, 0.0
          %v5743 = vsel %vm5231, %v2137, 0.0
          %v5744 = vsel %vm5232, %v2138, 0.0
          %v5745 = vsel %vm5233, %v2139, 0.0
          %v5746 = vsel %vm5234, %v2140, 0.0
          %v5747 = vsel %vm5235, %v2141, 0.0
          %v5748 = vsel %vm5236, %v2142, 0.0
          %v5749 = vsel %vm5237, %v2143, 0.0
          %v5750 = vsel %vm5238, %v2144, 0.0
          %v5751 = vsel %vm5239, %v2145, 0.0
          %v5752 = vsel %vm5240, %v2146, 0.0
          %v5753 = vsel %vm5241, %v2147, 0.0
          %v5754 = vsel %vm5242, %v2148, 0.0
          %v5755 = vsel %vm5243, %v2149, 0.0
          %v5756 = vsel %vm5244, %v2150, 0.0
          %v5757 = vsel %vm5245, %v2151, 0.0
          %v5758 = vsel %vm5246, %v2152, 0.0
          %v5759 = vsel %vm5247, %v2153, 0.0
          %v5760 = vsel %vm5248, %v2154, 0.0
          %v5761 = vsel %vm5249, %v2155, 0.0
          %v5762 = vsel %vm5250, %v2156, 0.0
          %v5763 = vsel %vm5251, %v2157, 0.0
          %v5764 = vsel %vm5252, %v2158, 0.0
          %v5765 = vsel %vm5253, %v2159, 0.0
          %v5766 = vsel %vm5254, %v2160, 0.0
          %v5767 = vsel %vm5255, %v2161, 0.0
          %v5768 = vsel %vm5256, %v2162, 0.0
          %v5769 = vsel %vm5257, %v2163, 0.0
          %v5770 = vsel %vm5258, %v2164, 0.0
          %v5771 = vsel %vm5259, %v2165, 0.0
          %v5772 = vsel %vm5260, %v2166, 0.0
          %v5773 = vsel %vm5261, %v2167, 0.0
          %v5774 = vsel %vm5262, %v2168, 0.0
          %v5775 = vsel %vm5263, %v2169, 0.0
          %v5776 = vsel %vm5264, %v2170, 0.0
          %v5777 = vsel %vm5265, %v2171, 0.0
          %v5778 = vsel %vm5266, %v2172, 0.0
          %v5779 = vsel %vm5267, %v2173, 0.0
          %v5780 = vsel %vm5268, %v2174, 0.0
          %v5781 = vsel %vm5269, %v2175, 0.0
          %v5782 = vsel %vm5270, %v2176, 0.0
          %v5783 = vsel %vm5271, %v2177, 0.0
          %v5784 = vsel %vm5272, %v2178, 0.0
          %v5785 = vsel %vm5273, %v2179, 0.0
          %v5786 = vsel %vm5274, %v2180, 0.0
          %v5787 = vsel %vm5275, %v2181, 0.0
          %v5788 = vsel %vm5276, %v2182, 0.0
          %v5789 = vsel %vm5277, %v2183, 0.0
          %v5790 = vsel %vm5278, %v2184, 0.0
          %v5791 = vsel %vm5279, %v2185, 0.0
          %v5792 = vsel %vm5280, %v2186, 0.0
          %v5793 = vsel %vm5281, %v2187, 0.0
          %v5794 = vsel %vm5282, %v2188, 0.0
          %v5795 = vsel %vm5283, %v2189, 0.0
          %v5796 = vsel %vm5284, %v2190, 0.0
          %v5797 = vsel %vm5285, %v2191, 0.0
          %v5798 = vsel %vm5286, %v2192, 0.0
          %v5799 = vsel %vm5287, %v2193, 0.0
          %v5800 = vsel %vm5288, %v2194, 0.0
          %v5801 = vsel %vm5289, %v2195, 0.0
          %v5802 = vsel %vm5290, %v2196, 0.0
          %v5803 = vsel %vm5291, %v2197, 0.0
          %v5804 = vsel %vm5292, %v2198, 0.0
          %v5805 = vsel %vm5293, %v2199, 0.0
          %v5806 = vsel %vm5294, %v2200, 0.0
          %v5807 = vsel %vm5295, %v2201, 0.0
          %v5808 = vsel %vm5296, %v2202, 0.0
          %v5809 = vsel %vm5297, %v2203, 0.0
          %v5810 = vsel %vm5298, %v2204, 0.0
          %v5811 = vsel %vm5299, %v2205, 0.0
          %v5812 = vsel %vm5300, %v2206, 0.0
          %v5813 = vsel %vm5301, %v2207, 0.0
          %v5814 = vsel %vm5302, %v2208, 0.0
          %v5815 = vsel %vm5303, %v2209, 0.0
          %v5816 = vsel %vm5304, %v2210, 0.0
          %v5817 = vsel %vm5305, %v2211, 0.0
          %v5818 = vsel %vm5306, %v2212, 0.0
          %v5819 = vsel %vm5307, %v2213, 0.0
          %v5820 = vsel %vm5308, %v2214, 0.0
          %v5821 = vsel %vm5309, %v2215, 0.0
          %v5822 = vsel %vm5310, %v2216, 0.0
          %v5823 = vsel %vm5311, %v2217, 0.0
          %v5824 = vsel %vm5312, %v2218, 0.0
          %v5825 = vsel %vm5313, %v2219, 0.0
          %v5826 = vsel %vm5314, %v2220, 0.0
          %v5827 = vsel %vm5315, %v2221, 0.0
          %v5828 = vsel %vm5316, %v2222, 0.0
          %v5829 = vsel %vm5317, %v2223, 0.0
          %v5830 = vsel %vm5318, %v2224, 0.0
          %v5831 = vsel %vm5319, %v2225, 0.0
          %v5832 = vsel %vm5320, %v2226, 0.0
          %v5833 = vsel %vm5321, %v2227, 0.0
          %v5834 = vsel %vm5322, %v2228, 0.0
          %v5835 = vsel %vm5323, %v2229, 0.0
          %v5836 = vsel %vm5324, %v2230, 0.0
          %v5837 = vsel %vm5325, %v2231, 0.0
          %v5838 = vsel %vm5326, %v2232, 0.0
          %v5839 = vsel %vm5327, %v2233, 0.0
          %v5840 = vsel %vm5328, %v2234, 0.0
          %v5841 = vsel %vm5329, %v2235, 0.0
          %v5842 = vsel %vm5330, %v2236, 0.0
          %v5843 = vsel %vm5331, %v2237, 0.0
          %v5844 = vsel %vm5332, %v2238, 0.0
          %v5845 = vsel %vm5333, %v2239, 0.0
          %v5846 = vsel %vm5334, %v2240, 0.0
          %v5847 = vsel %vm5335, %v2241, 0.0
          %v5848 = vsel %vm5336, %v2242, 0.0
          %v5849 = vsel %vm5337, %v2243, 0.0
          %v5850 = vsel %vm5338, %v2244, 0.0
          %v5851 = vsel %vm5339, %v2245, 0.0
          %v5852 = vsel %vm5340, %v2246, 0.0
          %v5853 = vsel %vm5341, %v2247, 0.0
          %v5854 = vsel %vm5342, %v2248, 0.0
          %v5855 = vsel %vm5343, %v2249, 0.0
          %v5856 = vsel %vm5344, %v2250, 0.0
          %v5857 = vsel %vm5345, %v2251, 0.0
          %v5858 = vsel %vm5346, %v2252, 0.0
          %v5859 = vsel %vm5347, %v2253, 0.0
          %v5860 = vsel %vm5348, %v2254, 0.0
          %v5861 = vsel %vm5349, %v2255, 0.0
          %v5862 = vsel %vm5350, %v2256, 0.0
          %v5863 = vsel %vm5351, %v2257, 0.0
          %v5864 = vsel %vm5352, %v2258, 0.0
          %v5865 = vsel %vm5353, %v2259, 0.0
          %v5866 = vsel %vm5354, %v2260, 0.0
          %v5867 = vsel %vm5355, %v2261, 0.0
          %v5868 = vsel %vm5356, %v2262, 0.0
          %v5869 = vsel %vm5357, %v2263, 0.0
          %v5870 = vsel %vm5358, %v2264, 0.0
          %v5871 = vsel %vm5359, %v2265, 0.0
          %v5872 = vsel %vm5360, %v2266, 0.0
          %v5873 = vsel %vm5361, %v2267, 0.0
          %v5874 = vsel %vm5362, %v2268, 0.0
          %v5875 = vsel %vm5363, %v2269, 0.0
          %v5876 = vsel %vm5364, %v2270, 0.0
          %v5877 = vsel %vm5365, %v2271, 0.0
          %v5878 = vsel %vm5366, %v2272, 0.0
          %v5879 = vsel %vm5367, %v2273, 0.0
          %v5880 = vsel %vm5368, %v2274, 0.0
          %v5881 = vsel %vm5369, %v2275, 0.0
          %v5882 = vsel %vm5370, %v2276, 0.0
          %v5883 = vsel %vm5371, %v2277, 0.0
          %v5884 = vsel %vm5372, %v2278, 0.0
          %v5885 = vsel %vm5373, %v2279, 0.0
          %v5886 = vsel %vm5374, %v2280, 0.0
          %v5887 = vsel %vm5375, %v2281, 0.0
          %v5888 = vsel %vm5376, %v2282, 0.0
          %v5889 = vsel %vm5377, %v2283, 0.0
          %v5890 = vsel %vm5378, %v2284, 0.0
          %v5891 = vsel %vm5379, %v2285, 0.0
          %v5892 = vsel %vm5380, %v2286, 0.0
          %v5893 = vsel %vm5381, %v2287, 0.0
          %v5894 = vsel %vm5382, %v2288, 0.0
          %v5895 = vsel %vm5383, %v2289, 0.0
          %v5896 = vsel %vm5384, %v2290, 0.0
          %v5897 = vsel %vm5385, %v2291, 0.0
          %v5898 = vsel %vm5386, %v2292, 0.0
          %v5899 = vsel %vm5387, %v2293, 0.0
          %v5900 = vsel %vm5388, %v2294, 0.0
          %v5901 = vsel %vm5389, %v2295, 0.0
          %v5902 = vsel %vm5390, %v2296, 0.0
          %v5903 = vsel %vm5391, %v2297, 0.0
          %v5904 = vsel %vm5392, %v2298, 0.0
          %v5905 = vsel %vm5393, %v2299, 0.0
          %v5906 = vsel %vm5394, %v2300, 0.0
          %v5907 = vsel %vm5395, %v2301, 0.0
          %v5908 = vsel %vm5396, %v2302, 0.0
          %v5909 = vsel %vm5397, %v2303, 0.0
          %v5910 = vsel %vm5398, %v2304, 0.0
          %v5911 = vsel %vm5399, %v2305, 0.0
          %v5912 = vsel %vm5400, %v2306, 0.0
          %v5913 = vsel %vm5401, %v2307, 0.0
          %v5914 = vsel %vm5402, %v2308, 0.0
          %v5915 = vsel %vm5403, %v2309, 0.0
          %v5916 = vsel %vm5404, %v2310, 0.0
          %v5917 = vsel %vm5405, %v2311, 0.0
          %v5918 = vsel %vm5406, %v2312, 0.0
          %v5919 = vsel %vm5407, %v2313, 0.0
          %v5920 = vsel %vm5408, %v2314, 0.0
          %v5921 = vsel %vm5409, %v2315, 0.0
          %v5922 = vsel %vm5410, %v2316, 0.0
          %v5923 = vsel %vm5411, %v2317, 0.0
          %v5924 = vsel %vm5412, %v2318, 0.0
          %v5925 = vsel %vm5413, %v2319, 0.0
          %v5926 = vsel %vm5414, %v2320, 0.0
          %v5927 = vsel %vm5415, %v2321, 0.0
          %v5928 = vsel %vm5416, %v2322, 0.0
          %v5929 = vsel %vm5417, %v2323, 0.0
          %v5930 = vld [vmem:[%s249] sm:$0xff]
          %v5931 = vld [vmem:[%s249 + $0x8] sm:$0xff]
          %v5932 = vld [vmem:[%s249 + $0x10] sm:$0xff]
          %v5933 = vld [vmem:[%s249 + $0x18] sm:$0xff]
          %v5934 = vadd.f32 %v5418, %v5422
          %v5935 = vadd.f32 %v5934, %v5426
          %v5936 = vadd.f32 %v5935, %v5430
          %v5937 = vadd.f32 %v5936, %v5434
          %v5938 = vadd.f32 %v5937, %v5438
          %v5939 = vadd.f32 %v5938, %v5442
          %v5940 = vadd.f32 %v5939, %v5446
          %v5941 = vadd.f32 %v5940, %v5450
          %v5942 = vadd.f32 %v5941, %v5454
          %v5943 = vadd.f32 %v5942, %v5458
          %v5944 = vadd.f32 %v5943, %v5462
          %v5945 = vadd.f32 %v5944, %v5466
          %v5946 = vadd.f32 %v5945, %v5470
          %v5947 = vadd.f32 %v5946, %v5474
          %v5948 = vadd.f32 %v5947, %v5478
          %v5949 = vadd.f32 %v5948, %v5482
          %v5950 = vadd.f32 %v5949, %v5486
          %v5951 = vadd.f32 %v5950, %v5490
          %v5952 = vadd.f32 %v5951, %v5494
          %v5953 = vadd.f32 %v5952, %v5498
          %v5954 = vadd.f32 %v5953, %v5502
          %v5955 = vadd.f32 %v5954, %v5506
          %v5956 = vadd.f32 %v5955, %v5510
          %v5957 = vadd.f32 %v5956, %v5514
          %v5958 = vadd.f32 %v5957, %v5518
          %v5959 = vadd.f32 %v5958, %v5522
          %v5960 = vadd.f32 %v5959, %v5526
          %v5961 = vadd.f32 %v5960, %v5530
          %v5962 = vadd.f32 %v5961, %v5534
          %v5963 = vadd.f32 %v5962, %v5538
          %v5964 = vadd.f32 %v5963, %v5542
          %v5965 = vadd.f32 %v5964, %v5546
          %v5966 = vadd.f32 %v5965, %v5550
          %v5967 = vadd.f32 %v5966, %v5554
          %v5968 = vadd.f32 %v5967, %v5558
          %v5969 = vadd.f32 %v5968, %v5562
          %v5970 = vadd.f32 %v5969, %v5566
          %v5971 = vadd.f32 %v5970, %v5570
          %v5972 = vadd.f32 %v5971, %v5574
          %v5973 = vadd.f32 %v5972, %v5578
          %v5974 = vadd.f32 %v5973, %v5582
          %v5975 = vadd.f32 %v5974, %v5586
          %v5976 = vadd.f32 %v5975, %v5590
          %v5977 = vadd.f32 %v5976, %v5594
          %v5978 = vadd.f32 %v5977, %v5598
          %v5979 = vadd.f32 %v5978, %v5602
          %v5980 = vadd.f32 %v5979, %v5606
          %v5981 = vadd.f32 %v5980, %v5610
          %v5982 = vadd.f32 %v5981, %v5614
          %v5983 = vadd.f32 %v5982, %v5618
          %v5984 = vadd.f32 %v5983, %v5622
          %v5985 = vadd.f32 %v5984, %v5626
          %v5986 = vadd.f32 %v5985, %v5630
          %v5987 = vadd.f32 %v5986, %v5634
          %v5988 = vadd.f32 %v5987, %v5638
          %v5989 = vadd.f32 %v5988, %v5642
          %v5990 = vadd.f32 %v5989, %v5646
          %v5991 = vadd.f32 %v5990, %v5650
          %v5992 = vadd.f32 %v5991, %v5654
          %v5993 = vadd.f32 %v5992, %v5658
          %v5994 = vadd.f32 %v5993, %v5662
          %v5995 = vadd.f32 %v5994, %v5666
          %v5996 = vadd.f32 %v5995, %v5670
          %v5997 = vadd.f32 %v5996, %v5674
          %v5998 = vadd.f32 %v5997, %v5678
          %v5999 = vadd.f32 %v5998, %v5682
          %v6000 = vadd.f32 %v5999, %v5686
          %v6001 = vadd.f32 %v6000, %v5690
          %v6002 = vadd.f32 %v6001, %v5694
          %v6003 = vadd.f32 %v6002, %v5698
          %v6004 = vadd.f32 %v6003, %v5702
          %v6005 = vadd.f32 %v6004, %v5706
          %v6006 = vadd.f32 %v6005, %v5710
          %v6007 = vadd.f32 %v6006, %v5714
          %v6008 = vadd.f32 %v6007, %v5718
          %v6009 = vadd.f32 %v6008, %v5722
          %v6010 = vadd.f32 %v6009, %v5726
          %v6011 = vadd.f32 %v6010, %v5730
          %v6012 = vadd.f32 %v6011, %v5734
          %v6013 = vadd.f32 %v6012, %v5738
          %v6014 = vadd.f32 %v6013, %v5742
          %v6015 = vadd.f32 %v6014, %v5746
          %v6016 = vadd.f32 %v6015, %v5750
          %v6017 = vadd.f32 %v6016, %v5754
          %v6018 = vadd.f32 %v6017, %v5758
          %v6019 = vadd.f32 %v6018, %v5762
          %v6020 = vadd.f32 %v6019, %v5766
          %v6021 = vadd.f32 %v6020, %v5770
          %v6022 = vadd.f32 %v6021, %v5774
          %v6023 = vadd.f32 %v6022, %v5778
          %v6024 = vadd.f32 %v6023, %v5782
          %v6025 = vadd.f32 %v6024, %v5786
          %v6026 = vadd.f32 %v6025, %v5790
          %v6027 = vadd.f32 %v6026, %v5794
          %v6028 = vadd.f32 %v6027, %v5798
          %v6029 = vadd.f32 %v6028, %v5802
          %v6030 = vadd.f32 %v6029, %v5806
          %v6031 = vadd.f32 %v6030, %v5810
          %v6032 = vadd.f32 %v6031, %v5814
          %v6033 = vadd.f32 %v6032, %v5818
          %v6034 = vadd.f32 %v6033, %v5822
          %v6035 = vadd.f32 %v6034, %v5826
          %v6036 = vadd.f32 %v6035, %v5830
          %v6037 = vadd.f32 %v6036, %v5834
          %v6038 = vadd.f32 %v6037, %v5838
          %v6039 = vadd.f32 %v6038, %v5842
          %v6040 = vadd.f32 %v6039, %v5846
          %v6041 = vadd.f32 %v6040, %v5850
          %v6042 = vadd.f32 %v6041, %v5854
          %v6043 = vadd.f32 %v6042, %v5858
          %v6044 = vadd.f32 %v6043, %v5862
          %v6045 = vadd.f32 %v6044, %v5866
          %v6046 = vadd.f32 %v6045, %v5870
          %v6047 = vadd.f32 %v6046, %v5874
          %v6048 = vadd.f32 %v6047, %v5878
          %v6049 = vadd.f32 %v6048, %v5882
          %v6050 = vadd.f32 %v6049, %v5886
          %v6051 = vadd.f32 %v6050, %v5890
          %v6052 = vadd.f32 %v6051, %v5894
          %v6053 = vadd.f32 %v6052, %v5898
          %v6054 = vadd.f32 %v6053, %v5902
          %v6055 = vadd.f32 %v6054, %v5906
          %v6056 = vadd.f32 %v6055, %v5910
          %v6057 = vadd.f32 %v6056, %v5914
          %v6058 = vadd.f32 %v6057, %v5918
          %v6059 = vadd.f32 %v6058, %v5922
          %v6060 = vadd.f32 %v6059, %v5926
          %v6061 = vadd.f32 %v5419, %v5423
          %v6062 = vadd.f32 %v6061, %v5427
          %v6063 = vadd.f32 %v6062, %v5431
          %v6064 = vadd.f32 %v6063, %v5435
          %v6065 = vadd.f32 %v6064, %v5439
          %v6066 = vadd.f32 %v6065, %v5443
          %v6067 = vadd.f32 %v6066, %v5447
          %v6068 = vadd.f32 %v6067, %v5451
          %v6069 = vadd.f32 %v6068, %v5455
          %v6070 = vadd.f32 %v6069, %v5459
          %v6071 = vadd.f32 %v6070, %v5463
          %v6072 = vadd.f32 %v6071, %v5467
          %v6073 = vadd.f32 %v6072, %v5471
          %v6074 = vadd.f32 %v6073, %v5475
          %v6075 = vadd.f32 %v6074, %v5479
          %v6076 = vadd.f32 %v6075, %v5483
          %v6077 = vadd.f32 %v6076, %v5487
          %v6078 = vadd.f32 %v6077, %v5491
          %v6079 = vadd.f32 %v6078, %v5495
          %v6080 = vadd.f32 %v6079, %v5499
          %v6081 = vadd.f32 %v6080, %v5503
          %v6082 = vadd.f32 %v6081, %v5507
          %v6083 = vadd.f32 %v6082, %v5511
          %v6084 = vadd.f32 %v6083, %v5515
          %v6085 = vadd.f32 %v6084, %v5519
          %v6086 = vadd.f32 %v6085, %v5523
          %v6087 = vadd.f32 %v6086, %v5527
          %v6088 = vadd.f32 %v6087, %v5531
          %v6089 = vadd.f32 %v6088, %v5535
          %v6090 = vadd.f32 %v6089, %v5539
          %v6091 = vadd.f32 %v6090, %v5543
          %v6092 = vadd.f32 %v6091, %v5547
          %v6093 = vadd.f32 %v6092, %v5551
          %v6094 = vadd.f32 %v6093, %v5555
          %v6095 = vadd.f32 %v6094, %v5559
          %v6096 = vadd.f32 %v6095, %v5563
          %v6097 = vadd.f32 %v6096, %v5567
          %v6098 = vadd.f32 %v6097, %v5571
          %v6099 = vadd.f32 %v6098, %v5575
          %v6100 = vadd.f32 %v6099, %v5579
          %v6101 = vadd.f32 %v6100, %v5583
          %v6102 = vadd.f32 %v6101, %v5587
          %v6103 = vadd.f32 %v6102, %v5591
          %v6104 = vadd.f32 %v6103, %v5595
          %v6105 = vadd.f32 %v6104, %v5599
          %v6106 = vadd.f32 %v6105, %v5603
          %v6107 = vadd.f32 %v6106, %v5607
          %v6108 = vadd.f32 %v6107, %v5611
          %v6109 = vadd.f32 %v6108, %v5615
          %v6110 = vadd.f32 %v6109, %v5619
          %v6111 = vadd.f32 %v6110, %v5623
          %v6112 = vadd.f32 %v6111, %v5627
          %v6113 = vadd.f32 %v6112, %v5631
          %v6114 = vadd.f32 %v6113, %v5635
          %v6115 = vadd.f32 %v6114, %v5639
          %v6116 = vadd.f32 %v6115, %v5643
          %v6117 = vadd.f32 %v6116, %v5647
          %v6118 = vadd.f32 %v6117, %v5651
          %v6119 = vadd.f32 %v6118, %v5655
          %v6120 = vadd.f32 %v6119, %v5659
          %v6121 = vadd.f32 %v6120, %v5663
          %v6122 = vadd.f32 %v6121, %v5667
          %v6123 = vadd.f32 %v6122, %v5671
          %v6124 = vadd.f32 %v6123, %v5675
          %v6125 = vadd.f32 %v6124, %v5679
          %v6126 = vadd.f32 %v6125, %v5683
          %v6127 = vadd.f32 %v6126, %v5687
          %v6128 = vadd.f32 %v6127, %v5691
          %v6129 = vadd.f32 %v6128, %v5695
          %v6130 = vadd.f32 %v6129, %v5699
          %v6131 = vadd.f32 %v6130, %v5703
          %v6132 = vadd.f32 %v6131, %v5707
          %v6133 = vadd.f32 %v6132, %v5711
          %v6134 = vadd.f32 %v6133, %v5715
          %v6135 = vadd.f32 %v6134, %v5719
          %v6136 = vadd.f32 %v6135, %v5723
          %v6137 = vadd.f32 %v6136, %v5727
          %v6138 = vadd.f32 %v6137, %v5731
          %v6139 = vadd.f32 %v6138, %v5735
          %v6140 = vadd.f32 %v6139, %v5739
          %v6141 = vadd.f32 %v6140, %v5743
          %v6142 = vadd.f32 %v6141, %v5747
          %v6143 = vadd.f32 %v6142, %v5751
          %v6144 = vadd.f32 %v6143, %v5755
          %v6145 = vadd.f32 %v6144, %v5759
          %v6146 = vadd.f32 %v6145, %v5763
          %v6147 = vadd.f32 %v6146, %v5767
          %v6148 = vadd.f32 %v6147, %v5771
          %v6149 = vadd.f32 %v6148, %v5775
          %v6150 = vadd.f32 %v6149, %v5779
          %v6151 = vadd.f32 %v6150, %v5783
          %v6152 = vadd.f32 %v6151, %v5787
          %v6153 = vadd.f32 %v6152, %v5791
          %v6154 = vadd.f32 %v6153, %v5795
          %v6155 = vadd.f32 %v6154, %v5799
          %v6156 = vadd.f32 %v6155, %v5803
          %v6157 = vadd.f32 %v6156, %v5807
          %v6158 = vadd.f32 %v6157, %v5811
          %v6159 = vadd.f32 %v6158, %v5815
          %v6160 = vadd.f32 %v6159, %v5819
          %v6161 = vadd.f32 %v6160, %v5823
          %v6162 = vadd.f32 %v6161, %v5827
          %v6163 = vadd.f32 %v6162, %v5831
          %v6164 = vadd.f32 %v6163, %v5835
          %v6165 = vadd.f32 %v6164, %v5839
          %v6166 = vadd.f32 %v6165, %v5843
          %v6167 = vadd.f32 %v6166, %v5847
          %v6168 = vadd.f32 %v6167, %v5851
          %v6169 = vadd.f32 %v6168, %v5855
          %v6170 = vadd.f32 %v6169, %v5859
          %v6171 = vadd.f32 %v6170, %v5863
          %v6172 = vadd.f32 %v6171, %v5867
          %v6173 = vadd.f32 %v6172, %v5871
          %v6174 = vadd.f32 %v6173, %v5875
          %v6175 = vadd.f32 %v6174, %v5879
          %v6176 = vadd.f32 %v6175, %v5883
          %v6177 = vadd.f32 %v6176, %v5887
          %v6178 = vadd.f32 %v6177, %v5891
          %v6179 = vadd.f32 %v6178, %v5895
          %v6180 = vadd.f32 %v6179, %v5899
          %v6181 = vadd.f32 %v6180, %v5903
          %v6182 = vadd.f32 %v6181, %v5907
          %v6183 = vadd.f32 %v6182, %v5911
          %v6184 = vadd.f32 %v6183, %v5915
          %v6185 = vadd.f32 %v6184, %v5919
          %v6186 = vadd.f32 %v6185, %v5923
          %v6187 = vadd.f32 %v6186, %v5927
          %v6188 = vadd.f32 %v5420, %v5424
          %v6189 = vadd.f32 %v6188, %v5428
          %v6190 = vadd.f32 %v6189, %v5432
          %v6191 = vadd.f32 %v6190, %v5436
          %v6192 = vadd.f32 %v6191, %v5440
          %v6193 = vadd.f32 %v6192, %v5444
          %v6194 = vadd.f32 %v6193, %v5448
          %v6195 = vadd.f32 %v6194, %v5452
          %v6196 = vadd.f32 %v6195, %v5456
          %v6197 = vadd.f32 %v6196, %v5460
          %v6198 = vadd.f32 %v6197, %v5464
          %v6199 = vadd.f32 %v6198, %v5468
          %v6200 = vadd.f32 %v6199, %v5472
          %v6201 = vadd.f32 %v6200, %v5476
          %v6202 = vadd.f32 %v6201, %v5480
          %v6203 = vadd.f32 %v6202, %v5484
          %v6204 = vadd.f32 %v6203, %v5488
          %v6205 = vadd.f32 %v6204, %v5492
          %v6206 = vadd.f32 %v6205, %v5496
          %v6207 = vadd.f32 %v6206, %v5500
          %v6208 = vadd.f32 %v6207, %v5504
          %v6209 = vadd.f32 %v6208, %v5508
          %v6210 = vadd.f32 %v6209, %v5512
          %v6211 = vadd.f32 %v6210, %v5516
          %v6212 = vadd.f32 %v6211, %v5520
          %v6213 = vadd.f32 %v6212, %v5524
          %v6214 = vadd.f32 %v6213, %v5528
          %v6215 = vadd.f32 %v6214, %v5532
          %v6216 = vadd.f32 %v6215, %v5536
          %v6217 = vadd.f32 %v6216, %v5540
          %v6218 = vadd.f32 %v6217, %v5544
          %v6219 = vadd.f32 %v6218, %v5548
          %v6220 = vadd.f32 %v6219, %v5552
          %v6221 = vadd.f32 %v6220, %v5556
          %v6222 = vadd.f32 %v6221, %v5560
          %v6223 = vadd.f32 %v6222, %v5564
          %v6224 = vadd.f32 %v6223, %v5568
          %v6225 = vadd.f32 %v6224, %v5572
          %v6226 = vadd.f32 %v6225, %v5576
          %v6227 = vadd.f32 %v6226, %v5580
          %v6228 = vadd.f32 %v6227, %v5584
          %v6229 = vadd.f32 %v6228, %v5588
          %v6230 = vadd.f32 %v6229, %v5592
          %v6231 = vadd.f32 %v6230, %v5596
          %v6232 = vadd.f32 %v6231, %v5600
          %v6233 = vadd.f32 %v6232, %v5604
          %v6234 = vadd.f32 %v6233, %v5608
          %v6235 = vadd.f32 %v6234, %v5612
          %v6236 = vadd.f32 %v6235, %v5616
          %v6237 = vadd.f32 %v6236, %v5620
          %v6238 = vadd.f32 %v6237, %v5624
          %v6239 = vadd.f32 %v6238, %v5628
          %v6240 = vadd.f32 %v6239, %v5632
          %v6241 = vadd.f32 %v6240, %v5636
          %v6242 = vadd.f32 %v6241, %v5640
          %v6243 = vadd.f32 %v6242, %v5644
          %v6244 = vadd.f32 %v6243, %v5648
          %v6245 = vadd.f32 %v6244, %v5652
          %v6246 = vadd.f32 %v6245, %v5656
          %v6247 = vadd.f32 %v6246, %v5660
          %v6248 = vadd.f32 %v6247, %v5664
          %v6249 = vadd.f32 %v6248, %v5668
          %v6250 = vadd.f32 %v6249, %v5672
          %v6251 = vadd.f32 %v6250, %v5676
          %v6252 = vadd.f32 %v6251, %v5680
          %v6253 = vadd.f32 %v6252, %v5684
          %v6254 = vadd.f32 %v6253, %v5688
          %v6255 = vadd.f32 %v6254, %v5692
          %v6256 = vadd.f32 %v6255, %v5696
          %v6257 = vadd.f32 %v6256, %v5700
          %v6258 = vadd.f32 %v6257, %v5704
          %v6259 = vadd.f32 %v6258, %v5708
          %v6260 = vadd.f32 %v6259, %v5712
          %v6261 = vadd.f32 %v6260, %v5716
          %v6262 = vadd.f32 %v6261, %v5720
          %v6263 = vadd.f32 %v6262, %v5724
          %v6264 = vadd.f32 %v6263, %v5728
          %v6265 = vadd.f32 %v6264, %v5732
          %v6266 = vadd.f32 %v6265, %v5736
          %v6267 = vadd.f32 %v6266, %v5740
          %v6268 = vadd.f32 %v6267, %v5744
          %v6269 = vadd.f32 %v6268, %v5748
          %v6270 = vadd.f32 %v6269, %v5752
          %v6271 = vadd.f32 %v6270, %v5756
          %v6272 = vadd.f32 %v6271, %v5760
          %v6273 = vadd.f32 %v6272, %v5764
          %v6274 = vadd.f32 %v6273, %v5768
          %v6275 = vadd.f32 %v6274, %v5772
          %v6276 = vadd.f32 %v6275, %v5776
          %v6277 = vadd.f32 %v6276, %v5780
          %v6278 = vadd.f32 %v6277, %v5784
          %v6279 = vadd.f32 %v6278, %v5788
          %v6280 = vadd.f32 %v6279, %v5792
          %v6281 = vadd.f32 %v6280, %v5796
          %v6282 = vadd.f32 %v6281, %v5800
          %v6283 = vadd.f32 %v6282, %v5804
          %v6284 = vadd.f32 %v6283, %v5808
          %v6285 = vadd.f32 %v6284, %v5812
          %v6286 = vadd.f32 %v6285, %v5816
          %v6287 = vadd.f32 %v6286, %v5820
          %v6288 = vadd.f32 %v6287, %v5824
          %v6289 = vadd.f32 %v6288, %v5828
          %v6290 = vadd.f32 %v6289, %v5832
          %v6291 = vadd.f32 %v6290, %v5836
          %v6292 = vadd.f32 %v6291, %v5840
          %v6293 = vadd.f32 %v6292, %v5844
          %v6294 = vadd.f32 %v6293, %v5848
          %v6295 = vadd.f32 %v6294, %v5852
          %v6296 = vadd.f32 %v6295, %v5856
          %v6297 = vadd.f32 %v6296, %v5860
          %v6298 = vadd.f32 %v6297, %v5864
          %v6299 = vadd.f32 %v6298, %v5868
          %v6300 = vadd.f32 %v6299, %v5872
          %v6301 = vadd.f32 %v6300, %v5876
          %v6302 = vadd.f32 %v6301, %v5880
          %v6303 = vadd.f32 %v6302, %v5884
          %v6304 = vadd.f32 %v6303, %v5888
          %v6305 = vadd.f32 %v6304, %v5892
          %v6306 = vadd.f32 %v6305, %v5896
          %v6307 = vadd.f32 %v6306, %v5900
          %v6308 = vadd.f32 %v6307, %v5904
          %v6309 = vadd.f32 %v6308, %v5908
          %v6310 = vadd.f32 %v6309, %v5912
          %v6311 = vadd.f32 %v6310, %v5916
          %v6312 = vadd.f32 %v6311, %v5920
          %v6313 = vadd.f32 %v6312, %v5924
          %v6314 = vadd.f32 %v6313, %v5928
          %v6315 = vadd.f32 %v5421, %v5425
          %v6316 = vadd.f32 %v6315, %v5429
          %v6317 = vadd.f32 %v6316, %v5433
          %v6318 = vadd.f32 %v6317, %v5437
          %v6319 = vadd.f32 %v6318, %v5441
          %v6320 = vadd.f32 %v6319, %v5445
          %v6321 = vadd.f32 %v6320, %v5449
          %v6322 = vadd.f32 %v6321, %v5453
          %v6323 = vadd.f32 %v6322, %v5457
          %v6324 = vadd.f32 %v6323, %v5461
          %v6325 = vadd.f32 %v6324, %v5465
          %v6326 = vadd.f32 %v6325, %v5469
          %v6327 = vadd.f32 %v6326, %v5473
          %v6328 = vadd.f32 %v6327, %v5477
          %v6329 = vadd.f32 %v6328, %v5481
          %v6330 = vadd.f32 %v6329, %v5485
          %v6331 = vadd.f32 %v6330, %v5489
          %v6332 = vadd.f32 %v6331, %v5493
          %v6333 = vadd.f32 %v6332, %v5497
          %v6334 = vadd.f32 %v6333, %v5501
          %v6335 = vadd.f32 %v6334, %v5505
          %v6336 = vadd.f32 %v6335, %v5509
          %v6337 = vadd.f32 %v6336, %v5513
          %v6338 = vadd.f32 %v6337, %v5517
          %v6339 = vadd.f32 %v6338, %v5521
          %v6340 = vadd.f32 %v6339, %v5525
          %v6341 = vadd.f32 %v6340, %v5529
          %v6342 = vadd.f32 %v6341, %v5533
          %v6343 = vadd.f32 %v6342, %v5537
          %v6344 = vadd.f32 %v6343, %v5541
          %v6345 = vadd.f32 %v6344, %v5545
          %v6346 = vadd.f32 %v6345, %v5549
          %v6347 = vadd.f32 %v6346, %v5553
          %v6348 = vadd.f32 %v6347, %v5557
          %v6349 = vadd.f32 %v6348, %v5561
          %v6350 = vadd.f32 %v6349, %v5565
          %v6351 = vadd.f32 %v6350, %v5569
          %v6352 = vadd.f32 %v6351, %v5573
          %v6353 = vadd.f32 %v6352, %v5577
          %v6354 = vadd.f32 %v6353, %v5581
          %v6355 = vadd.f32 %v6354, %v5585
          %v6356 = vadd.f32 %v6355, %v5589
          %v6357 = vadd.f32 %v6356, %v5593
          %v6358 = vadd.f32 %v6357, %v5597
          %v6359 = vadd.f32 %v6358, %v5601
          %v6360 = vadd.f32 %v6359, %v5605
          %v6361 = vadd.f32 %v6360, %v5609
          %v6362 = vadd.f32 %v6361, %v5613
          %v6363 = vadd.f32 %v6362, %v5617
          %v6364 = vadd.f32 %v6363, %v5621
          %v6365 = vadd.f32 %v6364, %v5625
          %v6366 = vadd.f32 %v6365, %v5629
          %v6367 = vadd.f32 %v6366, %v5633
          %v6368 = vadd.f32 %v6367, %v5637
          %v6369 = vadd.f32 %v6368, %v5641
          %v6370 = vadd.f32 %v6369, %v5645
          %v6371 = vadd.f32 %v6370, %v5649
          %v6372 = vadd.f32 %v6371, %v5653
          %v6373 = vadd.f32 %v6372, %v5657
          %v6374 = vadd.f32 %v6373, %v5661
          %v6375 = vadd.f32 %v6374, %v5665
          %v6376 = vadd.f32 %v6375, %v5669
          %v6377 = vadd.f32 %v6376, %v5673
          %v6378 = vadd.f32 %v6377, %v5677
          %v6379 = vadd.f32 %v6378, %v5681
          %v6380 = vadd.f32 %v6379, %v5685
          %v6381 = vadd.f32 %v6380, %v5689
          %v6382 = vadd.f32 %v6381, %v5693
          %v6383 = vadd.f32 %v6382, %v5697
          %v6384 = vadd.f32 %v6383, %v5701
          %v6385 = vadd.f32 %v6384, %v5705
          %v6386 = vadd.f32 %v6385, %v5709
          %v6387 = vadd.f32 %v6386, %v5713
          %v6388 = vadd.f32 %v6387, %v5717
          %v6389 = vadd.f32 %v6388, %v5721
          %v6390 = vadd.f32 %v6389, %v5725
          %v6391 = vadd.f32 %v6390, %v5729
          %v6392 = vadd.f32 %v6391, %v5733
          %v6393 = vadd.f32 %v6392, %v5737
          %v6394 = vadd.f32 %v6393, %v5741
          %v6395 = vadd.f32 %v6394, %v5745
          %v6396 = vadd.f32 %v6395, %v5749
          %v6397 = vadd.f32 %v6396, %v5753
          %v6398 = vadd.f32 %v6397, %v5757
          %v6399 = vadd.f32 %v6398, %v5761
          %v6400 = vadd.f32 %v6399, %v5765
          %v6401 = vadd.f32 %v6400, %v5769
          %v6402 = vadd.f32 %v6401, %v5773
          %v6403 = vadd.f32 %v6402, %v5777
          %v6404 = vadd.f32 %v6403, %v5781
          %v6405 = vadd.f32 %v6404, %v5785
          %v6406 = vadd.f32 %v6405, %v5789
          %v6407 = vadd.f32 %v6406, %v5793
          %v6408 = vadd.f32 %v6407, %v5797
          %v6409 = vadd.f32 %v6408, %v5801
          %v6410 = vadd.f32 %v6409, %v5805
          %v6411 = vadd.f32 %v6410, %v5809
          %v6412 = vadd.f32 %v6411, %v5813
          %v6413 = vadd.f32 %v6412, %v5817
          %v6414 = vadd.f32 %v6413, %v5821
          %v6415 = vadd.f32 %v6414, %v5825
          %v6416 = vadd.f32 %v6415, %v5829
          %v6417 = vadd.f32 %v6416, %v5833
          %v6418 = vadd.f32 %v6417, %v5837
          %v6419 = vadd.f32 %v6418, %v5841
          %v6420 = vadd.f32 %v6419, %v5845
          %v6421 = vadd.f32 %v6420, %v5849
          %v6422 = vadd.f32 %v6421, %v5853
          %v6423 = vadd.f32 %v6422, %v5857
          %v6424 = vadd.f32 %v6423, %v5861
          %v6425 = vadd.f32 %v6424, %v5865
          %v6426 = vadd.f32 %v6425, %v5869
          %v6427 = vadd.f32 %v6426, %v5873
          %v6428 = vadd.f32 %v6427, %v5877
          %v6429 = vadd.f32 %v6428, %v5881
          %v6430 = vadd.f32 %v6429, %v5885
          %v6431 = vadd.f32 %v6430, %v5889
          %v6432 = vadd.f32 %v6431, %v5893
          %v6433 = vadd.f32 %v6432, %v5897
          %v6434 = vadd.f32 %v6433, %v5901
          %v6435 = vadd.f32 %v6434, %v5905
          %v6436 = vadd.f32 %v6435, %v5909
          %v6437 = vadd.f32 %v6436, %v5913
          %v6438 = vadd.f32 %v6437, %v5917
          %v6439 = vadd.f32 %v6438, %v5921
          %v6440 = vadd.f32 %v6439, %v5925
          %v6441 = vadd.f32 %v6440, %v5929
          %v6442 = vadd.f32 %v5930, %v6060
          %v6443 = vadd.f32 %v5931, %v6187
          %v6444 = vadd.f32 %v5932, %v6314
          %v6445 = vadd.f32 %v5933, %v6441
          %6446 = vst [vmem:[%s249] sm:$0xff] %v6442
          %6447 = vst [vmem:[%s249 + $0x8] sm:$0xff] %v6443
          %6448 = vst [vmem:[%s249 + $0x10] sm:$0xff] %v6444
          %6449 = vst [vmem:[%s249 + $0x18] sm:$0xff] %v6445
        $region48: #{tpu_custom_call.1} parent=27 // pred_fallthru
          _
        %s6450 = sand.u32 %s110, 1
        %s6451 = scalar_lea.sflag [#allocation4], %s6450
        %s6452 = sand.u32 %s110, 1
        %s6453 = smul.addr %s6452, 32
        %s6454 = scalar_lea.vmem [#allocation7], %s6453
        // Predicated region
        $region49: #{tpu_custom_call.1} parent=27 // pred_check
          %p6455 = pneg %p120
        $region50: #{tpu_custom_call.1} parent=27 // pred_check_branch
          %6457 = sbr.rel (%p6455) target = $region52
        $region51: #{tpu_custom_call.1} parent=27 // pred_region
          %s6459 = ssub.s32 512, 512
          %6460 = vsyncadd %s6451, %s6459
          %s6461 = smul.addr %s26, 4
          %s6462 = smul.addr %s6461, 128
          %s6463 = scalar_lea.hbm %s2, %s6462
          %s6464 = sshll.u32 %s6454, 4
          %s6465 = int_to_ptr.vmem [resolvable:$true] %s6464
          %6470 = dma.vmem_to_hbm [thread:$0]  %s6465, 512, %s6463, %s6451, 128, 128, 8
        $region52: #{tpu_custom_call.1} parent=27 // pred_fallthru
          _
      $region28: #{tpu_custom_call.1} parent=5 // pred_fallthru
        _
      %p6471 = scmp.le.s32.totalorder 2, %s17
      // Predicated region
      $region53: #{tpu_custom_call.1} parent=5 // pred_check
        %p6472 = pneg %p6471
      $region54: #{tpu_custom_call.1} parent=5 // pred_check_branch
        %6474 = sbr.rel (%p6472) target = $region56
      $region55: #{tpu_custom_call.1} parent=5 // pred_region
        %s6475 = ssub.s32 %s17, 2
        // Predicated region
        $region57: #{tpu_custom_call.1} parent=55 // pred_check
          %p6476 = pneg %p126
        $region58: #{tpu_custom_call.1} parent=55 // pred_check_branch
          %6478 = sbr.rel (%p6476) target = $region60
        $region59: #{tpu_custom_call.1} parent=55 // pred_region
          %s6479 = sand.u32 %s111, 1
          %s6480 = scalar_lea.sflag [#allocation4], %s6479
          %s6481 = sand.u32 %s111, 1
          %s6482 = smul.addr %s6481, 32
          %s6483 = scalar_lea.vmem [#allocation7], %s6482
          %6484 = dma.done %s6480, 512
        $region60: #{tpu_custom_call.1} parent=55 // pred_fallthru
          _
      $region56: #{tpu_custom_call.1} parent=5 // pred_fallthru
        _
    $region6: #{tpu_custom_call.1} parent=1 // loop_footer
      %s21 = sadd.s32 1, %s17
    $region7: #{tpu_custom_call.1} parent=1 // loop_footer_branch
      %16 = sbr.rel target = $region3
    $region8: #{tpu_custom_call.1} parent=1 // loop_exit
      _
    %6485 = vsyncpa [#allocation3], 1
    %s6486 = scalar_lea.sflag [#allocation3], 1
    %6487 = vsyncpa %s6486, 1
    %6488 = vsyncpa [#allocation6], 1
    %s6489 = scalar_lea.sflag [#allocation6], 1
    %6490 = vsyncpa %s6489, 1
    %6491 = vsyncpa [#allocation4], 1
    %s6492 = scalar_lea.sflag [#allocation4], 1
    %6493 = vsyncpa %s6492, 1

</llo_original>
